<compile_context>
chip_gen: v6e
topology: v6e:2x2x1
jax: 0.10.0
libtpu: 0.0.40
codegen_flags: <defaults>
</compile_context>

<pallas_src>
import jax
import jax.numpy as jnp
from jax.experimental import pallas as pl
from jax.experimental.pallas import tpu as pltpu  # noqa: F401  (no TPU-specific params needed; every call is one sub-VMEM block)


# ----------------------------- Pallas kernels -----------------------------

def conv_pool_kernel(p_ref, w_ref, b_ref, o_ref):
    """Fused conv-as-matmul + bias + ReLU + MaxPool (batch folded into M).

    p_ref: [T, M, K] bf16 im2col patches grouped by pool tap
           (T = pool-window taps, M = N * pooled output pixels, K = 5*5*Cin).
    w_ref: [K, Cout] bf16 conv weight;  b_ref: [1, Cout] f32;  o_ref: [M, Cout].
    relu(max_t(p_t @ w) + b) == maxpool(relu(conv + b)) since relu/max/+const commute.
    """
    w = w_ref[...]
    acc = jnp.dot(p_ref[0], w, preferred_element_type=jnp.float32)
    for t in range(1, p_ref.shape[0]):                       # T=4, static unroll
        acc = jnp.maximum(acc, jnp.dot(p_ref[t], w, preferred_element_type=jnp.float32))
    o_ref[...] = jnp.maximum(acc + b_ref[...], 0.0).astype(o_ref.dtype)


def fc_fold_kernel(x_ref, w_ref, b_ref, o_ref):
    """fc1->fc2->fc3->fc4 (activation-free, dropout=identity) folded to one affine map."""
    o_ref[...] = (jnp.dot(x_ref[...], w_ref[...], preferred_element_type=jnp.float32)
                  + b_ref[...])


# ------------------------------- wrappers --------------------------------

def conv_relu_pool(patches, wmat, b, out_dtype):
    """One gridless fused pallas_call per conv layer (whole problem in one VMEM block)."""
    T, M, K = patches.shape
    Cout = wmat.shape[1]
    return pl.pallas_call(
        conv_pool_kernel,
        out_shape=jax.ShapeDtypeStruct((M, Cout), out_dtype),
    )(patches, wmat, b)


def fc_fold(x, w, b):
    """Folded FC stack: [N, 2304] @ [2304, 2] + bias — ~18 KB of weights total."""
    return pl.pallas_call(
        fc_fold_kernel,
        out_shape=jax.ShapeDtypeStruct((x.shape[0], w.shape[1]), jnp.float32),
    )(x, w, b)


def _conv_pool_patches(x_nhwc, *, k, pad, pk, ps):
    """im2col patches grouped by pooling tap: [pk*pk, N*Ph*Pw, k*k*Cin] (bf16).

    Pure XLA glue (pad + shifted slices + strided pool-tap slices, fused at trace
    level); conv output pixels the pool stride skips are never materialized.
    Runs in the input's dtype (bf16 — cast happens BEFORE this glue, review #7).
    """
    N, H, W, Cin = x_nhwc.shape
    Ph = (H - pk) // ps + 1
    Pw = (W - pk) // ps + 1
    xp = jnp.pad(x_nhwc, ((0, 0), (pad, pad), (pad, pad), (0, 0)))
    # cols[n, h, w, (ky*k + kx)*Cin + cin] = x_padded[n, h+ky, w+kx, cin]
    cols = jnp.concatenate([xp[:, ky:ky + H, kx:kx + W, :]
                            for ky in range(k) for kx in range(k)], axis=-1)
    taps = []
    for dy in range(pk):
        for dx in range(pk):
            t = cols[:, dy:dy + (Ph - 1) * ps + 1:ps, dx:dx + (Pw - 1) * ps + 1:ps, :]
            taps.append(t.reshape(N * Ph * Pw, k * k * Cin))
    return jnp.stack(taps, axis=0), Ph, Pw


# ------------------------------- ConvNet ----------------------------------

def init_params(key):
    ks = jax.random.split(key, 12)

    def rnd(k, shape, fan_in):
        return (jax.random.normal(k, shape) / jnp.sqrt(fan_in)).astype(jnp.float32)

    def rndb(k, shape):
        return (0.1 * jax.random.normal(k, shape)).astype(jnp.float32)

    # Raw parameters in PyTorch-equivalent layouts (HWIO conv, [in, out] linear;
    # fc1's input index follows torch's NCHW flatten order c*36 + h*6 + w).
    raw = {
        "conv1_w": rnd(ks[0], (5, 5, 1, 32), 25),   "conv1_b": rndb(ks[1], (32,)),
        "conv2_w": rnd(ks[2], (5, 5, 32, 64), 800), "conv2_b": rndb(ks[3], (64,)),
        "fc1_w": rnd(ks[4], (2304, 4608), 2304),    "fc1_b": rndb(ks[5], (4608,)),
        "fc2_w": rnd(ks[6], (4608, 1000), 4608),    "fc2_b": rndb(ks[7], (1000,)),
        "fc3_w": rnd(ks[8], (1000, 100), 1000),     "fc3_b": rndb(ks[9], (100,)),
        "fc4_w": rnd(ks[10], (100, 2), 100),        "fc4_b": rndb(ks[11], (2,)),
    }

    # One-time init-side transforms:
    #  * conv weights -> im2col matrices [k*k*Cin, Cout] in bf16;
    #  * fc1 rows permuted to absorb torch's NCHW flatten (my conv output flattens
    #    in NHWC order: index h*384 + w*64 + c  ->  torch index c*36 + h*6 + w);
    #  * fold the activation-free FC stack into ONE [2304, 2] matrix + [1, 2] bias
    #    (exact f32, right-associated so the fold itself is ~30 MFLOP).
    perm = jnp.transpose(jnp.arange(2304).reshape(64, 6, 6), (1, 2, 0)).reshape(-1)
    with jax.default_matmul_precision("highest"):
        w234 = jnp.dot(raw["fc2_w"], jnp.dot(raw["fc3_w"], raw["fc4_w"]))    # [4608, 2]
        w_fold = jnp.dot(raw["fc1_w"][perm, :], w234)                        # [2304, 2]
        b_fold = (jnp.dot(jnp.dot(jnp.dot(raw["fc1_b"], raw["fc2_w"]) + raw["fc2_b"],
                                  raw["fc3_w"]) + raw["fc3_b"],
                          raw["fc4_w"]) + raw["fc4_b"])                      # [2]

    params = {
        "conv1_wm": raw["conv1_w"].reshape(5 * 5 * 1, 32).astype(jnp.bfloat16),
        "conv1_b": raw["conv1_b"].reshape(1, 32),
        "conv2_wm": raw["conv2_w"].reshape(5 * 5 * 32, 64).astype(jnp.bfloat16),
        "conv2_b": raw["conv2_b"].reshape(1, 64),
        "fc_fold_w": w_fold,                   # [2304, 2] f32
        "fc_fold_b": b_fold.reshape(1, 2),     # [1, 2]    f32
    }
    return params, raw


def convnet_forward(params, x_nchw):
    N = x_nchw.shape[0]
    # NCHW -> NHWC (Cin=1: free) and cast to bf16 BEFORE the patch glue (review #7).
    x = jnp.transpose(x_nchw, (0, 2, 3, 1)).astype(jnp.bfloat16)

    # layer1: Conv(1->32, k5, p2) + ReLU + MaxPool(2, 2)   -- one fused kernel, bf16 out.
    p1, ph1, pw1 = _conv_pool_patches(x, k=5, pad=2, pk=2, ps=2)      # [4, N*324, 25]
    y1 = conv_relu_pool(p1, params["conv1_wm"], params["conv1_b"], jnp.bfloat16)
    y1 = y1.reshape(N, ph1, pw1, 32)                                  # [N, 18, 18, 32] bf16

    # layer2: Conv(32->64, k5, p2) + ReLU + MaxPool(k=2, s=3) -- one fused kernel, f32 out.
    p2, ph2, pw2 = _conv_pool_patches(y1, k=5, pad=2, pk=2, ps=3)     # [4, N*36, 800]
    y2 = conv_relu_pool(p2, params["conv2_wm"], params["conv2_b"], jnp.float32)

    # Flatten in NHWC order (free reshape); the fold's row permutation reproduces
    # torch's NCHW `out.reshape(out.size(0), -1)` exactly.
    flat = y2.reshape(N, ph2 * pw2 * 64)                              # [N, 2304] f32

    # TODO(synk): nn.Dropout(0.3) is the identity at inference; training-mode masking omitted.
    return fc_fold(flat, params["fc_fold_w"], params["fc_fold_b"])    # [N, 2]


# ----------------------- pure-f32 layer-by-layer reference -----------------------

def reference_forward(raw, x_nchw):
    """Plain-XLA f32 reference matching the PyTorch forward layer by layer."""
    with jax.default_matmul_precision("highest"):
        x = jnp.transpose(x_nchw, (0, 2, 3, 1))

        def conv(v, w, b):
            y = jax.lax.conv_general_dilated(
                v, w, window_strides=(1, 1), padding=[(2, 2), (2, 2)],
                dimension_numbers=("NHWC", "HWIO", "NHWC"),
                precision=jax.lax.Precision.HIGHEST)
            return jax.nn.relu(y + b)

        def pool(v, k, s):
            return jax.lax.reduce_window(v, -jnp.inf, jax.lax.max,
                                         (1, k, k, 1), (1, s, s, 1), "VALID")

        y = pool(conv(x, raw["conv1_w"], raw["conv1_b"]), 2, 2)
        y = pool(conv(y, raw["conv2_w"], raw["conv2_b"]), 2, 3)
        flat = jnp.transpose(y, (0, 3, 1, 2)).reshape(x.shape[0], -1)   # torch NCHW flatten
        h = jnp.dot(flat, raw["fc1_w"]) + raw["fc1_b"]
        h = jnp.dot(h, raw["fc2_w"]) + raw["fc2_b"]
        h = jnp.dot(h, raw["fc3_w"]) + raw["fc3_b"]
        return jnp.dot(h, raw["fc4_w"]) + raw["fc4_b"]


if __name__ == "__main__":
    key = jax.random.PRNGKey(0)
    pkey, xkey = jax.random.split(key)
    params, raw = init_params(pkey)
    x = jax.random.normal(xkey, (2, 1, 36, 36), dtype=jnp.float32)      # NCHW, like PyTorch

    out = jax.block_until_ready(jax.jit(convnet_forward)(params, x))
    assert out.shape == (2, 2) and out.dtype == jnp.float32
    assert bool(jnp.all(jnp.isfinite(out)))

    # Tolerance check against the pure-f32 reference (review correctness concern):
    # only deviations are bf16 conv weights/activations and the f32 FC-fold
    # re-association, so a 10% band is a >5x margin while still catching
    # structural errors (wrong perm / pool / bias fold -> O(1) differences).
    ref = jax.block_until_ready(jax.jit(reference_forward)(raw, x))
    err = float(jnp.max(jnp.abs(out - ref)))
    tol = 1e-1 * float(jnp.max(jnp.abs(ref))) + 1e-1
    assert err <= tol, (err, tol)

    print("KERNEL_OK")
</pallas_src>

<mosaic_0001>
module attributes {stable_mosaic.version = 11 : i64} {
  func.func @conv_pool_kernel(%arg0: memref<4x648x25xbf16, #tpu.memory_space<vmem>>, %arg1: memref<25x32xbf16, #tpu.memory_space<vmem>>, %arg2: memref<1x32xf32, #tpu.memory_space<vmem>>, %arg3: memref<648x32xbf16, #tpu.memory_space<vmem>>) attributes {dimension_semantics = [], scalar_prefetch = 0 : i64, scratch_operands = 0 : i64, tpu.core_type = #tpu.core_type<tc>} {
    %c0 = arith.constant 0 : index
    %c0_0 = arith.constant 0 : index
    %0 = vector.load %arg1[%c0, %c0_0] : memref<25x32xbf16, #tpu.memory_space<vmem>>, vector<25x32xbf16>
    %c0_1 = arith.constant 0 : index
    %c0_2 = arith.constant 0 : index
    %c0_3 = arith.constant 0 : index
    %1 = vector.load %arg0[%c0_1, %c0_2, %c0_3] : memref<4x648x25xbf16, #tpu.memory_space<vmem>>, vector<1x648x25xbf16>
    %2 = vector.shape_cast %1 : vector<1x648x25xbf16> to vector<648x25xbf16>
    %cst = arith.constant dense<0.000000e+00> : vector<648x32xf32>
    %3 = tpu.matmul %2, %0, %cst {dimension_numbers = #tpu.dot_dimension_numbers<[1], [0], [0], [1], [0, 0, 1, 1], [], []>} : vector<648x25xbf16>, vector<25x32xbf16>, vector<648x32xf32> -> vector<648x32xf32>
    %c1 = arith.constant 1 : index
    %c0_4 = arith.constant 0 : index
    %c0_5 = arith.constant 0 : index
    %4 = vector.load %arg0[%c1, %c0_4, %c0_5] : memref<4x648x25xbf16, #tpu.memory_space<vmem>>, vector<1x648x25xbf16>
    %5 = vector.shape_cast %4 : vector<1x648x25xbf16> to vector<648x25xbf16>
    %cst_6 = arith.constant dense<0.000000e+00> : vector<648x32xf32>
    %6 = tpu.matmul %5, %0, %cst_6 {dimension_numbers = #tpu.dot_dimension_numbers<[1], [0], [0], [1], [0, 0, 1, 1], [], []>} : vector<648x25xbf16>, vector<25x32xbf16>, vector<648x32xf32> -> vector<648x32xf32>
    %7 = arith.maximumf %3, %6 : vector<648x32xf32>
    %c2 = arith.constant 2 : index
    %c0_7 = arith.constant 0 : index
    %c0_8 = arith.constant 0 : index
    %8 = vector.load %arg0[%c2, %c0_7, %c0_8] : memref<4x648x25xbf16, #tpu.memory_space<vmem>>, vector<1x648x25xbf16>
    %9 = vector.shape_cast %8 : vector<1x648x25xbf16> to vector<648x25xbf16>
    %cst_9 = arith.constant dense<0.000000e+00> : vector<648x32xf32>
    %10 = tpu.matmul %9, %0, %cst_9 {dimension_numbers = #tpu.dot_dimension_numbers<[1], [0], [0], [1], [0, 0, 1, 1], [], []>} : vector<648x25xbf16>, vector<25x32xbf16>, vector<648x32xf32> -> vector<648x32xf32>
    %11 = arith.maximumf %7, %10 : vector<648x32xf32>
    %c3 = arith.constant 3 : index
    %c0_10 = arith.constant 0 : index
    %c0_11 = arith.constant 0 : index
    %12 = vector.load %arg0[%c3, %c0_10, %c0_11] : memref<4x648x25xbf16, #tpu.memory_space<vmem>>, vector<1x648x25xbf16>
    %13 = vector.shape_cast %12 : vector<1x648x25xbf16> to vector<648x25xbf16>
    %cst_12 = arith.constant dense<0.000000e+00> : vector<648x32xf32>
    %14 = tpu.matmul %13, %0, %cst_12 {dimension_numbers = #tpu.dot_dimension_numbers<[1], [0], [0], [1], [0, 0, 1, 1], [], []>} : vector<648x25xbf16>, vector<25x32xbf16>, vector<648x32xf32> -> vector<648x32xf32>
    %15 = arith.maximumf %11, %14 : vector<648x32xf32>
    %c0_13 = arith.constant 0 : index
    %c0_14 = arith.constant 0 : index
    %16 = vector.load %arg2[%c0_13, %c0_14] : memref<1x32xf32, #tpu.memory_space<vmem>>, vector<1x32xf32>
    %17 = vector.broadcast %16 : vector<1x32xf32> to vector<648x32xf32>
    %18 = arith.addf %15, %17 : vector<648x32xf32>
    %cst_15 = arith.constant 0.000000e+00 : f32
    %19 = vector.broadcast %cst_15 : f32 to vector<648x32xf32>
    %20 = arith.maximumf %18, %19 : vector<648x32xf32>
    %21 = arith.truncf %20 : vector<648x32xf32> to vector<648x32xbf16>
    %c0_16 = arith.constant 0 : index
    %c0_17 = arith.constant 0 : index
    %22 = vector.load %arg3[%c0_16, %c0_17] : memref<648x32xbf16, #tpu.memory_space<vmem>>, vector<648x32xbf16>
    tpu.vector_store %arg3[%c0_16, %c0_17], %21 {strides = array<i32>} : memref<648x32xbf16, #tpu.memory_space<vmem>>, vector<648x32xbf16>,
    return
  }
}

module attributes {stable_mosaic.version = 11 : i64} {
  func.func @conv_pool_kernel(%arg0: memref<4x72x800xbf16, #tpu.memory_space<vmem>>, %arg1: memref<800x64xbf16, #tpu.memory_space<vmem>>, %arg2: memref<1x64xf32, #tpu.memory_space<vmem>>, %arg3: memref<72x64xf32, #tpu.memory_space<vmem>>) attributes {dimension_semantics = [], scalar_prefetch = 0 : i64, scratch_operands = 0 : i64, tpu.core_type = #tpu.core_type<tc>} {
    %c0 = arith.constant 0 : index
    %c0_0 = arith.constant 0 : index
    %0 = vector.load %arg1[%c0, %c0_0] : memref<800x64xbf16, #tpu.memory_space<vmem>>, vector<800x64xbf16>
    %c0_1 = arith.constant 0 : index
    %c0_2 = arith.constant 0 : index
    %c0_3 = arith.constant 0 : index
    %1 = vector.load %arg0[%c0_1, %c0_2, %c0_3] : memref<4x72x800xbf16, #tpu.memory_space<vmem>>, vector<1x72x800xbf16>
    %2 = vector.shape_cast %1 : vector<1x72x800xbf16> to vector<72x800xbf16>
    %cst = arith.constant dense<0.000000e+00> : vector<72x64xf32>
    %3 = tpu.matmul %2, %0, %cst {dimension_numbers = #tpu.dot_dimension_numbers<[1], [0], [0], [1], [0, 0, 1, 1], [], []>} : vector<72x800xbf16>, vector<800x64xbf16>, vector<72x64xf32> -> vector<72x64xf32>
    %c1 = arith.constant 1 : index
    %c0_4 = arith.constant 0 : index
    %c0_5 = arith.constant 0 : index
    %4 = vector.load %arg0[%c1, %c0_4, %c0_5] : memref<4x72x800xbf16, #tpu.memory_space<vmem>>, vector<1x72x800xbf16>
    %5 = vector.shape_cast %4 : vector<1x72x800xbf16> to vector<72x800xbf16>
    %cst_6 = arith.constant dense<0.000000e+00> : vector<72x64xf32>
    %6 = tpu.matmul %5, %0, %cst_6 {dimension_numbers = #tpu.dot_dimension_numbers<[1], [0], [0], [1], [0, 0, 1, 1], [], []>} : vector<72x800xbf16>, vector<800x64xbf16>, vector<72x64xf32> -> vector<72x64xf32>
    %7 = arith.maximumf %3, %6 : vector<72x64xf32>
    %c2 = arith.constant 2 : index
    %c0_7 = arith.constant 0 : index
    %c0_8 = arith.constant 0 : index
    %8 = vector.load %arg0[%c2, %c0_7, %c0_8] : memref<4x72x800xbf16, #tpu.memory_space<vmem>>, vector<1x72x800xbf16>
    %9 = vector.shape_cast %8 : vector<1x72x800xbf16> to vector<72x800xbf16>
    %cst_9 = arith.constant dense<0.000000e+00> : vector<72x64xf32>
    %10 = tpu.matmul %9, %0, %cst_9 {dimension_numbers = #tpu.dot_dimension_numbers<[1], [0], [0], [1], [0, 0, 1, 1], [], []>} : vector<72x800xbf16>, vector<800x64xbf16>, vector<72x64xf32> -> vector<72x64xf32>
    %11 = arith.maximumf %7, %10 : vector<72x64xf32>
    %c3 = arith.constant 3 : index
    %c0_10 = arith.constant 0 : index
    %c0_11 = arith.constant 0 : index
    %12 = vector.load %arg0[%c3, %c0_10, %c0_11] : memref<4x72x800xbf16, #tpu.memory_space<vmem>>, vector<1x72x800xbf16>
    %13 = vector.shape_cast %12 : vector<1x72x800xbf16> to vector<72x800xbf16>
    %cst_12 = arith.constant dense<0.000000e+00> : vector<72x64xf32>
    %14 = tpu.matmul %13, %0, %cst_12 {dimension_numbers = #tpu.dot_dimension_numbers<[1], [0], [0], [1], [0, 0, 1, 1], [], []>} : vector<72x800xbf16>, vector<800x64xbf16>, vector<72x64xf32> -> vector<72x64xf32>
    %15 = arith.maximumf %11, %14 : vector<72x64xf32>
    %c0_13 = arith.constant 0 : index
    %c0_14 = arith.constant 0 : index
    %16 = vector.load %arg2[%c0_13, %c0_14] : memref<1x64xf32, #tpu.memory_space<vmem>>, vector<1x64xf32>
    %17 = vector.broadcast %16 : vector<1x64xf32> to vector<72x64xf32>
    %18 = arith.addf %15, %17 : vector<72x64xf32>
    %cst_15 = arith.constant 0.000000e+00 : f32
    %19 = vector.broadcast %cst_15 : f32 to vector<72x64xf32>
    %20 = arith.maximumf %18, %19 : vector<72x64xf32>
    %c0_16 = arith.constant 0 : index
    %c0_17 = arith.constant 0 : index
    %21 = vector.load %arg3[%c0_16, %c0_17] : memref<72x64xf32, #tpu.memory_space<vmem>>, vector<72x64xf32>
    tpu.vector_store %arg3[%c0_16, %c0_17], %20 {strides = array<i32>} : memref<72x64xf32, #tpu.memory_space<vmem>>, vector<72x64xf32>,
    return
  }
}

module attributes {stable_mosaic.version = 11 : i64} {
  func.func @fc_fold_kernel(%arg0: memref<2x2304xf32, #tpu.memory_space<vmem>>, %arg1: memref<2304x2xf32, #tpu.memory_space<vmem>>, %arg2: memref<1x2xf32, #tpu.memory_space<vmem>>, %arg3: memref<2x2xf32, #tpu.memory_space<vmem>>) attributes {dimension_semantics = [], scalar_prefetch = 0 : i64, scratch_operands = 0 : i64, tpu.core_type = #tpu.core_type<tc>} {
    %c0 = arith.constant 0 : index
    %c0_0 = arith.constant 0 : index
    %0 = vector.load %arg0[%c0, %c0_0] : memref<2x2304xf32, #tpu.memory_space<vmem>>, vector<2x2304xf32>
    %c0_1 = arith.constant 0 : index
    %c0_2 = arith.constant 0 : index
    %1 = vector.load %arg1[%c0_1, %c0_2] : memref<2304x2xf32, #tpu.memory_space<vmem>>, vector<2304x2xf32>
    %cst = arith.constant dense<0.000000e+00> : vector<2x2xf32>
    %2 = tpu.matmul %0, %1, %cst {dimension_numbers = #tpu.dot_dimension_numbers<[1], [0], [0], [1], [0, 0, 1, 1], [], []>} : vector<2x2304xf32>, vector<2304x2xf32>, vector<2x2xf32> -> vector<2x2xf32>
    %c0_3 = arith.constant 0 : index
    %c0_4 = arith.constant 0 : index
    %3 = vector.load %arg2[%c0_3, %c0_4] : memref<1x2xf32, #tpu.memory_space<vmem>>, vector<1x2xf32>
    %4 = vector.broadcast %3 : vector<1x2xf32> to vector<2x2xf32>
    %5 = arith.addf %2, %4 : vector<2x2xf32>
    %c0_5 = arith.constant 0 : index
    %c0_6 = arith.constant 0 : index
    %6 = vector.load %arg3[%c0_5, %c0_6] : memref<2x2xf32, #tpu.memory_space<vmem>>, vector<2x2xf32>
    tpu.vector_store %arg3[%c0_5, %c0_6], %5 {strides = array<i32>} : memref<2x2xf32, #tpu.memory_space<vmem>>, vector<2x2xf32>,
    return
  }
}

</mosaic_0001>

<llo_original>
// kernel: convnet_forward.3
$region0: #{convnet_forward.3}
  #allocation0 [shape = 'u32[]', space=smem, size = 0x4, offset = 0x4, fixed_abs, tag = 'smem constant byte address 0x4 - core index']
  #allocation1 [shape = 'u32[144,128]{1,0:T(1,128)}', space=vmem, size = 0x12000, scoped, tag = 'internal scratch']
  %s0 = inlined_call_operand.vmem [shape: bf16[4,648,25], index: 0, kind: input, shape index: {}]
  %s1 = inlined_call_operand.vmem [shape: bf16[25,32], index: 1, kind: input, shape index: {}]
  %s2 = inlined_call_operand.vmem [shape: f32[1,32], index: 2, kind: input, shape index: {}]
  %s3 = inlined_call_operand.vmem [shape: bf16[648,32], index: 3, kind: output, shape index: {}]
  %s4 = sld [smem:[#allocation0]]
  $region22: #{convnet_forward.3} parent=0
    _
  %s6 = ssub.s32 1, %s4
  %s7 = scalar_select 0, %s6, %s4
  // Predicated region
  $region2: #{convnet_forward.3} parent=0 // pred_check
    _
  $region3: #{convnet_forward.3} parent=0 // pred_check_branch
    %9 = sbr.rel (0) target = $region5
  $region4: #{convnet_forward.3} parent=0 // pred_region
    _
  $region5: #{convnet_forward.3} parent=0 // pred_fallthru
    _
  // Predicated region
  $region6: #{convnet_forward.3} parent=0 // pred_check
    _
  $region7: #{convnet_forward.3} parent=0 // pred_check_branch
    %11 = sbr.rel (0) target = $region9
  $region8: #{convnet_forward.3} parent=0 // pred_region
    _
  $region9: #{convnet_forward.3} parent=0 // pred_fallthru
    _
  // Predicated region
  $region10: #{convnet_forward.3} parent=0 // pred_check
    _
  $region11: #{convnet_forward.3} parent=0 // pred_check_branch
    %13 = sbr.rel (0) target = $region13
  $region12: #{convnet_forward.3} parent=0 // pred_region
    _
  $region13: #{convnet_forward.3} parent=0 // pred_fallthru
    _
  %v15 = vld [vmem:[%s1] sm:$0xf]
  %v16 = vld [vmem:[%s1 + $0x4] sm:$0xf]
  %v17 = vld [vmem:[%s1 + $0x8] sm:$0xf]
  %v18 = vld [vmem:[%s1 + $0xc] sm:$0x1]
  %v19 = vld [vmem:[%s0] sm:$0xf]
  %v20 = vld [vmem:[%s0 + $0x4] sm:$0xf]
  %v21 = vld [vmem:[%s0 + $0x8] sm:$0xf]
  %v22 = vld [vmem:[%s0 + $0xc] sm:$0xf]
  %v23 = vld [vmem:[%s0 + $0x10] sm:$0xf]
  %v24 = vld [vmem:[%s0 + $0x14] sm:$0xf]
  %v25 = vld [vmem:[%s0 + $0x18] sm:$0xf]
  %v26 = vld [vmem:[%s0 + $0x1c] sm:$0xf]
  %v27 = vld [vmem:[%s0 + $0x20] sm:$0xf]
  %v28 = vld [vmem:[%s0 + $0x24] sm:$0xf]
  %v29 = vld [vmem:[%s0 + $0x28] sm:$0xf]
  %v30 = vld [vmem:[%s0 + $0x2c] sm:$0xf]
  %v31 = vld [vmem:[%s0 + $0x30] sm:$0xf]
  %v32 = vld [vmem:[%s0 + $0x34] sm:$0xf]
  %v33 = vld [vmem:[%s0 + $0x38] sm:$0xf]
  %v34 = vld [vmem:[%s0 + $0x3c] sm:$0xf]
  %v35 = vld [vmem:[%s0 + $0x40] sm:$0xf]
  %v36 = vld [vmem:[%s0 + $0x44] sm:$0xf]
  %v37 = vld [vmem:[%s0 + $0x48] sm:$0xf]
  %v38 = vld [vmem:[%s0 + $0x4c] sm:$0xf]
  %v39 = vld [vmem:[%s0 + $0x50] sm:$0xf]
  %v40 = vld [vmem:[%s0 + $0x54] sm:$0xf]
  %v41 = vld [vmem:[%s0 + $0x58] sm:$0xf]
  %v42 = vld [vmem:[%s0 + $0x5c] sm:$0xf]
  %v43 = vld [vmem:[%s0 + $0x60] sm:$0xf]
  %v44 = vld [vmem:[%s0 + $0x64] sm:$0xf]
  %v45 = vld [vmem:[%s0 + $0x68] sm:$0xf]
  %v46 = vld [vmem:[%s0 + $0x6c] sm:$0xf]
  %v47 = vld [vmem:[%s0 + $0x70] sm:$0xf]
  %v48 = vld [vmem:[%s0 + $0x74] sm:$0xf]
  %v49 = vld [vmem:[%s0 + $0x78] sm:$0xf]
  %v50 = vld [vmem:[%s0 + $0x7c] sm:$0xf]
  %v51 = vld [vmem:[%s0 + $0x80] sm:$0xf]
  %v52 = vld [vmem:[%s0 + $0x84] sm:$0xf]
  %v53 = vld [vmem:[%s0 + $0x88] sm:$0xf]
  %v54 = vld [vmem:[%s0 + $0x8c] sm:$0xf]
  %v55 = vld [vmem:[%s0 + $0x90] sm:$0xf]
  %v56 = vld [vmem:[%s0 + $0x94] sm:$0xf]
  %v57 = vld [vmem:[%s0 + $0x98] sm:$0xf]
  %v58 = vld [vmem:[%s0 + $0x9c] sm:$0xf]
  %v59 = vld [vmem:[%s0 + $0xa0] sm:$0xf]
  %v60 = vld [vmem:[%s0 + $0xa4] sm:$0xf]
  %v61 = vld [vmem:[%s0 + $0xa8] sm:$0xf]
  %v62 = vld [vmem:[%s0 + $0xac] sm:$0xf]
  %v63 = vld [vmem:[%s0 + $0xb0] sm:$0xf]
  %v64 = vld [vmem:[%s0 + $0xb4] sm:$0xf]
  %v65 = vld [vmem:[%s0 + $0xb8] sm:$0xf]
  %v66 = vld [vmem:[%s0 + $0xbc] sm:$0xf]
  %v67 = vld [vmem:[%s0 + $0xc0] sm:$0xf]
  %v68 = vld [vmem:[%s0 + $0xc4] sm:$0xf]
  %v69 = vld [vmem:[%s0 + $0xc8] sm:$0xf]
  %v70 = vld [vmem:[%s0 + $0xcc] sm:$0xf]
  %v71 = vld [vmem:[%s0 + $0xd0] sm:$0xf]
  %v72 = vld [vmem:[%s0 + $0xd4] sm:$0xf]
  %v73 = vld [vmem:[%s0 + $0xd8] sm:$0xf]
  %v74 = vld [vmem:[%s0 + $0xdc] sm:$0xf]
  %v75 = vld [vmem:[%s0 + $0xe0] sm:$0xf]
  %v76 = vld [vmem:[%s0 + $0xe4] sm:$0xf]
  %v77 = vld [vmem:[%s0 + $0xe8] sm:$0xf]
  %v78 = vld [vmem:[%s0 + $0xec] sm:$0xf]
  %v79 = vld [vmem:[%s0 + $0xf0] sm:$0xf]
  %v80 = vld [vmem:[%s0 + $0xf4] sm:$0xf]
  %v81 = vld [vmem:[%s0 + $0xf8] sm:$0xf]
  %v82 = vld [vmem:[%s0 + $0xfc] sm:$0xf]
  %v83 = vld [vmem:[%s0 + $0x100] sm:$0xf]
  %v84 = vld [vmem:[%s0 + $0x104] sm:$0xf]
  %v85 = vld [vmem:[%s0 + $0x108] sm:$0xf]
  %v86 = vld [vmem:[%s0 + $0x10c] sm:$0xf]
  %v87 = vld [vmem:[%s0 + $0x110] sm:$0xf]
  %v88 = vld [vmem:[%s0 + $0x114] sm:$0xf]
  %v89 = vld [vmem:[%s0 + $0x118] sm:$0xf]
  %v90 = vld [vmem:[%s0 + $0x11c] sm:$0xf]
  %v91 = vld [vmem:[%s0 + $0x120] sm:$0xf]
  %v92 = vld [vmem:[%s0 + $0x124] sm:$0xf]
  %v93 = vld [vmem:[%s0 + $0x128] sm:$0xf]
  %v94 = vld [vmem:[%s0 + $0x12c] sm:$0xf]
  %v95 = vld [vmem:[%s0 + $0x130] sm:$0xf]
  %v96 = vld [vmem:[%s0 + $0x134] sm:$0xf]
  %v97 = vld [vmem:[%s0 + $0x138] sm:$0xf]
  %v98 = vld [vmem:[%s0 + $0x13c] sm:$0xf]
  %v99 = vld [vmem:[%s0 + $0x140] sm:$0xf]
  %v181 = vunpack.c.l.b16 %v19
  %v182 = vunpack.c.l.b16 %v20
  %v183 = vunpack.c.l.b16 %v21
  %v184 = vunpack.c.l.b16 %v22
  %v185 = vunpack.c.l.b16 %v23
  %v186 = vunpack.c.l.b16 %v24
  %v187 = vunpack.c.l.b16 %v25
  %v188 = vunpack.c.l.b16 %v26
  %v189 = vunpack.c.l.b16 %v27
  %v190 = vunpack.c.l.b16 %v28
  %v191 = vunpack.c.l.b16 %v29
  %v192 = vunpack.c.l.b16 %v30
  %v193 = vunpack.c.l.b16 %v31
  %v194 = vunpack.c.l.b16 %v32
  %v195 = vunpack.c.l.b16 %v33
  %v196 = vunpack.c.l.b16 %v34
  %v197 = vunpack.c.l.b16 %v35
  %v198 = vunpack.c.l.b16 %v36
  %v199 = vunpack.c.l.b16 %v37
  %v200 = vunpack.c.l.b16 %v38
  %v201 = vunpack.c.l.b16 %v39
  %v202 = vunpack.c.l.b16 %v40
  %v203 = vunpack.c.l.b16 %v41
  %v204 = vunpack.c.l.b16 %v42
  %v205 = vunpack.c.l.b16 %v43
  %v206 = vunpack.c.l.b16 %v44
  %v207 = vunpack.c.l.b16 %v45
  %v208 = vunpack.c.l.b16 %v46
  %v209 = vunpack.c.l.b16 %v47
  %v210 = vunpack.c.l.b16 %v48
  %v211 = vunpack.c.l.b16 %v49
  %v212 = vunpack.c.l.b16 %v50
  %v213 = vunpack.c.l.b16 %v51
  %v214 = vunpack.c.l.b16 %v52
  %v215 = vunpack.c.l.b16 %v53
  %v216 = vunpack.c.l.b16 %v54
  %v217 = vunpack.c.l.b16 %v55
  %v218 = vunpack.c.l.b16 %v56
  %v219 = vunpack.c.l.b16 %v57
  %v220 = vunpack.c.l.b16 %v58
  %v221 = vunpack.c.l.b16 %v59
  %v222 = vunpack.c.l.b16 %v60
  %v223 = vunpack.c.l.b16 %v61
  %v224 = vunpack.c.l.b16 %v62
  %v225 = vunpack.c.l.b16 %v63
  %v226 = vunpack.c.l.b16 %v64
  %v227 = vunpack.c.l.b16 %v65
  %v228 = vunpack.c.l.b16 %v66
  %v229 = vunpack.c.l.b16 %v67
  %v230 = vunpack.c.l.b16 %v68
  %v231 = vunpack.c.l.b16 %v69
  %v232 = vunpack.c.l.b16 %v70
  %v233 = vunpack.c.l.b16 %v71
  %v234 = vunpack.c.l.b16 %v72
  %v235 = vunpack.c.l.b16 %v73
  %v236 = vunpack.c.l.b16 %v74
  %v237 = vunpack.c.l.b16 %v75
  %v238 = vunpack.c.l.b16 %v76
  %v239 = vunpack.c.l.b16 %v77
  %v240 = vunpack.c.l.b16 %v78
  %v241 = vunpack.c.l.b16 %v79
  %v242 = vunpack.c.l.b16 %v80
  %v243 = vunpack.c.l.b16 %v81
  %v244 = vunpack.c.l.b16 %v82
  %v245 = vunpack.c.l.b16 %v83
  %v246 = vunpack.c.l.b16 %v84
  %v247 = vunpack.c.l.b16 %v85
  %v248 = vunpack.c.l.b16 %v86
  %v249 = vunpack.c.l.b16 %v87
  %v250 = vunpack.c.l.b16 %v88
  %v251 = vunpack.c.l.b16 %v89
  %v252 = vunpack.c.l.b16 %v90
  %v253 = vunpack.c.l.b16 %v91
  %v254 = vunpack.c.l.b16 %v92
  %v255 = vunpack.c.l.b16 %v93
  %v256 = vunpack.c.l.b16 %v94
  %v257 = vunpack.c.l.b16 %v95
  %v258 = vunpack.c.l.b16 %v96
  %v259 = vunpack.c.l.b16 %v97
  %v260 = vunpack.c.l.b16 %v98
  %v261 = vunpack.c.l.b16 %v99
  %v262 = vpack.c.b16 %v182, %v181
  %v263 = vpack.c.b16 %v184, %v183
  %v264 = vpack.c.b16 %v186, %v185
  %v265 = vpack.c.b16 %v188, %v187
  %v266 = vpack.c.b16 %v190, %v189
  %v267 = vpack.c.b16 %v192, %v191
  %v268 = vpack.c.b16 %v194, %v193
  %v269 = vpack.c.b16 %v196, %v195
  %v270 = vpack.c.b16 %v198, %v197
  %v271 = vpack.c.b16 %v200, %v199
  %v272 = vpack.c.b16 %v202, %v201
  %v273 = vpack.c.b16 %v204, %v203
  %v274 = vpack.c.b16 %v206, %v205
  %v275 = vpack.c.b16 %v208, %v207
  %v276 = vpack.c.b16 %v210, %v209
  %v277 = vpack.c.b16 %v212, %v211
  %v278 = vpack.c.b16 %v214, %v213
  %v279 = vpack.c.b16 %v216, %v215
  %v280 = vpack.c.b16 %v218, %v217
  %v281 = vpack.c.b16 %v220, %v219
  %v282 = vpack.c.b16 %v222, %v221
  %v283 = vpack.c.b16 %v224, %v223
  %v284 = vpack.c.b16 %v226, %v225
  %v285 = vpack.c.b16 %v228, %v227
  %v286 = vpack.c.b16 %v230, %v229
  %v287 = vpack.c.b16 %v232, %v231
  %v288 = vpack.c.b16 %v234, %v233
  %v289 = vpack.c.b16 %v236, %v235
  %v290 = vpack.c.b16 %v238, %v237
  %v291 = vpack.c.b16 %v240, %v239
  %v292 = vpack.c.b16 %v242, %v241
  %v293 = vpack.c.b16 %v244, %v243
  %v294 = vpack.c.b16 %v246, %v245
  %v295 = vpack.c.b16 %v248, %v247
  %v296 = vpack.c.b16 %v250, %v249
  %v297 = vpack.c.b16 %v252, %v251
  %v298 = vpack.c.b16 %v254, %v253
  %v299 = vpack.c.b16 %v256, %v255
  %v300 = vpack.c.b16 %v258, %v257
  %v301 = vpack.c.b16 %v260, %v259
  %v302 = vpack.c.b16 %v261, %v261
  %v307 = vunpack.c.l.b16 %v15
  %v308 = vunpack.c.l.b16 %v16
  %v309 = vunpack.c.l.b16 %v17
  %v310 = vunpack.c.l.b16 %v18
  %v311 = vpack.c.b16 %v308, %v307
  %v312 = vpack.c.b16 %v310, %v309
  %vm314 = vcmask 203776
  %v316 = vsel %vm314, %v262, 0
  %v319 = vsel %vm314, %v263, 0
  %v322 = vsel %vm314, %v264, 0
  %v325 = vsel %vm314, %v265, 0
  %v328 = vsel %vm314, %v266, 0
  %v331 = vsel %vm314, %v267, 0
  %v334 = vsel %vm314, %v268, 0
  %v337 = vsel %vm314, %v269, 0
  %v340 = vsel %vm314, %v270, 0
  %v343 = vsel %vm314, %v271, 0
  %v346 = vsel %vm314, %v272, 0
  %v349 = vsel %vm314, %v273, 0
  %v352 = vsel %vm314, %v274, 0
  %v355 = vsel %vm314, %v275, 0
  %v358 = vsel %vm314, %v276, 0
  %v361 = vsel %vm314, %v277, 0
  %v364 = vsel %vm314, %v278, 0
  %v367 = vsel %vm314, %v279, 0
  %v370 = vsel %vm314, %v280, 0
  %v373 = vsel %vm314, %v281, 0
  %v376 = vsel %vm314, %v282, 0
  %v379 = vsel %vm314, %v283, 0
  %v382 = vsel %vm314, %v284, 0
  %v385 = vsel %vm314, %v285, 0
  %v388 = vsel %vm314, %v286, 0
  %v391 = vsel %vm314, %v287, 0
  %v394 = vsel %vm314, %v288, 0
  %v397 = vsel %vm314, %v289, 0
  %v400 = vsel %vm314, %v290, 0
  %v403 = vsel %vm314, %v291, 0
  %v406 = vsel %vm314, %v292, 0
  %v409 = vsel %vm314, %v293, 0
  %v412 = vsel %vm314, %v294, 0
  %v415 = vsel %vm314, %v295, 0
  %v418 = vsel %vm314, %v296, 0
  %v421 = vsel %vm314, %v297, 0
  %v424 = vsel %vm314, %v298, 0
  %v427 = vsel %vm314, %v299, 0
  %v430 = vsel %vm314, %v300, 0
  %v433 = vsel %vm314, %v301, 0
  %v436 = vsel %vm314, %v302, 0
  %vm438 = vcmask 1043456
  %vm439 = vcmask 1044480
  %v440 = vsel %vm438, 4294967295, 65535
  %v441 = vsel %vm439, %v440, 0
  %v443 = vand.u32 %v312, %v441
  %445 = vmatprep.subr.bf16.mxu0 0
  %446 = vmatpush1.bf16.msra.mxu0 0
  %447 = vmatprep.subr.bf16.mxu0 0
  %448 = vmatpush1.bf16.msra.mxu0 0
  %449 = vmatprep.subr.bf16.mxu0 0
  %450 = vmatpush1.bf16.msra.mxu0 0
  %451 = vmatprep.subr.bf16.mxu0 0
  %452 = vmatpush1.bf16.msra.mxu0 0
  %453 = vmatprep.subr.bf16.mxu0 0
  %454 = vmatpush1.bf16.msra.mxu0 0
  %455 = vmatprep.subr.bf16.mxu0 0
  %456 = vmatpush1.bf16.msra.mxu0 0
  %457 = vmatprep.subr.bf16.mxu0 0
  %458 = vmatpush1.bf16.msra.mxu0 %v443
  %459 = vmatprep.subr.bf16.mxu0 0
  %460 = vmatpush1.bf16.msra.mxu0 %v311
  %461 = vmatprep.subr.bf16.mxu0 0
  %462 = vmatpush2.bf16.msra.mxu0 0
  %463 = vmatprep.subr.bf16.mxu0 0
  %464 = vmatpush2.bf16.msra.mxu0 0
  %465 = vmatprep.subr.bf16.mxu0 0
  %466 = vmatpush2.bf16.msra.mxu0 0
  %467 = vmatprep.subr.bf16.mxu0 0
  %468 = vmatpush2.bf16.msra.mxu0 0
  %469 = vmatprep.subr.bf16.mxu0 0
  %470 = vmatpush2.bf16.msra.mxu0 0
  %471 = vmatprep.subr.bf16.mxu0 0
  %472 = vmatpush2.bf16.msra.mxu0 0
  %473 = vmatprep.subr.bf16.mxu0 0
  %474 = vmatpush2.bf16.msra.mxu0 0
  %475 = vmatprep.subr.bf16.mxu0 0
  %476 = vmatpush2.bf16.msra.mxu0 0
  %477 = vmatprep.mubr.bf16.mxu0 0
  %478 = vmatmul.mubr.bf16.gmra.mxu0 %v316
  %v479 = vpop.f32.mrf.mxu0
  %v480 = vadd.f32 0.0, %v479
  %v481 = vpop.f32.mrf.mxu0
  %v482 = vpop.f32.mrf.mxu0
  %v483 = vadd.f32 0.0, %v482
  %v484 = vpop.f32.mrf.mxu0
  %485 = vmatprep.mubr.bf16.mxu0 0
  %486 = vmatmul.mubr.bf16.gmra.mxu0 %v319
  %v487 = vpop.f32.mrf.mxu0
  %v488 = vadd.f32 0.0, %v487
  %v489 = vpop.f32.mrf.mxu0
  %v490 = vpop.f32.mrf.mxu0
  %v491 = vadd.f32 0.0, %v490
  %v492 = vpop.f32.mrf.mxu0
  %493 = vmatprep.mubr.bf16.mxu0 0
  %494 = vmatmul.mubr.bf16.gmra.mxu0 %v322
  %v495 = vpop.f32.mrf.mxu0
  %v496 = vadd.f32 0.0, %v495
  %v497 = vpop.f32.mrf.mxu0
  %v498 = vpop.f32.mrf.mxu0
  %v499 = vadd.f32 0.0, %v498
  %v500 = vpop.f32.mrf.mxu0
  %501 = vmatprep.mubr.bf16.mxu0 0
  %502 = vmatmul.mubr.bf16.gmra.mxu0 %v325
  %v503 = vpop.f32.mrf.mxu0
  %v504 = vadd.f32 0.0, %v503
  %v505 = vpop.f32.mrf.mxu0
  %v506 = vpop.f32.mrf.mxu0
  %v507 = vadd.f32 0.0, %v506
  %v508 = vpop.f32.mrf.mxu0
  %509 = vmatprep.mubr.bf16.mxu0 0
  %510 = vmatmul.mubr.bf16.gmra.mxu0 %v328
  %v511 = vpop.f32.mrf.mxu0
  %v512 = vadd.f32 0.0, %v511
  %v513 = vpop.f32.mrf.mxu0
  %v514 = vpop.f32.mrf.mxu0
  %v515 = vadd.f32 0.0, %v514
  %v516 = vpop.f32.mrf.mxu0
  %517 = vmatprep.mubr.bf16.mxu0 0
  %518 = vmatmul.mubr.bf16.gmra.mxu0 %v331
  %v519 = vpop.f32.mrf.mxu0
  %v520 = vadd.f32 0.0, %v519
  %v521 = vpop.f32.mrf.mxu0
  %v522 = vpop.f32.mrf.mxu0
  %v523 = vadd.f32 0.0, %v522
  %v524 = vpop.f32.mrf.mxu0
  %525 = vmatprep.mubr.bf16.mxu0 0
  %526 = vmatmul.mubr.bf16.gmra.mxu0 %v334
  %v527 = vpop.f32.mrf.mxu0
  %v528 = vadd.f32 0.0, %v527
  %v529 = vpop.f32.mrf.mxu0
  %v530 = vpop.f32.mrf.mxu0
  %v531 = vadd.f32 0.0, %v530
  %v532 = vpop.f32.mrf.mxu0
  %533 = vmatprep.mubr.bf16.mxu0 0
  %534 = vmatmul.mubr.bf16.gmra.mxu0 %v337
  %v535 = vpop.f32.mrf.mxu0
  %v536 = vadd.f32 0.0, %v535
  %v537 = vpop.f32.mrf.mxu0
  %v538 = vpop.f32.mrf.mxu0
  %v539 = vadd.f32 0.0, %v538
  %v540 = vpop.f32.mrf.mxu0
  %541 = vmatprep.mubr.bf16.mxu0 0
  %542 = vmatmul.mubr.bf16.gmra.mxu0 %v340
  %v543 = vpop.f32.mrf.mxu0
  %v544 = vadd.f32 0.0, %v543
  %v545 = vpop.f32.mrf.mxu0
  %v546 = vpop.f32.mrf.mxu0
  %v547 = vadd.f32 0.0, %v546
  %v548 = vpop.f32.mrf.mxu0
  %549 = vmatprep.mubr.bf16.mxu0 0
  %550 = vmatmul.mubr.bf16.gmra.mxu0 %v343
  %v551 = vpop.f32.mrf.mxu0
  %v552 = vadd.f32 0.0, %v551
  %v553 = vpop.f32.mrf.mxu0
  %v554 = vpop.f32.mrf.mxu0
  %v555 = vadd.f32 0.0, %v554
  %v556 = vpop.f32.mrf.mxu0
  %557 = vmatprep.mubr.bf16.mxu0 0
  %558 = vmatmul.mubr.bf16.gmra.mxu0 %v346
  %v559 = vpop.f32.mrf.mxu0
  %v560 = vadd.f32 0.0, %v559
  %v561 = vpop.f32.mrf.mxu0
  %v562 = vpop.f32.mrf.mxu0
  %v563 = vadd.f32 0.0, %v562
  %v564 = vpop.f32.mrf.mxu0
  %565 = vmatprep.mubr.bf16.mxu0 0
  %566 = vmatmul.mubr.bf16.gmra.mxu0 %v349
  %v567 = vpop.f32.mrf.mxu0
  %v568 = vadd.f32 0.0, %v567
  %v569 = vpop.f32.mrf.mxu0
  %v570 = vpop.f32.mrf.mxu0
  %v571 = vadd.f32 0.0, %v570
  %v572 = vpop.f32.mrf.mxu0
  %573 = vmatprep.mubr.bf16.mxu0 0
  %574 = vmatmul.mubr.bf16.gmra.mxu0 %v352
  %v575 = vpop.f32.mrf.mxu0
  %v576 = vadd.f32 0.0, %v575
  %v577 = vpop.f32.mrf.mxu0
  %v578 = vpop.f32.mrf.mxu0
  %v579 = vadd.f32 0.0, %v578
  %v580 = vpop.f32.mrf.mxu0
  %581 = vmatprep.mubr.bf16.mxu0 0
  %582 = vmatmul.mubr.bf16.gmra.mxu0 %v355
  %v583 = vpop.f32.mrf.mxu0
  %v584 = vadd.f32 0.0, %v583
  %v585 = vpop.f32.mrf.mxu0
  %v586 = vpop.f32.mrf.mxu0
  %v587 = vadd.f32 0.0, %v586
  %v588 = vpop.f32.mrf.mxu0
  %589 = vmatprep.mubr.bf16.mxu0 0
  %590 = vmatmul.mubr.bf16.gmra.mxu0 %v358
  %v591 = vpop.f32.mrf.mxu0
  %v592 = vadd.f32 0.0, %v591
  %v593 = vpop.f32.mrf.mxu0
  %v594 = vpop.f32.mrf.mxu0
  %v595 = vadd.f32 0.0, %v594
  %v596 = vpop.f32.mrf.mxu0
  %597 = vmatprep.mubr.bf16.mxu0 0
  %598 = vmatmul.mubr.bf16.gmra.mxu0 %v361
  %v599 = vpop.f32.mrf.mxu0
  %v600 = vadd.f32 0.0, %v599
  %v601 = vpop.f32.mrf.mxu0
  %v602 = vpop.f32.mrf.mxu0
  %v603 = vadd.f32 0.0, %v602
  %v604 = vpop.f32.mrf.mxu0
  %605 = vmatprep.mubr.bf16.mxu0 0
  %606 = vmatmul.mubr.bf16.gmra.mxu0 %v364
  %v607 = vpop.f32.mrf.mxu0
  %v608 = vadd.f32 0.0, %v607
  %v609 = vpop.f32.mrf.mxu0
  %v610 = vpop.f32.mrf.mxu0
  %v611 = vadd.f32 0.0, %v610
  %v612 = vpop.f32.mrf.mxu0
  %613 = vmatprep.mubr.bf16.mxu0 0
  %614 = vmatmul.mubr.bf16.gmra.mxu0 %v367
  %v615 = vpop.f32.mrf.mxu0
  %v616 = vadd.f32 0.0, %v615
  %v617 = vpop.f32.mrf.mxu0
  %v618 = vpop.f32.mrf.mxu0
  %v619 = vadd.f32 0.0, %v618
  %v620 = vpop.f32.mrf.mxu0
  %621 = vmatprep.mubr.bf16.mxu0 0
  %622 = vmatmul.mubr.bf16.gmra.mxu0 %v370
  %v623 = vpop.f32.mrf.mxu0
  %v624 = vadd.f32 0.0, %v623
  %v625 = vpop.f32.mrf.mxu0
  %v626 = vpop.f32.mrf.mxu0
  %v627 = vadd.f32 0.0, %v626
  %v628 = vpop.f32.mrf.mxu0
  %629 = vmatprep.mubr.bf16.mxu0 0
  %630 = vmatmul.mubr.bf16.gmra.mxu0 %v373
  %v631 = vpop.f32.mrf.mxu0
  %v632 = vadd.f32 0.0, %v631
  %v633 = vpop.f32.mrf.mxu0
  %v634 = vpop.f32.mrf.mxu0
  %v635 = vadd.f32 0.0, %v634
  %v636 = vpop.f32.mrf.mxu0
  %637 = vmatprep.mubr.bf16.mxu0 0
  %638 = vmatmul.mubr.bf16.gmra.mxu0 %v376
  %v639 = vpop.f32.mrf.mxu0
  %v640 = vadd.f32 0.0, %v639
  %v641 = vpop.f32.mrf.mxu0
  %v642 = vpop.f32.mrf.mxu0
  %v643 = vadd.f32 0.0, %v642
  %v644 = vpop.f32.mrf.mxu0
  %645 = vmatprep.mubr.bf16.mxu0 0
  %646 = vmatmul.mubr.bf16.gmra.mxu0 %v379
  %v647 = vpop.f32.mrf.mxu0
  %v648 = vadd.f32 0.0, %v647
  %v649 = vpop.f32.mrf.mxu0
  %v650 = vpop.f32.mrf.mxu0
  %v651 = vadd.f32 0.0, %v650
  %v652 = vpop.f32.mrf.mxu0
  %653 = vmatprep.mubr.bf16.mxu0 0
  %654 = vmatmul.mubr.bf16.gmra.mxu0 %v382
  %v655 = vpop.f32.mrf.mxu0
  %v656 = vadd.f32 0.0, %v655
  %v657 = vpop.f32.mrf.mxu0
  %v658 = vpop.f32.mrf.mxu0
  %v659 = vadd.f32 0.0, %v658
  %v660 = vpop.f32.mrf.mxu0
  %661 = vmatprep.mubr.bf16.mxu0 0
  %662 = vmatmul.mubr.bf16.gmra.mxu0 %v385
  %v663 = vpop.f32.mrf.mxu0
  %v664 = vadd.f32 0.0, %v663
  %v665 = vpop.f32.mrf.mxu0
  %v666 = vpop.f32.mrf.mxu0
  %v667 = vadd.f32 0.0, %v666
  %v668 = vpop.f32.mrf.mxu0
  %669 = vmatprep.mubr.bf16.mxu0 0
  %670 = vmatmul.mubr.bf16.gmra.mxu0 %v388
  %v671 = vpop.f32.mrf.mxu0
  %v672 = vadd.f32 0.0, %v671
  %v673 = vpop.f32.mrf.mxu0
  %v674 = vpop.f32.mrf.mxu0
  %v675 = vadd.f32 0.0, %v674
  %v676 = vpop.f32.mrf.mxu0
  %677 = vmatprep.mubr.bf16.mxu0 0
  %678 = vmatmul.mubr.bf16.gmra.mxu0 %v391
  %v679 = vpop.f32.mrf.mxu0
  %v680 = vadd.f32 0.0, %v679
  %v681 = vpop.f32.mrf.mxu0
  %v682 = vpop.f32.mrf.mxu0
  %v683 = vadd.f32 0.0, %v682
  %v684 = vpop.f32.mrf.mxu0
  %685 = vmatprep.mubr.bf16.mxu0 0
  %686 = vmatmul.mubr.bf16.gmra.mxu0 %v394
  %v687 = vpop.f32.mrf.mxu0
  %v688 = vadd.f32 0.0, %v687
  %v689 = vpop.f32.mrf.mxu0
  %v690 = vpop.f32.mrf.mxu0
  %v691 = vadd.f32 0.0, %v690
  %v692 = vpop.f32.mrf.mxu0
  %693 = vmatprep.mubr.bf16.mxu0 0
  %694 = vmatmul.mubr.bf16.gmra.mxu0 %v397
  %v695 = vpop.f32.mrf.mxu0
  %v696 = vadd.f32 0.0, %v695
  %v697 = vpop.f32.mrf.mxu0
  %v698 = vpop.f32.mrf.mxu0
  %v699 = vadd.f32 0.0, %v698
  %v700 = vpop.f32.mrf.mxu0
  %701 = vmatprep.mubr.bf16.mxu0 0
  %702 = vmatmul.mubr.bf16.gmra.mxu0 %v400
  %v703 = vpop.f32.mrf.mxu0
  %v704 = vadd.f32 0.0, %v703
  %v705 = vpop.f32.mrf.mxu0
  %v706 = vpop.f32.mrf.mxu0
  %v707 = vadd.f32 0.0, %v706
  %v708 = vpop.f32.mrf.mxu0
  %709 = vmatprep.mubr.bf16.mxu0 0
  %710 = vmatmul.mubr.bf16.gmra.mxu0 %v403
  %v711 = vpop.f32.mrf.mxu0
  %v712 = vadd.f32 0.0, %v711
  %v713 = vpop.f32.mrf.mxu0
  %v714 = vpop.f32.mrf.mxu0
  %v715 = vadd.f32 0.0, %v714
  %v716 = vpop.f32.mrf.mxu0
  %717 = vmatprep.mubr.bf16.mxu0 0
  %718 = vmatmul.mubr.bf16.gmra.mxu0 %v406
  %v719 = vpop.f32.mrf.mxu0
  %v720 = vadd.f32 0.0, %v719
  %v721 = vpop.f32.mrf.mxu0
  %v722 = vpop.f32.mrf.mxu0
  %v723 = vadd.f32 0.0, %v722
  %v724 = vpop.f32.mrf.mxu0
  %725 = vmatprep.mubr.bf16.mxu0 0
  %726 = vmatmul.mubr.bf16.gmra.mxu0 %v409
  %v727 = vpop.f32.mrf.mxu0
  %v728 = vadd.f32 0.0, %v727
  %v729 = vpop.f32.mrf.mxu0
  %v730 = vpop.f32.mrf.mxu0
  %v731 = vadd.f32 0.0, %v730
  %v732 = vpop.f32.mrf.mxu0
  %733 = vmatprep.mubr.bf16.mxu0 0
  %734 = vmatmul.mubr.bf16.gmra.mxu0 %v412
  %v735 = vpop.f32.mrf.mxu0
  %v736 = vadd.f32 0.0, %v735
  %v737 = vpop.f32.mrf.mxu0
  %v738 = vpop.f32.mrf.mxu0
  %v739 = vadd.f32 0.0, %v738
  %v740 = vpop.f32.mrf.mxu0
  %741 = vmatprep.mubr.bf16.mxu0 0
  %742 = vmatmul.mubr.bf16.gmra.mxu0 %v415
  %v743 = vpop.f32.mrf.mxu0
  %v744 = vadd.f32 0.0, %v743
  %v745 = vpop.f32.mrf.mxu0
  %v746 = vpop.f32.mrf.mxu0
  %v747 = vadd.f32 0.0, %v746
  %v748 = vpop.f32.mrf.mxu0
  %749 = vmatprep.mubr.bf16.mxu0 0
  %750 = vmatmul.mubr.bf16.gmra.mxu0 %v418
  %v751 = vpop.f32.mrf.mxu0
  %v752 = vadd.f32 0.0, %v751
  %v753 = vpop.f32.mrf.mxu0
  %v754 = vpop.f32.mrf.mxu0
  %v755 = vadd.f32 0.0, %v754
  %v756 = vpop.f32.mrf.mxu0
  %757 = vmatprep.mubr.bf16.mxu0 0
  %758 = vmatmul.mubr.bf16.gmra.mxu0 %v421
  %v759 = vpop.f32.mrf.mxu0
  %v760 = vadd.f32 0.0, %v759
  %v761 = vpop.f32.mrf.mxu0
  %v762 = vpop.f32.mrf.mxu0
  %v763 = vadd.f32 0.0, %v762
  %v764 = vpop.f32.mrf.mxu0
  %765 = vmatprep.mubr.bf16.mxu0 0
  %766 = vmatmul.mubr.bf16.gmra.mxu0 %v424
  %v767 = vpop.f32.mrf.mxu0
  %v768 = vadd.f32 0.0, %v767
  %v769 = vpop.f32.mrf.mxu0
  %v770 = vpop.f32.mrf.mxu0
  %v771 = vadd.f32 0.0, %v770
  %v772 = vpop.f32.mrf.mxu0
  %773 = vmatprep.mubr.bf16.mxu0 0
  %774 = vmatmul.mubr.bf16.gmra.mxu0 %v427
  %v775 = vpop.f32.mrf.mxu0
  %v776 = vadd.f32 0.0, %v775
  %v777 = vpop.f32.mrf.mxu0
  %v778 = vpop.f32.mrf.mxu0
  %v779 = vadd.f32 0.0, %v778
  %v780 = vpop.f32.mrf.mxu0
  %781 = vmatprep.mubr.bf16.mxu0 0
  %782 = vmatmul.mubr.bf16.gmra.mxu0 %v430
  %v783 = vpop.f32.mrf.mxu0
  %v784 = vadd.f32 0.0, %v783
  %v785 = vpop.f32.mrf.mxu0
  %v786 = vpop.f32.mrf.mxu0
  %v787 = vadd.f32 0.0, %v786
  %v788 = vpop.f32.mrf.mxu0
  %789 = vmatprep.mubr.bf16.mxu0 0
  %790 = vmatmul.mubr.bf16.gmra.mxu0 %v433
  %v791 = vpop.f32.mrf.mxu0
  %v792 = vadd.f32 0.0, %v791
  %v793 = vpop.f32.mrf.mxu0
  %v794 = vpop.f32.mrf.mxu0
  %v795 = vadd.f32 0.0, %v794
  %v796 = vpop.f32.mrf.mxu0
  %797 = vmatprep.mubr.bf16.mxu0 0
  %798 = vmatmul.mubr.bf16.gmra.mxu0 %v436
  %v799 = vpop.f32.mrf.mxu0
  %v800 = vadd.f32 0.0, %v799
  %v801 = vpop.f32.mrf.mxu0
  %v802 = vpop.f32.mrf.mxu0
  %v803 = vpop.f32.mrf.mxu0
  %804 = vdwg.mxu0
  %s805 = scalar_lea.vmem %s0, 324
  %v806 = vld [vmem:[%s805] sm:$0xf]
  %v807 = vld [vmem:[%s805 + $0x4] sm:$0xf]
  %v808 = vld [vmem:[%s805 + $0x8] sm:$0xf]
  %v809 = vld [vmem:[%s805 + $0xc] sm:$0xf]
  %v810 = vld [vmem:[%s805 + $0x10] sm:$0xf]
  %v811 = vld [vmem:[%s805 + $0x14] sm:$0xf]
  %v812 = vld [vmem:[%s805 + $0x18] sm:$0xf]
  %v813 = vld [vmem:[%s805 + $0x1c] sm:$0xf]
  %v814 = vld [vmem:[%s805 + $0x20] sm:$0xf]
  %v815 = vld [vmem:[%s805 + $0x24] sm:$0xf]
  %v816 = vld [vmem:[%s805 + $0x28] sm:$0xf]
  %v817 = vld [vmem:[%s805 + $0x2c] sm:$0xf]
  %v818 = vld [vmem:[%s805 + $0x30] sm:$0xf]
  %v819 = vld [vmem:[%s805 + $0x34] sm:$0xf]
  %v820 = vld [vmem:[%s805 + $0x38] sm:$0xf]
  %v821 = vld [vmem:[%s805 + $0x3c] sm:$0xf]
  %v822 = vld [vmem:[%s805 + $0x40] sm:$0xf]
  %v823 = vld [vmem:[%s805 + $0x44] sm:$0xf]
  %v824 = vld [vmem:[%s805 + $0x48] sm:$0xf]
  %v825 = vld [vmem:[%s805 + $0x4c] sm:$0xf]
  %v826 = vld [vmem:[%s805 + $0x50] sm:$0xf]
  %v827 = vld [vmem:[%s805 + $0x54] sm:$0xf]
  %v828 = vld [vmem:[%s805 + $0x58] sm:$0xf]
  %v829 = vld [vmem:[%s805 + $0x5c] sm:$0xf]
  %v830 = vld [vmem:[%s805 + $0x60] sm:$0xf]
  %v831 = vld [vmem:[%s805 + $0x64] sm:$0xf]
  %v832 = vld [vmem:[%s805 + $0x68] sm:$0xf]
  %v833 = vld [vmem:[%s805 + $0x6c] sm:$0xf]
  %v834 = vld [vmem:[%s805 + $0x70] sm:$0xf]
  %v835 = vld [vmem:[%s805 + $0x74] sm:$0xf]
  %v836 = vld [vmem:[%s805 + $0x78] sm:$0xf]
  %v837 = vld [vmem:[%s805 + $0x7c] sm:$0xf]
  %v838 = vld [vmem:[%s805 + $0x80] sm:$0xf]
  %v839 = vld [vmem:[%s805 + $0x84] sm:$0xf]
  %v840 = vld [vmem:[%s805 + $0x88] sm:$0xf]
  %v841 = vld [vmem:[%s805 + $0x8c] sm:$0xf]
  %v842 = vld [vmem:[%s805 + $0x90] sm:$0xf]
  %v843 = vld [vmem:[%s805 + $0x94] sm:$0xf]
  %v844 = vld [vmem:[%s805 + $0x98] sm:$0xf]
  %v845 = vld [vmem:[%s805 + $0x9c] sm:$0xf]
  %v846 = vld [vmem:[%s805 + $0xa0] sm:$0xf]
  %v847 = vld [vmem:[%s805 + $0xa4] sm:$0xf]
  %v848 = vld [vmem:[%s805 + $0xa8] sm:$0xf]
  %v849 = vld [vmem:[%s805 + $0xac] sm:$0xf]
  %v850 = vld [vmem:[%s805 + $0xb0] sm:$0xf]
  %v851 = vld [vmem:[%s805 + $0xb4] sm:$0xf]
  %v852 = vld [vmem:[%s805 + $0xb8] sm:$0xf]
  %v853 = vld [vmem:[%s805 + $0xbc] sm:$0xf]
  %v854 = vld [vmem:[%s805 + $0xc0] sm:$0xf]
  %v855 = vld [vmem:[%s805 + $0xc4] sm:$0xf]
  %v856 = vld [vmem:[%s805 + $0xc8] sm:$0xf]
  %v857 = vld [vmem:[%s805 + $0xcc] sm:$0xf]
  %v858 = vld [vmem:[%s805 + $0xd0] sm:$0xf]
  %v859 = vld [vmem:[%s805 + $0xd4] sm:$0xf]
  %v860 = vld [vmem:[%s805 + $0xd8] sm:$0xf]
  %v861 = vld [vmem:[%s805 + $0xdc] sm:$0xf]
  %v862 = vld [vmem:[%s805 + $0xe0] sm:$0xf]
  %v863 = vld [vmem:[%s805 + $0xe4] sm:$0xf]
  %v864 = vld [vmem:[%s805 + $0xe8] sm:$0xf]
  %v865 = vld [vmem:[%s805 + $0xec] sm:$0xf]
  %v866 = vld [vmem:[%s805 + $0xf0] sm:$0xf]
  %v867 = vld [vmem:[%s805 + $0xf4] sm:$0xf]
  %v868 = vld [vmem:[%s805 + $0xf8] sm:$0xf]
  %v869 = vld [vmem:[%s805 + $0xfc] sm:$0xf]
  %v870 = vld [vmem:[%s805 + $0x100] sm:$0xf]
  %v871 = vld [vmem:[%s805 + $0x104] sm:$0xf]
  %v872 = vld [vmem:[%s805 + $0x108] sm:$0xf]
  %v873 = vld [vmem:[%s805 + $0x10c] sm:$0xf]
  %v874 = vld [vmem:[%s805 + $0x110] sm:$0xf]
  %v875 = vld [vmem:[%s805 + $0x114] sm:$0xf]
  %v876 = vld [vmem:[%s805 + $0x118] sm:$0xf]
  %v877 = vld [vmem:[%s805 + $0x11c] sm:$0xf]
  %v878 = vld [vmem:[%s805 + $0x120] sm:$0xf]
  %v879 = vld [vmem:[%s805 + $0x124] sm:$0xf]
  %v880 = vld [vmem:[%s805 + $0x128] sm:$0xf]
  %v881 = vld [vmem:[%s805 + $0x12c] sm:$0xf]
  %v882 = vld [vmem:[%s805 + $0x130] sm:$0xf]
  %v883 = vld [vmem:[%s805 + $0x134] sm:$0xf]
  %v884 = vld [vmem:[%s805 + $0x138] sm:$0xf]
  %v885 = vld [vmem:[%s805 + $0x13c] sm:$0xf]
  %v886 = vld [vmem:[%s805 + $0x140] sm:$0xf]
  %v968 = vunpack.c.l.b16 %v806
  %v969 = vunpack.c.l.b16 %v807
  %v970 = vunpack.c.l.b16 %v808
  %v971 = vunpack.c.l.b16 %v809
  %v972 = vunpack.c.l.b16 %v810
  %v973 = vunpack.c.l.b16 %v811
  %v974 = vunpack.c.l.b16 %v812
  %v975 = vunpack.c.l.b16 %v813
  %v976 = vunpack.c.l.b16 %v814
  %v977 = vunpack.c.l.b16 %v815
  %v978 = vunpack.c.l.b16 %v816
  %v979 = vunpack.c.l.b16 %v817
  %v980 = vunpack.c.l.b16 %v818
  %v981 = vunpack.c.l.b16 %v819
  %v982 = vunpack.c.l.b16 %v820
  %v983 = vunpack.c.l.b16 %v821
  %v984 = vunpack.c.l.b16 %v822
  %v985 = vunpack.c.l.b16 %v823
  %v986 = vunpack.c.l.b16 %v824
  %v987 = vunpack.c.l.b16 %v825
  %v988 = vunpack.c.l.b16 %v826
  %v989 = vunpack.c.l.b16 %v827
  %v990 = vunpack.c.l.b16 %v828
  %v991 = vunpack.c.l.b16 %v829
  %v992 = vunpack.c.l.b16 %v830
  %v993 = vunpack.c.l.b16 %v831
  %v994 = vunpack.c.l.b16 %v832
  %v995 = vunpack.c.l.b16 %v833
  %v996 = vunpack.c.l.b16 %v834
  %v997 = vunpack.c.l.b16 %v835
  %v998 = vunpack.c.l.b16 %v836
  %v999 = vunpack.c.l.b16 %v837
  %v1000 = vunpack.c.l.b16 %v838
  %v1001 = vunpack.c.l.b16 %v839
  %v1002 = vunpack.c.l.b16 %v840
  %v1003 = vunpack.c.l.b16 %v841
  %v1004 = vunpack.c.l.b16 %v842
  %v1005 = vunpack.c.l.b16 %v843
  %v1006 = vunpack.c.l.b16 %v844
  %v1007 = vunpack.c.l.b16 %v845
  %v1008 = vunpack.c.l.b16 %v846
  %v1009 = vunpack.c.l.b16 %v847
  %v1010 = vunpack.c.l.b16 %v848
  %v1011 = vunpack.c.l.b16 %v849
  %v1012 = vunpack.c.l.b16 %v850
  %v1013 = vunpack.c.l.b16 %v851
  %v1014 = vunpack.c.l.b16 %v852
  %v1015 = vunpack.c.l.b16 %v853
  %v1016 = vunpack.c.l.b16 %v854
  %v1017 = vunpack.c.l.b16 %v855
  %v1018 = vunpack.c.l.b16 %v856
  %v1019 = vunpack.c.l.b16 %v857
  %v1020 = vunpack.c.l.b16 %v858
  %v1021 = vunpack.c.l.b16 %v859
  %v1022 = vunpack.c.l.b16 %v860
  %v1023 = vunpack.c.l.b16 %v861
  %v1024 = vunpack.c.l.b16 %v862
  %v1025 = vunpack.c.l.b16 %v863
  %v1026 = vunpack.c.l.b16 %v864
  %v1027 = vunpack.c.l.b16 %v865
  %v1028 = vunpack.c.l.b16 %v866
  %v1029 = vunpack.c.l.b16 %v867
  %v1030 = vunpack.c.l.b16 %v868
  %v1031 = vunpack.c.l.b16 %v869
  %v1032 = vunpack.c.l.b16 %v870
  %v1033 = vunpack.c.l.b16 %v871
  %v1034 = vunpack.c.l.b16 %v872
  %v1035 = vunpack.c.l.b16 %v873
  %v1036 = vunpack.c.l.b16 %v874
  %v1037 = vunpack.c.l.b16 %v875
  %v1038 = vunpack.c.l.b16 %v876
  %v1039 = vunpack.c.l.b16 %v877
  %v1040 = vunpack.c.l.b16 %v878
  %v1041 = vunpack.c.l.b16 %v879
  %v1042 = vunpack.c.l.b16 %v880
  %v1043 = vunpack.c.l.b16 %v881
  %v1044 = vunpack.c.l.b16 %v882
  %v1045 = vunpack.c.l.b16 %v883
  %v1046 = vunpack.c.l.b16 %v884
  %v1047 = vunpack.c.l.b16 %v885
  %v1048 = vunpack.c.l.b16 %v886
  %v1049 = vpack.c.b16 %v969, %v968
  %v1050 = vpack.c.b16 %v971, %v970
  %v1051 = vpack.c.b16 %v973, %v972
  %v1052 = vpack.c.b16 %v975, %v974
  %v1053 = vpack.c.b16 %v977, %v976
  %v1054 = vpack.c.b16 %v979, %v978
  %v1055 = vpack.c.b16 %v981, %v980
  %v1056 = vpack.c.b16 %v983, %v982
  %v1057 = vpack.c.b16 %v985, %v984
  %v1058 = vpack.c.b16 %v987, %v986
  %v1059 = vpack.c.b16 %v989, %v988
  %v1060 = vpack.c.b16 %v991, %v990
  %v1061 = vpack.c.b16 %v993, %v992
  %v1062 = vpack.c.b16 %v995, %v994
  %v1063 = vpack.c.b16 %v997, %v996
  %v1064 = vpack.c.b16 %v999, %v998
  %v1065 = vpack.c.b16 %v1001, %v1000
  %v1066 = vpack.c.b16 %v1003, %v1002
  %v1067 = vpack.c.b16 %v1005, %v1004
  %v1068 = vpack.c.b16 %v1007, %v1006
  %v1069 = vpack.c.b16 %v1009, %v1008
  %v1070 = vpack.c.b16 %v1011, %v1010
  %v1071 = vpack.c.b16 %v1013, %v1012
  %v1072 = vpack.c.b16 %v1015, %v1014
  %v1073 = vpack.c.b16 %v1017, %v1016
  %v1074 = vpack.c.b16 %v1019, %v1018
  %v1075 = vpack.c.b16 %v1021, %v1020
  %v1076 = vpack.c.b16 %v1023, %v1022
  %v1077 = vpack.c.b16 %v1025, %v1024
  %v1078 = vpack.c.b16 %v1027, %v1026
  %v1079 = vpack.c.b16 %v1029, %v1028
  %v1080 = vpack.c.b16 %v1031, %v1030
  %v1081 = vpack.c.b16 %v1033, %v1032
  %v1082 = vpack.c.b16 %v1035, %v1034
  %v1083 = vpack.c.b16 %v1037, %v1036
  %v1084 = vpack.c.b16 %v1039, %v1038
  %v1085 = vpack.c.b16 %v1041, %v1040
  %v1086 = vpack.c.b16 %v1043, %v1042
  %v1087 = vpack.c.b16 %v1045, %v1044
  %v1088 = vpack.c.b16 %v1047, %v1046
  %v1089 = vpack.c.b16 %v1048, %v1048
  %v1091 = vsel %vm314, %v1049, 0
  %v1094 = vsel %vm314, %v1050, 0
  %v1097 = vsel %vm314, %v1051, 0
  %v1100 = vsel %vm314, %v1052, 0
  %v1103 = vsel %vm314, %v1053, 0
  %v1106 = vsel %vm314, %v1054, 0
  %v1109 = vsel %vm314, %v1055, 0
  %v1112 = vsel %vm314, %v1056, 0
  %v1115 = vsel %vm314, %v1057, 0
  %v1118 = vsel %vm314, %v1058, 0
  %v1121 = vsel %vm314, %v1059, 0
  %v1124 = vsel %vm314, %v1060, 0
  %v1127 = vsel %vm314, %v1061, 0
  %v1130 = vsel %vm314, %v1062, 0
  %v1133 = vsel %vm314, %v1063, 0
  %v1136 = vsel %vm314, %v1064, 0
  %v1139 = vsel %vm314, %v1065, 0
  %v1142 = vsel %vm314, %v1066, 0
  %v1145 = vsel %vm314, %v1067, 0
  %v1148 = vsel %vm314, %v1068, 0
  %v1151 = vsel %vm314, %v1069, 0
  %v1154 = vsel %vm314, %v1070, 0
  %v1157 = vsel %vm314, %v1071, 0
  %v1160 = vsel %vm314, %v1072, 0
  %v1163 = vsel %vm314, %v1073, 0
  %v1166 = vsel %vm314, %v1074, 0
  %v1169 = vsel %vm314, %v1075, 0
  %v1172 = vsel %vm314, %v1076, 0
  %v1175 = vsel %vm314, %v1077, 0
  %v1178 = vsel %vm314, %v1078, 0
  %v1181 = vsel %vm314, %v1079, 0
  %v1184 = vsel %vm314, %v1080, 0
  %v1187 = vsel %vm314, %v1081, 0
  %v1190 = vsel %vm314, %v1082, 0
  %v1193 = vsel %vm314, %v1083, 0
  %v1196 = vsel %vm314, %v1084, 0
  %v1199 = vsel %vm314, %v1085, 0
  %v1202 = vsel %vm314, %v1086, 0
  %v1205 = vsel %vm314, %v1087, 0
  %v1208 = vsel %vm314, %v1088, 0
  %v1211 = vsel %vm314, %v1089, 0
  %1213 = vmatprep.subr.bf16.mxu0 0
  %1214 = vmatpush1.bf16.msra.mxu0 0
  %1215 = vmatprep.subr.bf16.mxu0 0
  %1216 = vmatpush1.bf16.msra.mxu0 0
  %1217 = vmatprep.subr.bf16.mxu0 0
  %1218 = vmatpush1.bf16.msra.mxu0 0
  %1219 = vmatprep.subr.bf16.mxu0 0
  %1220 = vmatpush1.bf16.msra.mxu0 0
  %1221 = vmatprep.subr.bf16.mxu0 0
  %1222 = vmatpush1.bf16.msra.mxu0 0
  %1223 = vmatprep.subr.bf16.mxu0 0
  %1224 = vmatpush1.bf16.msra.mxu0 0
  %1225 = vmatprep.subr.bf16.mxu0 0
  %1226 = vmatpush1.bf16.msra.mxu0 %v443
  %1227 = vmatprep.subr.bf16.mxu0 0
  %1228 = vmatpush1.bf16.msra.mxu0 %v311
  %1229 = vmatprep.subr.bf16.mxu0 0
  %1230 = vmatpush2.bf16.msra.mxu0 0
  %1231 = vmatprep.subr.bf16.mxu0 0
  %1232 = vmatpush2.bf16.msra.mxu0 0
  %1233 = vmatprep.subr.bf16.mxu0 0
  %1234 = vmatpush2.bf16.msra.mxu0 0
  %1235 = vmatprep.subr.bf16.mxu0 0
  %1236 = vmatpush2.bf16.msra.mxu0 0
  %1237 = vmatprep.subr.bf16.mxu0 0
  %1238 = vmatpush2.bf16.msra.mxu0 0
  %1239 = vmatprep.subr.bf16.mxu0 0
  %1240 = vmatpush2.bf16.msra.mxu0 0
  %1241 = vmatprep.subr.bf16.mxu0 0
  %1242 = vmatpush2.bf16.msra.mxu0 0
  %1243 = vmatprep.subr.bf16.mxu0 0
  %1244 = vmatpush2.bf16.msra.mxu0 0
  %1245 = vmatprep.mubr.bf16.mxu0 0
  %1246 = vmatmul.mubr.bf16.gmra.mxu0 %v1091
  %v1247 = vpop.f32.mrf.mxu0
  %v1248 = vadd.f32 0.0, %v1247
  %v1249 = vpop.f32.mrf.mxu0
  %v1250 = vpop.f32.mrf.mxu0
  %v1251 = vadd.f32 0.0, %v1250
  %v1252 = vpop.f32.mrf.mxu0
  %1253 = vmatprep.mubr.bf16.mxu0 0
  %1254 = vmatmul.mubr.bf16.gmra.mxu0 %v1094
  %v1255 = vpop.f32.mrf.mxu0
  %v1256 = vadd.f32 0.0, %v1255
  %v1257 = vpop.f32.mrf.mxu0
  %v1258 = vpop.f32.mrf.mxu0
  %v1259 = vadd.f32 0.0, %v1258
  %v1260 = vpop.f32.mrf.mxu0
  %1261 = vmatprep.mubr.bf16.mxu0 0
  %1262 = vmatmul.mubr.bf16.gmra.mxu0 %v1097
  %v1263 = vpop.f32.mrf.mxu0
  %v1264 = vadd.f32 0.0, %v1263
  %v1265 = vpop.f32.mrf.mxu0
  %v1266 = vpop.f32.mrf.mxu0
  %v1267 = vadd.f32 0.0, %v1266
  %v1268 = vpop.f32.mrf.mxu0
  %1269 = vmatprep.mubr.bf16.mxu0 0
  %1270 = vmatmul.mubr.bf16.gmra.mxu0 %v1100
  %v1271 = vpop.f32.mrf.mxu0
  %v1272 = vadd.f32 0.0, %v1271
  %v1273 = vpop.f32.mrf.mxu0
  %v1274 = vpop.f32.mrf.mxu0
  %v1275 = vadd.f32 0.0, %v1274
  %v1276 = vpop.f32.mrf.mxu0
  %1277 = vmatprep.mubr.bf16.mxu0 0
  %1278 = vmatmul.mubr.bf16.gmra.mxu0 %v1103
  %v1279 = vpop.f32.mrf.mxu0
  %v1280 = vadd.f32 0.0, %v1279
  %v1281 = vpop.f32.mrf.mxu0
  %v1282 = vpop.f32.mrf.mxu0
  %v1283 = vadd.f32 0.0, %v1282
  %v1284 = vpop.f32.mrf.mxu0
  %1285 = vmatprep.mubr.bf16.mxu0 0
  %1286 = vmatmul.mubr.bf16.gmra.mxu0 %v1106
  %v1287 = vpop.f32.mrf.mxu0
  %v1288 = vadd.f32 0.0, %v1287
  %v1289 = vpop.f32.mrf.mxu0
  %v1290 = vpop.f32.mrf.mxu0
  %v1291 = vadd.f32 0.0, %v1290
  %v1292 = vpop.f32.mrf.mxu0
  %1293 = vmatprep.mubr.bf16.mxu0 0
  %1294 = vmatmul.mubr.bf16.gmra.mxu0 %v1109
  %v1295 = vpop.f32.mrf.mxu0
  %v1296 = vadd.f32 0.0, %v1295
  %v1297 = vpop.f32.mrf.mxu0
  %v1298 = vpop.f32.mrf.mxu0
  %v1299 = vadd.f32 0.0, %v1298
  %v1300 = vpop.f32.mrf.mxu0
  %1301 = vmatprep.mubr.bf16.mxu0 0
  %1302 = vmatmul.mubr.bf16.gmra.mxu0 %v1112
  %v1303 = vpop.f32.mrf.mxu0
  %v1304 = vadd.f32 0.0, %v1303
  %v1305 = vpop.f32.mrf.mxu0
  %v1306 = vpop.f32.mrf.mxu0
  %v1307 = vadd.f32 0.0, %v1306
  %v1308 = vpop.f32.mrf.mxu0
  %1309 = vmatprep.mubr.bf16.mxu0 0
  %1310 = vmatmul.mubr.bf16.gmra.mxu0 %v1115
  %v1311 = vpop.f32.mrf.mxu0
  %v1312 = vadd.f32 0.0, %v1311
  %v1313 = vpop.f32.mrf.mxu0
  %v1314 = vpop.f32.mrf.mxu0
  %v1315 = vadd.f32 0.0, %v1314
  %v1316 = vpop.f32.mrf.mxu0
  %1317 = vmatprep.mubr.bf16.mxu0 0
  %1318 = vmatmul.mubr.bf16.gmra.mxu0 %v1118
  %v1319 = vpop.f32.mrf.mxu0
  %v1320 = vadd.f32 0.0, %v1319
  %v1321 = vpop.f32.mrf.mxu0
  %v1322 = vpop.f32.mrf.mxu0
  %v1323 = vadd.f32 0.0, %v1322
  %v1324 = vpop.f32.mrf.mxu0
  %1325 = vmatprep.mubr.bf16.mxu0 0
  %1326 = vmatmul.mubr.bf16.gmra.mxu0 %v1121
  %v1327 = vpop.f32.mrf.mxu0
  %v1328 = vadd.f32 0.0, %v1327
  %v1329 = vpop.f32.mrf.mxu0
  %v1330 = vpop.f32.mrf.mxu0
  %v1331 = vadd.f32 0.0, %v1330
  %v1332 = vpop.f32.mrf.mxu0
  %1333 = vmatprep.mubr.bf16.mxu0 0
  %1334 = vmatmul.mubr.bf16.gmra.mxu0 %v1124
  %v1335 = vpop.f32.mrf.mxu0
  %v1336 = vadd.f32 0.0, %v1335
  %v1337 = vpop.f32.mrf.mxu0
  %v1338 = vpop.f32.mrf.mxu0
  %v1339 = vadd.f32 0.0, %v1338
  %v1340 = vpop.f32.mrf.mxu0
  %1341 = vmatprep.mubr.bf16.mxu0 0
  %1342 = vmatmul.mubr.bf16.gmra.mxu0 %v1127
  %v1343 = vpop.f32.mrf.mxu0
  %v1344 = vadd.f32 0.0, %v1343
  %v1345 = vpop.f32.mrf.mxu0
  %v1346 = vpop.f32.mrf.mxu0
  %v1347 = vadd.f32 0.0, %v1346
  %v1348 = vpop.f32.mrf.mxu0
  %1349 = vmatprep.mubr.bf16.mxu0 0
  %1350 = vmatmul.mubr.bf16.gmra.mxu0 %v1130
  %v1351 = vpop.f32.mrf.mxu0
  %v1352 = vadd.f32 0.0, %v1351
  %v1353 = vpop.f32.mrf.mxu0
  %v1354 = vpop.f32.mrf.mxu0
  %v1355 = vadd.f32 0.0, %v1354
  %v1356 = vpop.f32.mrf.mxu0
  %1357 = vmatprep.mubr.bf16.mxu0 0
  %1358 = vmatmul.mubr.bf16.gmra.mxu0 %v1133
  %v1359 = vpop.f32.mrf.mxu0
  %v1360 = vadd.f32 0.0, %v1359
  %v1361 = vpop.f32.mrf.mxu0
  %v1362 = vpop.f32.mrf.mxu0
  %v1363 = vadd.f32 0.0, %v1362
  %v1364 = vpop.f32.mrf.mxu0
  %1365 = vmatprep.mubr.bf16.mxu0 0
  %1366 = vmatmul.mubr.bf16.gmra.mxu0 %v1136
  %v1367 = vpop.f32.mrf.mxu0
  %v1368 = vadd.f32 0.0, %v1367
  %v1369 = vpop.f32.mrf.mxu0
  %v1370 = vpop.f32.mrf.mxu0
  %v1371 = vadd.f32 0.0, %v1370
  %v1372 = vpop.f32.mrf.mxu0
  %1373 = vmatprep.mubr.bf16.mxu0 0
  %1374 = vmatmul.mubr.bf16.gmra.mxu0 %v1139
  %v1375 = vpop.f32.mrf.mxu0
  %v1376 = vadd.f32 0.0, %v1375
  %v1377 = vpop.f32.mrf.mxu0
  %v1378 = vpop.f32.mrf.mxu0
  %v1379 = vadd.f32 0.0, %v1378
  %v1380 = vpop.f32.mrf.mxu0
  %1381 = vmatprep.mubr.bf16.mxu0 0
  %1382 = vmatmul.mubr.bf16.gmra.mxu0 %v1142
  %v1383 = vpop.f32.mrf.mxu0
  %v1384 = vadd.f32 0.0, %v1383
  %v1385 = vpop.f32.mrf.mxu0
  %v1386 = vpop.f32.mrf.mxu0
  %v1387 = vadd.f32 0.0, %v1386
  %v1388 = vpop.f32.mrf.mxu0
  %1389 = vmatprep.mubr.bf16.mxu0 0
  %1390 = vmatmul.mubr.bf16.gmra.mxu0 %v1145
  %v1391 = vpop.f32.mrf.mxu0
  %v1392 = vadd.f32 0.0, %v1391
  %v1393 = vpop.f32.mrf.mxu0
  %v1394 = vpop.f32.mrf.mxu0
  %v1395 = vadd.f32 0.0, %v1394
  %v1396 = vpop.f32.mrf.mxu0
  %1397 = vmatprep.mubr.bf16.mxu0 0
  %1398 = vmatmul.mubr.bf16.gmra.mxu0 %v1148
  %v1399 = vpop.f32.mrf.mxu0
  %v1400 = vadd.f32 0.0, %v1399
  %v1401 = vpop.f32.mrf.mxu0
  %v1402 = vpop.f32.mrf.mxu0
  %v1403 = vadd.f32 0.0, %v1402
  %v1404 = vpop.f32.mrf.mxu0
  %1405 = vmatprep.mubr.bf16.mxu0 0
  %1406 = vmatmul.mubr.bf16.gmra.mxu0 %v1151
  %v1407 = vpop.f32.mrf.mxu0
  %v1408 = vadd.f32 0.0, %v1407
  %v1409 = vpop.f32.mrf.mxu0
  %v1410 = vpop.f32.mrf.mxu0
  %v1411 = vadd.f32 0.0, %v1410
  %v1412 = vpop.f32.mrf.mxu0
  %1413 = vmatprep.mubr.bf16.mxu0 0
  %1414 = vmatmul.mubr.bf16.gmra.mxu0 %v1154
  %v1415 = vpop.f32.mrf.mxu0
  %v1416 = vadd.f32 0.0, %v1415
  %v1417 = vpop.f32.mrf.mxu0
  %v1418 = vpop.f32.mrf.mxu0
  %v1419 = vadd.f32 0.0, %v1418
  %v1420 = vpop.f32.mrf.mxu0
  %1421 = vmatprep.mubr.bf16.mxu0 0
  %1422 = vmatmul.mubr.bf16.gmra.mxu0 %v1157
  %v1423 = vpop.f32.mrf.mxu0
  %v1424 = vadd.f32 0.0, %v1423
  %v1425 = vpop.f32.mrf.mxu0
  %v1426 = vpop.f32.mrf.mxu0
  %v1427 = vadd.f32 0.0, %v1426
  %v1428 = vpop.f32.mrf.mxu0
  %1429 = vmatprep.mubr.bf16.mxu0 0
  %1430 = vmatmul.mubr.bf16.gmra.mxu0 %v1160
  %v1431 = vpop.f32.mrf.mxu0
  %v1432 = vadd.f32 0.0, %v1431
  %v1433 = vpop.f32.mrf.mxu0
  %v1434 = vpop.f32.mrf.mxu0
  %v1435 = vadd.f32 0.0, %v1434
  %v1436 = vpop.f32.mrf.mxu0
  %1437 = vmatprep.mubr.bf16.mxu0 0
  %1438 = vmatmul.mubr.bf16.gmra.mxu0 %v1163
  %v1439 = vpop.f32.mrf.mxu0
  %v1440 = vadd.f32 0.0, %v1439
  %v1441 = vpop.f32.mrf.mxu0
  %v1442 = vpop.f32.mrf.mxu0
  %v1443 = vadd.f32 0.0, %v1442
  %v1444 = vpop.f32.mrf.mxu0
  %1445 = vmatprep.mubr.bf16.mxu0 0
  %1446 = vmatmul.mubr.bf16.gmra.mxu0 %v1166
  %v1447 = vpop.f32.mrf.mxu0
  %v1448 = vadd.f32 0.0, %v1447
  %v1449 = vpop.f32.mrf.mxu0
  %v1450 = vpop.f32.mrf.mxu0
  %v1451 = vadd.f32 0.0, %v1450
  %v1452 = vpop.f32.mrf.mxu0
  %1453 = vmatprep.mubr.bf16.mxu0 0
  %1454 = vmatmul.mubr.bf16.gmra.mxu0 %v1169
  %v1455 = vpop.f32.mrf.mxu0
  %v1456 = vadd.f32 0.0, %v1455
  %v1457 = vpop.f32.mrf.mxu0
  %v1458 = vpop.f32.mrf.mxu0
  %v1459 = vadd.f32 0.0, %v1458
  %v1460 = vpop.f32.mrf.mxu0
  %1461 = vmatprep.mubr.bf16.mxu0 0
  %1462 = vmatmul.mubr.bf16.gmra.mxu0 %v1172
  %v1463 = vpop.f32.mrf.mxu0
  %v1464 = vadd.f32 0.0, %v1463
  %v1465 = vpop.f32.mrf.mxu0
  %v1466 = vpop.f32.mrf.mxu0
  %v1467 = vadd.f32 0.0, %v1466
  %v1468 = vpop.f32.mrf.mxu0
  %1469 = vmatprep.mubr.bf16.mxu0 0
  %1470 = vmatmul.mubr.bf16.gmra.mxu0 %v1175
  %v1471 = vpop.f32.mrf.mxu0
  %v1472 = vadd.f32 0.0, %v1471
  %v1473 = vpop.f32.mrf.mxu0
  %v1474 = vpop.f32.mrf.mxu0
  %v1475 = vadd.f32 0.0, %v1474
  %v1476 = vpop.f32.mrf.mxu0
  %1477 = vmatprep.mubr.bf16.mxu0 0
  %1478 = vmatmul.mubr.bf16.gmra.mxu0 %v1178
  %v1479 = vpop.f32.mrf.mxu0
  %v1480 = vadd.f32 0.0, %v1479
  %v1481 = vpop.f32.mrf.mxu0
  %v1482 = vpop.f32.mrf.mxu0
  %v1483 = vadd.f32 0.0, %v1482
  %v1484 = vpop.f32.mrf.mxu0
  %1485 = vmatprep.mubr.bf16.mxu0 0
  %1486 = vmatmul.mubr.bf16.gmra.mxu0 %v1181
  %v1487 = vpop.f32.mrf.mxu0
  %v1488 = vadd.f32 0.0, %v1487
  %v1489 = vpop.f32.mrf.mxu0
  %v1490 = vpop.f32.mrf.mxu0
  %v1491 = vadd.f32 0.0, %v1490
  %v1492 = vpop.f32.mrf.mxu0
  %1493 = vmatprep.mubr.bf16.mxu0 0
  %1494 = vmatmul.mubr.bf16.gmra.mxu0 %v1184
  %v1495 = vpop.f32.mrf.mxu0
  %v1496 = vadd.f32 0.0, %v1495
  %v1497 = vpop.f32.mrf.mxu0
  %v1498 = vpop.f32.mrf.mxu0
  %v1499 = vadd.f32 0.0, %v1498
  %v1500 = vpop.f32.mrf.mxu0
  %1501 = vmatprep.mubr.bf16.mxu0 0
  %1502 = vmatmul.mubr.bf16.gmra.mxu0 %v1187
  %v1503 = vpop.f32.mrf.mxu0
  %v1504 = vadd.f32 0.0, %v1503
  %v1505 = vpop.f32.mrf.mxu0
  %v1506 = vpop.f32.mrf.mxu0
  %v1507 = vadd.f32 0.0, %v1506
  %v1508 = vpop.f32.mrf.mxu0
  %1509 = vmatprep.mubr.bf16.mxu0 0
  %1510 = vmatmul.mubr.bf16.gmra.mxu0 %v1190
  %v1511 = vpop.f32.mrf.mxu0
  %v1512 = vadd.f32 0.0, %v1511
  %v1513 = vpop.f32.mrf.mxu0
  %v1514 = vpop.f32.mrf.mxu0
  %v1515 = vadd.f32 0.0, %v1514
  %v1516 = vpop.f32.mrf.mxu0
  %1517 = vmatprep.mubr.bf16.mxu0 0
  %1518 = vmatmul.mubr.bf16.gmra.mxu0 %v1193
  %v1519 = vpop.f32.mrf.mxu0
  %v1520 = vadd.f32 0.0, %v1519
  %v1521 = vpop.f32.mrf.mxu0
  %v1522 = vpop.f32.mrf.mxu0
  %v1523 = vadd.f32 0.0, %v1522
  %v1524 = vpop.f32.mrf.mxu0
  %1525 = vmatprep.mubr.bf16.mxu0 0
  %1526 = vmatmul.mubr.bf16.gmra.mxu0 %v1196
  %v1527 = vpop.f32.mrf.mxu0
  %v1528 = vadd.f32 0.0, %v1527
  %v1529 = vpop.f32.mrf.mxu0
  %v1530 = vpop.f32.mrf.mxu0
  %v1531 = vadd.f32 0.0, %v1530
  %v1532 = vpop.f32.mrf.mxu0
  %1533 = vmatprep.mubr.bf16.mxu0 0
  %1534 = vmatmul.mubr.bf16.gmra.mxu0 %v1199
  %v1535 = vpop.f32.mrf.mxu0
  %v1536 = vadd.f32 0.0, %v1535
  %v1537 = vpop.f32.mrf.mxu0
  %v1538 = vpop.f32.mrf.mxu0
  %v1539 = vadd.f32 0.0, %v1538
  %v1540 = vpop.f32.mrf.mxu0
  %1541 = vmatprep.mubr.bf16.mxu0 0
  %1542 = vmatmul.mubr.bf16.gmra.mxu0 %v1202
  %v1543 = vpop.f32.mrf.mxu0
  %v1544 = vadd.f32 0.0, %v1543
  %v1545 = vpop.f32.mrf.mxu0
  %v1546 = vpop.f32.mrf.mxu0
  %v1547 = vadd.f32 0.0, %v1546
  %v1548 = vpop.f32.mrf.mxu0
  %1549 = vmatprep.mubr.bf16.mxu0 0
  %1550 = vmatmul.mubr.bf16.gmra.mxu0 %v1205
  %v1551 = vpop.f32.mrf.mxu0
  %v1552 = vadd.f32 0.0, %v1551
  %v1553 = vpop.f32.mrf.mxu0
  %v1554 = vpop.f32.mrf.mxu0
  %v1555 = vadd.f32 0.0, %v1554
  %v1556 = vpop.f32.mrf.mxu0
  %1557 = vmatprep.mubr.bf16.mxu0 0
  %1558 = vmatmul.mubr.bf16.gmra.mxu0 %v1208
  %v1559 = vpop.f32.mrf.mxu0
  %v1560 = vadd.f32 0.0, %v1559
  %v1561 = vpop.f32.mrf.mxu0
  %v1562 = vpop.f32.mrf.mxu0
  %v1563 = vadd.f32 0.0, %v1562
  %v1564 = vpop.f32.mrf.mxu0
  %1565 = vmatprep.mubr.bf16.mxu0 0
  %1566 = vmatmul.mubr.bf16.gmra.mxu0 %v1211
  %v1567 = vpop.f32.mrf.mxu0
  %v1568 = vadd.f32 0.0, %v1567
  %v1569 = vpop.f32.mrf.mxu0
  %v1570 = vpop.f32.mrf.mxu0
  %v1571 = vpop.f32.mrf.mxu0
  %1572 = vdwg.mxu0
  %v1573 = vmax.f32 %v480, %v1248
  %v1574 = vmax.f32 %v483, %v1251
  %v1575 = vmax.f32 %v488, %v1256
  %v1576 = vmax.f32 %v491, %v1259
  %v1577 = vmax.f32 %v496, %v1264
  %v1578 = vmax.f32 %v499, %v1267
  %v1579 = vmax.f32 %v504, %v1272
  %v1580 = vmax.f32 %v507, %v1275
  %v1581 = vmax.f32 %v512, %v1280
  %v1582 = vmax.f32 %v515, %v1283
  %v1583 = vmax.f32 %v520, %v1288
  %v1584 = vmax.f32 %v523, %v1291
  %v1585 = vmax.f32 %v528, %v1296
  %v1586 = vmax.f32 %v531, %v1299
  %v1587 = vmax.f32 %v536, %v1304
  %v1588 = vmax.f32 %v539, %v1307
  %v1589 = vmax.f32 %v544, %v1312
  %v1590 = vmax.f32 %v547, %v1315
  %v1591 = vmax.f32 %v552, %v1320
  %v1592 = vmax.f32 %v555, %v1323
  %v1593 = vmax.f32 %v560, %v1328
  %v1594 = vmax.f32 %v563, %v1331
  %v1595 = vmax.f32 %v568, %v1336
  %v1596 = vmax.f32 %v571, %v1339
  %v1597 = vmax.f32 %v576, %v1344
  %v1598 = vmax.f32 %v579, %v1347
  %v1599 = vmax.f32 %v584, %v1352
  %v1600 = vmax.f32 %v587, %v1355
  %v1601 = vmax.f32 %v592, %v1360
  %v1602 = vmax.f32 %v595, %v1363
  %v1603 = vmax.f32 %v600, %v1368
  %v1604 = vmax.f32 %v603, %v1371
  %v1605 = vmax.f32 %v608, %v1376
  %v1606 = vmax.f32 %v611, %v1379
  %v1607 = vmax.f32 %v616, %v1384
  %v1608 = vmax.f32 %v619, %v1387
  %v1609 = vmax.f32 %v624, %v1392
  %v1610 = vmax.f32 %v627, %v1395
  %v1611 = vmax.f32 %v632, %v1400
  %v1612 = vmax.f32 %v635, %v1403
  %v1613 = vmax.f32 %v640, %v1408
  %v1614 = vmax.f32 %v643, %v1411
  %v1615 = vmax.f32 %v648, %v1416
  %v1616 = vmax.f32 %v651, %v1419
  %v1617 = vmax.f32 %v656, %v1424
  %v1618 = vmax.f32 %v659, %v1427
  %v1619 = vmax.f32 %v664, %v1432
  %v1620 = vmax.f32 %v667, %v1435
  %v1621 = vmax.f32 %v672, %v1440
  %v1622 = vmax.f32 %v675, %v1443
  %v1623 = vmax.f32 %v680, %v1448
  %v1624 = vmax.f32 %v683, %v1451
  %v1625 = vmax.f32 %v688, %v1456
  %v1626 = vmax.f32 %v691, %v1459
  %v1627 = vmax.f32 %v696, %v1464
  %v1628 = vmax.f32 %v699, %v1467
  %v1629 = vmax.f32 %v704, %v1472
  %v1630 = vmax.f32 %v707, %v1475
  %v1631 = vmax.f32 %v712, %v1480
  %v1632 = vmax.f32 %v715, %v1483
  %v1633 = vmax.f32 %v720, %v1488
  %v1634 = vmax.f32 %v723, %v1491
  %v1635 = vmax.f32 %v728, %v1496
  %v1636 = vmax.f32 %v731, %v1499
  %v1637 = vmax.f32 %v736, %v1504
  %v1638 = vmax.f32 %v739, %v1507
  %v1639 = vmax.f32 %v744, %v1512
  %v1640 = vmax.f32 %v747, %v1515
  %v1641 = vmax.f32 %v752, %v1520
  %v1642 = vmax.f32 %v755, %v1523
  %v1643 = vmax.f32 %v760, %v1528
  %v1644 = vmax.f32 %v763, %v1531
  %v1645 = vmax.f32 %v768, %v1536
  %v1646 = vmax.f32 %v771, %v1539
  %v1647 = vmax.f32 %v776, %v1544
  %v1648 = vmax.f32 %v779, %v1547
  %v1649 = vmax.f32 %v784, %v1552
  %v1650 = vmax.f32 %v787, %v1555
  %v1651 = vmax.f32 %v792, %v1560
  %v1652 = vmax.f32 %v795, %v1563
  %v1653 = vmax.f32 %v800, %v1568
  %s1654 = scalar_lea.vmem %s0, 648
  %v1655 = vld [vmem:[%s1654] sm:$0xf]
  %v1656 = vld [vmem:[%s1654 + $0x4] sm:$0xf]
  %v1657 = vld [vmem:[%s1654 + $0x8] sm:$0xf]
  %v1658 = vld [vmem:[%s1654 + $0xc] sm:$0xf]
  %v1659 = vld [vmem:[%s1654 + $0x10] sm:$0xf]
  %v1660 = vld [vmem:[%s1654 + $0x14] sm:$0xf]
  %v1661 = vld [vmem:[%s1654 + $0x18] sm:$0xf]
  %v1662 = vld [vmem:[%s1654 + $0x1c] sm:$0xf]
  %v1663 = vld [vmem:[%s1654 + $0x20] sm:$0xf]
  %v1664 = vld [vmem:[%s1654 + $0x24] sm:$0xf]
  %v1665 = vld [vmem:[%s1654 + $0x28] sm:$0xf]
  %v1666 = vld [vmem:[%s1654 + $0x2c] sm:$0xf]
  %v1667 = vld [vmem:[%s1654 + $0x30] sm:$0xf]
  %v1668 = vld [vmem:[%s1654 + $0x34] sm:$0xf]
  %v1669 = vld [vmem:[%s1654 + $0x38] sm:$0xf]
  %v1670 = vld [vmem:[%s1654 + $0x3c] sm:$0xf]
  %v1671 = vld [vmem:[%s1654 + $0x40] sm:$0xf]
  %v1672 = vld [vmem:[%s1654 + $0x44] sm:$0xf]
  %v1673 = vld [vmem:[%s1654 + $0x48] sm:$0xf]
  %v1674 = vld [vmem:[%s1654 + $0x4c] sm:$0xf]
  %v1675 = vld [vmem:[%s1654 + $0x50] sm:$0xf]
  %v1676 = vld [vmem:[%s1654 + $0x54] sm:$0xf]
  %v1677 = vld [vmem:[%s1654 + $0x58] sm:$0xf]
  %v1678 = vld [vmem:[%s1654 + $0x5c] sm:$0xf]
  %v1679 = vld [vmem:[%s1654 + $0x60] sm:$0xf]
  %v1680 = vld [vmem:[%s1654 + $0x64] sm:$0xf]
  %v1681 = vld [vmem:[%s1654 + $0x68] sm:$0xf]
  %v1682 = vld [vmem:[%s1654 + $0x6c] sm:$0xf]
  %v1683 = vld [vmem:[%s1654 + $0x70] sm:$0xf]
  %v1684 = vld [vmem:[%s1654 + $0x74] sm:$0xf]
  %v1685 = vld [vmem:[%s1654 + $0x78] sm:$0xf]
  %v1686 = vld [vmem:[%s1654 + $0x7c] sm:$0xf]
  %v1687 = vld [vmem:[%s1654 + $0x80] sm:$0xf]
  %v1688 = vld [vmem:[%s1654 + $0x84] sm:$0xf]
  %v1689 = vld [vmem:[%s1654 + $0x88] sm:$0xf]
  %v1690 = vld [vmem:[%s1654 + $0x8c] sm:$0xf]
  %v1691 = vld [vmem:[%s1654 + $0x90] sm:$0xf]
  %v1692 = vld [vmem:[%s1654 + $0x94] sm:$0xf]
  %v1693 = vld [vmem:[%s1654 + $0x98] sm:$0xf]
  %v1694 = vld [vmem:[%s1654 + $0x9c] sm:$0xf]
  %v1695 = vld [vmem:[%s1654 + $0xa0] sm:$0xf]
  %v1696 = vld [vmem:[%s1654 + $0xa4] sm:$0xf]
  %v1697 = vld [vmem:[%s1654 + $0xa8] sm:$0xf]
  %v1698 = vld [vmem:[%s1654 + $0xac] sm:$0xf]
  %v1699 = vld [vmem:[%s1654 + $0xb0] sm:$0xf]
  %v1700 = vld [vmem:[%s1654 + $0xb4] sm:$0xf]
  %v1701 = vld [vmem:[%s1654 + $0xb8] sm:$0xf]
  %v1702 = vld [vmem:[%s1654 + $0xbc] sm:$0xf]
  %v1703 = vld [vmem:[%s1654 + $0xc0] sm:$0xf]
  %v1704 = vld [vmem:[%s1654 + $0xc4] sm:$0xf]
  %v1705 = vld [vmem:[%s1654 + $0xc8] sm:$0xf]
  %v1706 = vld [vmem:[%s1654 + $0xcc] sm:$0xf]
  %v1707 = vld [vmem:[%s1654 + $0xd0] sm:$0xf]
  %v1708 = vld [vmem:[%s1654 + $0xd4] sm:$0xf]
  %v1709 = vld [vmem:[%s1654 + $0xd8] sm:$0xf]
  %v1710 = vld [vmem:[%s1654 + $0xdc] sm:$0xf]
  %v1711 = vld [vmem:[%s1654 + $0xe0] sm:$0xf]
  %v1712 = vld [vmem:[%s1654 + $0xe4] sm:$0xf]
  %v1713 = vld [vmem:[%s1654 + $0xe8] sm:$0xf]
  %v1714 = vld [vmem:[%s1654 + $0xec] sm:$0xf]
  %v1715 = vld [vmem:[%s1654 + $0xf0] sm:$0xf]
  %v1716 = vld [vmem:[%s1654 + $0xf4] sm:$0xf]
  %v1717 = vld [vmem:[%s1654 + $0xf8] sm:$0xf]
  %v1718 = vld [vmem:[%s1654 + $0xfc] sm:$0xf]
  %v1719 = vld [vmem:[%s1654 + $0x100] sm:$0xf]
  %v1720 = vld [vmem:[%s1654 + $0x104] sm:$0xf]
  %v1721 = vld [vmem:[%s1654 + $0x108] sm:$0xf]
  %v1722 = vld [vmem:[%s1654 + $0x10c] sm:$0xf]
  %v1723 = vld [vmem:[%s1654 + $0x110] sm:$0xf]
  %v1724 = vld [vmem:[%s1654 + $0x114] sm:$0xf]
  %v1725 = vld [vmem:[%s1654 + $0x118] sm:$0xf]
  %v1726 = vld [vmem:[%s1654 + $0x11c] sm:$0xf]
  %v1727 = vld [vmem:[%s1654 + $0x120] sm:$0xf]
  %v1728 = vld [vmem:[%s1654 + $0x124] sm:$0xf]
  %v1729 = vld [vmem:[%s1654 + $0x128] sm:$0xf]
  %v1730 = vld [vmem:[%s1654 + $0x12c] sm:$0xf]
  %v1731 = vld [vmem:[%s1654 + $0x130] sm:$0xf]
  %v1732 = vld [vmem:[%s1654 + $0x134] sm:$0xf]
  %v1733 = vld [vmem:[%s1654 + $0x138] sm:$0xf]
  %v1734 = vld [vmem:[%s1654 + $0x13c] sm:$0xf]
  %v1735 = vld [vmem:[%s1654 + $0x140] sm:$0xf]
  %v1817 = vunpack.c.l.b16 %v1655
  %v1818 = vunpack.c.l.b16 %v1656
  %v1819 = vunpack.c.l.b16 %v1657
  %v1820 = vunpack.c.l.b16 %v1658
  %v1821 = vunpack.c.l.b16 %v1659
  %v1822 = vunpack.c.l.b16 %v1660
  %v1823 = vunpack.c.l.b16 %v1661
  %v1824 = vunpack.c.l.b16 %v1662
  %v1825 = vunpack.c.l.b16 %v1663
  %v1826 = vunpack.c.l.b16 %v1664
  %v1827 = vunpack.c.l.b16 %v1665
  %v1828 = vunpack.c.l.b16 %v1666
  %v1829 = vunpack.c.l.b16 %v1667
  %v1830 = vunpack.c.l.b16 %v1668
  %v1831 = vunpack.c.l.b16 %v1669
  %v1832 = vunpack.c.l.b16 %v1670
  %v1833 = vunpack.c.l.b16 %v1671
  %v1834 = vunpack.c.l.b16 %v1672
  %v1835 = vunpack.c.l.b16 %v1673
  %v1836 = vunpack.c.l.b16 %v1674
  %v1837 = vunpack.c.l.b16 %v1675
  %v1838 = vunpack.c.l.b16 %v1676
  %v1839 = vunpack.c.l.b16 %v1677
  %v1840 = vunpack.c.l.b16 %v1678
  %v1841 = vunpack.c.l.b16 %v1679
  %v1842 = vunpack.c.l.b16 %v1680
  %v1843 = vunpack.c.l.b16 %v1681
  %v1844 = vunpack.c.l.b16 %v1682
  %v1845 = vunpack.c.l.b16 %v1683
  %v1846 = vunpack.c.l.b16 %v1684
  %v1847 = vunpack.c.l.b16 %v1685
  %v1848 = vunpack.c.l.b16 %v1686
  %v1849 = vunpack.c.l.b16 %v1687
  %v1850 = vunpack.c.l.b16 %v1688
  %v1851 = vunpack.c.l.b16 %v1689
  %v1852 = vunpack.c.l.b16 %v1690
  %v1853 = vunpack.c.l.b16 %v1691
  %v1854 = vunpack.c.l.b16 %v1692
  %v1855 = vunpack.c.l.b16 %v1693
  %v1856 = vunpack.c.l.b16 %v1694
  %v1857 = vunpack.c.l.b16 %v1695
  %v1858 = vunpack.c.l.b16 %v1696
  %v1859 = vunpack.c.l.b16 %v1697
  %v1860 = vunpack.c.l.b16 %v1698
  %v1861 = vunpack.c.l.b16 %v1699
  %v1862 = vunpack.c.l.b16 %v1700
  %v1863 = vunpack.c.l.b16 %v1701
  %v1864 = vunpack.c.l.b16 %v1702
  %v1865 = vunpack.c.l.b16 %v1703
  %v1866 = vunpack.c.l.b16 %v1704
  %v1867 = vunpack.c.l.b16 %v1705
  %v1868 = vunpack.c.l.b16 %v1706
  %v1869 = vunpack.c.l.b16 %v1707
  %v1870 = vunpack.c.l.b16 %v1708
  %v1871 = vunpack.c.l.b16 %v1709
  %v1872 = vunpack.c.l.b16 %v1710
  %v1873 = vunpack.c.l.b16 %v1711
  %v1874 = vunpack.c.l.b16 %v1712
  %v1875 = vunpack.c.l.b16 %v1713
  %v1876 = vunpack.c.l.b16 %v1714
  %v1877 = vunpack.c.l.b16 %v1715
  %v1878 = vunpack.c.l.b16 %v1716
  %v1879 = vunpack.c.l.b16 %v1717
  %v1880 = vunpack.c.l.b16 %v1718
  %v1881 = vunpack.c.l.b16 %v1719
  %v1882 = vunpack.c.l.b16 %v1720
  %v1883 = vunpack.c.l.b16 %v1721
  %v1884 = vunpack.c.l.b16 %v1722
  %v1885 = vunpack.c.l.b16 %v1723
  %v1886 = vunpack.c.l.b16 %v1724
  %v1887 = vunpack.c.l.b16 %v1725
  %v1888 = vunpack.c.l.b16 %v1726
  %v1889 = vunpack.c.l.b16 %v1727
  %v1890 = vunpack.c.l.b16 %v1728
  %v1891 = vunpack.c.l.b16 %v1729
  %v1892 = vunpack.c.l.b16 %v1730
  %v1893 = vunpack.c.l.b16 %v1731
  %v1894 = vunpack.c.l.b16 %v1732
  %v1895 = vunpack.c.l.b16 %v1733
  %v1896 = vunpack.c.l.b16 %v1734
  %v1897 = vunpack.c.l.b16 %v1735
  %v1898 = vpack.c.b16 %v1818, %v1817
  %v1899 = vpack.c.b16 %v1820, %v1819
  %v1900 = vpack.c.b16 %v1822, %v1821
  %v1901 = vpack.c.b16 %v1824, %v1823
  %v1902 = vpack.c.b16 %v1826, %v1825
  %v1903 = vpack.c.b16 %v1828, %v1827
  %v1904 = vpack.c.b16 %v1830, %v1829
  %v1905 = vpack.c.b16 %v1832, %v1831
  %v1906 = vpack.c.b16 %v1834, %v1833
  %v1907 = vpack.c.b16 %v1836, %v1835
  %v1908 = vpack.c.b16 %v1838, %v1837
  %v1909 = vpack.c.b16 %v1840, %v1839
  %v1910 = vpack.c.b16 %v1842, %v1841
  %v1911 = vpack.c.b16 %v1844, %v1843
  %v1912 = vpack.c.b16 %v1846, %v1845
  %v1913 = vpack.c.b16 %v1848, %v1847
  %v1914 = vpack.c.b16 %v1850, %v1849
  %v1915 = vpack.c.b16 %v1852, %v1851
  %v1916 = vpack.c.b16 %v1854, %v1853
  %v1917 = vpack.c.b16 %v1856, %v1855
  %v1918 = vpack.c.b16 %v1858, %v1857
  %v1919 = vpack.c.b16 %v1860, %v1859
  %v1920 = vpack.c.b16 %v1862, %v1861
  %v1921 = vpack.c.b16 %v1864, %v1863
  %v1922 = vpack.c.b16 %v1866, %v1865
  %v1923 = vpack.c.b16 %v1868, %v1867
  %v1924 = vpack.c.b16 %v1870, %v1869
  %v1925 = vpack.c.b16 %v1872, %v1871
  %v1926 = vpack.c.b16 %v1874, %v1873
  %v1927 = vpack.c.b16 %v1876, %v1875
  %v1928 = vpack.c.b16 %v1878, %v1877
  %v1929 = vpack.c.b16 %v1880, %v1879
  %v1930 = vpack.c.b16 %v1882, %v1881
  %v1931 = vpack.c.b16 %v1884, %v1883
  %v1932 = vpack.c.b16 %v1886, %v1885
  %v1933 = vpack.c.b16 %v1888, %v1887
  %v1934 = vpack.c.b16 %v1890, %v1889
  %v1935 = vpack.c.b16 %v1892, %v1891
  %v1936 = vpack.c.b16 %v1894, %v1893
  %v1937 = vpack.c.b16 %v1896, %v1895
  %v1938 = vpack.c.b16 %v1897, %v1897
  %v1940 = vsel %vm314, %v1898, 0
  %v1943 = vsel %vm314, %v1899, 0
  %v1946 = vsel %vm314, %v1900, 0
  %v1949 = vsel %vm314, %v1901, 0
  %v1952 = vsel %vm314, %v1902, 0
  %v1955 = vsel %vm314, %v1903, 0
  %v1958 = vsel %vm314, %v1904, 0
  %v1961 = vsel %vm314, %v1905, 0
  %v1964 = vsel %vm314, %v1906, 0
  %v1967 = vsel %vm314, %v1907, 0
  %v1970 = vsel %vm314, %v1908, 0
  %v1973 = vsel %vm314, %v1909, 0
  %v1976 = vsel %vm314, %v1910, 0
  %v1979 = vsel %vm314, %v1911, 0
  %v1982 = vsel %vm314, %v1912, 0
  %v1985 = vsel %vm314, %v1913, 0
  %v1988 = vsel %vm314, %v1914, 0
  %v1991 = vsel %vm314, %v1915, 0
  %v1994 = vsel %vm314, %v1916, 0
  %v1997 = vsel %vm314, %v1917, 0
  %v2000 = vsel %vm314, %v1918, 0
  %v2003 = vsel %vm314, %v1919, 0
  %v2006 = vsel %vm314, %v1920, 0
  %v2009 = vsel %vm314, %v1921, 0
  %v2012 = vsel %vm314, %v1922, 0
  %v2015 = vsel %vm314, %v1923, 0
  %v2018 = vsel %vm314, %v1924, 0
  %v2021 = vsel %vm314, %v1925, 0
  %v2024 = vsel %vm314, %v1926, 0
  %v2027 = vsel %vm314, %v1927, 0
  %v2030 = vsel %vm314, %v1928, 0
  %v2033 = vsel %vm314, %v1929, 0
  %v2036 = vsel %vm314, %v1930, 0
  %v2039 = vsel %vm314, %v1931, 0
  %v2042 = vsel %vm314, %v1932, 0
  %v2045 = vsel %vm314, %v1933, 0
  %v2048 = vsel %vm314, %v1934, 0
  %v2051 = vsel %vm314, %v1935, 0
  %v2054 = vsel %vm314, %v1936, 0
  %v2057 = vsel %vm314, %v1937, 0
  %v2060 = vsel %vm314, %v1938, 0
  %2062 = vmatprep.subr.bf16.mxu0 0
  %2063 = vmatpush1.bf16.msra.mxu0 0
  %2064 = vmatprep.subr.bf16.mxu0 0
  %2065 = vmatpush1.bf16.msra.mxu0 0
  %2066 = vmatprep.subr.bf16.mxu0 0
  %2067 = vmatpush1.bf16.msra.mxu0 0
  %2068 = vmatprep.subr.bf16.mxu0 0
  %2069 = vmatpush1.bf16.msra.mxu0 0
  %2070 = vmatprep.subr.bf16.mxu0 0
  %2071 = vmatpush1.bf16.msra.mxu0 0
  %2072 = vmatprep.subr.bf16.mxu0 0
  %2073 = vmatpush1.bf16.msra.mxu0 0
  %2074 = vmatprep.subr.bf16.mxu0 0
  %2075 = vmatpush1.bf16.msra.mxu0 %v443
  %2076 = vmatprep.subr.bf16.mxu0 0
  %2077 = vmatpush1.bf16.msra.mxu0 %v311
  %2078 = vmatprep.subr.bf16.mxu0 0
  %2079 = vmatpush2.bf16.msra.mxu0 0
  %2080 = vmatprep.subr.bf16.mxu0 0
  %2081 = vmatpush2.bf16.msra.mxu0 0
  %2082 = vmatprep.subr.bf16.mxu0 0
  %2083 = vmatpush2.bf16.msra.mxu0 0
  %2084 = vmatprep.subr.bf16.mxu0 0
  %2085 = vmatpush2.bf16.msra.mxu0 0
  %2086 = vmatprep.subr.bf16.mxu0 0
  %2087 = vmatpush2.bf16.msra.mxu0 0
  %2088 = vmatprep.subr.bf16.mxu0 0
  %2089 = vmatpush2.bf16.msra.mxu0 0
  %2090 = vmatprep.subr.bf16.mxu0 0
  %2091 = vmatpush2.bf16.msra.mxu0 0
  %2092 = vmatprep.subr.bf16.mxu0 0
  %2093 = vmatpush2.bf16.msra.mxu0 0
  %2094 = vmatprep.mubr.bf16.mxu0 0
  %2095 = vmatmul.mubr.bf16.gmra.mxu0 %v1940
  %v2096 = vpop.f32.mrf.mxu0
  %v2097 = vadd.f32 0.0, %v2096
  %v2098 = vpop.f32.mrf.mxu0
  %v2099 = vpop.f32.mrf.mxu0
  %v2100 = vadd.f32 0.0, %v2099
  %v2101 = vpop.f32.mrf.mxu0
  %2102 = vmatprep.mubr.bf16.mxu0 0
  %2103 = vmatmul.mubr.bf16.gmra.mxu0 %v1943
  %v2104 = vpop.f32.mrf.mxu0
  %v2105 = vadd.f32 0.0, %v2104
  %v2106 = vpop.f32.mrf.mxu0
  %v2107 = vpop.f32.mrf.mxu0
  %v2108 = vadd.f32 0.0, %v2107
  %v2109 = vpop.f32.mrf.mxu0
  %2110 = vmatprep.mubr.bf16.mxu0 0
  %2111 = vmatmul.mubr.bf16.gmra.mxu0 %v1946
  %v2112 = vpop.f32.mrf.mxu0
  %v2113 = vadd.f32 0.0, %v2112
  %v2114 = vpop.f32.mrf.mxu0
  %v2115 = vpop.f32.mrf.mxu0
  %v2116 = vadd.f32 0.0, %v2115
  %v2117 = vpop.f32.mrf.mxu0
  %2118 = vmatprep.mubr.bf16.mxu0 0
  %2119 = vmatmul.mubr.bf16.gmra.mxu0 %v1949
  %v2120 = vpop.f32.mrf.mxu0
  %v2121 = vadd.f32 0.0, %v2120
  %v2122 = vpop.f32.mrf.mxu0
  %v2123 = vpop.f32.mrf.mxu0
  %v2124 = vadd.f32 0.0, %v2123
  %v2125 = vpop.f32.mrf.mxu0
  %2126 = vmatprep.mubr.bf16.mxu0 0
  %2127 = vmatmul.mubr.bf16.gmra.mxu0 %v1952
  %v2128 = vpop.f32.mrf.mxu0
  %v2129 = vadd.f32 0.0, %v2128
  %v2130 = vpop.f32.mrf.mxu0
  %v2131 = vpop.f32.mrf.mxu0
  %v2132 = vadd.f32 0.0, %v2131
  %v2133 = vpop.f32.mrf.mxu0
  %2134 = vmatprep.mubr.bf16.mxu0 0
  %2135 = vmatmul.mubr.bf16.gmra.mxu0 %v1955
  %v2136 = vpop.f32.mrf.mxu0
  %v2137 = vadd.f32 0.0, %v2136
  %v2138 = vpop.f32.mrf.mxu0
  %v2139 = vpop.f32.mrf.mxu0
  %v2140 = vadd.f32 0.0, %v2139
  %v2141 = vpop.f32.mrf.mxu0
  %2142 = vmatprep.mubr.bf16.mxu0 0
  %2143 = vmatmul.mubr.bf16.gmra.mxu0 %v1958
  %v2144 = vpop.f32.mrf.mxu0
  %v2145 = vadd.f32 0.0, %v2144
  %v2146 = vpop.f32.mrf.mxu0
  %v2147 = vpop.f32.mrf.mxu0
  %v2148 = vadd.f32 0.0, %v2147
  %v2149 = vpop.f32.mrf.mxu0
  %2150 = vmatprep.mubr.bf16.mxu0 0
  %2151 = vmatmul.mubr.bf16.gmra.mxu0 %v1961
  %v2152 = vpop.f32.mrf.mxu0
  %v2153 = vadd.f32 0.0, %v2152
  %v2154 = vpop.f32.mrf.mxu0
  %v2155 = vpop.f32.mrf.mxu0
  %v2156 = vadd.f32 0.0, %v2155
  %v2157 = vpop.f32.mrf.mxu0
  %2158 = vmatprep.mubr.bf16.mxu0 0
  %2159 = vmatmul.mubr.bf16.gmra.mxu0 %v1964
  %v2160 = vpop.f32.mrf.mxu0
  %v2161 = vadd.f32 0.0, %v2160
  %v2162 = vpop.f32.mrf.mxu0
  %v2163 = vpop.f32.mrf.mxu0
  %v2164 = vadd.f32 0.0, %v2163
  %v2165 = vpop.f32.mrf.mxu0
  %2166 = vmatprep.mubr.bf16.mxu0 0
  %2167 = vmatmul.mubr.bf16.gmra.mxu0 %v1967
  %v2168 = vpop.f32.mrf.mxu0
  %v2169 = vadd.f32 0.0, %v2168
  %v2170 = vpop.f32.mrf.mxu0
  %v2171 = vpop.f32.mrf.mxu0
  %v2172 = vadd.f32 0.0, %v2171
  %v2173 = vpop.f32.mrf.mxu0
  %2174 = vmatprep.mubr.bf16.mxu0 0
  %2175 = vmatmul.mubr.bf16.gmra.mxu0 %v1970
  %v2176 = vpop.f32.mrf.mxu0
  %v2177 = vadd.f32 0.0, %v2176
  %v2178 = vpop.f32.mrf.mxu0
  %v2179 = vpop.f32.mrf.mxu0
  %v2180 = vadd.f32 0.0, %v2179
  %v2181 = vpop.f32.mrf.mxu0
  %2182 = vmatprep.mubr.bf16.mxu0 0
  %2183 = vmatmul.mubr.bf16.gmra.mxu0 %v1973
  %v2184 = vpop.f32.mrf.mxu0
  %v2185 = vadd.f32 0.0, %v2184
  %v2186 = vpop.f32.mrf.mxu0
  %v2187 = vpop.f32.mrf.mxu0
  %v2188 = vadd.f32 0.0, %v2187
  %v2189 = vpop.f32.mrf.mxu0
  %2190 = vmatprep.mubr.bf16.mxu0 0
  %2191 = vmatmul.mubr.bf16.gmra.mxu0 %v1976
  %v2192 = vpop.f32.mrf.mxu0
  %v2193 = vadd.f32 0.0, %v2192
  %v2194 = vpop.f32.mrf.mxu0
  %v2195 = vpop.f32.mrf.mxu0
  %v2196 = vadd.f32 0.0, %v2195
  %v2197 = vpop.f32.mrf.mxu0
  %2198 = vmatprep.mubr.bf16.mxu0 0
  %2199 = vmatmul.mubr.bf16.gmra.mxu0 %v1979
  %v2200 = vpop.f32.mrf.mxu0
  %v2201 = vadd.f32 0.0, %v2200
  %v2202 = vpop.f32.mrf.mxu0
  %v2203 = vpop.f32.mrf.mxu0
  %v2204 = vadd.f32 0.0, %v2203
  %v2205 = vpop.f32.mrf.mxu0
  %2206 = vmatprep.mubr.bf16.mxu0 0
  %2207 = vmatmul.mubr.bf16.gmra.mxu0 %v1982
  %v2208 = vpop.f32.mrf.mxu0
  %v2209 = vadd.f32 0.0, %v2208
  %v2210 = vpop.f32.mrf.mxu0
  %v2211 = vpop.f32.mrf.mxu0
  %v2212 = vadd.f32 0.0, %v2211
  %v2213 = vpop.f32.mrf.mxu0
  %2214 = vmatprep.mubr.bf16.mxu0 0
  %2215 = vmatmul.mubr.bf16.gmra.mxu0 %v1985
  %v2216 = vpop.f32.mrf.mxu0
  %v2217 = vadd.f32 0.0, %v2216
  %v2218 = vpop.f32.mrf.mxu0
  %v2219 = vpop.f32.mrf.mxu0
  %v2220 = vadd.f32 0.0, %v2219
  %v2221 = vpop.f32.mrf.mxu0
  %2222 = vmatprep.mubr.bf16.mxu0 0
  %2223 = vmatmul.mubr.bf16.gmra.mxu0 %v1988
  %v2224 = vpop.f32.mrf.mxu0
  %v2225 = vadd.f32 0.0, %v2224
  %v2226 = vpop.f32.mrf.mxu0
  %v2227 = vpop.f32.mrf.mxu0
  %v2228 = vadd.f32 0.0, %v2227
  %v2229 = vpop.f32.mrf.mxu0
  %2230 = vmatprep.mubr.bf16.mxu0 0
  %2231 = vmatmul.mubr.bf16.gmra.mxu0 %v1991
  %v2232 = vpop.f32.mrf.mxu0
  %v2233 = vadd.f32 0.0, %v2232
  %v2234 = vpop.f32.mrf.mxu0
  %v2235 = vpop.f32.mrf.mxu0
  %v2236 = vadd.f32 0.0, %v2235
  %v2237 = vpop.f32.mrf.mxu0
  %2238 = vmatprep.mubr.bf16.mxu0 0
  %2239 = vmatmul.mubr.bf16.gmra.mxu0 %v1994
  %v2240 = vpop.f32.mrf.mxu0
  %v2241 = vadd.f32 0.0, %v2240
  %v2242 = vpop.f32.mrf.mxu0
  %v2243 = vpop.f32.mrf.mxu0
  %v2244 = vadd.f32 0.0, %v2243
  %v2245 = vpop.f32.mrf.mxu0
  %2246 = vmatprep.mubr.bf16.mxu0 0
  %2247 = vmatmul.mubr.bf16.gmra.mxu0 %v1997
  %v2248 = vpop.f32.mrf.mxu0
  %v2249 = vadd.f32 0.0, %v2248
  %v2250 = vpop.f32.mrf.mxu0
  %v2251 = vpop.f32.mrf.mxu0
  %v2252 = vadd.f32 0.0, %v2251
  %v2253 = vpop.f32.mrf.mxu0
  %2254 = vmatprep.mubr.bf16.mxu0 0
  %2255 = vmatmul.mubr.bf16.gmra.mxu0 %v2000
  %v2256 = vpop.f32.mrf.mxu0
  %v2257 = vadd.f32 0.0, %v2256
  %v2258 = vpop.f32.mrf.mxu0
  %v2259 = vpop.f32.mrf.mxu0
  %v2260 = vadd.f32 0.0, %v2259
  %v2261 = vpop.f32.mrf.mxu0
  %2262 = vmatprep.mubr.bf16.mxu0 0
  %2263 = vmatmul.mubr.bf16.gmra.mxu0 %v2003
  %v2264 = vpop.f32.mrf.mxu0
  %v2265 = vadd.f32 0.0, %v2264
  %v2266 = vpop.f32.mrf.mxu0
  %v2267 = vpop.f32.mrf.mxu0
  %v2268 = vadd.f32 0.0, %v2267
  %v2269 = vpop.f32.mrf.mxu0
  %2270 = vmatprep.mubr.bf16.mxu0 0
  %2271 = vmatmul.mubr.bf16.gmra.mxu0 %v2006
  %v2272 = vpop.f32.mrf.mxu0
  %v2273 = vadd.f32 0.0, %v2272
  %v2274 = vpop.f32.mrf.mxu0
  %v2275 = vpop.f32.mrf.mxu0
  %v2276 = vadd.f32 0.0, %v2275
  %v2277 = vpop.f32.mrf.mxu0
  %2278 = vmatprep.mubr.bf16.mxu0 0
  %2279 = vmatmul.mubr.bf16.gmra.mxu0 %v2009
  %v2280 = vpop.f32.mrf.mxu0
  %v2281 = vadd.f32 0.0, %v2280
  %v2282 = vpop.f32.mrf.mxu0
  %v2283 = vpop.f32.mrf.mxu0
  %v2284 = vadd.f32 0.0, %v2283
  %v2285 = vpop.f32.mrf.mxu0
  %2286 = vmatprep.mubr.bf16.mxu0 0
  %2287 = vmatmul.mubr.bf16.gmra.mxu0 %v2012
  %v2288 = vpop.f32.mrf.mxu0
  %v2289 = vadd.f32 0.0, %v2288
  %v2290 = vpop.f32.mrf.mxu0
  %v2291 = vpop.f32.mrf.mxu0
  %v2292 = vadd.f32 0.0, %v2291
  %v2293 = vpop.f32.mrf.mxu0
  %2294 = vmatprep.mubr.bf16.mxu0 0
  %2295 = vmatmul.mubr.bf16.gmra.mxu0 %v2015
  %v2296 = vpop.f32.mrf.mxu0
  %v2297 = vadd.f32 0.0, %v2296
  %v2298 = vpop.f32.mrf.mxu0
  %v2299 = vpop.f32.mrf.mxu0
  %v2300 = vadd.f32 0.0, %v2299
  %v2301 = vpop.f32.mrf.mxu0
  %2302 = vmatprep.mubr.bf16.mxu0 0
  %2303 = vmatmul.mubr.bf16.gmra.mxu0 %v2018
  %v2304 = vpop.f32.mrf.mxu0
  %v2305 = vadd.f32 0.0, %v2304
  %v2306 = vpop.f32.mrf.mxu0
  %v2307 = vpop.f32.mrf.mxu0
  %v2308 = vadd.f32 0.0, %v2307
  %v2309 = vpop.f32.mrf.mxu0
  %2310 = vmatprep.mubr.bf16.mxu0 0
  %2311 = vmatmul.mubr.bf16.gmra.mxu0 %v2021
  %v2312 = vpop.f32.mrf.mxu0
  %v2313 = vadd.f32 0.0, %v2312
  %v2314 = vpop.f32.mrf.mxu0
  %v2315 = vpop.f32.mrf.mxu0
  %v2316 = vadd.f32 0.0, %v2315
  %v2317 = vpop.f32.mrf.mxu0
  %2318 = vmatprep.mubr.bf16.mxu0 0
  %2319 = vmatmul.mubr.bf16.gmra.mxu0 %v2024
  %v2320 = vpop.f32.mrf.mxu0
  %v2321 = vadd.f32 0.0, %v2320
  %v2322 = vpop.f32.mrf.mxu0
  %v2323 = vpop.f32.mrf.mxu0
  %v2324 = vadd.f32 0.0, %v2323
  %v2325 = vpop.f32.mrf.mxu0
  %2326 = vmatprep.mubr.bf16.mxu0 0
  %2327 = vmatmul.mubr.bf16.gmra.mxu0 %v2027
  %v2328 = vpop.f32.mrf.mxu0
  %v2329 = vadd.f32 0.0, %v2328
  %v2330 = vpop.f32.mrf.mxu0
  %v2331 = vpop.f32.mrf.mxu0
  %v2332 = vadd.f32 0.0, %v2331
  %v2333 = vpop.f32.mrf.mxu0
  %2334 = vmatprep.mubr.bf16.mxu0 0
  %2335 = vmatmul.mubr.bf16.gmra.mxu0 %v2030
  %v2336 = vpop.f32.mrf.mxu0
  %v2337 = vadd.f32 0.0, %v2336
  %v2338 = vpop.f32.mrf.mxu0
  %v2339 = vpop.f32.mrf.mxu0
  %v2340 = vadd.f32 0.0, %v2339
  %v2341 = vpop.f32.mrf.mxu0
  %2342 = vmatprep.mubr.bf16.mxu0 0
  %2343 = vmatmul.mubr.bf16.gmra.mxu0 %v2033
  %v2344 = vpop.f32.mrf.mxu0
  %v2345 = vadd.f32 0.0, %v2344
  %v2346 = vpop.f32.mrf.mxu0
  %v2347 = vpop.f32.mrf.mxu0
  %v2348 = vadd.f32 0.0, %v2347
  %v2349 = vpop.f32.mrf.mxu0
  %2350 = vmatprep.mubr.bf16.mxu0 0
  %2351 = vmatmul.mubr.bf16.gmra.mxu0 %v2036
  %v2352 = vpop.f32.mrf.mxu0
  %v2353 = vadd.f32 0.0, %v2352
  %v2354 = vpop.f32.mrf.mxu0
  %v2355 = vpop.f32.mrf.mxu0
  %v2356 = vadd.f32 0.0, %v2355
  %v2357 = vpop.f32.mrf.mxu0
  %2358 = vmatprep.mubr.bf16.mxu0 0
  %2359 = vmatmul.mubr.bf16.gmra.mxu0 %v2039
  %v2360 = vpop.f32.mrf.mxu0
  %v2361 = vadd.f32 0.0, %v2360
  %v2362 = vpop.f32.mrf.mxu0
  %v2363 = vpop.f32.mrf.mxu0
  %v2364 = vadd.f32 0.0, %v2363
  %v2365 = vpop.f32.mrf.mxu0
  %2366 = vmatprep.mubr.bf16.mxu0 0
  %2367 = vmatmul.mubr.bf16.gmra.mxu0 %v2042
  %v2368 = vpop.f32.mrf.mxu0
  %v2369 = vadd.f32 0.0, %v2368
  %v2370 = vpop.f32.mrf.mxu0
  %v2371 = vpop.f32.mrf.mxu0
  %v2372 = vadd.f32 0.0, %v2371
  %v2373 = vpop.f32.mrf.mxu0
  %2374 = vmatprep.mubr.bf16.mxu0 0
  %2375 = vmatmul.mubr.bf16.gmra.mxu0 %v2045
  %v2376 = vpop.f32.mrf.mxu0
  %v2377 = vadd.f32 0.0, %v2376
  %v2378 = vpop.f32.mrf.mxu0
  %v2379 = vpop.f32.mrf.mxu0
  %v2380 = vadd.f32 0.0, %v2379
  %v2381 = vpop.f32.mrf.mxu0
  %2382 = vmatprep.mubr.bf16.mxu0 0
  %2383 = vmatmul.mubr.bf16.gmra.mxu0 %v2048
  %v2384 = vpop.f32.mrf.mxu0
  %v2385 = vadd.f32 0.0, %v2384
  %v2386 = vpop.f32.mrf.mxu0
  %v2387 = vpop.f32.mrf.mxu0
  %v2388 = vadd.f32 0.0, %v2387
  %v2389 = vpop.f32.mrf.mxu0
  %2390 = vmatprep.mubr.bf16.mxu0 0
  %2391 = vmatmul.mubr.bf16.gmra.mxu0 %v2051
  %v2392 = vpop.f32.mrf.mxu0
  %v2393 = vadd.f32 0.0, %v2392
  %v2394 = vpop.f32.mrf.mxu0
  %v2395 = vpop.f32.mrf.mxu0
  %v2396 = vadd.f32 0.0, %v2395
  %v2397 = vpop.f32.mrf.mxu0
  %2398 = vmatprep.mubr.bf16.mxu0 0
  %2399 = vmatmul.mubr.bf16.gmra.mxu0 %v2054
  %v2400 = vpop.f32.mrf.mxu0
  %v2401 = vadd.f32 0.0, %v2400
  %v2402 = vpop.f32.mrf.mxu0
  %v2403 = vpop.f32.mrf.mxu0
  %v2404 = vadd.f32 0.0, %v2403
  %v2405 = vpop.f32.mrf.mxu0
  %2406 = vmatprep.mubr.bf16.mxu0 0
  %2407 = vmatmul.mubr.bf16.gmra.mxu0 %v2057
  %v2408 = vpop.f32.mrf.mxu0
  %v2409 = vadd.f32 0.0, %v2408
  %v2410 = vpop.f32.mrf.mxu0
  %v2411 = vpop.f32.mrf.mxu0
  %v2412 = vadd.f32 0.0, %v2411
  %v2413 = vpop.f32.mrf.mxu0
  %2414 = vmatprep.mubr.bf16.mxu0 0
  %2415 = vmatmul.mubr.bf16.gmra.mxu0 %v2060
  %v2416 = vpop.f32.mrf.mxu0
  %v2417 = vadd.f32 0.0, %v2416
  %v2418 = vpop.f32.mrf.mxu0
  %v2419 = vpop.f32.mrf.mxu0
  %v2420 = vpop.f32.mrf.mxu0
  %2421 = vdwg.mxu0
  %v2422 = vmax.f32 %v1573, %v2097
  %v2423 = vmax.f32 %v1574, %v2100
  %v2424 = vmax.f32 %v1575, %v2105
  %v2425 = vmax.f32 %v1576, %v2108
  %v2426 = vmax.f32 %v1577, %v2113
  %v2427 = vmax.f32 %v1578, %v2116
  %v2428 = vmax.f32 %v1579, %v2121
  %v2429 = vmax.f32 %v1580, %v2124
  %v2430 = vmax.f32 %v1581, %v2129
  %v2431 = vmax.f32 %v1582, %v2132
  %v2432 = vmax.f32 %v1583, %v2137
  %v2433 = vmax.f32 %v1584, %v2140
  %v2434 = vmax.f32 %v1585, %v2145
  %v2435 = vmax.f32 %v1586, %v2148
  %v2436 = vmax.f32 %v1587, %v2153
  %v2437 = vmax.f32 %v1588, %v2156
  %v2438 = vmax.f32 %v1589, %v2161
  %v2439 = vmax.f32 %v1590, %v2164
  %v2440 = vmax.f32 %v1591, %v2169
  %v2441 = vmax.f32 %v1592, %v2172
  %v2442 = vmax.f32 %v1593, %v2177
  %v2443 = vmax.f32 %v1594, %v2180
  %v2444 = vmax.f32 %v1595, %v2185
  %v2445 = vmax.f32 %v1596, %v2188
  %v2446 = vmax.f32 %v1597, %v2193
  %v2447 = vmax.f32 %v1598, %v2196
  %v2448 = vmax.f32 %v1599, %v2201
  %v2449 = vmax.f32 %v1600, %v2204
  %v2450 = vmax.f32 %v1601, %v2209
  %v2451 = vmax.f32 %v1602, %v2212
  %v2452 = vmax.f32 %v1603, %v2217
  %v2453 = vmax.f32 %v1604, %v2220
  %v2454 = vmax.f32 %v1605, %v2225
  %v2455 = vmax.f32 %v1606, %v2228
  %v2456 = vmax.f32 %v1607, %v2233
  %v2457 = vmax.f32 %v1608, %v2236
  %v2458 = vmax.f32 %v1609, %v2241
  %v2459 = vmax.f32 %v1610, %v2244
  %v2460 = vmax.f32 %v1611, %v2249
  %v2461 = vmax.f32 %v1612, %v2252
  %v2462 = vmax.f32 %v1613, %v2257
  %v2463 = vmax.f32 %v1614, %v2260
  %v2464 = vmax.f32 %v1615, %v2265
  %v2465 = vmax.f32 %v1616, %v2268
  %v2466 = vmax.f32 %v1617, %v2273
  %v2467 = vmax.f32 %v1618, %v2276
  %v2468 = vmax.f32 %v1619, %v2281
  %v2469 = vmax.f32 %v1620, %v2284
  %v2470 = vmax.f32 %v1621, %v2289
  %v2471 = vmax.f32 %v1622, %v2292
  %v2472 = vmax.f32 %v1623, %v2297
  %v2473 = vmax.f32 %v1624, %v2300
  %v2474 = vmax.f32 %v1625, %v2305
  %v2475 = vmax.f32 %v1626, %v2308
  %v2476 = vmax.f32 %v1627, %v2313
  %v2477 = vmax.f32 %v1628, %v2316
  %v2478 = vmax.f32 %v1629, %v2321
  %v2479 = vmax.f32 %v1630, %v2324
  %v2480 = vmax.f32 %v1631, %v2329
  %v2481 = vmax.f32 %v1632, %v2332
  %v2482 = vmax.f32 %v1633, %v2337
  %v2483 = vmax.f32 %v1634, %v2340
  %v2484 = vmax.f32 %v1635, %v2345
  %v2485 = vmax.f32 %v1636, %v2348
  %v2486 = vmax.f32 %v1637, %v2353
  %v2487 = vmax.f32 %v1638, %v2356
  %v2488 = vmax.f32 %v1639, %v2361
  %v2489 = vmax.f32 %v1640, %v2364
  %v2490 = vmax.f32 %v1641, %v2369
  %v2491 = vmax.f32 %v1642, %v2372
  %v2492 = vmax.f32 %v1643, %v2377
  %v2493 = vmax.f32 %v1644, %v2380
  %v2494 = vmax.f32 %v1645, %v2385
  %v2495 = vmax.f32 %v1646, %v2388
  %v2496 = vmax.f32 %v1647, %v2393
  %v2497 = vmax.f32 %v1648, %v2396
  %v2498 = vmax.f32 %v1649, %v2401
  %v2499 = vmax.f32 %v1650, %v2404
  %v2500 = vmax.f32 %v1651, %v2409
  %v2501 = vmax.f32 %v1652, %v2412
  %v2502 = vmax.f32 %v1653, %v2417
  %s2503 = scalar_lea.vmem %s0, 972
  %v2504 = vld [vmem:[%s2503] sm:$0xf]
  %v2505 = vld [vmem:[%s2503 + $0x4] sm:$0xf]
  %v2506 = vld [vmem:[%s2503 + $0x8] sm:$0xf]
  %v2507 = vld [vmem:[%s2503 + $0xc] sm:$0xf]
  %v2508 = vld [vmem:[%s2503 + $0x10] sm:$0xf]
  %v2509 = vld [vmem:[%s2503 + $0x14] sm:$0xf]
  %v2510 = vld [vmem:[%s2503 + $0x18] sm:$0xf]
  %v2511 = vld [vmem:[%s2503 + $0x1c] sm:$0xf]
  %v2512 = vld [vmem:[%s2503 + $0x20] sm:$0xf]
  %v2513 = vld [vmem:[%s2503 + $0x24] sm:$0xf]
  %v2514 = vld [vmem:[%s2503 + $0x28] sm:$0xf]
  %v2515 = vld [vmem:[%s2503 + $0x2c] sm:$0xf]
  %v2516 = vld [vmem:[%s2503 + $0x30] sm:$0xf]
  %v2517 = vld [vmem:[%s2503 + $0x34] sm:$0xf]
  %v2518 = vld [vmem:[%s2503 + $0x38] sm:$0xf]
  %v2519 = vld [vmem:[%s2503 + $0x3c] sm:$0xf]
  %v2520 = vld [vmem:[%s2503 + $0x40] sm:$0xf]
  %v2521 = vld [vmem:[%s2503 + $0x44] sm:$0xf]
  %v2522 = vld [vmem:[%s2503 + $0x48] sm:$0xf]
  %v2523 = vld [vmem:[%s2503 + $0x4c] sm:$0xf]
  %v2524 = vld [vmem:[%s2503 + $0x50] sm:$0xf]
  %v2525 = vld [vmem:[%s2503 + $0x54] sm:$0xf]
  %v2526 = vld [vmem:[%s2503 + $0x58] sm:$0xf]
  %v2527 = vld [vmem:[%s2503 + $0x5c] sm:$0xf]
  %v2528 = vld [vmem:[%s2503 + $0x60] sm:$0xf]
  %v2529 = vld [vmem:[%s2503 + $0x64] sm:$0xf]
  %v2530 = vld [vmem:[%s2503 + $0x68] sm:$0xf]
  %v2531 = vld [vmem:[%s2503 + $0x6c] sm:$0xf]
  %v2532 = vld [vmem:[%s2503 + $0x70] sm:$0xf]
  %v2533 = vld [vmem:[%s2503 + $0x74] sm:$0xf]
  %v2534 = vld [vmem:[%s2503 + $0x78] sm:$0xf]
  %v2535 = vld [vmem:[%s2503 + $0x7c] sm:$0xf]
  %v2536 = vld [vmem:[%s2503 + $0x80] sm:$0xf]
  %v2537 = vld [vmem:[%s2503 + $0x84] sm:$0xf]
  %v2538 = vld [vmem:[%s2503 + $0x88] sm:$0xf]
  %v2539 = vld [vmem:[%s2503 + $0x8c] sm:$0xf]
  %v2540 = vld [vmem:[%s2503 + $0x90] sm:$0xf]
  %v2541 = vld [vmem:[%s2503 + $0x94] sm:$0xf]
  %v2542 = vld [vmem:[%s2503 + $0x98] sm:$0xf]
  %v2543 = vld [vmem:[%s2503 + $0x9c] sm:$0xf]
  %v2544 = vld [vmem:[%s2503 + $0xa0] sm:$0xf]
  %v2545 = vld [vmem:[%s2503 + $0xa4] sm:$0xf]
  %v2546 = vld [vmem:[%s2503 + $0xa8] sm:$0xf]
  %v2547 = vld [vmem:[%s2503 + $0xac] sm:$0xf]
  %v2548 = vld [vmem:[%s2503 + $0xb0] sm:$0xf]
  %v2549 = vld [vmem:[%s2503 + $0xb4] sm:$0xf]
  %v2550 = vld [vmem:[%s2503 + $0xb8] sm:$0xf]
  %v2551 = vld [vmem:[%s2503 + $0xbc] sm:$0xf]
  %v2552 = vld [vmem:[%s2503 + $0xc0] sm:$0xf]
  %v2553 = vld [vmem:[%s2503 + $0xc4] sm:$0xf]
  %v2554 = vld [vmem:[%s2503 + $0xc8] sm:$0xf]
  %v2555 = vld [vmem:[%s2503 + $0xcc] sm:$0xf]
  %v2556 = vld [vmem:[%s2503 + $0xd0] sm:$0xf]
  %v2557 = vld [vmem:[%s2503 + $0xd4] sm:$0xf]
  %v2558 = vld [vmem:[%s2503 + $0xd8] sm:$0xf]
  %v2559 = vld [vmem:[%s2503 + $0xdc] sm:$0xf]
  %v2560 = vld [vmem:[%s2503 + $0xe0] sm:$0xf]
  %v2561 = vld [vmem:[%s2503 + $0xe4] sm:$0xf]
  %v2562 = vld [vmem:[%s2503 + $0xe8] sm:$0xf]
  %v2563 = vld [vmem:[%s2503 + $0xec] sm:$0xf]
  %v2564 = vld [vmem:[%s2503 + $0xf0] sm:$0xf]
  %v2565 = vld [vmem:[%s2503 + $0xf4] sm:$0xf]
  %v2566 = vld [vmem:[%s2503 + $0xf8] sm:$0xf]
  %v2567 = vld [vmem:[%s2503 + $0xfc] sm:$0xf]
  %v2568 = vld [vmem:[%s2503 + $0x100] sm:$0xf]
  %v2569 = vld [vmem:[%s2503 + $0x104] sm:$0xf]
  %v2570 = vld [vmem:[%s2503 + $0x108] sm:$0xf]
  %v2571 = vld [vmem:[%s2503 + $0x10c] sm:$0xf]
  %v2572 = vld [vmem:[%s2503 + $0x110] sm:$0xf]
  %v2573 = vld [vmem:[%s2503 + $0x114] sm:$0xf]
  %v2574 = vld [vmem:[%s2503 + $0x118] sm:$0xf]
  %v2575 = vld [vmem:[%s2503 + $0x11c] sm:$0xf]
  %v2576 = vld [vmem:[%s2503 + $0x120] sm:$0xf]
  %v2577 = vld [vmem:[%s2503 + $0x124] sm:$0xf]
  %v2578 = vld [vmem:[%s2503 + $0x128] sm:$0xf]
  %v2579 = vld [vmem:[%s2503 + $0x12c] sm:$0xf]
  %v2580 = vld [vmem:[%s2503 + $0x130] sm:$0xf]
  %v2581 = vld [vmem:[%s2503 + $0x134] sm:$0xf]
  %v2582 = vld [vmem:[%s2503 + $0x138] sm:$0xf]
  %v2583 = vld [vmem:[%s2503 + $0x13c] sm:$0xf]
  %v2584 = vld [vmem:[%s2503 + $0x140] sm:$0xf]
  %v2666 = vunpack.c.l.b16 %v2504
  %v2667 = vunpack.c.l.b16 %v2505
  %v2668 = vunpack.c.l.b16 %v2506
  %v2669 = vunpack.c.l.b16 %v2507
  %v2670 = vunpack.c.l.b16 %v2508
  %v2671 = vunpack.c.l.b16 %v2509
  %v2672 = vunpack.c.l.b16 %v2510
  %v2673 = vunpack.c.l.b16 %v2511
  %v2674 = vunpack.c.l.b16 %v2512
  %v2675 = vunpack.c.l.b16 %v2513
  %v2676 = vunpack.c.l.b16 %v2514
  %v2677 = vunpack.c.l.b16 %v2515
  %v2678 = vunpack.c.l.b16 %v2516
  %v2679 = vunpack.c.l.b16 %v2517
  %v2680 = vunpack.c.l.b16 %v2518
  %v2681 = vunpack.c.l.b16 %v2519
  %v2682 = vunpack.c.l.b16 %v2520
  %v2683 = vunpack.c.l.b16 %v2521
  %v2684 = vunpack.c.l.b16 %v2522
  %v2685 = vunpack.c.l.b16 %v2523
  %v2686 = vunpack.c.l.b16 %v2524
  %v2687 = vunpack.c.l.b16 %v2525
  %v2688 = vunpack.c.l.b16 %v2526
  %v2689 = vunpack.c.l.b16 %v2527
  %v2690 = vunpack.c.l.b16 %v2528
  %v2691 = vunpack.c.l.b16 %v2529
  %v2692 = vunpack.c.l.b16 %v2530
  %v2693 = vunpack.c.l.b16 %v2531
  %v2694 = vunpack.c.l.b16 %v2532
  %v2695 = vunpack.c.l.b16 %v2533
  %v2696 = vunpack.c.l.b16 %v2534
  %v2697 = vunpack.c.l.b16 %v2535
  %v2698 = vunpack.c.l.b16 %v2536
  %v2699 = vunpack.c.l.b16 %v2537
  %v2700 = vunpack.c.l.b16 %v2538
  %v2701 = vunpack.c.l.b16 %v2539
  %v2702 = vunpack.c.l.b16 %v2540
  %v2703 = vunpack.c.l.b16 %v2541
  %v2704 = vunpack.c.l.b16 %v2542
  %v2705 = vunpack.c.l.b16 %v2543
  %v2706 = vunpack.c.l.b16 %v2544
  %v2707 = vunpack.c.l.b16 %v2545
  %v2708 = vunpack.c.l.b16 %v2546
  %v2709 = vunpack.c.l.b16 %v2547
  %v2710 = vunpack.c.l.b16 %v2548
  %v2711 = vunpack.c.l.b16 %v2549
  %v2712 = vunpack.c.l.b16 %v2550
  %v2713 = vunpack.c.l.b16 %v2551
  %v2714 = vunpack.c.l.b16 %v2552
  %v2715 = vunpack.c.l.b16 %v2553
  %v2716 = vunpack.c.l.b16 %v2554
  %v2717 = vunpack.c.l.b16 %v2555
  %v2718 = vunpack.c.l.b16 %v2556
  %v2719 = vunpack.c.l.b16 %v2557
  %v2720 = vunpack.c.l.b16 %v2558
  %v2721 = vunpack.c.l.b16 %v2559
  %v2722 = vunpack.c.l.b16 %v2560
  %v2723 = vunpack.c.l.b16 %v2561
  %v2724 = vunpack.c.l.b16 %v2562
  %v2725 = vunpack.c.l.b16 %v2563
  %v2726 = vunpack.c.l.b16 %v2564
  %v2727 = vunpack.c.l.b16 %v2565
  %v2728 = vunpack.c.l.b16 %v2566
  %v2729 = vunpack.c.l.b16 %v2567
  %v2730 = vunpack.c.l.b16 %v2568
  %v2731 = vunpack.c.l.b16 %v2569
  %v2732 = vunpack.c.l.b16 %v2570
  %v2733 = vunpack.c.l.b16 %v2571
  %v2734 = vunpack.c.l.b16 %v2572
  %v2735 = vunpack.c.l.b16 %v2573
  %v2736 = vunpack.c.l.b16 %v2574
  %v2737 = vunpack.c.l.b16 %v2575
  %v2738 = vunpack.c.l.b16 %v2576
  %v2739 = vunpack.c.l.b16 %v2577
  %v2740 = vunpack.c.l.b16 %v2578
  %v2741 = vunpack.c.l.b16 %v2579
  %v2742 = vunpack.c.l.b16 %v2580
  %v2743 = vunpack.c.l.b16 %v2581
  %v2744 = vunpack.c.l.b16 %v2582
  %v2745 = vunpack.c.l.b16 %v2583
  %v2746 = vunpack.c.l.b16 %v2584
  %v2747 = vpack.c.b16 %v2667, %v2666
  %v2748 = vpack.c.b16 %v2669, %v2668
  %v2749 = vpack.c.b16 %v2671, %v2670
  %v2750 = vpack.c.b16 %v2673, %v2672
  %v2751 = vpack.c.b16 %v2675, %v2674
  %v2752 = vpack.c.b16 %v2677, %v2676
  %v2753 = vpack.c.b16 %v2679, %v2678
  %v2754 = vpack.c.b16 %v2681, %v2680
  %v2755 = vpack.c.b16 %v2683, %v2682
  %v2756 = vpack.c.b16 %v2685, %v2684
  %v2757 = vpack.c.b16 %v2687, %v2686
  %v2758 = vpack.c.b16 %v2689, %v2688
  %v2759 = vpack.c.b16 %v2691, %v2690
  %v2760 = vpack.c.b16 %v2693, %v2692
  %v2761 = vpack.c.b16 %v2695, %v2694
  %v2762 = vpack.c.b16 %v2697, %v2696
  %v2763 = vpack.c.b16 %v2699, %v2698
  %v2764 = vpack.c.b16 %v2701, %v2700
  %v2765 = vpack.c.b16 %v2703, %v2702
  %v2766 = vpack.c.b16 %v2705, %v2704
  %v2767 = vpack.c.b16 %v2707, %v2706
  %v2768 = vpack.c.b16 %v2709, %v2708
  %v2769 = vpack.c.b16 %v2711, %v2710
  %v2770 = vpack.c.b16 %v2713, %v2712
  %v2771 = vpack.c.b16 %v2715, %v2714
  %v2772 = vpack.c.b16 %v2717, %v2716
  %v2773 = vpack.c.b16 %v2719, %v2718
  %v2774 = vpack.c.b16 %v2721, %v2720
  %v2775 = vpack.c.b16 %v2723, %v2722
  %v2776 = vpack.c.b16 %v2725, %v2724
  %v2777 = vpack.c.b16 %v2727, %v2726
  %v2778 = vpack.c.b16 %v2729, %v2728
  %v2779 = vpack.c.b16 %v2731, %v2730
  %v2780 = vpack.c.b16 %v2733, %v2732
  %v2781 = vpack.c.b16 %v2735, %v2734
  %v2782 = vpack.c.b16 %v2737, %v2736
  %v2783 = vpack.c.b16 %v2739, %v2738
  %v2784 = vpack.c.b16 %v2741, %v2740
  %v2785 = vpack.c.b16 %v2743, %v2742
  %v2786 = vpack.c.b16 %v2745, %v2744
  %v2787 = vpack.c.b16 %v2746, %v2746
  %v2789 = vsel %vm314, %v2747, 0
  %v2792 = vsel %vm314, %v2748, 0
  %v2795 = vsel %vm314, %v2749, 0
  %v2798 = vsel %vm314, %v2750, 0
  %v2801 = vsel %vm314, %v2751, 0
  %v2804 = vsel %vm314, %v2752, 0
  %v2807 = vsel %vm314, %v2753, 0
  %v2810 = vsel %vm314, %v2754, 0
  %v2813 = vsel %vm314, %v2755, 0
  %v2816 = vsel %vm314, %v2756, 0
  %v2819 = vsel %vm314, %v2757, 0
  %v2822 = vsel %vm314, %v2758, 0
  %v2825 = vsel %vm314, %v2759, 0
  %v2828 = vsel %vm314, %v2760, 0
  %v2831 = vsel %vm314, %v2761, 0
  %v2834 = vsel %vm314, %v2762, 0
  %v2837 = vsel %vm314, %v2763, 0
  %v2840 = vsel %vm314, %v2764, 0
  %v2843 = vsel %vm314, %v2765, 0
  %v2846 = vsel %vm314, %v2766, 0
  %v2849 = vsel %vm314, %v2767, 0
  %v2852 = vsel %vm314, %v2768, 0
  %v2855 = vsel %vm314, %v2769, 0
  %v2858 = vsel %vm314, %v2770, 0
  %v2861 = vsel %vm314, %v2771, 0
  %v2864 = vsel %vm314, %v2772, 0
  %v2867 = vsel %vm314, %v2773, 0
  %v2870 = vsel %vm314, %v2774, 0
  %v2873 = vsel %vm314, %v2775, 0
  %v2876 = vsel %vm314, %v2776, 0
  %v2879 = vsel %vm314, %v2777, 0
  %v2882 = vsel %vm314, %v2778, 0
  %v2885 = vsel %vm314, %v2779, 0
  %v2888 = vsel %vm314, %v2780, 0
  %v2891 = vsel %vm314, %v2781, 0
  %v2894 = vsel %vm314, %v2782, 0
  %v2897 = vsel %vm314, %v2783, 0
  %v2900 = vsel %vm314, %v2784, 0
  %v2903 = vsel %vm314, %v2785, 0
  %v2906 = vsel %vm314, %v2786, 0
  %v2909 = vsel %vm314, %v2787, 0
  %2911 = vmatprep.subr.bf16.mxu0 0
  %2912 = vmatpush1.bf16.msra.mxu0 0
  %2913 = vmatprep.subr.bf16.mxu0 0
  %2914 = vmatpush1.bf16.msra.mxu0 0
  %2915 = vmatprep.subr.bf16.mxu0 0
  %2916 = vmatpush1.bf16.msra.mxu0 0
  %2917 = vmatprep.subr.bf16.mxu0 0
  %2918 = vmatpush1.bf16.msra.mxu0 0
  %2919 = vmatprep.subr.bf16.mxu0 0
  %2920 = vmatpush1.bf16.msra.mxu0 0
  %2921 = vmatprep.subr.bf16.mxu0 0
  %2922 = vmatpush1.bf16.msra.mxu0 0
  %2923 = vmatprep.subr.bf16.mxu0 0
  %2924 = vmatpush1.bf16.msra.mxu0 %v443
  %2925 = vmatprep.subr.bf16.mxu0 0
  %2926 = vmatpush1.bf16.msra.mxu0 %v311
  %2927 = vmatprep.subr.bf16.mxu0 0
  %2928 = vmatpush2.bf16.msra.mxu0 0
  %2929 = vmatprep.subr.bf16.mxu0 0
  %2930 = vmatpush2.bf16.msra.mxu0 0
  %2931 = vmatprep.subr.bf16.mxu0 0
  %2932 = vmatpush2.bf16.msra.mxu0 0
  %2933 = vmatprep.subr.bf16.mxu0 0
  %2934 = vmatpush2.bf16.msra.mxu0 0
  %2935 = vmatprep.subr.bf16.mxu0 0
  %2936 = vmatpush2.bf16.msra.mxu0 0
  %2937 = vmatprep.subr.bf16.mxu0 0
  %2938 = vmatpush2.bf16.msra.mxu0 0
  %2939 = vmatprep.subr.bf16.mxu0 0
  %2940 = vmatpush2.bf16.msra.mxu0 0
  %2941 = vmatprep.subr.bf16.mxu0 0
  %2942 = vmatpush2.bf16.msra.mxu0 0
  %2943 = vmatprep.mubr.bf16.mxu0 0
  %2944 = vmatmul.mubr.bf16.gmra.mxu0 %v2789
  %v2945 = vpop.f32.mrf.mxu0
  %v2946 = vadd.f32 0.0, %v2945
  %v2947 = vpop.f32.mrf.mxu0
  %v2948 = vpop.f32.mrf.mxu0
  %v2949 = vadd.f32 0.0, %v2948
  %v2950 = vpop.f32.mrf.mxu0
  %2951 = vmatprep.mubr.bf16.mxu0 0
  %2952 = vmatmul.mubr.bf16.gmra.mxu0 %v2792
  %v2953 = vpop.f32.mrf.mxu0
  %v2954 = vadd.f32 0.0, %v2953
  %v2955 = vpop.f32.mrf.mxu0
  %v2956 = vpop.f32.mrf.mxu0
  %v2957 = vadd.f32 0.0, %v2956
  %v2958 = vpop.f32.mrf.mxu0
  %2959 = vmatprep.mubr.bf16.mxu0 0
  %2960 = vmatmul.mubr.bf16.gmra.mxu0 %v2795
  %v2961 = vpop.f32.mrf.mxu0
  %v2962 = vadd.f32 0.0, %v2961
  %v2963 = vpop.f32.mrf.mxu0
  %v2964 = vpop.f32.mrf.mxu0
  %v2965 = vadd.f32 0.0, %v2964
  %v2966 = vpop.f32.mrf.mxu0
  %2967 = vmatprep.mubr.bf16.mxu0 0
  %2968 = vmatmul.mubr.bf16.gmra.mxu0 %v2798
  %v2969 = vpop.f32.mrf.mxu0
  %v2970 = vadd.f32 0.0, %v2969
  %v2971 = vpop.f32.mrf.mxu0
  %v2972 = vpop.f32.mrf.mxu0
  %v2973 = vadd.f32 0.0, %v2972
  %v2974 = vpop.f32.mrf.mxu0
  %2975 = vmatprep.mubr.bf16.mxu0 0
  %2976 = vmatmul.mubr.bf16.gmra.mxu0 %v2801
  %v2977 = vpop.f32.mrf.mxu0
  %v2978 = vadd.f32 0.0, %v2977
  %v2979 = vpop.f32.mrf.mxu0
  %v2980 = vpop.f32.mrf.mxu0
  %v2981 = vadd.f32 0.0, %v2980
  %v2982 = vpop.f32.mrf.mxu0
  %2983 = vmatprep.mubr.bf16.mxu0 0
  %2984 = vmatmul.mubr.bf16.gmra.mxu0 %v2804
  %v2985 = vpop.f32.mrf.mxu0
  %v2986 = vadd.f32 0.0, %v2985
  %v2987 = vpop.f32.mrf.mxu0
  %v2988 = vpop.f32.mrf.mxu0
  %v2989 = vadd.f32 0.0, %v2988
  %v2990 = vpop.f32.mrf.mxu0
  %2991 = vmatprep.mubr.bf16.mxu0 0
  %2992 = vmatmul.mubr.bf16.gmra.mxu0 %v2807
  %v2993 = vpop.f32.mrf.mxu0
  %v2994 = vadd.f32 0.0, %v2993
  %v2995 = vpop.f32.mrf.mxu0
  %v2996 = vpop.f32.mrf.mxu0
  %v2997 = vadd.f32 0.0, %v2996
  %v2998 = vpop.f32.mrf.mxu0
  %2999 = vmatprep.mubr.bf16.mxu0 0
  %3000 = vmatmul.mubr.bf16.gmra.mxu0 %v2810
  %v3001 = vpop.f32.mrf.mxu0
  %v3002 = vadd.f32 0.0, %v3001
  %v3003 = vpop.f32.mrf.mxu0
  %v3004 = vpop.f32.mrf.mxu0
  %v3005 = vadd.f32 0.0, %v3004
  %v3006 = vpop.f32.mrf.mxu0
  %3007 = vmatprep.mubr.bf16.mxu0 0
  %3008 = vmatmul.mubr.bf16.gmra.mxu0 %v2813
  %v3009 = vpop.f32.mrf.mxu0
  %v3010 = vadd.f32 0.0, %v3009
  %v3011 = vpop.f32.mrf.mxu0
  %v3012 = vpop.f32.mrf.mxu0
  %v3013 = vadd.f32 0.0, %v3012
  %v3014 = vpop.f32.mrf.mxu0
  %3015 = vmatprep.mubr.bf16.mxu0 0
  %3016 = vmatmul.mubr.bf16.gmra.mxu0 %v2816
  %v3017 = vpop.f32.mrf.mxu0
  %v3018 = vadd.f32 0.0, %v3017
  %v3019 = vpop.f32.mrf.mxu0
  %v3020 = vpop.f32.mrf.mxu0
  %v3021 = vadd.f32 0.0, %v3020
  %v3022 = vpop.f32.mrf.mxu0
  %3023 = vmatprep.mubr.bf16.mxu0 0
  %3024 = vmatmul.mubr.bf16.gmra.mxu0 %v2819
  %v3025 = vpop.f32.mrf.mxu0
  %v3026 = vadd.f32 0.0, %v3025
  %v3027 = vpop.f32.mrf.mxu0
  %v3028 = vpop.f32.mrf.mxu0
  %v3029 = vadd.f32 0.0, %v3028
  %v3030 = vpop.f32.mrf.mxu0
  %3031 = vmatprep.mubr.bf16.mxu0 0
  %3032 = vmatmul.mubr.bf16.gmra.mxu0 %v2822
  %v3033 = vpop.f32.mrf.mxu0
  %v3034 = vadd.f32 0.0, %v3033
  %v3035 = vpop.f32.mrf.mxu0
  %v3036 = vpop.f32.mrf.mxu0
  %v3037 = vadd.f32 0.0, %v3036
  %v3038 = vpop.f32.mrf.mxu0
  %3039 = vmatprep.mubr.bf16.mxu0 0
  %3040 = vmatmul.mubr.bf16.gmra.mxu0 %v2825
  %v3041 = vpop.f32.mrf.mxu0
  %v3042 = vadd.f32 0.0, %v3041
  %v3043 = vpop.f32.mrf.mxu0
  %v3044 = vpop.f32.mrf.mxu0
  %v3045 = vadd.f32 0.0, %v3044
  %v3046 = vpop.f32.mrf.mxu0
  %3047 = vmatprep.mubr.bf16.mxu0 0
  %3048 = vmatmul.mubr.bf16.gmra.mxu0 %v2828
  %v3049 = vpop.f32.mrf.mxu0
  %v3050 = vadd.f32 0.0, %v3049
  %v3051 = vpop.f32.mrf.mxu0
  %v3052 = vpop.f32.mrf.mxu0
  %v3053 = vadd.f32 0.0, %v3052
  %v3054 = vpop.f32.mrf.mxu0
  %3055 = vmatprep.mubr.bf16.mxu0 0
  %3056 = vmatmul.mubr.bf16.gmra.mxu0 %v2831
  %v3057 = vpop.f32.mrf.mxu0
  %v3058 = vadd.f32 0.0, %v3057
  %v3059 = vpop.f32.mrf.mxu0
  %v3060 = vpop.f32.mrf.mxu0
  %v3061 = vadd.f32 0.0, %v3060
  %v3062 = vpop.f32.mrf.mxu0
  %3063 = vmatprep.mubr.bf16.mxu0 0
  %3064 = vmatmul.mubr.bf16.gmra.mxu0 %v2834
  %v3065 = vpop.f32.mrf.mxu0
  %v3066 = vadd.f32 0.0, %v3065
  %v3067 = vpop.f32.mrf.mxu0
  %v3068 = vpop.f32.mrf.mxu0
  %v3069 = vadd.f32 0.0, %v3068
  %v3070 = vpop.f32.mrf.mxu0
  %3071 = vmatprep.mubr.bf16.mxu0 0
  %3072 = vmatmul.mubr.bf16.gmra.mxu0 %v2837
  %v3073 = vpop.f32.mrf.mxu0
  %v3074 = vadd.f32 0.0, %v3073
  %v3075 = vpop.f32.mrf.mxu0
  %v3076 = vpop.f32.mrf.mxu0
  %v3077 = vadd.f32 0.0, %v3076
  %v3078 = vpop.f32.mrf.mxu0
  %3079 = vmatprep.mubr.bf16.mxu0 0
  %3080 = vmatmul.mubr.bf16.gmra.mxu0 %v2840
  %v3081 = vpop.f32.mrf.mxu0
  %v3082 = vadd.f32 0.0, %v3081
  %v3083 = vpop.f32.mrf.mxu0
  %v3084 = vpop.f32.mrf.mxu0
  %v3085 = vadd.f32 0.0, %v3084
  %v3086 = vpop.f32.mrf.mxu0
  %3087 = vmatprep.mubr.bf16.mxu0 0
  %3088 = vmatmul.mubr.bf16.gmra.mxu0 %v2843
  %v3089 = vpop.f32.mrf.mxu0
  %v3090 = vadd.f32 0.0, %v3089
  %v3091 = vpop.f32.mrf.mxu0
  %v3092 = vpop.f32.mrf.mxu0
  %v3093 = vadd.f32 0.0, %v3092
  %v3094 = vpop.f32.mrf.mxu0
  %3095 = vmatprep.mubr.bf16.mxu0 0
  %3096 = vmatmul.mubr.bf16.gmra.mxu0 %v2846
  %v3097 = vpop.f32.mrf.mxu0
  %v3098 = vadd.f32 0.0, %v3097
  %v3099 = vpop.f32.mrf.mxu0
  %v3100 = vpop.f32.mrf.mxu0
  %v3101 = vadd.f32 0.0, %v3100
  %v3102 = vpop.f32.mrf.mxu0
  %3103 = vmatprep.mubr.bf16.mxu0 0
  %3104 = vmatmul.mubr.bf16.gmra.mxu0 %v2849
  %v3105 = vpop.f32.mrf.mxu0
  %v3106 = vadd.f32 0.0, %v3105
  %v3107 = vpop.f32.mrf.mxu0
  %v3108 = vpop.f32.mrf.mxu0
  %v3109 = vadd.f32 0.0, %v3108
  %v3110 = vpop.f32.mrf.mxu0
  %3111 = vmatprep.mubr.bf16.mxu0 0
  %3112 = vmatmul.mubr.bf16.gmra.mxu0 %v2852
  %v3113 = vpop.f32.mrf.mxu0
  %v3114 = vadd.f32 0.0, %v3113
  %v3115 = vpop.f32.mrf.mxu0
  %v3116 = vpop.f32.mrf.mxu0
  %v3117 = vadd.f32 0.0, %v3116
  %v3118 = vpop.f32.mrf.mxu0
  %3119 = vmatprep.mubr.bf16.mxu0 0
  %3120 = vmatmul.mubr.bf16.gmra.mxu0 %v2855
  %v3121 = vpop.f32.mrf.mxu0
  %v3122 = vadd.f32 0.0, %v3121
  %v3123 = vpop.f32.mrf.mxu0
  %v3124 = vpop.f32.mrf.mxu0
  %v3125 = vadd.f32 0.0, %v3124
  %v3126 = vpop.f32.mrf.mxu0
  %3127 = vmatprep.mubr.bf16.mxu0 0
  %3128 = vmatmul.mubr.bf16.gmra.mxu0 %v2858
  %v3129 = vpop.f32.mrf.mxu0
  %v3130 = vadd.f32 0.0, %v3129
  %v3131 = vpop.f32.mrf.mxu0
  %v3132 = vpop.f32.mrf.mxu0
  %v3133 = vadd.f32 0.0, %v3132
  %v3134 = vpop.f32.mrf.mxu0
  %3135 = vmatprep.mubr.bf16.mxu0 0
  %3136 = vmatmul.mubr.bf16.gmra.mxu0 %v2861
  %v3137 = vpop.f32.mrf.mxu0
  %v3138 = vadd.f32 0.0, %v3137
  %v3139 = vpop.f32.mrf.mxu0
  %v3140 = vpop.f32.mrf.mxu0
  %v3141 = vadd.f32 0.0, %v3140
  %v3142 = vpop.f32.mrf.mxu0
  %3143 = vmatprep.mubr.bf16.mxu0 0
  %3144 = vmatmul.mubr.bf16.gmra.mxu0 %v2864
  %v3145 = vpop.f32.mrf.mxu0
  %v3146 = vadd.f32 0.0, %v3145
  %v3147 = vpop.f32.mrf.mxu0
  %v3148 = vpop.f32.mrf.mxu0
  %v3149 = vadd.f32 0.0, %v3148
  %v3150 = vpop.f32.mrf.mxu0
  %3151 = vmatprep.mubr.bf16.mxu0 0
  %3152 = vmatmul.mubr.bf16.gmra.mxu0 %v2867
  %v3153 = vpop.f32.mrf.mxu0
  %v3154 = vadd.f32 0.0, %v3153
  %v3155 = vpop.f32.mrf.mxu0
  %v3156 = vpop.f32.mrf.mxu0
  %v3157 = vadd.f32 0.0, %v3156
  %v3158 = vpop.f32.mrf.mxu0
  %3159 = vmatprep.mubr.bf16.mxu0 0
  %3160 = vmatmul.mubr.bf16.gmra.mxu0 %v2870
  %v3161 = vpop.f32.mrf.mxu0
  %v3162 = vadd.f32 0.0, %v3161
  %v3163 = vpop.f32.mrf.mxu0
  %v3164 = vpop.f32.mrf.mxu0
  %v3165 = vadd.f32 0.0, %v3164
  %v3166 = vpop.f32.mrf.mxu0
  %3167 = vmatprep.mubr.bf16.mxu0 0
  %3168 = vmatmul.mubr.bf16.gmra.mxu0 %v2873
  %v3169 = vpop.f32.mrf.mxu0
  %v3170 = vadd.f32 0.0, %v3169
  %v3171 = vpop.f32.mrf.mxu0
  %v3172 = vpop.f32.mrf.mxu0
  %v3173 = vadd.f32 0.0, %v3172
  %v3174 = vpop.f32.mrf.mxu0
  %3175 = vmatprep.mubr.bf16.mxu0 0
  %3176 = vmatmul.mubr.bf16.gmra.mxu0 %v2876
  %v3177 = vpop.f32.mrf.mxu0
  %v3178 = vadd.f32 0.0, %v3177
  %v3179 = vpop.f32.mrf.mxu0
  %v3180 = vpop.f32.mrf.mxu0
  %v3181 = vadd.f32 0.0, %v3180
  %v3182 = vpop.f32.mrf.mxu0
  %3183 = vmatprep.mubr.bf16.mxu0 0
  %3184 = vmatmul.mubr.bf16.gmra.mxu0 %v2879
  %v3185 = vpop.f32.mrf.mxu0
  %v3186 = vadd.f32 0.0, %v3185
  %v3187 = vpop.f32.mrf.mxu0
  %v3188 = vpop.f32.mrf.mxu0
  %v3189 = vadd.f32 0.0, %v3188
  %v3190 = vpop.f32.mrf.mxu0
  %3191 = vmatprep.mubr.bf16.mxu0 0
  %3192 = vmatmul.mubr.bf16.gmra.mxu0 %v2882
  %v3193 = vpop.f32.mrf.mxu0
  %v3194 = vadd.f32 0.0, %v3193
  %v3195 = vpop.f32.mrf.mxu0
  %v3196 = vpop.f32.mrf.mxu0
  %v3197 = vadd.f32 0.0, %v3196
  %v3198 = vpop.f32.mrf.mxu0
  %3199 = vmatprep.mubr.bf16.mxu0 0
  %3200 = vmatmul.mubr.bf16.gmra.mxu0 %v2885
  %v3201 = vpop.f32.mrf.mxu0
  %v3202 = vadd.f32 0.0, %v3201
  %v3203 = vpop.f32.mrf.mxu0
  %v3204 = vpop.f32.mrf.mxu0
  %v3205 = vadd.f32 0.0, %v3204
  %v3206 = vpop.f32.mrf.mxu0
  %3207 = vmatprep.mubr.bf16.mxu0 0
  %3208 = vmatmul.mubr.bf16.gmra.mxu0 %v2888
  %v3209 = vpop.f32.mrf.mxu0
  %v3210 = vadd.f32 0.0, %v3209
  %v3211 = vpop.f32.mrf.mxu0
  %v3212 = vpop.f32.mrf.mxu0
  %v3213 = vadd.f32 0.0, %v3212
  %v3214 = vpop.f32.mrf.mxu0
  %3215 = vmatprep.mubr.bf16.mxu0 0
  %3216 = vmatmul.mubr.bf16.gmra.mxu0 %v2891
  %v3217 = vpop.f32.mrf.mxu0
  %v3218 = vadd.f32 0.0, %v3217
  %v3219 = vpop.f32.mrf.mxu0
  %v3220 = vpop.f32.mrf.mxu0
  %v3221 = vadd.f32 0.0, %v3220
  %v3222 = vpop.f32.mrf.mxu0
  %3223 = vmatprep.mubr.bf16.mxu0 0
  %3224 = vmatmul.mubr.bf16.gmra.mxu0 %v2894
  %v3225 = vpop.f32.mrf.mxu0
  %v3226 = vadd.f32 0.0, %v3225
  %v3227 = vpop.f32.mrf.mxu0
  %v3228 = vpop.f32.mrf.mxu0
  %v3229 = vadd.f32 0.0, %v3228
  %v3230 = vpop.f32.mrf.mxu0
  %3231 = vmatprep.mubr.bf16.mxu0 0
  %3232 = vmatmul.mubr.bf16.gmra.mxu0 %v2897
  %v3233 = vpop.f32.mrf.mxu0
  %v3234 = vadd.f32 0.0, %v3233
  %v3235 = vpop.f32.mrf.mxu0
  %v3236 = vpop.f32.mrf.mxu0
  %v3237 = vadd.f32 0.0, %v3236
  %v3238 = vpop.f32.mrf.mxu0
  %3239 = vmatprep.mubr.bf16.mxu0 0
  %3240 = vmatmul.mubr.bf16.gmra.mxu0 %v2900
  %v3241 = vpop.f32.mrf.mxu0
  %v3242 = vadd.f32 0.0, %v3241
  %v3243 = vpop.f32.mrf.mxu0
  %v3244 = vpop.f32.mrf.mxu0
  %v3245 = vadd.f32 0.0, %v3244
  %v3246 = vpop.f32.mrf.mxu0
  %3247 = vmatprep.mubr.bf16.mxu0 0
  %3248 = vmatmul.mubr.bf16.gmra.mxu0 %v2903
  %v3249 = vpop.f32.mrf.mxu0
  %v3250 = vadd.f32 0.0, %v3249
  %v3251 = vpop.f32.mrf.mxu0
  %v3252 = vpop.f32.mrf.mxu0
  %v3253 = vadd.f32 0.0, %v3252
  %v3254 = vpop.f32.mrf.mxu0
  %3255 = vmatprep.mubr.bf16.mxu0 0
  %3256 = vmatmul.mubr.bf16.gmra.mxu0 %v2906
  %v3257 = vpop.f32.mrf.mxu0
  %v3258 = vadd.f32 0.0, %v3257
  %v3259 = vpop.f32.mrf.mxu0
  %v3260 = vpop.f32.mrf.mxu0
  %v3261 = vadd.f32 0.0, %v3260
  %v3262 = vpop.f32.mrf.mxu0
  %3263 = vmatprep.mubr.bf16.mxu0 0
  %3264 = vmatmul.mubr.bf16.gmra.mxu0 %v2909
  %v3265 = vpop.f32.mrf.mxu0
  %v3266 = vadd.f32 0.0, %v3265
  %v3267 = vpop.f32.mrf.mxu0
  %v3268 = vpop.f32.mrf.mxu0
  %v3269 = vpop.f32.mrf.mxu0
  %3270 = vdwg.mxu0
  %v3271 = vmax.f32 %v2422, %v2946
  %v3272 = vmax.f32 %v2423, %v2949
  %v3273 = vmax.f32 %v2424, %v2954
  %v3274 = vmax.f32 %v2425, %v2957
  %v3275 = vmax.f32 %v2426, %v2962
  %v3276 = vmax.f32 %v2427, %v2965
  %v3277 = vmax.f32 %v2428, %v2970
  %v3278 = vmax.f32 %v2429, %v2973
  %v3279 = vmax.f32 %v2430, %v2978
  %v3280 = vmax.f32 %v2431, %v2981
  %v3281 = vmax.f32 %v2432, %v2986
  %v3282 = vmax.f32 %v2433, %v2989
  %v3283 = vmax.f32 %v2434, %v2994
  %v3284 = vmax.f32 %v2435, %v2997
  %v3285 = vmax.f32 %v2436, %v3002
  %v3286 = vmax.f32 %v2437, %v3005
  %v3287 = vmax.f32 %v2438, %v3010
  %v3288 = vmax.f32 %v2439, %v3013
  %v3289 = vmax.f32 %v2440, %v3018
  %v3290 = vmax.f32 %v2441, %v3021
  %v3291 = vmax.f32 %v2442, %v3026
  %v3292 = vmax.f32 %v2443, %v3029
  %v3293 = vmax.f32 %v2444, %v3034
  %v3294 = vmax.f32 %v2445, %v3037
  %v3295 = vmax.f32 %v2446, %v3042
  %v3296 = vmax.f32 %v2447, %v3045
  %v3297 = vmax.f32 %v2448, %v3050
  %v3298 = vmax.f32 %v2449, %v3053
  %v3299 = vmax.f32 %v2450, %v3058
  %v3300 = vmax.f32 %v2451, %v3061
  %v3301 = vmax.f32 %v2452, %v3066
  %v3302 = vmax.f32 %v2453, %v3069
  %v3303 = vmax.f32 %v2454, %v3074
  %v3304 = vmax.f32 %v2455, %v3077
  %v3305 = vmax.f32 %v2456, %v3082
  %v3306 = vmax.f32 %v2457, %v3085
  %v3307 = vmax.f32 %v2458, %v3090
  %v3308 = vmax.f32 %v2459, %v3093
  %v3309 = vmax.f32 %v2460, %v3098
  %v3310 = vmax.f32 %v2461, %v3101
  %v3311 = vmax.f32 %v2462, %v3106
  %v3312 = vmax.f32 %v2463, %v3109
  %v3313 = vmax.f32 %v2464, %v3114
  %v3314 = vmax.f32 %v2465, %v3117
  %v3315 = vmax.f32 %v2466, %v3122
  %v3316 = vmax.f32 %v2467, %v3125
  %v3317 = vmax.f32 %v2468, %v3130
  %v3318 = vmax.f32 %v2469, %v3133
  %v3319 = vmax.f32 %v2470, %v3138
  %v3320 = vmax.f32 %v2471, %v3141
  %v3321 = vmax.f32 %v2472, %v3146
  %v3322 = vmax.f32 %v2473, %v3149
  %v3323 = vmax.f32 %v2474, %v3154
  %v3324 = vmax.f32 %v2475, %v3157
  %v3325 = vmax.f32 %v2476, %v3162
  %v3326 = vmax.f32 %v2477, %v3165
  %v3327 = vmax.f32 %v2478, %v3170
  %v3328 = vmax.f32 %v2479, %v3173
  %v3329 = vmax.f32 %v2480, %v3178
  %v3330 = vmax.f32 %v2481, %v3181
  %v3331 = vmax.f32 %v2482, %v3186
  %v3332 = vmax.f32 %v2483, %v3189
  %v3333 = vmax.f32 %v2484, %v3194
  %v3334 = vmax.f32 %v2485, %v3197
  %v3335 = vmax.f32 %v2486, %v3202
  %v3336 = vmax.f32 %v2487, %v3205
  %v3337 = vmax.f32 %v2488, %v3210
  %v3338 = vmax.f32 %v2489, %v3213
  %v3339 = vmax.f32 %v2490, %v3218
  %v3340 = vmax.f32 %v2491, %v3221
  %v3341 = vmax.f32 %v2492, %v3226
  %v3342 = vmax.f32 %v2493, %v3229
  %v3343 = vmax.f32 %v2494, %v3234
  %v3344 = vmax.f32 %v2495, %v3237
  %v3345 = vmax.f32 %v2496, %v3242
  %v3346 = vmax.f32 %v2497, %v3245
  %v3347 = vmax.f32 %v2498, %v3250
  %v3348 = vmax.f32 %v2499, %v3253
  %v3349 = vmax.f32 %v2500, %v3258
  %v3350 = vmax.f32 %v2501, %v3261
  %v3351 = vmax.f32 %v2502, %v3266
  %v3352 = vld [vmem:[%s2] sm:$0x1]
  %v3354 = vlaneseq
  %v3355 = vshrl.u32 %v3354, 7
  %v3356 = vsub.s32 0, %v3355
  %v3357 = vrot.slane %v3352, %v3356
  %v3359 = vadd.f32 %v3271, %v3357
  %v3360 = vadd.f32 %v3272, %v3357
  %v3361 = vadd.f32 %v3273, %v3357
  %v3362 = vadd.f32 %v3274, %v3357
  %v3363 = vadd.f32 %v3275, %v3357
  %v3364 = vadd.f32 %v3276, %v3357
  %v3365 = vadd.f32 %v3277, %v3357
  %v3366 = vadd.f32 %v3278, %v3357
  %v3367 = vadd.f32 %v3279, %v3357
  %v3368 = vadd.f32 %v3280, %v3357
  %v3369 = vadd.f32 %v3281, %v3357
  %v3370 = vadd.f32 %v3282, %v3357
  %v3371 = vadd.f32 %v3283, %v3357
  %v3372 = vadd.f32 %v3284, %v3357
  %v3373 = vadd.f32 %v3285, %v3357
  %v3374 = vadd.f32 %v3286, %v3357
  %v3375 = vadd.f32 %v3287, %v3357
  %v3376 = vadd.f32 %v3288, %v3357
  %v3377 = vadd.f32 %v3289, %v3357
  %v3378 = vadd.f32 %v3290, %v3357
  %v3379 = vadd.f32 %v3291, %v3357
  %v3380 = vadd.f32 %v3292, %v3357
  %v3381 = vadd.f32 %v3293, %v3357
  %v3382 = vadd.f32 %v3294, %v3357
  %v3383 = vadd.f32 %v3295, %v3357
  %v3384 = vadd.f32 %v3296, %v3357
  %v3385 = vadd.f32 %v3297, %v3357
  %v3386 = vadd.f32 %v3298, %v3357
  %v3387 = vadd.f32 %v3299, %v3357
  %v3388 = vadd.f32 %v3300, %v3357
  %v3389 = vadd.f32 %v3301, %v3357
  %v3390 = vadd.f32 %v3302, %v3357
  %v3391 = vadd.f32 %v3303, %v3357
  %v3392 = vadd.f32 %v3304, %v3357
  %v3393 = vadd.f32 %v3305, %v3357
  %v3394 = vadd.f32 %v3306, %v3357
  %v3395 = vadd.f32 %v3307, %v3357
  %v3396 = vadd.f32 %v3308, %v3357
  %v3397 = vadd.f32 %v3309, %v3357
  %v3398 = vadd.f32 %v3310, %v3357
  %v3399 = vadd.f32 %v3311, %v3357
  %v3400 = vadd.f32 %v3312, %v3357
  %v3401 = vadd.f32 %v3313, %v3357
  %v3402 = vadd.f32 %v3314, %v3357
  %v3403 = vadd.f32 %v3315, %v3357
  %v3404 = vadd.f32 %v3316, %v3357
  %v3405 = vadd.f32 %v3317, %v3357
  %v3406 = vadd.f32 %v3318, %v3357
  %v3407 = vadd.f32 %v3319, %v3357
  %v3408 = vadd.f32 %v3320, %v3357
  %v3409 = vadd.f32 %v3321, %v3357
  %v3410 = vadd.f32 %v3322, %v3357
  %v3411 = vadd.f32 %v3323, %v3357
  %v3412 = vadd.f32 %v3324, %v3357
  %v3413 = vadd.f32 %v3325, %v3357
  %v3414 = vadd.f32 %v3326, %v3357
  %v3415 = vadd.f32 %v3327, %v3357
  %v3416 = vadd.f32 %v3328, %v3357
  %v3417 = vadd.f32 %v3329, %v3357
  %v3418 = vadd.f32 %v3330, %v3357
  %v3419 = vadd.f32 %v3331, %v3357
  %v3420 = vadd.f32 %v3332, %v3357
  %v3421 = vadd.f32 %v3333, %v3357
  %v3422 = vadd.f32 %v3334, %v3357
  %v3423 = vadd.f32 %v3335, %v3357
  %v3424 = vadd.f32 %v3336, %v3357
  %v3425 = vadd.f32 %v3337, %v3357
  %v3426 = vadd.f32 %v3338, %v3357
  %v3427 = vadd.f32 %v3339, %v3357
  %v3428 = vadd.f32 %v3340, %v3357
  %v3429 = vadd.f32 %v3341, %v3357
  %v3430 = vadd.f32 %v3342, %v3357
  %v3431 = vadd.f32 %v3343, %v3357
  %v3432 = vadd.f32 %v3344, %v3357
  %v3433 = vadd.f32 %v3345, %v3357
  %v3434 = vadd.f32 %v3346, %v3357
  %v3435 = vadd.f32 %v3347, %v3357
  %v3436 = vadd.f32 %v3348, %v3357
  %v3437 = vadd.f32 %v3349, %v3357
  %v3438 = vadd.f32 %v3350, %v3357
  %v3439 = vadd.f32 %v3351, %v3357
  %v3440 = vmax.f32 %v3359, 0.0
  %v3441 = vmax.f32 %v3360, 0.0
  %v3442 = vmax.f32 %v3361, 0.0
  %v3443 = vmax.f32 %v3362, 0.0
  %v3444 = vmax.f32 %v3363, 0.0
  %v3445 = vmax.f32 %v3364, 0.0
  %v3446 = vmax.f32 %v3365, 0.0
  %v3447 = vmax.f32 %v3366, 0.0
  %v3448 = vmax.f32 %v3367, 0.0
  %v3449 = vmax.f32 %v3368, 0.0
  %v3450 = vmax.f32 %v3369, 0.0
  %v3451 = vmax.f32 %v3370, 0.0
  %v3452 = vmax.f32 %v3371, 0.0
  %v3453 = vmax.f32 %v3372, 0.0
  %v3454 = vmax.f32 %v3373, 0.0
  %v3455 = vmax.f32 %v3374, 0.0
  %v3456 = vmax.f32 %v3375, 0.0
  %v3457 = vmax.f32 %v3376, 0.0
  %v3458 = vmax.f32 %v3377, 0.0
  %v3459 = vmax.f32 %v3378, 0.0
  %v3460 = vmax.f32 %v3379, 0.0
  %v3461 = vmax.f32 %v3380, 0.0
  %v3462 = vmax.f32 %v3381, 0.0
  %v3463 = vmax.f32 %v3382, 0.0
  %v3464 = vmax.f32 %v3383, 0.0
  %v3465 = vmax.f32 %v3384, 0.0
  %v3466 = vmax.f32 %v3385, 0.0
  %v3467 = vmax.f32 %v3386, 0.0
  %v3468 = vmax.f32 %v3387, 0.0
  %v3469 = vmax.f32 %v3388, 0.0
  %v3470 = vmax.f32 %v3389, 0.0
  %v3471 = vmax.f32 %v3390, 0.0
  %v3472 = vmax.f32 %v3391, 0.0
  %v3473 = vmax.f32 %v3392, 0.0
  %v3474 = vmax.f32 %v3393, 0.0
  %v3475 = vmax.f32 %v3394, 0.0
  %v3476 = vmax.f32 %v3395, 0.0
  %v3477 = vmax.f32 %v3396, 0.0
  %v3478 = vmax.f32 %v3397, 0.0
  %v3479 = vmax.f32 %v3398, 0.0
  %v3480 = vmax.f32 %v3399, 0.0
  %v3481 = vmax.f32 %v3400, 0.0
  %v3482 = vmax.f32 %v3401, 0.0
  %v3483 = vmax.f32 %v3402, 0.0
  %v3484 = vmax.f32 %v3403, 0.0
  %v3485 = vmax.f32 %v3404, 0.0
  %v3486 = vmax.f32 %v3405, 0.0
  %v3487 = vmax.f32 %v3406, 0.0
  %v3488 = vmax.f32 %v3407, 0.0
  %v3489 = vmax.f32 %v3408, 0.0
  %v3490 = vmax.f32 %v3409, 0.0
  %v3491 = vmax.f32 %v3410, 0.0
  %v3492 = vmax.f32 %v3411, 0.0
  %v3493 = vmax.f32 %v3412, 0.0
  %v3494 = vmax.f32 %v3413, 0.0
  %v3495 = vmax.f32 %v3414, 0.0
  %v3496 = vmax.f32 %v3415, 0.0
  %v3497 = vmax.f32 %v3416, 0.0
  %v3498 = vmax.f32 %v3417, 0.0
  %v3499 = vmax.f32 %v3418, 0.0
  %v3500 = vmax.f32 %v3419, 0.0
  %v3501 = vmax.f32 %v3420, 0.0
  %v3502 = vmax.f32 %v3421, 0.0
  %v3503 = vmax.f32 %v3422, 0.0
  %v3504 = vmax.f32 %v3423, 0.0
  %v3505 = vmax.f32 %v3424, 0.0
  %v3506 = vmax.f32 %v3425, 0.0
  %v3507 = vmax.f32 %v3426, 0.0
  %v3508 = vmax.f32 %v3427, 0.0
  %v3509 = vmax.f32 %v3428, 0.0
  %v3510 = vmax.f32 %v3429, 0.0
  %v3511 = vmax.f32 %v3430, 0.0
  %v3512 = vmax.f32 %v3431, 0.0
  %v3513 = vmax.f32 %v3432, 0.0
  %v3514 = vmax.f32 %v3433, 0.0
  %v3515 = vmax.f32 %v3434, 0.0
  %v3516 = vmax.f32 %v3435, 0.0
  %v3517 = vmax.f32 %v3436, 0.0
  %v3518 = vmax.f32 %v3437, 0.0
  %v3519 = vmax.f32 %v3438, 0.0
  %v3520 = vmax.f32 %v3439, 0.0
  %v3521 = vpack.c.bf16 %v3441, %v3440
  %v3522 = vpack.c.bf16 %v3443, %v3442
  %v3523 = vpack.c.bf16 %v3445, %v3444
  %v3524 = vpack.c.bf16 %v3447, %v3446
  %v3525 = vpack.c.bf16 %v3449, %v3448
  %v3526 = vpack.c.bf16 %v3451, %v3450
  %v3527 = vpack.c.bf16 %v3453, %v3452
  %v3528 = vpack.c.bf16 %v3455, %v3454
  %v3529 = vpack.c.bf16 %v3457, %v3456
  %v3530 = vpack.c.bf16 %v3459, %v3458
  %v3531 = vpack.c.bf16 %v3461, %v3460
  %v3532 = vpack.c.bf16 %v3463, %v3462
  %v3533 = vpack.c.bf16 %v3465, %v3464
  %v3534 = vpack.c.bf16 %v3467, %v3466
  %v3535 = vpack.c.bf16 %v3469, %v3468
  %v3536 = vpack.c.bf16 %v3471, %v3470
  %v3537 = vpack.c.bf16 %v3473, %v3472
  %v3538 = vpack.c.bf16 %v3475, %v3474
  %v3539 = vpack.c.bf16 %v3477, %v3476
  %v3540 = vpack.c.bf16 %v3479, %v3478
  %v3541 = vpack.c.bf16 %v3481, %v3480
  %v3542 = vpack.c.bf16 %v3483, %v3482
  %v3543 = vpack.c.bf16 %v3485, %v3484
  %v3544 = vpack.c.bf16 %v3487, %v3486
  %v3545 = vpack.c.bf16 %v3489, %v3488
  %v3546 = vpack.c.bf16 %v3491, %v3490
  %v3547 = vpack.c.bf16 %v3493, %v3492
  %v3548 = vpack.c.bf16 %v3495, %v3494
  %v3549 = vpack.c.bf16 %v3497, %v3496
  %v3550 = vpack.c.bf16 %v3499, %v3498
  %v3551 = vpack.c.bf16 %v3501, %v3500
  %v3552 = vpack.c.bf16 %v3503, %v3502
  %v3553 = vpack.c.bf16 %v3505, %v3504
  %v3554 = vpack.c.bf16 %v3507, %v3506
  %v3555 = vpack.c.bf16 %v3509, %v3508
  %v3556 = vpack.c.bf16 %v3511, %v3510
  %v3557 = vpack.c.bf16 %v3513, %v3512
  %v3558 = vpack.c.bf16 %v3515, %v3514
  %v3559 = vpack.c.bf16 %v3517, %v3516
  %v3560 = vpack.c.bf16 %v3519, %v3518
  %v3561 = vpack.c.bf16 %v3520, %v3520
  %v3603 = vunpack.c.l.b16 %v3521
  %v3604 = vunpack.c.h.b16 %v3521
  %v3605 = vunpack.c.l.b16 %v3522
  %v3606 = vunpack.c.h.b16 %v3522
  %v3607 = vunpack.c.l.b16 %v3523
  %v3608 = vunpack.c.h.b16 %v3523
  %v3609 = vunpack.c.l.b16 %v3524
  %v3610 = vunpack.c.h.b16 %v3524
  %v3611 = vunpack.c.l.b16 %v3525
  %v3612 = vunpack.c.h.b16 %v3525
  %v3613 = vunpack.c.l.b16 %v3526
  %v3614 = vunpack.c.h.b16 %v3526
  %v3615 = vunpack.c.l.b16 %v3527
  %v3616 = vunpack.c.h.b16 %v3527
  %v3617 = vunpack.c.l.b16 %v3528
  %v3618 = vunpack.c.h.b16 %v3528
  %v3619 = vunpack.c.l.b16 %v3529
  %v3620 = vunpack.c.h.b16 %v3529
  %v3621 = vunpack.c.l.b16 %v3530
  %v3622 = vunpack.c.h.b16 %v3530
  %v3623 = vunpack.c.l.b16 %v3531
  %v3624 = vunpack.c.h.b16 %v3531
  %v3625 = vunpack.c.l.b16 %v3532
  %v3626 = vunpack.c.h.b16 %v3532
  %v3627 = vunpack.c.l.b16 %v3533
  %v3628 = vunpack.c.h.b16 %v3533
  %v3629 = vunpack.c.l.b16 %v3534
  %v3630 = vunpack.c.h.b16 %v3534
  %v3631 = vunpack.c.l.b16 %v3535
  %v3632 = vunpack.c.h.b16 %v3535
  %v3633 = vunpack.c.l.b16 %v3536
  %v3634 = vunpack.c.h.b16 %v3536
  %v3635 = vunpack.c.l.b16 %v3537
  %v3636 = vunpack.c.h.b16 %v3537
  %v3637 = vunpack.c.l.b16 %v3538
  %v3638 = vunpack.c.h.b16 %v3538
  %v3639 = vunpack.c.l.b16 %v3539
  %v3640 = vunpack.c.h.b16 %v3539
  %v3641 = vunpack.c.l.b16 %v3540
  %v3642 = vunpack.c.h.b16 %v3540
  %v3643 = vunpack.c.l.b16 %v3541
  %v3644 = vunpack.c.h.b16 %v3541
  %v3645 = vunpack.c.l.b16 %v3542
  %v3646 = vunpack.c.h.b16 %v3542
  %v3647 = vunpack.c.l.b16 %v3543
  %v3648 = vunpack.c.h.b16 %v3543
  %v3649 = vunpack.c.l.b16 %v3544
  %v3650 = vunpack.c.h.b16 %v3544
  %v3651 = vunpack.c.l.b16 %v3545
  %v3652 = vunpack.c.h.b16 %v3545
  %v3653 = vunpack.c.l.b16 %v3546
  %v3654 = vunpack.c.h.b16 %v3546
  %v3655 = vunpack.c.l.b16 %v3547
  %v3656 = vunpack.c.h.b16 %v3547
  %v3657 = vunpack.c.l.b16 %v3548
  %v3658 = vunpack.c.h.b16 %v3548
  %v3659 = vunpack.c.l.b16 %v3549
  %v3660 = vunpack.c.h.b16 %v3549
  %v3661 = vunpack.c.l.b16 %v3550
  %v3662 = vunpack.c.h.b16 %v3550
  %v3663 = vunpack.c.l.b16 %v3551
  %v3664 = vunpack.c.h.b16 %v3551
  %v3665 = vunpack.c.l.b16 %v3552
  %v3666 = vunpack.c.h.b16 %v3552
  %v3667 = vunpack.c.l.b16 %v3553
  %v3668 = vunpack.c.h.b16 %v3553
  %v3669 = vunpack.c.l.b16 %v3554
  %v3670 = vunpack.c.h.b16 %v3554
  %v3671 = vunpack.c.l.b16 %v3555
  %v3672 = vunpack.c.h.b16 %v3555
  %v3673 = vunpack.c.l.b16 %v3556
  %v3674 = vunpack.c.h.b16 %v3556
  %v3675 = vunpack.c.l.b16 %v3557
  %v3676 = vunpack.c.h.b16 %v3557
  %v3677 = vunpack.c.l.b16 %v3558
  %v3678 = vunpack.c.h.b16 %v3558
  %v3679 = vunpack.c.l.b16 %v3559
  %v3680 = vunpack.c.h.b16 %v3559
  %v3681 = vunpack.c.l.b16 %v3560
  %v3682 = vunpack.c.h.b16 %v3560
  %v3683 = vunpack.c.l.b16 %v3561
  %v3684 = vpack.c.b16 %v3603, %v3603
  %v3685 = vpack.c.b16 %v3604, %v3604
  %v3686 = vpack.c.b16 %v3605, %v3605
  %v3687 = vpack.c.b16 %v3606, %v3606
  %v3688 = vpack.c.b16 %v3607, %v3607
  %v3689 = vpack.c.b16 %v3608, %v3608
  %v3690 = vpack.c.b16 %v3609, %v3609
  %v3691 = vpack.c.b16 %v3610, %v3610
  %v3692 = vpack.c.b16 %v3611, %v3611
  %v3693 = vpack.c.b16 %v3612, %v3612
  %v3694 = vpack.c.b16 %v3613, %v3613
  %v3695 = vpack.c.b16 %v3614, %v3614
  %v3696 = vpack.c.b16 %v3615, %v3615
  %v3697 = vpack.c.b16 %v3616, %v3616
  %v3698 = vpack.c.b16 %v3617, %v3617
  %v3699 = vpack.c.b16 %v3618, %v3618
  %v3700 = vpack.c.b16 %v3619, %v3619
  %v3701 = vpack.c.b16 %v3620, %v3620
  %v3702 = vpack.c.b16 %v3621, %v3621
  %v3703 = vpack.c.b16 %v3622, %v3622
  %v3704 = vpack.c.b16 %v3623, %v3623
  %v3705 = vpack.c.b16 %v3624, %v3624
  %v3706 = vpack.c.b16 %v3625, %v3625
  %v3707 = vpack.c.b16 %v3626, %v3626
  %v3708 = vpack.c.b16 %v3627, %v3627
  %v3709 = vpack.c.b16 %v3628, %v3628
  %v3710 = vpack.c.b16 %v3629, %v3629
  %v3711 = vpack.c.b16 %v3630, %v3630
  %v3712 = vpack.c.b16 %v3631, %v3631
  %v3713 = vpack.c.b16 %v3632, %v3632
  %v3714 = vpack.c.b16 %v3633, %v3633
  %v3715 = vpack.c.b16 %v3634, %v3634
  %v3716 = vpack.c.b16 %v3635, %v3635
  %v3717 = vpack.c.b16 %v3636, %v3636
  %v3718 = vpack.c.b16 %v3637, %v3637
  %v3719 = vpack.c.b16 %v3638, %v3638
  %v3720 = vpack.c.b16 %v3639, %v3639
  %v3721 = vpack.c.b16 %v3640, %v3640
  %v3722 = vpack.c.b16 %v3641, %v3641
  %v3723 = vpack.c.b16 %v3642, %v3642
  %v3724 = vpack.c.b16 %v3643, %v3643
  %v3725 = vpack.c.b16 %v3644, %v3644
  %v3726 = vpack.c.b16 %v3645, %v3645
  %v3727 = vpack.c.b16 %v3646, %v3646
  %v3728 = vpack.c.b16 %v3647, %v3647
  %v3729 = vpack.c.b16 %v3648, %v3648
  %v3730 = vpack.c.b16 %v3649, %v3649
  %v3731 = vpack.c.b16 %v3650, %v3650
  %v3732 = vpack.c.b16 %v3651, %v3651
  %v3733 = vpack.c.b16 %v3652, %v3652
  %v3734 = vpack.c.b16 %v3653, %v3653
  %v3735 = vpack.c.b16 %v3654, %v3654
  %v3736 = vpack.c.b16 %v3655, %v3655
  %v3737 = vpack.c.b16 %v3656, %v3656
  %v3738 = vpack.c.b16 %v3657, %v3657
  %v3739 = vpack.c.b16 %v3658, %v3658
  %v3740 = vpack.c.b16 %v3659, %v3659
  %v3741 = vpack.c.b16 %v3660, %v3660
  %v3742 = vpack.c.b16 %v3661, %v3661
  %v3743 = vpack.c.b16 %v3662, %v3662
  %v3744 = vpack.c.b16 %v3663, %v3663
  %v3745 = vpack.c.b16 %v3664, %v3664
  %v3746 = vpack.c.b16 %v3665, %v3665
  %v3747 = vpack.c.b16 %v3666, %v3666
  %v3748 = vpack.c.b16 %v3667, %v3667
  %v3749 = vpack.c.b16 %v3668, %v3668
  %v3750 = vpack.c.b16 %v3669, %v3669
  %v3751 = vpack.c.b16 %v3670, %v3670
  %v3752 = vpack.c.b16 %v3671, %v3671
  %v3753 = vpack.c.b16 %v3672, %v3672
  %v3754 = vpack.c.b16 %v3673, %v3673
  %v3755 = vpack.c.b16 %v3674, %v3674
  %v3756 = vpack.c.b16 %v3675, %v3675
  %v3757 = vpack.c.b16 %v3676, %v3676
  %v3758 = vpack.c.b16 %v3677, %v3677
  %v3759 = vpack.c.b16 %v3678, %v3678
  %v3760 = vpack.c.b16 %v3679, %v3679
  %v3761 = vpack.c.b16 %v3680, %v3680
  %v3762 = vpack.c.b16 %v3681, %v3681
  %v3763 = vpack.c.b16 %v3682, %v3682
  %v3764 = vpack.c.b16 %v3683, %v3683
  %vm3846 = vcmask 257024
  %3847 = vst.msk [vmem:[%s3] sm:$0xf] %vm3846, %v3684
  %3848 = vst.msk [vmem:[%s3 + $0x4] sm:$0xf] %vm3846, %v3685
  %3849 = vst.msk [vmem:[%s3 + $0x8] sm:$0xf] %vm3846, %v3686
  %3850 = vst.msk [vmem:[%s3 + $0xc] sm:$0xf] %vm3846, %v3687
  %3851 = vst.msk [vmem:[%s3 + $0x10] sm:$0xf] %vm3846, %v3688
  %3852 = vst.msk [vmem:[%s3 + $0x14] sm:$0xf] %vm3846, %v3689
  %3853 = vst.msk [vmem:[%s3 + $0x18] sm:$0xf] %vm3846, %v3690
  %3854 = vst.msk [vmem:[%s3 + $0x1c] sm:$0xf] %vm3846, %v3691
  %3855 = vst.msk [vmem:[%s3 + $0x20] sm:$0xf] %vm3846, %v3692
  %3856 = vst.msk [vmem:[%s3 + $0x24] sm:$0xf] %vm3846, %v3693
  %3857 = vst.msk [vmem:[%s3 + $0x28] sm:$0xf] %vm3846, %v3694
  %3858 = vst.msk [vmem:[%s3 + $0x2c] sm:$0xf] %vm3846, %v3695
  %3859 = vst.msk [vmem:[%s3 + $0x30] sm:$0xf] %vm3846, %v3696
  %3860 = vst.msk [vmem:[%s3 + $0x34] sm:$0xf] %vm3846, %v3697
  %3861 = vst.msk [vmem:[%s3 + $0x38] sm:$0xf] %vm3846, %v3698
  %3862 = vst.msk [vmem:[%s3 + $0x3c] sm:$0xf] %vm3846, %v3699
  %3863 = vst.msk [vmem:[%s3 + $0x40] sm:$0xf] %vm3846, %v3700
  %3864 = vst.msk [vmem:[%s3 + $0x44] sm:$0xf] %vm3846, %v3701
  %3865 = vst.msk [vmem:[%s3 + $0x48] sm:$0xf] %vm3846, %v3702
  %3866 = vst.msk [vmem:[%s3 + $0x4c] sm:$0xf] %vm3846, %v3703
  %3867 = vst.msk [vmem:[%s3 + $0x50] sm:$0xf] %vm3846, %v3704
  %3868 = vst.msk [vmem:[%s3 + $0x54] sm:$0xf] %vm3846, %v3705
  %3869 = vst.msk [vmem:[%s3 + $0x58] sm:$0xf] %vm3846, %v3706
  %3870 = vst.msk [vmem:[%s3 + $0x5c] sm:$0xf] %vm3846, %v3707
  %3871 = vst.msk [vmem:[%s3 + $0x60] sm:$0xf] %vm3846, %v3708
  %3872 = vst.msk [vmem:[%s3 + $0x64] sm:$0xf] %vm3846, %v3709
  %3873 = vst.msk [vmem:[%s3 + $0x68] sm:$0xf] %vm3846, %v3710
  %3874 = vst.msk [vmem:[%s3 + $0x6c] sm:$0xf] %vm3846, %v3711
  %3875 = vst.msk [vmem:[%s3 + $0x70] sm:$0xf] %vm3846, %v3712
  %3876 = vst.msk [vmem:[%s3 + $0x74] sm:$0xf] %vm3846, %v3713
  %3877 = vst.msk [vmem:[%s3 + $0x78] sm:$0xf] %vm3846, %v3714
  %3878 = vst.msk [vmem:[%s3 + $0x7c] sm:$0xf] %vm3846, %v3715
  %3879 = vst.msk [vmem:[%s3 + $0x80] sm:$0xf] %vm3846, %v3716
  %3880 = vst.msk [vmem:[%s3 + $0x84] sm:$0xf] %vm3846, %v3717
  %3881 = vst.msk [vmem:[%s3 + $0x88] sm:$0xf] %vm3846, %v3718
  %3882 = vst.msk [vmem:[%s3 + $0x8c] sm:$0xf] %vm3846, %v3719
  %3883 = vst.msk [vmem:[%s3 + $0x90] sm:$0xf] %vm3846, %v3720
  %3884 = vst.msk [vmem:[%s3 + $0x94] sm:$0xf] %vm3846, %v3721
  %3885 = vst.msk [vmem:[%s3 + $0x98] sm:$0xf] %vm3846, %v3722
  %3886 = vst.msk [vmem:[%s3 + $0x9c] sm:$0xf] %vm3846, %v3723
  %3887 = vst.msk [vmem:[%s3 + $0xa0] sm:$0xf] %vm3846, %v3724
  %3888 = vst.msk [vmem:[%s3 + $0xa4] sm:$0xf] %vm3846, %v3725
  %3889 = vst.msk [vmem:[%s3 + $0xa8] sm:$0xf] %vm3846, %v3726
  %3890 = vst.msk [vmem:[%s3 + $0xac] sm:$0xf] %vm3846, %v3727
  %3891 = vst.msk [vmem:[%s3 + $0xb0] sm:$0xf] %vm3846, %v3728
  %3892 = vst.msk [vmem:[%s3 + $0xb4] sm:$0xf] %vm3846, %v3729
  %3893 = vst.msk [vmem:[%s3 + $0xb8] sm:$0xf] %vm3846, %v3730
  %3894 = vst.msk [vmem:[%s3 + $0xbc] sm:$0xf] %vm3846, %v3731
  %3895 = vst.msk [vmem:[%s3 + $0xc0] sm:$0xf] %vm3846, %v3732
  %3896 = vst.msk [vmem:[%s3 + $0xc4] sm:$0xf] %vm3846, %v3733
  %3897 = vst.msk [vmem:[%s3 + $0xc8] sm:$0xf] %vm3846, %v3734
  %3898 = vst.msk [vmem:[%s3 + $0xcc] sm:$0xf] %vm3846, %v3735
  %3899 = vst.msk [vmem:[%s3 + $0xd0] sm:$0xf] %vm3846, %v3736
  %3900 = vst.msk [vmem:[%s3 + $0xd4] sm:$0xf] %vm3846, %v3737
  %3901 = vst.msk [vmem:[%s3 + $0xd8] sm:$0xf] %vm3846, %v3738
  %3902 = vst.msk [vmem:[%s3 + $0xdc] sm:$0xf] %vm3846, %v3739
  %3903 = vst.msk [vmem:[%s3 + $0xe0] sm:$0xf] %vm3846, %v3740
  %3904 = vst.msk [vmem:[%s3 + $0xe4] sm:$0xf] %vm3846, %v3741
  %3905 = vst.msk [vmem:[%s3 + $0xe8] sm:$0xf] %vm3846, %v3742
  %3906 = vst.msk [vmem:[%s3 + $0xec] sm:$0xf] %vm3846, %v3743
  %3907 = vst.msk [vmem:[%s3 + $0xf0] sm:$0xf] %vm3846, %v3744
  %3908 = vst.msk [vmem:[%s3 + $0xf4] sm:$0xf] %vm3846, %v3745
  %3909 = vst.msk [vmem:[%s3 + $0xf8] sm:$0xf] %vm3846, %v3746
  %3910 = vst.msk [vmem:[%s3 + $0xfc] sm:$0xf] %vm3846, %v3747
  %3911 = vst.msk [vmem:[%s3 + $0x100] sm:$0xf] %vm3846, %v3748
  %3912 = vst.msk [vmem:[%s3 + $0x104] sm:$0xf] %vm3846, %v3749
  %3913 = vst.msk [vmem:[%s3 + $0x108] sm:$0xf] %vm3846, %v3750
  %3914 = vst.msk [vmem:[%s3 + $0x10c] sm:$0xf] %vm3846, %v3751
  %3915 = vst.msk [vmem:[%s3 + $0x110] sm:$0xf] %vm3846, %v3752
  %3916 = vst.msk [vmem:[%s3 + $0x114] sm:$0xf] %vm3846, %v3753
  %3917 = vst.msk [vmem:[%s3 + $0x118] sm:$0xf] %vm3846, %v3754
  %3918 = vst.msk [vmem:[%s3 + $0x11c] sm:$0xf] %vm3846, %v3755
  %3919 = vst.msk [vmem:[%s3 + $0x120] sm:$0xf] %vm3846, %v3756
  %3920 = vst.msk [vmem:[%s3 + $0x124] sm:$0xf] %vm3846, %v3757
  %3921 = vst.msk [vmem:[%s3 + $0x128] sm:$0xf] %vm3846, %v3758
  %3922 = vst.msk [vmem:[%s3 + $0x12c] sm:$0xf] %vm3846, %v3759
  %3923 = vst.msk [vmem:[%s3 + $0x130] sm:$0xf] %vm3846, %v3760
  %3924 = vst.msk [vmem:[%s3 + $0x134] sm:$0xf] %vm3846, %v3761
  %3925 = vst.msk [vmem:[%s3 + $0x138] sm:$0xf] %vm3846, %v3762
  %3926 = vst.msk [vmem:[%s3 + $0x13c] sm:$0xf] %vm3846, %v3763
  %3927 = vst.msk [vmem:[%s3 + $0x140] sm:$0xf] %vm3846, %v3764
  // Predicated region
  $region14: #{convnet_forward.3} parent=0 // pred_check
    _
  $region15: #{convnet_forward.3} parent=0 // pred_check_branch
    %3929 = sbr.rel (0) target = $region17
  $region16: #{convnet_forward.3} parent=0 // pred_region
    _
  $region17: #{convnet_forward.3} parent=0 // pred_fallthru
    _
  // Predicated region
  $region18: #{convnet_forward.3} parent=0 // pred_check
    _
  $region19: #{convnet_forward.3} parent=0 // pred_check_branch
    %3931 = sbr.rel (0) target = $region21
  $region20: #{convnet_forward.3} parent=0 // pred_region
    _
  $region21: #{convnet_forward.3} parent=0 // pred_fallthru
    _

// kernel: convnet_forward.4
$region0: #{convnet_forward.4}
  #allocation0 [shape = 'u32[]', space=smem, size = 0x4, offset = 0x4, fixed_abs, tag = 'smem constant byte address 0x4 - core index']
  #allocation1 [shape = 'u32[144,128]{1,0:T(1,128)}', space=vmem, size = 0x12000, scoped, tag = 'internal scratch']
  %s0 = inlined_call_operand.vmem [shape: bf16[4,72,800], index: 0, kind: input, shape index: {}]
  %s1 = inlined_call_operand.vmem [shape: bf16[800,64], index: 1, kind: input, shape index: {}]
  %s2 = inlined_call_operand.vmem [shape: f32[1,64], index: 2, kind: input, shape index: {}]
  %s3 = inlined_call_operand.vmem [shape: f32[72,64], index: 3, kind: output, shape index: {}]
  %s4 = sld [smem:[#allocation0]]
  $region22: #{convnet_forward.4} parent=0
    _
  %s6 = ssub.s32 1, %s4
  %s7 = scalar_select 0, %s6, %s4
  // Predicated region
  $region2: #{convnet_forward.4} parent=0 // pred_check
    _
  $region3: #{convnet_forward.4} parent=0 // pred_check_branch
    %9 = sbr.rel (0) target = $region5
  $region4: #{convnet_forward.4} parent=0 // pred_region
    _
  $region5: #{convnet_forward.4} parent=0 // pred_fallthru
    _
  // Predicated region
  $region6: #{convnet_forward.4} parent=0 // pred_check
    _
  $region7: #{convnet_forward.4} parent=0 // pred_check_branch
    %11 = sbr.rel (0) target = $region9
  $region8: #{convnet_forward.4} parent=0 // pred_region
    _
  $region9: #{convnet_forward.4} parent=0 // pred_fallthru
    _
  // Predicated region
  $region10: #{convnet_forward.4} parent=0 // pred_check
    _
  $region11: #{convnet_forward.4} parent=0 // pred_check_branch
    %13 = sbr.rel (0) target = $region13
  $region12: #{convnet_forward.4} parent=0 // pred_region
    _
  $region13: #{convnet_forward.4} parent=0 // pred_fallthru
    _
  %v15 = vld [vmem:[%s1] sm:$0xf]
  %v16 = vld [vmem:[%s1 + $0x4] sm:$0xf]
  %v17 = vld [vmem:[%s1 + $0x8] sm:$0xf]
  %v18 = vld [vmem:[%s1 + $0xc] sm:$0xf]
  %v19 = vld [vmem:[%s1 + $0x10] sm:$0xf]
  %v20 = vld [vmem:[%s1 + $0x14] sm:$0xf]
  %v21 = vld [vmem:[%s1 + $0x18] sm:$0xf]
  %v22 = vld [vmem:[%s1 + $0x1c] sm:$0xf]
  %v23 = vld [vmem:[%s1 + $0x20] sm:$0xf]
  %v24 = vld [vmem:[%s1 + $0x24] sm:$0xf]
  %v25 = vld [vmem:[%s1 + $0x28] sm:$0xf]
  %v26 = vld [vmem:[%s1 + $0x2c] sm:$0xf]
  %v27 = vld [vmem:[%s1 + $0x30] sm:$0xf]
  %v28 = vld [vmem:[%s1 + $0x34] sm:$0xf]
  %v29 = vld [vmem:[%s1 + $0x38] sm:$0xf]
  %v30 = vld [vmem:[%s1 + $0x3c] sm:$0xf]
  %v31 = vld [vmem:[%s1 + $0x40] sm:$0xf]
  %v32 = vld [vmem:[%s1 + $0x44] sm:$0xf]
  %v33 = vld [vmem:[%s1 + $0x48] sm:$0xf]
  %v34 = vld [vmem:[%s1 + $0x4c] sm:$0xf]
  %v35 = vld [vmem:[%s1 + $0x50] sm:$0xf]
  %v36 = vld [vmem:[%s1 + $0x54] sm:$0xf]
  %v37 = vld [vmem:[%s1 + $0x58] sm:$0xf]
  %v38 = vld [vmem:[%s1 + $0x5c] sm:$0xf]
  %v39 = vld [vmem:[%s1 + $0x60] sm:$0xf]
  %v40 = vld [vmem:[%s1 + $0x64] sm:$0xf]
  %v41 = vld [vmem:[%s1 + $0x68] sm:$0xf]
  %v42 = vld [vmem:[%s1 + $0x6c] sm:$0xf]
  %v43 = vld [vmem:[%s1 + $0x70] sm:$0xf]
  %v44 = vld [vmem:[%s1 + $0x74] sm:$0xf]
  %v45 = vld [vmem:[%s1 + $0x78] sm:$0xf]
  %v46 = vld [vmem:[%s1 + $0x7c] sm:$0xf]
  %v47 = vld [vmem:[%s1 + $0x80] sm:$0xf]
  %v48 = vld [vmem:[%s1 + $0x84] sm:$0xf]
  %v49 = vld [vmem:[%s1 + $0x88] sm:$0xf]
  %v50 = vld [vmem:[%s1 + $0x8c] sm:$0xf]
  %v51 = vld [vmem:[%s1 + $0x90] sm:$0xf]
  %v52 = vld [vmem:[%s1 + $0x94] sm:$0xf]
  %v53 = vld [vmem:[%s1 + $0x98] sm:$0xf]
  %v54 = vld [vmem:[%s1 + $0x9c] sm:$0xf]
  %v55 = vld [vmem:[%s1 + $0xa0] sm:$0xf]
  %v56 = vld [vmem:[%s1 + $0xa4] sm:$0xf]
  %v57 = vld [vmem:[%s1 + $0xa8] sm:$0xf]
  %v58 = vld [vmem:[%s1 + $0xac] sm:$0xf]
  %v59 = vld [vmem:[%s1 + $0xb0] sm:$0xf]
  %v60 = vld [vmem:[%s1 + $0xb4] sm:$0xf]
  %v61 = vld [vmem:[%s1 + $0xb8] sm:$0xf]
  %v62 = vld [vmem:[%s1 + $0xbc] sm:$0xf]
  %v63 = vld [vmem:[%s1 + $0xc0] sm:$0xf]
  %v64 = vld [vmem:[%s1 + $0xc4] sm:$0xf]
  %v65 = vld [vmem:[%s1 + $0xc8] sm:$0xf]
  %v66 = vld [vmem:[%s1 + $0xcc] sm:$0xf]
  %v67 = vld [vmem:[%s1 + $0xd0] sm:$0xf]
  %v68 = vld [vmem:[%s1 + $0xd4] sm:$0xf]
  %v69 = vld [vmem:[%s1 + $0xd8] sm:$0xf]
  %v70 = vld [vmem:[%s1 + $0xdc] sm:$0xf]
  %v71 = vld [vmem:[%s1 + $0xe0] sm:$0xf]
  %v72 = vld [vmem:[%s1 + $0xe4] sm:$0xf]
  %v73 = vld [vmem:[%s1 + $0xe8] sm:$0xf]
  %v74 = vld [vmem:[%s1 + $0xec] sm:$0xf]
  %v75 = vld [vmem:[%s1 + $0xf0] sm:$0xf]
  %v76 = vld [vmem:[%s1 + $0xf4] sm:$0xf]
  %v77 = vld [vmem:[%s1 + $0xf8] sm:$0xf]
  %v78 = vld [vmem:[%s1 + $0xfc] sm:$0xf]
  %v79 = vld [vmem:[%s1 + $0x100] sm:$0xf]
  %v80 = vld [vmem:[%s1 + $0x104] sm:$0xf]
  %v81 = vld [vmem:[%s1 + $0x108] sm:$0xf]
  %v82 = vld [vmem:[%s1 + $0x10c] sm:$0xf]
  %v83 = vld [vmem:[%s1 + $0x110] sm:$0xf]
  %v84 = vld [vmem:[%s1 + $0x114] sm:$0xf]
  %v85 = vld [vmem:[%s1 + $0x118] sm:$0xf]
  %v86 = vld [vmem:[%s1 + $0x11c] sm:$0xf]
  %v87 = vld [vmem:[%s1 + $0x120] sm:$0xf]
  %v88 = vld [vmem:[%s1 + $0x124] sm:$0xf]
  %v89 = vld [vmem:[%s1 + $0x128] sm:$0xf]
  %v90 = vld [vmem:[%s1 + $0x12c] sm:$0xf]
  %v91 = vld [vmem:[%s1 + $0x130] sm:$0xf]
  %v92 = vld [vmem:[%s1 + $0x134] sm:$0xf]
  %v93 = vld [vmem:[%s1 + $0x138] sm:$0xf]
  %v94 = vld [vmem:[%s1 + $0x13c] sm:$0xf]
  %v95 = vld [vmem:[%s1 + $0x140] sm:$0xf]
  %v96 = vld [vmem:[%s1 + $0x144] sm:$0xf]
  %v97 = vld [vmem:[%s1 + $0x148] sm:$0xf]
  %v98 = vld [vmem:[%s1 + $0x14c] sm:$0xf]
  %v99 = vld [vmem:[%s1 + $0x150] sm:$0xf]
  %v100 = vld [vmem:[%s1 + $0x154] sm:$0xf]
  %v101 = vld [vmem:[%s1 + $0x158] sm:$0xf]
  %v102 = vld [vmem:[%s1 + $0x15c] sm:$0xf]
  %v103 = vld [vmem:[%s1 + $0x160] sm:$0xf]
  %v104 = vld [vmem:[%s1 + $0x164] sm:$0xf]
  %v105 = vld [vmem:[%s1 + $0x168] sm:$0xf]
  %v106 = vld [vmem:[%s1 + $0x16c] sm:$0xf]
  %v107 = vld [vmem:[%s1 + $0x170] sm:$0xf]
  %v108 = vld [vmem:[%s1 + $0x174] sm:$0xf]
  %v109 = vld [vmem:[%s1 + $0x178] sm:$0xf]
  %v110 = vld [vmem:[%s1 + $0x17c] sm:$0xf]
  %v111 = vld [vmem:[%s1 + $0x180] sm:$0xf]
  %v112 = vld [vmem:[%s1 + $0x184] sm:$0xf]
  %v113 = vld [vmem:[%s1 + $0x188] sm:$0xf]
  %v114 = vld [vmem:[%s1 + $0x18c] sm:$0xf]
  %v115 = vld [vmem:[%s0] sm:$0xff]
  %v116 = vld [vmem:[%s0 + $0x8] sm:$0xff]
  %v117 = vld [vmem:[%s0 + $0x10] sm:$0xff]
  %v118 = vld [vmem:[%s0 + $0x18] sm:$0xf]
  %v119 = vld [vmem:[%s0 + $0x1c] sm:$0xff]
  %v120 = vld [vmem:[%s0 + $0x24] sm:$0xff]
  %v121 = vld [vmem:[%s0 + $0x2c] sm:$0xff]
  %v122 = vld [vmem:[%s0 + $0x34] sm:$0xf]
  %v123 = vld [vmem:[%s0 + $0x38] sm:$0xff]
  %v124 = vld [vmem:[%s0 + $0x40] sm:$0xff]
  %v125 = vld [vmem:[%s0 + $0x48] sm:$0xff]
  %v126 = vld [vmem:[%s0 + $0x50] sm:$0xf]
  %v127 = vld [vmem:[%s0 + $0x54] sm:$0xff]
  %v128 = vld [vmem:[%s0 + $0x5c] sm:$0xff]
  %v129 = vld [vmem:[%s0 + $0x64] sm:$0xff]
  %v130 = vld [vmem:[%s0 + $0x6c] sm:$0xf]
  %v131 = vld [vmem:[%s0 + $0x70] sm:$0xff]
  %v132 = vld [vmem:[%s0 + $0x78] sm:$0xff]
  %v133 = vld [vmem:[%s0 + $0x80] sm:$0xff]
  %v134 = vld [vmem:[%s0 + $0x88] sm:$0xf]
  %v135 = vld [vmem:[%s0 + $0x8c] sm:$0xff]
  %v136 = vld [vmem:[%s0 + $0x94] sm:$0xff]
  %v137 = vld [vmem:[%s0 + $0x9c] sm:$0xff]
  %v138 = vld [vmem:[%s0 + $0xa4] sm:$0xf]
  %v139 = vld [vmem:[%s0 + $0xa8] sm:$0xff]
  %v140 = vld [vmem:[%s0 + $0xb0] sm:$0xff]
  %v141 = vld [vmem:[%s0 + $0xb8] sm:$0xff]
  %v142 = vld [vmem:[%s0 + $0xc0] sm:$0xf]
  %v143 = vld [vmem:[%s0 + $0xc4] sm:$0xff]
  %v144 = vld [vmem:[%s0 + $0xcc] sm:$0xff]
  %v145 = vld [vmem:[%s0 + $0xd4] sm:$0xff]
  %v146 = vld [vmem:[%s0 + $0xdc] sm:$0xf]
  %v147 = vld [vmem:[%s0 + $0xe0] sm:$0xff]
  %v148 = vld [vmem:[%s0 + $0xe8] sm:$0xff]
  %v149 = vld [vmem:[%s0 + $0xf0] sm:$0xff]
  %v150 = vld [vmem:[%s0 + $0xf8] sm:$0xf]
  %v187 = vunpack.c.l.b16 %v115
  %v188 = vunpack.c.h.b16 %v115
  %v189 = vunpack.c.l.b16 %v116
  %v190 = vunpack.c.h.b16 %v116
  %v191 = vunpack.c.l.b16 %v117
  %v192 = vunpack.c.h.b16 %v117
  %v193 = vunpack.c.l.b16 %v118
  %v194 = vunpack.c.l.b16 %v119
  %v195 = vunpack.c.h.b16 %v119
  %v196 = vunpack.c.l.b16 %v120
  %v197 = vunpack.c.h.b16 %v120
  %v198 = vunpack.c.l.b16 %v121
  %v199 = vunpack.c.h.b16 %v121
  %v200 = vunpack.c.l.b16 %v122
  %v201 = vunpack.c.l.b16 %v123
  %v202 = vunpack.c.h.b16 %v123
  %v203 = vunpack.c.l.b16 %v124
  %v204 = vunpack.c.h.b16 %v124
  %v205 = vunpack.c.l.b16 %v125
  %v206 = vunpack.c.h.b16 %v125
  %v207 = vunpack.c.l.b16 %v126
  %v208 = vunpack.c.l.b16 %v127
  %v209 = vunpack.c.h.b16 %v127
  %v210 = vunpack.c.l.b16 %v128
  %v211 = vunpack.c.h.b16 %v128
  %v212 = vunpack.c.l.b16 %v129
  %v213 = vunpack.c.h.b16 %v129
  %v214 = vunpack.c.l.b16 %v130
  %v215 = vunpack.c.l.b16 %v131
  %v216 = vunpack.c.h.b16 %v131
  %v217 = vunpack.c.l.b16 %v132
  %v218 = vunpack.c.h.b16 %v132
  %v219 = vunpack.c.l.b16 %v133
  %v220 = vunpack.c.h.b16 %v133
  %v221 = vunpack.c.l.b16 %v134
  %v222 = vunpack.c.l.b16 %v135
  %v223 = vunpack.c.h.b16 %v135
  %v224 = vunpack.c.l.b16 %v136
  %v225 = vunpack.c.h.b16 %v136
  %v226 = vunpack.c.l.b16 %v137
  %v227 = vunpack.c.h.b16 %v137
  %v228 = vunpack.c.l.b16 %v138
  %v229 = vunpack.c.l.b16 %v139
  %v230 = vunpack.c.h.b16 %v139
  %v231 = vunpack.c.l.b16 %v140
  %v232 = vunpack.c.h.b16 %v140
  %v233 = vunpack.c.l.b16 %v141
  %v234 = vunpack.c.h.b16 %v141
  %v235 = vunpack.c.l.b16 %v142
  %v236 = vunpack.c.l.b16 %v143
  %v237 = vunpack.c.h.b16 %v143
  %v238 = vunpack.c.l.b16 %v144
  %v239 = vunpack.c.h.b16 %v144
  %v240 = vunpack.c.l.b16 %v145
  %v241 = vunpack.c.h.b16 %v145
  %v242 = vunpack.c.l.b16 %v146
  %v243 = vunpack.c.l.b16 %v147
  %v244 = vunpack.c.h.b16 %v147
  %v245 = vunpack.c.l.b16 %v148
  %v246 = vunpack.c.h.b16 %v148
  %v247 = vunpack.c.l.b16 %v149
  %v248 = vunpack.c.h.b16 %v149
  %v249 = vunpack.c.l.b16 %v150
  %v250 = vpack.c.b16 %v194, %v187
  %v251 = vpack.c.b16 %v195, %v188
  %v252 = vpack.c.b16 %v196, %v189
  %v253 = vpack.c.b16 %v197, %v190
  %v254 = vpack.c.b16 %v198, %v191
  %v255 = vpack.c.b16 %v199, %v192
  %v256 = vpack.c.b16 %v200, %v193
  %v257 = vpack.c.b16 %v208, %v201
  %v258 = vpack.c.b16 %v209, %v202
  %v259 = vpack.c.b16 %v210, %v203
  %v260 = vpack.c.b16 %v211, %v204
  %v261 = vpack.c.b16 %v212, %v205
  %v262 = vpack.c.b16 %v213, %v206
  %v263 = vpack.c.b16 %v214, %v207
  %v264 = vpack.c.b16 %v222, %v215
  %v265 = vpack.c.b16 %v223, %v216
  %v266 = vpack.c.b16 %v224, %v217
  %v267 = vpack.c.b16 %v225, %v218
  %v268 = vpack.c.b16 %v226, %v219
  %v269 = vpack.c.b16 %v227, %v220
  %v270 = vpack.c.b16 %v228, %v221
  %v271 = vpack.c.b16 %v236, %v229
  %v272 = vpack.c.b16 %v237, %v230
  %v273 = vpack.c.b16 %v238, %v231
  %v274 = vpack.c.b16 %v239, %v232
  %v275 = vpack.c.b16 %v240, %v233
  %v276 = vpack.c.b16 %v241, %v234
  %v277 = vpack.c.b16 %v242, %v235
  %v278 = vpack.c.b16 %v243, %v243
  %v279 = vpack.c.b16 %v244, %v244
  %v280 = vpack.c.b16 %v245, %v245
  %v281 = vpack.c.b16 %v246, %v246
  %v282 = vpack.c.b16 %v247, %v247
  %v283 = vpack.c.b16 %v248, %v248
  %v284 = vpack.c.b16 %v249, %v249
  %v415 = vunpack.c.l.b16 %v15
  %v416 = vunpack.c.l.b16 %v16
  %v417 = vunpack.c.l.b16 %v17
  %v418 = vunpack.c.l.b16 %v18
  %v419 = vunpack.c.l.b16 %v19
  %v420 = vunpack.c.l.b16 %v20
  %v421 = vunpack.c.l.b16 %v21
  %v422 = vunpack.c.l.b16 %v22
  %v423 = vunpack.c.l.b16 %v23
  %v424 = vunpack.c.l.b16 %v24
  %v425 = vunpack.c.l.b16 %v25
  %v426 = vunpack.c.l.b16 %v26
  %v427 = vunpack.c.l.b16 %v27
  %v428 = vunpack.c.l.b16 %v28
  %v429 = vunpack.c.l.b16 %v29
  %v430 = vunpack.c.l.b16 %v30
  %v431 = vunpack.c.l.b16 %v31
  %v432 = vunpack.c.l.b16 %v32
  %v433 = vunpack.c.l.b16 %v33
  %v434 = vunpack.c.l.b16 %v34
  %v435 = vunpack.c.l.b16 %v35
  %v436 = vunpack.c.l.b16 %v36
  %v437 = vunpack.c.l.b16 %v37
  %v438 = vunpack.c.l.b16 %v38
  %v439 = vunpack.c.l.b16 %v39
  %v440 = vunpack.c.l.b16 %v40
  %v441 = vunpack.c.l.b16 %v41
  %v442 = vunpack.c.l.b16 %v42
  %v443 = vunpack.c.l.b16 %v43
  %v444 = vunpack.c.l.b16 %v44
  %v445 = vunpack.c.l.b16 %v45
  %v446 = vunpack.c.l.b16 %v46
  %v447 = vunpack.c.l.b16 %v47
  %v448 = vunpack.c.l.b16 %v48
  %v449 = vunpack.c.l.b16 %v49
  %v450 = vunpack.c.l.b16 %v50
  %v451 = vunpack.c.l.b16 %v51
  %v452 = vunpack.c.l.b16 %v52
  %v453 = vunpack.c.l.b16 %v53
  %v454 = vunpack.c.l.b16 %v54
  %v455 = vunpack.c.l.b16 %v55
  %v456 = vunpack.c.l.b16 %v56
  %v457 = vunpack.c.l.b16 %v57
  %v458 = vunpack.c.l.b16 %v58
  %v459 = vunpack.c.l.b16 %v59
  %v460 = vunpack.c.l.b16 %v60
  %v461 = vunpack.c.l.b16 %v61
  %v462 = vunpack.c.l.b16 %v62
  %v463 = vunpack.c.l.b16 %v63
  %v464 = vunpack.c.l.b16 %v64
  %v465 = vunpack.c.l.b16 %v65
  %v466 = vunpack.c.l.b16 %v66
  %v467 = vunpack.c.l.b16 %v67
  %v468 = vunpack.c.l.b16 %v68
  %v469 = vunpack.c.l.b16 %v69
  %v470 = vunpack.c.l.b16 %v70
  %v471 = vunpack.c.l.b16 %v71
  %v472 = vunpack.c.l.b16 %v72
  %v473 = vunpack.c.l.b16 %v73
  %v474 = vunpack.c.l.b16 %v74
  %v475 = vunpack.c.l.b16 %v75
  %v476 = vunpack.c.l.b16 %v76
  %v477 = vunpack.c.l.b16 %v77
  %v478 = vunpack.c.l.b16 %v78
  %v479 = vunpack.c.l.b16 %v79
  %v480 = vunpack.c.l.b16 %v80
  %v481 = vunpack.c.l.b16 %v81
  %v482 = vunpack.c.l.b16 %v82
  %v483 = vunpack.c.l.b16 %v83
  %v484 = vunpack.c.l.b16 %v84
  %v485 = vunpack.c.l.b16 %v85
  %v486 = vunpack.c.l.b16 %v86
  %v487 = vunpack.c.l.b16 %v87
  %v488 = vunpack.c.l.b16 %v88
  %v489 = vunpack.c.l.b16 %v89
  %v490 = vunpack.c.l.b16 %v90
  %v491 = vunpack.c.l.b16 %v91
  %v492 = vunpack.c.l.b16 %v92
  %v493 = vunpack.c.l.b16 %v93
  %v494 = vunpack.c.l.b16 %v94
  %v495 = vunpack.c.l.b16 %v95
  %v496 = vunpack.c.l.b16 %v96
  %v497 = vunpack.c.l.b16 %v97
  %v498 = vunpack.c.l.b16 %v98
  %v499 = vunpack.c.l.b16 %v99
  %v500 = vunpack.c.l.b16 %v100
  %v501 = vunpack.c.l.b16 %v101
  %v502 = vunpack.c.l.b16 %v102
  %v503 = vunpack.c.l.b16 %v103
  %v504 = vunpack.c.l.b16 %v104
  %v505 = vunpack.c.l.b16 %v105
  %v506 = vunpack.c.l.b16 %v106
  %v507 = vunpack.c.l.b16 %v107
  %v508 = vunpack.c.l.b16 %v108
  %v509 = vunpack.c.l.b16 %v109
  %v510 = vunpack.c.l.b16 %v110
  %v511 = vunpack.c.l.b16 %v111
  %v512 = vunpack.c.l.b16 %v112
  %v513 = vunpack.c.l.b16 %v113
  %v514 = vunpack.c.l.b16 %v114
  %v515 = vpack.c.b16 %v416, %v415
  %v516 = vpack.c.b16 %v418, %v417
  %v517 = vpack.c.b16 %v420, %v419
  %v518 = vpack.c.b16 %v422, %v421
  %v519 = vpack.c.b16 %v424, %v423
  %v520 = vpack.c.b16 %v426, %v425
  %v521 = vpack.c.b16 %v428, %v427
  %v522 = vpack.c.b16 %v430, %v429
  %v523 = vpack.c.b16 %v432, %v431
  %v524 = vpack.c.b16 %v434, %v433
  %v525 = vpack.c.b16 %v436, %v435
  %v526 = vpack.c.b16 %v438, %v437
  %v527 = vpack.c.b16 %v440, %v439
  %v528 = vpack.c.b16 %v442, %v441
  %v529 = vpack.c.b16 %v444, %v443
  %v530 = vpack.c.b16 %v446, %v445
  %v531 = vpack.c.b16 %v448, %v447
  %v532 = vpack.c.b16 %v450, %v449
  %v533 = vpack.c.b16 %v452, %v451
  %v534 = vpack.c.b16 %v454, %v453
  %v535 = vpack.c.b16 %v456, %v455
  %v536 = vpack.c.b16 %v458, %v457
  %v537 = vpack.c.b16 %v460, %v459
  %v538 = vpack.c.b16 %v462, %v461
  %v539 = vpack.c.b16 %v464, %v463
  %v540 = vpack.c.b16 %v466, %v465
  %v541 = vpack.c.b16 %v468, %v467
  %v542 = vpack.c.b16 %v470, %v469
  %v543 = vpack.c.b16 %v472, %v471
  %v544 = vpack.c.b16 %v474, %v473
  %v545 = vpack.c.b16 %v476, %v475
  %v546 = vpack.c.b16 %v478, %v477
  %v547 = vpack.c.b16 %v480, %v479
  %v548 = vpack.c.b16 %v482, %v481
  %v549 = vpack.c.b16 %v484, %v483
  %v550 = vpack.c.b16 %v486, %v485
  %v551 = vpack.c.b16 %v488, %v487
  %v552 = vpack.c.b16 %v490, %v489
  %v553 = vpack.c.b16 %v492, %v491
  %v554 = vpack.c.b16 %v494, %v493
  %v555 = vpack.c.b16 %v496, %v495
  %v556 = vpack.c.b16 %v498, %v497
  %v557 = vpack.c.b16 %v500, %v499
  %v558 = vpack.c.b16 %v502, %v501
  %v559 = vpack.c.b16 %v504, %v503
  %v560 = vpack.c.b16 %v506, %v505
  %v561 = vpack.c.b16 %v508, %v507
  %v562 = vpack.c.b16 %v510, %v509
  %v563 = vpack.c.b16 %v512, %v511
  %v564 = vpack.c.b16 %v514, %v513
  %vm615 = vcmask 261120
  %v617 = vsel %vm615, %v256, 0
  %v620 = vsel %vm615, %v263, 0
  %v623 = vsel %vm615, %v270, 0
  %v626 = vsel %vm615, %v277, 0
  %v629 = vsel %vm615, %v284, 0
  %631 = vmatprep.subr.bf16.mxu0 0
  %632 = vmatpush1.bf16.msra.mxu0 %v522
  %633 = vmatprep.subr.bf16.mxu0 0
  %634 = vmatpush1.bf16.msra.mxu0 %v521
  %635 = vmatprep.subr.bf16.mxu0 0
  %636 = vmatpush1.bf16.msra.mxu0 %v520
  %637 = vmatprep.subr.bf16.mxu0 0
  %638 = vmatpush1.bf16.msra.mxu0 %v519
  %639 = vmatprep.subr.bf16.mxu0 0
  %640 = vmatpush1.bf16.msra.mxu0 %v518
  %641 = vmatprep.subr.bf16.mxu0 0
  %642 = vmatpush1.bf16.msra.mxu0 %v517
  %643 = vmatprep.subr.bf16.mxu0 0
  %644 = vmatpush1.bf16.msra.mxu0 %v516
  %645 = vmatprep.subr.bf16.mxu0 0
  %646 = vmatpush1.bf16.msra.mxu0 %v515
  %647 = vmatprep.subr.bf16.mxu0 0
  %648 = vmatpush2.bf16.msra.mxu0 %v530
  %649 = vmatprep.subr.bf16.mxu0 0
  %650 = vmatpush2.bf16.msra.mxu0 %v529
  %651 = vmatprep.subr.bf16.mxu0 0
  %652 = vmatpush2.bf16.msra.mxu0 %v528
  %653 = vmatprep.subr.bf16.mxu0 0
  %654 = vmatpush2.bf16.msra.mxu0 %v527
  %655 = vmatprep.subr.bf16.mxu0 0
  %656 = vmatpush2.bf16.msra.mxu0 %v526
  %657 = vmatprep.subr.bf16.mxu0 0
  %658 = vmatpush2.bf16.msra.mxu0 %v525
  %659 = vmatprep.subr.bf16.mxu0 0
  %660 = vmatpush2.bf16.msra.mxu0 %v524
  %661 = vmatprep.subr.bf16.mxu0 0
  %662 = vmatpush2.bf16.msra.mxu0 %v523
  %663 = vmatprep.mubr.bf16.mxu0 %v251
  %664 = vmatmul.mubr.bf16.gmra.mxu0 %v250
  %v665 = vpop.f32.mrf.mxu0
  %v666 = vadd.f32 0.0, %v665
  %v667 = vpop.f32.mrf.mxu0
  %v668 = vpop.f32.mrf.mxu0
  %v669 = vadd.f32 0.0, %v668
  %v670 = vpop.f32.mrf.mxu0
  %671 = vmatprep.mubr.bf16.mxu0 %v258
  %672 = vmatmul.mubr.bf16.gmra.mxu0 %v257
  %v673 = vpop.f32.mrf.mxu0
  %v674 = vadd.f32 0.0, %v673
  %v675 = vpop.f32.mrf.mxu0
  %v676 = vpop.f32.mrf.mxu0
  %v677 = vadd.f32 0.0, %v676
  %v678 = vpop.f32.mrf.mxu0
  %679 = vmatprep.mubr.bf16.mxu0 %v265
  %680 = vmatmul.mubr.bf16.gmra.mxu0 %v264
  %v681 = vpop.f32.mrf.mxu0
  %v682 = vadd.f32 0.0, %v681
  %v683 = vpop.f32.mrf.mxu0
  %v684 = vpop.f32.mrf.mxu0
  %v685 = vadd.f32 0.0, %v684
  %v686 = vpop.f32.mrf.mxu0
  %687 = vmatprep.mubr.bf16.mxu0 %v272
  %688 = vmatmul.mubr.bf16.gmra.mxu0 %v271
  %v689 = vpop.f32.mrf.mxu0
  %v690 = vadd.f32 0.0, %v689
  %v691 = vpop.f32.mrf.mxu0
  %v692 = vpop.f32.mrf.mxu0
  %v693 = vadd.f32 0.0, %v692
  %v694 = vpop.f32.mrf.mxu0
  %695 = vmatprep.mubr.bf16.mxu0 %v279
  %696 = vmatmul.mubr.bf16.gmra.mxu0 %v278
  %v697 = vpop.f32.mrf.mxu0
  %v698 = vadd.f32 0.0, %v697
  %v699 = vpop.f32.mrf.mxu0
  %v700 = vpop.f32.mrf.mxu0
  %v701 = vpop.f32.mrf.mxu0
  %702 = vdwg.mxu0
  %703 = vmatprep.subr.bf16.mxu0 0
  %704 = vmatpush1.bf16.msra.mxu0 %v538
  %705 = vmatprep.subr.bf16.mxu0 0
  %706 = vmatpush1.bf16.msra.mxu0 %v537
  %707 = vmatprep.subr.bf16.mxu0 0
  %708 = vmatpush1.bf16.msra.mxu0 %v536
  %709 = vmatprep.subr.bf16.mxu0 0
  %710 = vmatpush1.bf16.msra.mxu0 %v535
  %711 = vmatprep.subr.bf16.mxu0 0
  %712 = vmatpush1.bf16.msra.mxu0 %v534
  %713 = vmatprep.subr.bf16.mxu0 0
  %714 = vmatpush1.bf16.msra.mxu0 %v533
  %715 = vmatprep.subr.bf16.mxu0 0
  %716 = vmatpush1.bf16.msra.mxu0 %v532
  %717 = vmatprep.subr.bf16.mxu0 0
  %718 = vmatpush1.bf16.msra.mxu0 %v531
  %719 = vmatprep.subr.bf16.mxu0 0
  %720 = vmatpush2.bf16.msra.mxu0 %v546
  %721 = vmatprep.subr.bf16.mxu0 0
  %722 = vmatpush2.bf16.msra.mxu0 %v545
  %723 = vmatprep.subr.bf16.mxu0 0
  %724 = vmatpush2.bf16.msra.mxu0 %v544
  %725 = vmatprep.subr.bf16.mxu0 0
  %726 = vmatpush2.bf16.msra.mxu0 %v543
  %727 = vmatprep.subr.bf16.mxu0 0
  %728 = vmatpush2.bf16.msra.mxu0 %v542
  %729 = vmatprep.subr.bf16.mxu0 0
  %730 = vmatpush2.bf16.msra.mxu0 %v541
  %731 = vmatprep.subr.bf16.mxu0 0
  %732 = vmatpush2.bf16.msra.mxu0 %v540
  %733 = vmatprep.subr.bf16.mxu0 0
  %734 = vmatpush2.bf16.msra.mxu0 %v539
  %735 = vmatprep.mubr.bf16.mxu0 %v253
  %736 = vmatmul.mubr.bf16.gmra.mxu0 %v252
  %v737 = vpop.f32.mrf.mxu0
  %v738 = vadd.f32 %v666, %v737
  %v739 = vpop.f32.mrf.mxu0
  %v740 = vpop.f32.mrf.mxu0
  %v741 = vadd.f32 %v669, %v740
  %v742 = vpop.f32.mrf.mxu0
  %743 = vmatprep.mubr.bf16.mxu0 %v260
  %744 = vmatmul.mubr.bf16.gmra.mxu0 %v259
  %v745 = vpop.f32.mrf.mxu0
  %v746 = vadd.f32 %v674, %v745
  %v747 = vpop.f32.mrf.mxu0
  %v748 = vpop.f32.mrf.mxu0
  %v749 = vadd.f32 %v677, %v748
  %v750 = vpop.f32.mrf.mxu0
  %751 = vmatprep.mubr.bf16.mxu0 %v267
  %752 = vmatmul.mubr.bf16.gmra.mxu0 %v266
  %v753 = vpop.f32.mrf.mxu0
  %v754 = vadd.f32 %v682, %v753
  %v755 = vpop.f32.mrf.mxu0
  %v756 = vpop.f32.mrf.mxu0
  %v757 = vadd.f32 %v685, %v756
  %v758 = vpop.f32.mrf.mxu0
  %759 = vmatprep.mubr.bf16.mxu0 %v274
  %760 = vmatmul.mubr.bf16.gmra.mxu0 %v273
  %v761 = vpop.f32.mrf.mxu0
  %v762 = vadd.f32 %v690, %v761
  %v763 = vpop.f32.mrf.mxu0
  %v764 = vpop.f32.mrf.mxu0
  %v765 = vadd.f32 %v693, %v764
  %v766 = vpop.f32.mrf.mxu0
  %767 = vmatprep.mubr.bf16.mxu0 %v281
  %768 = vmatmul.mubr.bf16.gmra.mxu0 %v280
  %v769 = vpop.f32.mrf.mxu0
  %v770 = vadd.f32 %v698, %v769
  %v771 = vpop.f32.mrf.mxu0
  %v772 = vpop.f32.mrf.mxu0
  %v773 = vpop.f32.mrf.mxu0
  %774 = vdwg.mxu0
  %775 = vmatprep.subr.bf16.mxu0 0
  %776 = vmatpush1.bf16.msra.mxu0 %v554
  %777 = vmatprep.subr.bf16.mxu0 0
  %778 = vmatpush1.bf16.msra.mxu0 %v553
  %779 = vmatprep.subr.bf16.mxu0 0
  %780 = vmatpush1.bf16.msra.mxu0 %v552
  %781 = vmatprep.subr.bf16.mxu0 0
  %782 = vmatpush1.bf16.msra.mxu0 %v551
  %783 = vmatprep.subr.bf16.mxu0 0
  %784 = vmatpush1.bf16.msra.mxu0 %v550
  %785 = vmatprep.subr.bf16.mxu0 0
  %786 = vmatpush1.bf16.msra.mxu0 %v549
  %787 = vmatprep.subr.bf16.mxu0 0
  %788 = vmatpush1.bf16.msra.mxu0 %v548
  %789 = vmatprep.subr.bf16.mxu0 0
  %790 = vmatpush1.bf16.msra.mxu0 %v547
  %791 = vmatprep.subr.bf16.mxu0 0
  %792 = vmatpush2.bf16.msra.mxu0 %v562
  %793 = vmatprep.subr.bf16.mxu0 0
  %794 = vmatpush2.bf16.msra.mxu0 %v561
  %795 = vmatprep.subr.bf16.mxu0 0
  %796 = vmatpush2.bf16.msra.mxu0 %v560
  %797 = vmatprep.subr.bf16.mxu0 0
  %798 = vmatpush2.bf16.msra.mxu0 %v559
  %799 = vmatprep.subr.bf16.mxu0 0
  %800 = vmatpush2.bf16.msra.mxu0 %v558
  %801 = vmatprep.subr.bf16.mxu0 0
  %802 = vmatpush2.bf16.msra.mxu0 %v557
  %803 = vmatprep.subr.bf16.mxu0 0
  %804 = vmatpush2.bf16.msra.mxu0 %v556
  %805 = vmatprep.subr.bf16.mxu0 0
  %806 = vmatpush2.bf16.msra.mxu0 %v555
  %807 = vmatprep.mubr.bf16.mxu0 %v255
  %808 = vmatmul.mubr.bf16.gmra.mxu0 %v254
  %v809 = vpop.f32.mrf.mxu0
  %v810 = vadd.f32 %v738, %v809
  %v811 = vpop.f32.mrf.mxu0
  %v812 = vpop.f32.mrf.mxu0
  %v813 = vadd.f32 %v741, %v812
  %v814 = vpop.f32.mrf.mxu0
  %815 = vmatprep.mubr.bf16.mxu0 %v262
  %816 = vmatmul.mubr.bf16.gmra.mxu0 %v261
  %v817 = vpop.f32.mrf.mxu0
  %v818 = vadd.f32 %v746, %v817
  %v819 = vpop.f32.mrf.mxu0
  %v820 = vpop.f32.mrf.mxu0
  %v821 = vadd.f32 %v749, %v820
  %v822 = vpop.f32.mrf.mxu0
  %823 = vmatprep.mubr.bf16.mxu0 %v269
  %824 = vmatmul.mubr.bf16.gmra.mxu0 %v268
  %v825 = vpop.f32.mrf.mxu0
  %v826 = vadd.f32 %v754, %v825
  %v827 = vpop.f32.mrf.mxu0
  %v828 = vpop.f32.mrf.mxu0
  %v829 = vadd.f32 %v757, %v828
  %v830 = vpop.f32.mrf.mxu0
  %831 = vmatprep.mubr.bf16.mxu0 %v276
  %832 = vmatmul.mubr.bf16.gmra.mxu0 %v275
  %v833 = vpop.f32.mrf.mxu0
  %v834 = vadd.f32 %v762, %v833
  %v835 = vpop.f32.mrf.mxu0
  %v836 = vpop.f32.mrf.mxu0
  %v837 = vadd.f32 %v765, %v836
  %v838 = vpop.f32.mrf.mxu0
  %839 = vmatprep.mubr.bf16.mxu0 %v283
  %840 = vmatmul.mubr.bf16.gmra.mxu0 %v282
  %v841 = vpop.f32.mrf.mxu0
  %v842 = vadd.f32 %v770, %v841
  %v843 = vpop.f32.mrf.mxu0
  %v844 = vpop.f32.mrf.mxu0
  %v845 = vpop.f32.mrf.mxu0
  %846 = vdwg.mxu0
  %847 = vmatprep.subr.bf16.mxu0 0
  %848 = vmatpush1.bf16.msra.mxu0 0
  %849 = vmatprep.subr.bf16.mxu0 0
  %850 = vmatpush1.bf16.msra.mxu0 0
  %851 = vmatprep.subr.bf16.mxu0 0
  %852 = vmatpush1.bf16.msra.mxu0 0
  %853 = vmatprep.subr.bf16.mxu0 0
  %854 = vmatpush1.bf16.msra.mxu0 0
  %855 = vmatprep.subr.bf16.mxu0 0
  %856 = vmatpush1.bf16.msra.mxu0 0
  %857 = vmatprep.subr.bf16.mxu0 0
  %858 = vmatpush1.bf16.msra.mxu0 0
  %859 = vmatprep.subr.bf16.mxu0 0
  %860 = vmatpush1.bf16.msra.mxu0 %v564
  %861 = vmatprep.subr.bf16.mxu0 0
  %862 = vmatpush1.bf16.msra.mxu0 %v563
  %863 = vmatprep.subr.bf16.mxu0 0
  %864 = vmatpush2.bf16.msra.mxu0 0
  %865 = vmatprep.subr.bf16.mxu0 0
  %866 = vmatpush2.bf16.msra.mxu0 0
  %867 = vmatprep.subr.bf16.mxu0 0
  %868 = vmatpush2.bf16.msra.mxu0 0
  %869 = vmatprep.subr.bf16.mxu0 0
  %870 = vmatpush2.bf16.msra.mxu0 0
  %871 = vmatprep.subr.bf16.mxu0 0
  %872 = vmatpush2.bf16.msra.mxu0 0
  %873 = vmatprep.subr.bf16.mxu0 0
  %874 = vmatpush2.bf16.msra.mxu0 0
  %875 = vmatprep.subr.bf16.mxu0 0
  %876 = vmatpush2.bf16.msra.mxu0 0
  %877 = vmatprep.subr.bf16.mxu0 0
  %878 = vmatpush2.bf16.msra.mxu0 0
  %879 = vmatprep.mubr.bf16.mxu0 0
  %880 = vmatmul.mubr.bf16.gmra.mxu0 %v617
  %v881 = vpop.f32.mrf.mxu0
  %v882 = vadd.f32 %v810, %v881
  %v883 = vpop.f32.mrf.mxu0
  %v884 = vpop.f32.mrf.mxu0
  %v885 = vadd.f32 %v813, %v884
  %v886 = vpop.f32.mrf.mxu0
  %887 = vmatprep.mubr.bf16.mxu0 0
  %888 = vmatmul.mubr.bf16.gmra.mxu0 %v620
  %v889 = vpop.f32.mrf.mxu0
  %v890 = vadd.f32 %v818, %v889
  %v891 = vpop.f32.mrf.mxu0
  %v892 = vpop.f32.mrf.mxu0
  %v893 = vadd.f32 %v821, %v892
  %v894 = vpop.f32.mrf.mxu0
  %895 = vmatprep.mubr.bf16.mxu0 0
  %896 = vmatmul.mubr.bf16.gmra.mxu0 %v623
  %v897 = vpop.f32.mrf.mxu0
  %v898 = vadd.f32 %v826, %v897
  %v899 = vpop.f32.mrf.mxu0
  %v900 = vpop.f32.mrf.mxu0
  %v901 = vadd.f32 %v829, %v900
  %v902 = vpop.f32.mrf.mxu0
  %903 = vmatprep.mubr.bf16.mxu0 0
  %904 = vmatmul.mubr.bf16.gmra.mxu0 %v626
  %v905 = vpop.f32.mrf.mxu0
  %v906 = vadd.f32 %v834, %v905
  %v907 = vpop.f32.mrf.mxu0
  %v908 = vpop.f32.mrf.mxu0
  %v909 = vadd.f32 %v837, %v908
  %v910 = vpop.f32.mrf.mxu0
  %911 = vmatprep.mubr.bf16.mxu0 0
  %912 = vmatmul.mubr.bf16.gmra.mxu0 %v629
  %v913 = vpop.f32.mrf.mxu0
  %v914 = vadd.f32 %v842, %v913
  %v915 = vpop.f32.mrf.mxu0
  %v916 = vpop.f32.mrf.mxu0
  %v917 = vpop.f32.mrf.mxu0
  %918 = vdwg.mxu0
  %s919 = scalar_lea.vmem %s0, 252
  %v920 = vld [vmem:[%s919] sm:$0xff]
  %v921 = vld [vmem:[%s919 + $0x8] sm:$0xff]
  %v922 = vld [vmem:[%s919 + $0x10] sm:$0xff]
  %v923 = vld [vmem:[%s919 + $0x18] sm:$0xf]
  %v924 = vld [vmem:[%s919 + $0x1c] sm:$0xff]
  %v925 = vld [vmem:[%s919 + $0x24] sm:$0xff]
  %v926 = vld [vmem:[%s919 + $0x2c] sm:$0xff]
  %v927 = vld [vmem:[%s919 + $0x34] sm:$0xf]
  %v928 = vld [vmem:[%s919 + $0x38] sm:$0xff]
  %v929 = vld [vmem:[%s919 + $0x40] sm:$0xff]
  %v930 = vld [vmem:[%s919 + $0x48] sm:$0xff]
  %v931 = vld [vmem:[%s919 + $0x50] sm:$0xf]
  %v932 = vld [vmem:[%s919 + $0x54] sm:$0xff]
  %v933 = vld [vmem:[%s919 + $0x5c] sm:$0xff]
  %v934 = vld [vmem:[%s919 + $0x64] sm:$0xff]
  %v935 = vld [vmem:[%s919 + $0x6c] sm:$0xf]
  %v936 = vld [vmem:[%s919 + $0x70] sm:$0xff]
  %v937 = vld [vmem:[%s919 + $0x78] sm:$0xff]
  %v938 = vld [vmem:[%s919 + $0x80] sm:$0xff]
  %v939 = vld [vmem:[%s919 + $0x88] sm:$0xf]
  %v940 = vld [vmem:[%s919 + $0x8c] sm:$0xff]
  %v941 = vld [vmem:[%s919 + $0x94] sm:$0xff]
  %v942 = vld [vmem:[%s919 + $0x9c] sm:$0xff]
  %v943 = vld [vmem:[%s919 + $0xa4] sm:$0xf]
  %v944 = vld [vmem:[%s919 + $0xa8] sm:$0xff]
  %v945 = vld [vmem:[%s919 + $0xb0] sm:$0xff]
  %v946 = vld [vmem:[%s919 + $0xb8] sm:$0xff]
  %v947 = vld [vmem:[%s919 + $0xc0] sm:$0xf]
  %v948 = vld [vmem:[%s919 + $0xc4] sm:$0xff]
  %v949 = vld [vmem:[%s919 + $0xcc] sm:$0xff]
  %v950 = vld [vmem:[%s919 + $0xd4] sm:$0xff]
  %v951 = vld [vmem:[%s919 + $0xdc] sm:$0xf]
  %v952 = vld [vmem:[%s919 + $0xe0] sm:$0xff]
  %v953 = vld [vmem:[%s919 + $0xe8] sm:$0xff]
  %v954 = vld [vmem:[%s919 + $0xf0] sm:$0xff]
  %v955 = vld [vmem:[%s919 + $0xf8] sm:$0xf]
  %v992 = vunpack.c.l.b16 %v920
  %v993 = vunpack.c.h.b16 %v920
  %v994 = vunpack.c.l.b16 %v921
  %v995 = vunpack.c.h.b16 %v921
  %v996 = vunpack.c.l.b16 %v922
  %v997 = vunpack.c.h.b16 %v922
  %v998 = vunpack.c.l.b16 %v923
  %v999 = vunpack.c.l.b16 %v924
  %v1000 = vunpack.c.h.b16 %v924
  %v1001 = vunpack.c.l.b16 %v925
  %v1002 = vunpack.c.h.b16 %v925
  %v1003 = vunpack.c.l.b16 %v926
  %v1004 = vunpack.c.h.b16 %v926
  %v1005 = vunpack.c.l.b16 %v927
  %v1006 = vunpack.c.l.b16 %v928
  %v1007 = vunpack.c.h.b16 %v928
  %v1008 = vunpack.c.l.b16 %v929
  %v1009 = vunpack.c.h.b16 %v929
  %v1010 = vunpack.c.l.b16 %v930
  %v1011 = vunpack.c.h.b16 %v930
  %v1012 = vunpack.c.l.b16 %v931
  %v1013 = vunpack.c.l.b16 %v932
  %v1014 = vunpack.c.h.b16 %v932
  %v1015 = vunpack.c.l.b16 %v933
  %v1016 = vunpack.c.h.b16 %v933
  %v1017 = vunpack.c.l.b16 %v934
  %v1018 = vunpack.c.h.b16 %v934
  %v1019 = vunpack.c.l.b16 %v935
  %v1020 = vunpack.c.l.b16 %v936
  %v1021 = vunpack.c.h.b16 %v936
  %v1022 = vunpack.c.l.b16 %v937
  %v1023 = vunpack.c.h.b16 %v937
  %v1024 = vunpack.c.l.b16 %v938
  %v1025 = vunpack.c.h.b16 %v938
  %v1026 = vunpack.c.l.b16 %v939
  %v1027 = vunpack.c.l.b16 %v940
  %v1028 = vunpack.c.h.b16 %v940
  %v1029 = vunpack.c.l.b16 %v941
  %v1030 = vunpack.c.h.b16 %v941
  %v1031 = vunpack.c.l.b16 %v942
  %v1032 = vunpack.c.h.b16 %v942
  %v1033 = vunpack.c.l.b16 %v943
  %v1034 = vunpack.c.l.b16 %v944
  %v1035 = vunpack.c.h.b16 %v944
  %v1036 = vunpack.c.l.b16 %v945
  %v1037 = vunpack.c.h.b16 %v945
  %v1038 = vunpack.c.l.b16 %v946
  %v1039 = vunpack.c.h.b16 %v946
  %v1040 = vunpack.c.l.b16 %v947
  %v1041 = vunpack.c.l.b16 %v948
  %v1042 = vunpack.c.h.b16 %v948
  %v1043 = vunpack.c.l.b16 %v949
  %v1044 = vunpack.c.h.b16 %v949
  %v1045 = vunpack.c.l.b16 %v950
  %v1046 = vunpack.c.h.b16 %v950
  %v1047 = vunpack.c.l.b16 %v951
  %v1048 = vunpack.c.l.b16 %v952
  %v1049 = vunpack.c.h.b16 %v952
  %v1050 = vunpack.c.l.b16 %v953
  %v1051 = vunpack.c.h.b16 %v953
  %v1052 = vunpack.c.l.b16 %v954
  %v1053 = vunpack.c.h.b16 %v954
  %v1054 = vunpack.c.l.b16 %v955
  %v1055 = vpack.c.b16 %v999, %v992
  %v1056 = vpack.c.b16 %v1000, %v993
  %v1057 = vpack.c.b16 %v1001, %v994
  %v1058 = vpack.c.b16 %v1002, %v995
  %v1059 = vpack.c.b16 %v1003, %v996
  %v1060 = vpack.c.b16 %v1004, %v997
  %v1061 = vpack.c.b16 %v1005, %v998
  %v1062 = vpack.c.b16 %v1013, %v1006
  %v1063 = vpack.c.b16 %v1014, %v1007
  %v1064 = vpack.c.b16 %v1015, %v1008
  %v1065 = vpack.c.b16 %v1016, %v1009
  %v1066 = vpack.c.b16 %v1017, %v1010
  %v1067 = vpack.c.b16 %v1018, %v1011
  %v1068 = vpack.c.b16 %v1019, %v1012
  %v1069 = vpack.c.b16 %v1027, %v1020
  %v1070 = vpack.c.b16 %v1028, %v1021
  %v1071 = vpack.c.b16 %v1029, %v1022
  %v1072 = vpack.c.b16 %v1030, %v1023
  %v1073 = vpack.c.b16 %v1031, %v1024
  %v1074 = vpack.c.b16 %v1032, %v1025
  %v1075 = vpack.c.b16 %v1033, %v1026
  %v1076 = vpack.c.b16 %v1041, %v1034
  %v1077 = vpack.c.b16 %v1042, %v1035
  %v1078 = vpack.c.b16 %v1043, %v1036
  %v1079 = vpack.c.b16 %v1044, %v1037
  %v1080 = vpack.c.b16 %v1045, %v1038
  %v1081 = vpack.c.b16 %v1046, %v1039
  %v1082 = vpack.c.b16 %v1047, %v1040
  %v1083 = vpack.c.b16 %v1048, %v1048
  %v1084 = vpack.c.b16 %v1049, %v1049
  %v1085 = vpack.c.b16 %v1050, %v1050
  %v1086 = vpack.c.b16 %v1051, %v1051
  %v1087 = vpack.c.b16 %v1052, %v1052
  %v1088 = vpack.c.b16 %v1053, %v1053
  %v1089 = vpack.c.b16 %v1054, %v1054
  %v1121 = vsel %vm615, %v1061, 0
  %v1124 = vsel %vm615, %v1068, 0
  %v1127 = vsel %vm615, %v1075, 0
  %v1130 = vsel %vm615, %v1082, 0
  %v1133 = vsel %vm615, %v1089, 0
  %1135 = vmatprep.subr.bf16.mxu0 0
  %1136 = vmatpush1.bf16.msra.mxu0 %v522
  %1137 = vmatprep.subr.bf16.mxu0 0
  %1138 = vmatpush1.bf16.msra.mxu0 %v521
  %1139 = vmatprep.subr.bf16.mxu0 0
  %1140 = vmatpush1.bf16.msra.mxu0 %v520
  %1141 = vmatprep.subr.bf16.mxu0 0
  %1142 = vmatpush1.bf16.msra.mxu0 %v519
  %1143 = vmatprep.subr.bf16.mxu0 0
  %1144 = vmatpush1.bf16.msra.mxu0 %v518
  %1145 = vmatprep.subr.bf16.mxu0 0
  %1146 = vmatpush1.bf16.msra.mxu0 %v517
  %1147 = vmatprep.subr.bf16.mxu0 0
  %1148 = vmatpush1.bf16.msra.mxu0 %v516
  %1149 = vmatprep.subr.bf16.mxu0 0
  %1150 = vmatpush1.bf16.msra.mxu0 %v515
  %1151 = vmatprep.subr.bf16.mxu0 0
  %1152 = vmatpush2.bf16.msra.mxu0 %v530
  %1153 = vmatprep.subr.bf16.mxu0 0
  %1154 = vmatpush2.bf16.msra.mxu0 %v529
  %1155 = vmatprep.subr.bf16.mxu0 0
  %1156 = vmatpush2.bf16.msra.mxu0 %v528
  %1157 = vmatprep.subr.bf16.mxu0 0
  %1158 = vmatpush2.bf16.msra.mxu0 %v527
  %1159 = vmatprep.subr.bf16.mxu0 0
  %1160 = vmatpush2.bf16.msra.mxu0 %v526
  %1161 = vmatprep.subr.bf16.mxu0 0
  %1162 = vmatpush2.bf16.msra.mxu0 %v525
  %1163 = vmatprep.subr.bf16.mxu0 0
  %1164 = vmatpush2.bf16.msra.mxu0 %v524
  %1165 = vmatprep.subr.bf16.mxu0 0
  %1166 = vmatpush2.bf16.msra.mxu0 %v523
  %1167 = vmatprep.mubr.bf16.mxu0 %v1056
  %1168 = vmatmul.mubr.bf16.gmra.mxu0 %v1055
  %v1169 = vpop.f32.mrf.mxu0
  %v1170 = vadd.f32 0.0, %v1169
  %v1171 = vpop.f32.mrf.mxu0
  %v1172 = vpop.f32.mrf.mxu0
  %v1173 = vadd.f32 0.0, %v1172
  %v1174 = vpop.f32.mrf.mxu0
  %1175 = vmatprep.mubr.bf16.mxu0 %v1063
  %1176 = vmatmul.mubr.bf16.gmra.mxu0 %v1062
  %v1177 = vpop.f32.mrf.mxu0
  %v1178 = vadd.f32 0.0, %v1177
  %v1179 = vpop.f32.mrf.mxu0
  %v1180 = vpop.f32.mrf.mxu0
  %v1181 = vadd.f32 0.0, %v1180
  %v1182 = vpop.f32.mrf.mxu0
  %1183 = vmatprep.mubr.bf16.mxu0 %v1070
  %1184 = vmatmul.mubr.bf16.gmra.mxu0 %v1069
  %v1185 = vpop.f32.mrf.mxu0
  %v1186 = vadd.f32 0.0, %v1185
  %v1187 = vpop.f32.mrf.mxu0
  %v1188 = vpop.f32.mrf.mxu0
  %v1189 = vadd.f32 0.0, %v1188
  %v1190 = vpop.f32.mrf.mxu0
  %1191 = vmatprep.mubr.bf16.mxu0 %v1077
  %1192 = vmatmul.mubr.bf16.gmra.mxu0 %v1076
  %v1193 = vpop.f32.mrf.mxu0
  %v1194 = vadd.f32 0.0, %v1193
  %v1195 = vpop.f32.mrf.mxu0
  %v1196 = vpop.f32.mrf.mxu0
  %v1197 = vadd.f32 0.0, %v1196
  %v1198 = vpop.f32.mrf.mxu0
  %1199 = vmatprep.mubr.bf16.mxu0 %v1084
  %1200 = vmatmul.mubr.bf16.gmra.mxu0 %v1083
  %v1201 = vpop.f32.mrf.mxu0
  %v1202 = vadd.f32 0.0, %v1201
  %v1203 = vpop.f32.mrf.mxu0
  %v1204 = vpop.f32.mrf.mxu0
  %v1205 = vpop.f32.mrf.mxu0
  %1206 = vdwg.mxu0
  %1207 = vmatprep.subr.bf16.mxu0 0
  %1208 = vmatpush1.bf16.msra.mxu0 %v538
  %1209 = vmatprep.subr.bf16.mxu0 0
  %1210 = vmatpush1.bf16.msra.mxu0 %v537
  %1211 = vmatprep.subr.bf16.mxu0 0
  %1212 = vmatpush1.bf16.msra.mxu0 %v536
  %1213 = vmatprep.subr.bf16.mxu0 0
  %1214 = vmatpush1.bf16.msra.mxu0 %v535
  %1215 = vmatprep.subr.bf16.mxu0 0
  %1216 = vmatpush1.bf16.msra.mxu0 %v534
  %1217 = vmatprep.subr.bf16.mxu0 0
  %1218 = vmatpush1.bf16.msra.mxu0 %v533
  %1219 = vmatprep.subr.bf16.mxu0 0
  %1220 = vmatpush1.bf16.msra.mxu0 %v532
  %1221 = vmatprep.subr.bf16.mxu0 0
  %1222 = vmatpush1.bf16.msra.mxu0 %v531
  %1223 = vmatprep.subr.bf16.mxu0 0
  %1224 = vmatpush2.bf16.msra.mxu0 %v546
  %1225 = vmatprep.subr.bf16.mxu0 0
  %1226 = vmatpush2.bf16.msra.mxu0 %v545
  %1227 = vmatprep.subr.bf16.mxu0 0
  %1228 = vmatpush2.bf16.msra.mxu0 %v544
  %1229 = vmatprep.subr.bf16.mxu0 0
  %1230 = vmatpush2.bf16.msra.mxu0 %v543
  %1231 = vmatprep.subr.bf16.mxu0 0
  %1232 = vmatpush2.bf16.msra.mxu0 %v542
  %1233 = vmatprep.subr.bf16.mxu0 0
  %1234 = vmatpush2.bf16.msra.mxu0 %v541
  %1235 = vmatprep.subr.bf16.mxu0 0
  %1236 = vmatpush2.bf16.msra.mxu0 %v540
  %1237 = vmatprep.subr.bf16.mxu0 0
  %1238 = vmatpush2.bf16.msra.mxu0 %v539
  %1239 = vmatprep.mubr.bf16.mxu0 %v1058
  %1240 = vmatmul.mubr.bf16.gmra.mxu0 %v1057
  %v1241 = vpop.f32.mrf.mxu0
  %v1242 = vadd.f32 %v1170, %v1241
  %v1243 = vpop.f32.mrf.mxu0
  %v1244 = vpop.f32.mrf.mxu0
  %v1245 = vadd.f32 %v1173, %v1244
  %v1246 = vpop.f32.mrf.mxu0
  %1247 = vmatprep.mubr.bf16.mxu0 %v1065
  %1248 = vmatmul.mubr.bf16.gmra.mxu0 %v1064
  %v1249 = vpop.f32.mrf.mxu0
  %v1250 = vadd.f32 %v1178, %v1249
  %v1251 = vpop.f32.mrf.mxu0
  %v1252 = vpop.f32.mrf.mxu0
  %v1253 = vadd.f32 %v1181, %v1252
  %v1254 = vpop.f32.mrf.mxu0
  %1255 = vmatprep.mubr.bf16.mxu0 %v1072
  %1256 = vmatmul.mubr.bf16.gmra.mxu0 %v1071
  %v1257 = vpop.f32.mrf.mxu0
  %v1258 = vadd.f32 %v1186, %v1257
  %v1259 = vpop.f32.mrf.mxu0
  %v1260 = vpop.f32.mrf.mxu0
  %v1261 = vadd.f32 %v1189, %v1260
  %v1262 = vpop.f32.mrf.mxu0
  %1263 = vmatprep.mubr.bf16.mxu0 %v1079
  %1264 = vmatmul.mubr.bf16.gmra.mxu0 %v1078
  %v1265 = vpop.f32.mrf.mxu0
  %v1266 = vadd.f32 %v1194, %v1265
  %v1267 = vpop.f32.mrf.mxu0
  %v1268 = vpop.f32.mrf.mxu0
  %v1269 = vadd.f32 %v1197, %v1268
  %v1270 = vpop.f32.mrf.mxu0
  %1271 = vmatprep.mubr.bf16.mxu0 %v1086
  %1272 = vmatmul.mubr.bf16.gmra.mxu0 %v1085
  %v1273 = vpop.f32.mrf.mxu0
  %v1274 = vadd.f32 %v1202, %v1273
  %v1275 = vpop.f32.mrf.mxu0
  %v1276 = vpop.f32.mrf.mxu0
  %v1277 = vpop.f32.mrf.mxu0
  %1278 = vdwg.mxu0
  %1279 = vmatprep.subr.bf16.mxu0 0
  %1280 = vmatpush1.bf16.msra.mxu0 %v554
  %1281 = vmatprep.subr.bf16.mxu0 0
  %1282 = vmatpush1.bf16.msra.mxu0 %v553
  %1283 = vmatprep.subr.bf16.mxu0 0
  %1284 = vmatpush1.bf16.msra.mxu0 %v552
  %1285 = vmatprep.subr.bf16.mxu0 0
  %1286 = vmatpush1.bf16.msra.mxu0 %v551
  %1287 = vmatprep.subr.bf16.mxu0 0
  %1288 = vmatpush1.bf16.msra.mxu0 %v550
  %1289 = vmatprep.subr.bf16.mxu0 0
  %1290 = vmatpush1.bf16.msra.mxu0 %v549
  %1291 = vmatprep.subr.bf16.mxu0 0
  %1292 = vmatpush1.bf16.msra.mxu0 %v548
  %1293 = vmatprep.subr.bf16.mxu0 0
  %1294 = vmatpush1.bf16.msra.mxu0 %v547
  %1295 = vmatprep.subr.bf16.mxu0 0
  %1296 = vmatpush2.bf16.msra.mxu0 %v562
  %1297 = vmatprep.subr.bf16.mxu0 0
  %1298 = vmatpush2.bf16.msra.mxu0 %v561
  %1299 = vmatprep.subr.bf16.mxu0 0
  %1300 = vmatpush2.bf16.msra.mxu0 %v560
  %1301 = vmatprep.subr.bf16.mxu0 0
  %1302 = vmatpush2.bf16.msra.mxu0 %v559
  %1303 = vmatprep.subr.bf16.mxu0 0
  %1304 = vmatpush2.bf16.msra.mxu0 %v558
  %1305 = vmatprep.subr.bf16.mxu0 0
  %1306 = vmatpush2.bf16.msra.mxu0 %v557
  %1307 = vmatprep.subr.bf16.mxu0 0
  %1308 = vmatpush2.bf16.msra.mxu0 %v556
  %1309 = vmatprep.subr.bf16.mxu0 0
  %1310 = vmatpush2.bf16.msra.mxu0 %v555
  %1311 = vmatprep.mubr.bf16.mxu0 %v1060
  %1312 = vmatmul.mubr.bf16.gmra.mxu0 %v1059
  %v1313 = vpop.f32.mrf.mxu0
  %v1314 = vadd.f32 %v1242, %v1313
  %v1315 = vpop.f32.mrf.mxu0
  %v1316 = vpop.f32.mrf.mxu0
  %v1317 = vadd.f32 %v1245, %v1316
  %v1318 = vpop.f32.mrf.mxu0
  %1319 = vmatprep.mubr.bf16.mxu0 %v1067
  %1320 = vmatmul.mubr.bf16.gmra.mxu0 %v1066
  %v1321 = vpop.f32.mrf.mxu0
  %v1322 = vadd.f32 %v1250, %v1321
  %v1323 = vpop.f32.mrf.mxu0
  %v1324 = vpop.f32.mrf.mxu0
  %v1325 = vadd.f32 %v1253, %v1324
  %v1326 = vpop.f32.mrf.mxu0
  %1327 = vmatprep.mubr.bf16.mxu0 %v1074
  %1328 = vmatmul.mubr.bf16.gmra.mxu0 %v1073
  %v1329 = vpop.f32.mrf.mxu0
  %v1330 = vadd.f32 %v1258, %v1329
  %v1331 = vpop.f32.mrf.mxu0
  %v1332 = vpop.f32.mrf.mxu0
  %v1333 = vadd.f32 %v1261, %v1332
  %v1334 = vpop.f32.mrf.mxu0
  %1335 = vmatprep.mubr.bf16.mxu0 %v1081
  %1336 = vmatmul.mubr.bf16.gmra.mxu0 %v1080
  %v1337 = vpop.f32.mrf.mxu0
  %v1338 = vadd.f32 %v1266, %v1337
  %v1339 = vpop.f32.mrf.mxu0
  %v1340 = vpop.f32.mrf.mxu0
  %v1341 = vadd.f32 %v1269, %v1340
  %v1342 = vpop.f32.mrf.mxu0
  %1343 = vmatprep.mubr.bf16.mxu0 %v1088
  %1344 = vmatmul.mubr.bf16.gmra.mxu0 %v1087
  %v1345 = vpop.f32.mrf.mxu0
  %v1346 = vadd.f32 %v1274, %v1345
  %v1347 = vpop.f32.mrf.mxu0
  %v1348 = vpop.f32.mrf.mxu0
  %v1349 = vpop.f32.mrf.mxu0
  %1350 = vdwg.mxu0
  %1351 = vmatprep.subr.bf16.mxu0 0
  %1352 = vmatpush1.bf16.msra.mxu0 0
  %1353 = vmatprep.subr.bf16.mxu0 0
  %1354 = vmatpush1.bf16.msra.mxu0 0
  %1355 = vmatprep.subr.bf16.mxu0 0
  %1356 = vmatpush1.bf16.msra.mxu0 0
  %1357 = vmatprep.subr.bf16.mxu0 0
  %1358 = vmatpush1.bf16.msra.mxu0 0
  %1359 = vmatprep.subr.bf16.mxu0 0
  %1360 = vmatpush1.bf16.msra.mxu0 0
  %1361 = vmatprep.subr.bf16.mxu0 0
  %1362 = vmatpush1.bf16.msra.mxu0 0
  %1363 = vmatprep.subr.bf16.mxu0 0
  %1364 = vmatpush1.bf16.msra.mxu0 %v564
  %1365 = vmatprep.subr.bf16.mxu0 0
  %1366 = vmatpush1.bf16.msra.mxu0 %v563
  %1367 = vmatprep.subr.bf16.mxu0 0
  %1368 = vmatpush2.bf16.msra.mxu0 0
  %1369 = vmatprep.subr.bf16.mxu0 0
  %1370 = vmatpush2.bf16.msra.mxu0 0
  %1371 = vmatprep.subr.bf16.mxu0 0
  %1372 = vmatpush2.bf16.msra.mxu0 0
  %1373 = vmatprep.subr.bf16.mxu0 0
  %1374 = vmatpush2.bf16.msra.mxu0 0
  %1375 = vmatprep.subr.bf16.mxu0 0
  %1376 = vmatpush2.bf16.msra.mxu0 0
  %1377 = vmatprep.subr.bf16.mxu0 0
  %1378 = vmatpush2.bf16.msra.mxu0 0
  %1379 = vmatprep.subr.bf16.mxu0 0
  %1380 = vmatpush2.bf16.msra.mxu0 0
  %1381 = vmatprep.subr.bf16.mxu0 0
  %1382 = vmatpush2.bf16.msra.mxu0 0
  %1383 = vmatprep.mubr.bf16.mxu0 0
  %1384 = vmatmul.mubr.bf16.gmra.mxu0 %v1121
  %v1385 = vpop.f32.mrf.mxu0
  %v1386 = vadd.f32 %v1314, %v1385
  %v1387 = vpop.f32.mrf.mxu0
  %v1388 = vpop.f32.mrf.mxu0
  %v1389 = vadd.f32 %v1317, %v1388
  %v1390 = vpop.f32.mrf.mxu0
  %1391 = vmatprep.mubr.bf16.mxu0 0
  %1392 = vmatmul.mubr.bf16.gmra.mxu0 %v1124
  %v1393 = vpop.f32.mrf.mxu0
  %v1394 = vadd.f32 %v1322, %v1393
  %v1395 = vpop.f32.mrf.mxu0
  %v1396 = vpop.f32.mrf.mxu0
  %v1397 = vadd.f32 %v1325, %v1396
  %v1398 = vpop.f32.mrf.mxu0
  %1399 = vmatprep.mubr.bf16.mxu0 0
  %1400 = vmatmul.mubr.bf16.gmra.mxu0 %v1127
  %v1401 = vpop.f32.mrf.mxu0
  %v1402 = vadd.f32 %v1330, %v1401
  %v1403 = vpop.f32.mrf.mxu0
  %v1404 = vpop.f32.mrf.mxu0
  %v1405 = vadd.f32 %v1333, %v1404
  %v1406 = vpop.f32.mrf.mxu0
  %1407 = vmatprep.mubr.bf16.mxu0 0
  %1408 = vmatmul.mubr.bf16.gmra.mxu0 %v1130
  %v1409 = vpop.f32.mrf.mxu0
  %v1410 = vadd.f32 %v1338, %v1409
  %v1411 = vpop.f32.mrf.mxu0
  %v1412 = vpop.f32.mrf.mxu0
  %v1413 = vadd.f32 %v1341, %v1412
  %v1414 = vpop.f32.mrf.mxu0
  %1415 = vmatprep.mubr.bf16.mxu0 0
  %1416 = vmatmul.mubr.bf16.gmra.mxu0 %v1133
  %v1417 = vpop.f32.mrf.mxu0
  %v1418 = vadd.f32 %v1346, %v1417
  %v1419 = vpop.f32.mrf.mxu0
  %v1420 = vpop.f32.mrf.mxu0
  %v1421 = vpop.f32.mrf.mxu0
  %1422 = vdwg.mxu0
  %v1423 = vmax.f32 %v882, %v1386
  %v1424 = vmax.f32 %v885, %v1389
  %v1425 = vmax.f32 %v890, %v1394
  %v1426 = vmax.f32 %v893, %v1397
  %v1427 = vmax.f32 %v898, %v1402
  %v1428 = vmax.f32 %v901, %v1405
  %v1429 = vmax.f32 %v906, %v1410
  %v1430 = vmax.f32 %v909, %v1413
  %v1431 = vmax.f32 %v914, %v1418
  %s1432 = scalar_lea.vmem %s0, 504
  %v1433 = vld [vmem:[%s1432] sm:$0xff]
  %v1434 = vld [vmem:[%s1432 + $0x8] sm:$0xff]
  %v1435 = vld [vmem:[%s1432 + $0x10] sm:$0xff]
  %v1436 = vld [vmem:[%s1432 + $0x18] sm:$0xf]
  %v1437 = vld [vmem:[%s1432 + $0x1c] sm:$0xff]
  %v1438 = vld [vmem:[%s1432 + $0x24] sm:$0xff]
  %v1439 = vld [vmem:[%s1432 + $0x2c] sm:$0xff]
  %v1440 = vld [vmem:[%s1432 + $0x34] sm:$0xf]
  %v1441 = vld [vmem:[%s1432 + $0x38] sm:$0xff]
  %v1442 = vld [vmem:[%s1432 + $0x40] sm:$0xff]
  %v1443 = vld [vmem:[%s1432 + $0x48] sm:$0xff]
  %v1444 = vld [vmem:[%s1432 + $0x50] sm:$0xf]
  %v1445 = vld [vmem:[%s1432 + $0x54] sm:$0xff]
  %v1446 = vld [vmem:[%s1432 + $0x5c] sm:$0xff]
  %v1447 = vld [vmem:[%s1432 + $0x64] sm:$0xff]
  %v1448 = vld [vmem:[%s1432 + $0x6c] sm:$0xf]
  %v1449 = vld [vmem:[%s1432 + $0x70] sm:$0xff]
  %v1450 = vld [vmem:[%s1432 + $0x78] sm:$0xff]
  %v1451 = vld [vmem:[%s1432 + $0x80] sm:$0xff]
  %v1452 = vld [vmem:[%s1432 + $0x88] sm:$0xf]
  %v1453 = vld [vmem:[%s1432 + $0x8c] sm:$0xff]
  %v1454 = vld [vmem:[%s1432 + $0x94] sm:$0xff]
  %v1455 = vld [vmem:[%s1432 + $0x9c] sm:$0xff]
  %v1456 = vld [vmem:[%s1432 + $0xa4] sm:$0xf]
  %v1457 = vld [vmem:[%s1432 + $0xa8] sm:$0xff]
  %v1458 = vld [vmem:[%s1432 + $0xb0] sm:$0xff]
  %v1459 = vld [vmem:[%s1432 + $0xb8] sm:$0xff]
  %v1460 = vld [vmem:[%s1432 + $0xc0] sm:$0xf]
  %v1461 = vld [vmem:[%s1432 + $0xc4] sm:$0xff]
  %v1462 = vld [vmem:[%s1432 + $0xcc] sm:$0xff]
  %v1463 = vld [vmem:[%s1432 + $0xd4] sm:$0xff]
  %v1464 = vld [vmem:[%s1432 + $0xdc] sm:$0xf]
  %v1465 = vld [vmem:[%s1432 + $0xe0] sm:$0xff]
  %v1466 = vld [vmem:[%s1432 + $0xe8] sm:$0xff]
  %v1467 = vld [vmem:[%s1432 + $0xf0] sm:$0xff]
  %v1468 = vld [vmem:[%s1432 + $0xf8] sm:$0xf]
  %v1505 = vunpack.c.l.b16 %v1433
  %v1506 = vunpack.c.h.b16 %v1433
  %v1507 = vunpack.c.l.b16 %v1434
  %v1508 = vunpack.c.h.b16 %v1434
  %v1509 = vunpack.c.l.b16 %v1435
  %v1510 = vunpack.c.h.b16 %v1435
  %v1511 = vunpack.c.l.b16 %v1436
  %v1512 = vunpack.c.l.b16 %v1437
  %v1513 = vunpack.c.h.b16 %v1437
  %v1514 = vunpack.c.l.b16 %v1438
  %v1515 = vunpack.c.h.b16 %v1438
  %v1516 = vunpack.c.l.b16 %v1439
  %v1517 = vunpack.c.h.b16 %v1439
  %v1518 = vunpack.c.l.b16 %v1440
  %v1519 = vunpack.c.l.b16 %v1441
  %v1520 = vunpack.c.h.b16 %v1441
  %v1521 = vunpack.c.l.b16 %v1442
  %v1522 = vunpack.c.h.b16 %v1442
  %v1523 = vunpack.c.l.b16 %v1443
  %v1524 = vunpack.c.h.b16 %v1443
  %v1525 = vunpack.c.l.b16 %v1444
  %v1526 = vunpack.c.l.b16 %v1445
  %v1527 = vunpack.c.h.b16 %v1445
  %v1528 = vunpack.c.l.b16 %v1446
  %v1529 = vunpack.c.h.b16 %v1446
  %v1530 = vunpack.c.l.b16 %v1447
  %v1531 = vunpack.c.h.b16 %v1447
  %v1532 = vunpack.c.l.b16 %v1448
  %v1533 = vunpack.c.l.b16 %v1449
  %v1534 = vunpack.c.h.b16 %v1449
  %v1535 = vunpack.c.l.b16 %v1450
  %v1536 = vunpack.c.h.b16 %v1450
  %v1537 = vunpack.c.l.b16 %v1451
  %v1538 = vunpack.c.h.b16 %v1451
  %v1539 = vunpack.c.l.b16 %v1452
  %v1540 = vunpack.c.l.b16 %v1453
  %v1541 = vunpack.c.h.b16 %v1453
  %v1542 = vunpack.c.l.b16 %v1454
  %v1543 = vunpack.c.h.b16 %v1454
  %v1544 = vunpack.c.l.b16 %v1455
  %v1545 = vunpack.c.h.b16 %v1455
  %v1546 = vunpack.c.l.b16 %v1456
  %v1547 = vunpack.c.l.b16 %v1457
  %v1548 = vunpack.c.h.b16 %v1457
  %v1549 = vunpack.c.l.b16 %v1458
  %v1550 = vunpack.c.h.b16 %v1458
  %v1551 = vunpack.c.l.b16 %v1459
  %v1552 = vunpack.c.h.b16 %v1459
  %v1553 = vunpack.c.l.b16 %v1460
  %v1554 = vunpack.c.l.b16 %v1461
  %v1555 = vunpack.c.h.b16 %v1461
  %v1556 = vunpack.c.l.b16 %v1462
  %v1557 = vunpack.c.h.b16 %v1462
  %v1558 = vunpack.c.l.b16 %v1463
  %v1559 = vunpack.c.h.b16 %v1463
  %v1560 = vunpack.c.l.b16 %v1464
  %v1561 = vunpack.c.l.b16 %v1465
  %v1562 = vunpack.c.h.b16 %v1465
  %v1563 = vunpack.c.l.b16 %v1466
  %v1564 = vunpack.c.h.b16 %v1466
  %v1565 = vunpack.c.l.b16 %v1467
  %v1566 = vunpack.c.h.b16 %v1467
  %v1567 = vunpack.c.l.b16 %v1468
  %v1568 = vpack.c.b16 %v1512, %v1505
  %v1569 = vpack.c.b16 %v1513, %v1506
  %v1570 = vpack.c.b16 %v1514, %v1507
  %v1571 = vpack.c.b16 %v1515, %v1508
  %v1572 = vpack.c.b16 %v1516, %v1509
  %v1573 = vpack.c.b16 %v1517, %v1510
  %v1574 = vpack.c.b16 %v1518, %v1511
  %v1575 = vpack.c.b16 %v1526, %v1519
  %v1576 = vpack.c.b16 %v1527, %v1520
  %v1577 = vpack.c.b16 %v1528, %v1521
  %v1578 = vpack.c.b16 %v1529, %v1522
  %v1579 = vpack.c.b16 %v1530, %v1523
  %v1580 = vpack.c.b16 %v1531, %v1524
  %v1581 = vpack.c.b16 %v1532, %v1525
  %v1582 = vpack.c.b16 %v1540, %v1533
  %v1583 = vpack.c.b16 %v1541, %v1534
  %v1584 = vpack.c.b16 %v1542, %v1535
  %v1585 = vpack.c.b16 %v1543, %v1536
  %v1586 = vpack.c.b16 %v1544, %v1537
  %v1587 = vpack.c.b16 %v1545, %v1538
  %v1588 = vpack.c.b16 %v1546, %v1539
  %v1589 = vpack.c.b16 %v1554, %v1547
  %v1590 = vpack.c.b16 %v1555, %v1548
  %v1591 = vpack.c.b16 %v1556, %v1549
  %v1592 = vpack.c.b16 %v1557, %v1550
  %v1593 = vpack.c.b16 %v1558, %v1551
  %v1594 = vpack.c.b16 %v1559, %v1552
  %v1595 = vpack.c.b16 %v1560, %v1553
  %v1596 = vpack.c.b16 %v1561, %v1561
  %v1597 = vpack.c.b16 %v1562, %v1562
  %v1598 = vpack.c.b16 %v1563, %v1563
  %v1599 = vpack.c.b16 %v1564, %v1564
  %v1600 = vpack.c.b16 %v1565, %v1565
  %v1601 = vpack.c.b16 %v1566, %v1566
  %v1602 = vpack.c.b16 %v1567, %v1567
  %v1634 = vsel %vm615, %v1574, 0
  %v1637 = vsel %vm615, %v1581, 0
  %v1640 = vsel %vm615, %v1588, 0
  %v1643 = vsel %vm615, %v1595, 0
  %v1646 = vsel %vm615, %v1602, 0
  %1648 = vmatprep.subr.bf16.mxu0 0
  %1649 = vmatpush1.bf16.msra.mxu0 %v522
  %1650 = vmatprep.subr.bf16.mxu0 0
  %1651 = vmatpush1.bf16.msra.mxu0 %v521
  %1652 = vmatprep.subr.bf16.mxu0 0
  %1653 = vmatpush1.bf16.msra.mxu0 %v520
  %1654 = vmatprep.subr.bf16.mxu0 0
  %1655 = vmatpush1.bf16.msra.mxu0 %v519
  %1656 = vmatprep.subr.bf16.mxu0 0
  %1657 = vmatpush1.bf16.msra.mxu0 %v518
  %1658 = vmatprep.subr.bf16.mxu0 0
  %1659 = vmatpush1.bf16.msra.mxu0 %v517
  %1660 = vmatprep.subr.bf16.mxu0 0
  %1661 = vmatpush1.bf16.msra.mxu0 %v516
  %1662 = vmatprep.subr.bf16.mxu0 0
  %1663 = vmatpush1.bf16.msra.mxu0 %v515
  %1664 = vmatprep.subr.bf16.mxu0 0
  %1665 = vmatpush2.bf16.msra.mxu0 %v530
  %1666 = vmatprep.subr.bf16.mxu0 0
  %1667 = vmatpush2.bf16.msra.mxu0 %v529
  %1668 = vmatprep.subr.bf16.mxu0 0
  %1669 = vmatpush2.bf16.msra.mxu0 %v528
  %1670 = vmatprep.subr.bf16.mxu0 0
  %1671 = vmatpush2.bf16.msra.mxu0 %v527
  %1672 = vmatprep.subr.bf16.mxu0 0
  %1673 = vmatpush2.bf16.msra.mxu0 %v526
  %1674 = vmatprep.subr.bf16.mxu0 0
  %1675 = vmatpush2.bf16.msra.mxu0 %v525
  %1676 = vmatprep.subr.bf16.mxu0 0
  %1677 = vmatpush2.bf16.msra.mxu0 %v524
  %1678 = vmatprep.subr.bf16.mxu0 0
  %1679 = vmatpush2.bf16.msra.mxu0 %v523
  %1680 = vmatprep.mubr.bf16.mxu0 %v1569
  %1681 = vmatmul.mubr.bf16.gmra.mxu0 %v1568
  %v1682 = vpop.f32.mrf.mxu0
  %v1683 = vadd.f32 0.0, %v1682
  %v1684 = vpop.f32.mrf.mxu0
  %v1685 = vpop.f32.mrf.mxu0
  %v1686 = vadd.f32 0.0, %v1685
  %v1687 = vpop.f32.mrf.mxu0
  %1688 = vmatprep.mubr.bf16.mxu0 %v1576
  %1689 = vmatmul.mubr.bf16.gmra.mxu0 %v1575
  %v1690 = vpop.f32.mrf.mxu0
  %v1691 = vadd.f32 0.0, %v1690
  %v1692 = vpop.f32.mrf.mxu0
  %v1693 = vpop.f32.mrf.mxu0
  %v1694 = vadd.f32 0.0, %v1693
  %v1695 = vpop.f32.mrf.mxu0
  %1696 = vmatprep.mubr.bf16.mxu0 %v1583
  %1697 = vmatmul.mubr.bf16.gmra.mxu0 %v1582
  %v1698 = vpop.f32.mrf.mxu0
  %v1699 = vadd.f32 0.0, %v1698
  %v1700 = vpop.f32.mrf.mxu0
  %v1701 = vpop.f32.mrf.mxu0
  %v1702 = vadd.f32 0.0, %v1701
  %v1703 = vpop.f32.mrf.mxu0
  %1704 = vmatprep.mubr.bf16.mxu0 %v1590
  %1705 = vmatmul.mubr.bf16.gmra.mxu0 %v1589
  %v1706 = vpop.f32.mrf.mxu0
  %v1707 = vadd.f32 0.0, %v1706
  %v1708 = vpop.f32.mrf.mxu0
  %v1709 = vpop.f32.mrf.mxu0
  %v1710 = vadd.f32 0.0, %v1709
  %v1711 = vpop.f32.mrf.mxu0
  %1712 = vmatprep.mubr.bf16.mxu0 %v1597
  %1713 = vmatmul.mubr.bf16.gmra.mxu0 %v1596
  %v1714 = vpop.f32.mrf.mxu0
  %v1715 = vadd.f32 0.0, %v1714
  %v1716 = vpop.f32.mrf.mxu0
  %v1717 = vpop.f32.mrf.mxu0
  %v1718 = vpop.f32.mrf.mxu0
  %1719 = vdwg.mxu0
  %1720 = vmatprep.subr.bf16.mxu0 0
  %1721 = vmatpush1.bf16.msra.mxu0 %v538
  %1722 = vmatprep.subr.bf16.mxu0 0
  %1723 = vmatpush1.bf16.msra.mxu0 %v537
  %1724 = vmatprep.subr.bf16.mxu0 0
  %1725 = vmatpush1.bf16.msra.mxu0 %v536
  %1726 = vmatprep.subr.bf16.mxu0 0
  %1727 = vmatpush1.bf16.msra.mxu0 %v535
  %1728 = vmatprep.subr.bf16.mxu0 0
  %1729 = vmatpush1.bf16.msra.mxu0 %v534
  %1730 = vmatprep.subr.bf16.mxu0 0
  %1731 = vmatpush1.bf16.msra.mxu0 %v533
  %1732 = vmatprep.subr.bf16.mxu0 0
  %1733 = vmatpush1.bf16.msra.mxu0 %v532
  %1734 = vmatprep.subr.bf16.mxu0 0
  %1735 = vmatpush1.bf16.msra.mxu0 %v531
  %1736 = vmatprep.subr.bf16.mxu0 0
  %1737 = vmatpush2.bf16.msra.mxu0 %v546
  %1738 = vmatprep.subr.bf16.mxu0 0
  %1739 = vmatpush2.bf16.msra.mxu0 %v545
  %1740 = vmatprep.subr.bf16.mxu0 0
  %1741 = vmatpush2.bf16.msra.mxu0 %v544
  %1742 = vmatprep.subr.bf16.mxu0 0
  %1743 = vmatpush2.bf16.msra.mxu0 %v543
  %1744 = vmatprep.subr.bf16.mxu0 0
  %1745 = vmatpush2.bf16.msra.mxu0 %v542
  %1746 = vmatprep.subr.bf16.mxu0 0
  %1747 = vmatpush2.bf16.msra.mxu0 %v541
  %1748 = vmatprep.subr.bf16.mxu0 0
  %1749 = vmatpush2.bf16.msra.mxu0 %v540
  %1750 = vmatprep.subr.bf16.mxu0 0
  %1751 = vmatpush2.bf16.msra.mxu0 %v539
  %1752 = vmatprep.mubr.bf16.mxu0 %v1571
  %1753 = vmatmul.mubr.bf16.gmra.mxu0 %v1570
  %v1754 = vpop.f32.mrf.mxu0
  %v1755 = vadd.f32 %v1683, %v1754
  %v1756 = vpop.f32.mrf.mxu0
  %v1757 = vpop.f32.mrf.mxu0
  %v1758 = vadd.f32 %v1686, %v1757
  %v1759 = vpop.f32.mrf.mxu0
  %1760 = vmatprep.mubr.bf16.mxu0 %v1578
  %1761 = vmatmul.mubr.bf16.gmra.mxu0 %v1577
  %v1762 = vpop.f32.mrf.mxu0
  %v1763 = vadd.f32 %v1691, %v1762
  %v1764 = vpop.f32.mrf.mxu0
  %v1765 = vpop.f32.mrf.mxu0
  %v1766 = vadd.f32 %v1694, %v1765
  %v1767 = vpop.f32.mrf.mxu0
  %1768 = vmatprep.mubr.bf16.mxu0 %v1585
  %1769 = vmatmul.mubr.bf16.gmra.mxu0 %v1584
  %v1770 = vpop.f32.mrf.mxu0
  %v1771 = vadd.f32 %v1699, %v1770
  %v1772 = vpop.f32.mrf.mxu0
  %v1773 = vpop.f32.mrf.mxu0
  %v1774 = vadd.f32 %v1702, %v1773
  %v1775 = vpop.f32.mrf.mxu0
  %1776 = vmatprep.mubr.bf16.mxu0 %v1592
  %1777 = vmatmul.mubr.bf16.gmra.mxu0 %v1591
  %v1778 = vpop.f32.mrf.mxu0
  %v1779 = vadd.f32 %v1707, %v1778
  %v1780 = vpop.f32.mrf.mxu0
  %v1781 = vpop.f32.mrf.mxu0
  %v1782 = vadd.f32 %v1710, %v1781
  %v1783 = vpop.f32.mrf.mxu0
  %1784 = vmatprep.mubr.bf16.mxu0 %v1599
  %1785 = vmatmul.mubr.bf16.gmra.mxu0 %v1598
  %v1786 = vpop.f32.mrf.mxu0
  %v1787 = vadd.f32 %v1715, %v1786
  %v1788 = vpop.f32.mrf.mxu0
  %v1789 = vpop.f32.mrf.mxu0
  %v1790 = vpop.f32.mrf.mxu0
  %1791 = vdwg.mxu0
  %1792 = vmatprep.subr.bf16.mxu0 0
  %1793 = vmatpush1.bf16.msra.mxu0 %v554
  %1794 = vmatprep.subr.bf16.mxu0 0
  %1795 = vmatpush1.bf16.msra.mxu0 %v553
  %1796 = vmatprep.subr.bf16.mxu0 0
  %1797 = vmatpush1.bf16.msra.mxu0 %v552
  %1798 = vmatprep.subr.bf16.mxu0 0
  %1799 = vmatpush1.bf16.msra.mxu0 %v551
  %1800 = vmatprep.subr.bf16.mxu0 0
  %1801 = vmatpush1.bf16.msra.mxu0 %v550
  %1802 = vmatprep.subr.bf16.mxu0 0
  %1803 = vmatpush1.bf16.msra.mxu0 %v549
  %1804 = vmatprep.subr.bf16.mxu0 0
  %1805 = vmatpush1.bf16.msra.mxu0 %v548
  %1806 = vmatprep.subr.bf16.mxu0 0
  %1807 = vmatpush1.bf16.msra.mxu0 %v547
  %1808 = vmatprep.subr.bf16.mxu0 0
  %1809 = vmatpush2.bf16.msra.mxu0 %v562
  %1810 = vmatprep.subr.bf16.mxu0 0
  %1811 = vmatpush2.bf16.msra.mxu0 %v561
  %1812 = vmatprep.subr.bf16.mxu0 0
  %1813 = vmatpush2.bf16.msra.mxu0 %v560
  %1814 = vmatprep.subr.bf16.mxu0 0
  %1815 = vmatpush2.bf16.msra.mxu0 %v559
  %1816 = vmatprep.subr.bf16.mxu0 0
  %1817 = vmatpush2.bf16.msra.mxu0 %v558
  %1818 = vmatprep.subr.bf16.mxu0 0
  %1819 = vmatpush2.bf16.msra.mxu0 %v557
  %1820 = vmatprep.subr.bf16.mxu0 0
  %1821 = vmatpush2.bf16.msra.mxu0 %v556
  %1822 = vmatprep.subr.bf16.mxu0 0
  %1823 = vmatpush2.bf16.msra.mxu0 %v555
  %1824 = vmatprep.mubr.bf16.mxu0 %v1573
  %1825 = vmatmul.mubr.bf16.gmra.mxu0 %v1572
  %v1826 = vpop.f32.mrf.mxu0
  %v1827 = vadd.f32 %v1755, %v1826
  %v1828 = vpop.f32.mrf.mxu0
  %v1829 = vpop.f32.mrf.mxu0
  %v1830 = vadd.f32 %v1758, %v1829
  %v1831 = vpop.f32.mrf.mxu0
  %1832 = vmatprep.mubr.bf16.mxu0 %v1580
  %1833 = vmatmul.mubr.bf16.gmra.mxu0 %v1579
  %v1834 = vpop.f32.mrf.mxu0
  %v1835 = vadd.f32 %v1763, %v1834
  %v1836 = vpop.f32.mrf.mxu0
  %v1837 = vpop.f32.mrf.mxu0
  %v1838 = vadd.f32 %v1766, %v1837
  %v1839 = vpop.f32.mrf.mxu0
  %1840 = vmatprep.mubr.bf16.mxu0 %v1587
  %1841 = vmatmul.mubr.bf16.gmra.mxu0 %v1586
  %v1842 = vpop.f32.mrf.mxu0
  %v1843 = vadd.f32 %v1771, %v1842
  %v1844 = vpop.f32.mrf.mxu0
  %v1845 = vpop.f32.mrf.mxu0
  %v1846 = vadd.f32 %v1774, %v1845
  %v1847 = vpop.f32.mrf.mxu0
  %1848 = vmatprep.mubr.bf16.mxu0 %v1594
  %1849 = vmatmul.mubr.bf16.gmra.mxu0 %v1593
  %v1850 = vpop.f32.mrf.mxu0
  %v1851 = vadd.f32 %v1779, %v1850
  %v1852 = vpop.f32.mrf.mxu0
  %v1853 = vpop.f32.mrf.mxu0
  %v1854 = vadd.f32 %v1782, %v1853
  %v1855 = vpop.f32.mrf.mxu0
  %1856 = vmatprep.mubr.bf16.mxu0 %v1601
  %1857 = vmatmul.mubr.bf16.gmra.mxu0 %v1600
  %v1858 = vpop.f32.mrf.mxu0
  %v1859 = vadd.f32 %v1787, %v1858
  %v1860 = vpop.f32.mrf.mxu0
  %v1861 = vpop.f32.mrf.mxu0
  %v1862 = vpop.f32.mrf.mxu0
  %1863 = vdwg.mxu0
  %1864 = vmatprep.subr.bf16.mxu0 0
  %1865 = vmatpush1.bf16.msra.mxu0 0
  %1866 = vmatprep.subr.bf16.mxu0 0
  %1867 = vmatpush1.bf16.msra.mxu0 0
  %1868 = vmatprep.subr.bf16.mxu0 0
  %1869 = vmatpush1.bf16.msra.mxu0 0
  %1870 = vmatprep.subr.bf16.mxu0 0
  %1871 = vmatpush1.bf16.msra.mxu0 0
  %1872 = vmatprep.subr.bf16.mxu0 0
  %1873 = vmatpush1.bf16.msra.mxu0 0
  %1874 = vmatprep.subr.bf16.mxu0 0
  %1875 = vmatpush1.bf16.msra.mxu0 0
  %1876 = vmatprep.subr.bf16.mxu0 0
  %1877 = vmatpush1.bf16.msra.mxu0 %v564
  %1878 = vmatprep.subr.bf16.mxu0 0
  %1879 = vmatpush1.bf16.msra.mxu0 %v563
  %1880 = vmatprep.subr.bf16.mxu0 0
  %1881 = vmatpush2.bf16.msra.mxu0 0
  %1882 = vmatprep.subr.bf16.mxu0 0
  %1883 = vmatpush2.bf16.msra.mxu0 0
  %1884 = vmatprep.subr.bf16.mxu0 0
  %1885 = vmatpush2.bf16.msra.mxu0 0
  %1886 = vmatprep.subr.bf16.mxu0 0
  %1887 = vmatpush2.bf16.msra.mxu0 0
  %1888 = vmatprep.subr.bf16.mxu0 0
  %1889 = vmatpush2.bf16.msra.mxu0 0
  %1890 = vmatprep.subr.bf16.mxu0 0
  %1891 = vmatpush2.bf16.msra.mxu0 0
  %1892 = vmatprep.subr.bf16.mxu0 0
  %1893 = vmatpush2.bf16.msra.mxu0 0
  %1894 = vmatprep.subr.bf16.mxu0 0
  %1895 = vmatpush2.bf16.msra.mxu0 0
  %1896 = vmatprep.mubr.bf16.mxu0 0
  %1897 = vmatmul.mubr.bf16.gmra.mxu0 %v1634
  %v1898 = vpop.f32.mrf.mxu0
  %v1899 = vadd.f32 %v1827, %v1898
  %v1900 = vpop.f32.mrf.mxu0
  %v1901 = vpop.f32.mrf.mxu0
  %v1902 = vadd.f32 %v1830, %v1901
  %v1903 = vpop.f32.mrf.mxu0
  %1904 = vmatprep.mubr.bf16.mxu0 0
  %1905 = vmatmul.mubr.bf16.gmra.mxu0 %v1637
  %v1906 = vpop.f32.mrf.mxu0
  %v1907 = vadd.f32 %v1835, %v1906
  %v1908 = vpop.f32.mrf.mxu0
  %v1909 = vpop.f32.mrf.mxu0
  %v1910 = vadd.f32 %v1838, %v1909
  %v1911 = vpop.f32.mrf.mxu0
  %1912 = vmatprep.mubr.bf16.mxu0 0
  %1913 = vmatmul.mubr.bf16.gmra.mxu0 %v1640
  %v1914 = vpop.f32.mrf.mxu0
  %v1915 = vadd.f32 %v1843, %v1914
  %v1916 = vpop.f32.mrf.mxu0
  %v1917 = vpop.f32.mrf.mxu0
  %v1918 = vadd.f32 %v1846, %v1917
  %v1919 = vpop.f32.mrf.mxu0
  %1920 = vmatprep.mubr.bf16.mxu0 0
  %1921 = vmatmul.mubr.bf16.gmra.mxu0 %v1643
  %v1922 = vpop.f32.mrf.mxu0
  %v1923 = vadd.f32 %v1851, %v1922
  %v1924 = vpop.f32.mrf.mxu0
  %v1925 = vpop.f32.mrf.mxu0
  %v1926 = vadd.f32 %v1854, %v1925
  %v1927 = vpop.f32.mrf.mxu0
  %1928 = vmatprep.mubr.bf16.mxu0 0
  %1929 = vmatmul.mubr.bf16.gmra.mxu0 %v1646
  %v1930 = vpop.f32.mrf.mxu0
  %v1931 = vadd.f32 %v1859, %v1930
  %v1932 = vpop.f32.mrf.mxu0
  %v1933 = vpop.f32.mrf.mxu0
  %v1934 = vpop.f32.mrf.mxu0
  %1935 = vdwg.mxu0
  %v1936 = vmax.f32 %v1423, %v1899
  %v1937 = vmax.f32 %v1424, %v1902
  %v1938 = vmax.f32 %v1425, %v1907
  %v1939 = vmax.f32 %v1426, %v1910
  %v1940 = vmax.f32 %v1427, %v1915
  %v1941 = vmax.f32 %v1428, %v1918
  %v1942 = vmax.f32 %v1429, %v1923
  %v1943 = vmax.f32 %v1430, %v1926
  %v1944 = vmax.f32 %v1431, %v1931
  %s1945 = scalar_lea.vmem %s0, 756
  %v1946 = vld [vmem:[%s1945] sm:$0xff]
  %v1947 = vld [vmem:[%s1945 + $0x8] sm:$0xff]
  %v1948 = vld [vmem:[%s1945 + $0x10] sm:$0xff]
  %v1949 = vld [vmem:[%s1945 + $0x18] sm:$0xf]
  %v1950 = vld [vmem:[%s1945 + $0x1c] sm:$0xff]
  %v1951 = vld [vmem:[%s1945 + $0x24] sm:$0xff]
  %v1952 = vld [vmem:[%s1945 + $0x2c] sm:$0xff]
  %v1953 = vld [vmem:[%s1945 + $0x34] sm:$0xf]
  %v1954 = vld [vmem:[%s1945 + $0x38] sm:$0xff]
  %v1955 = vld [vmem:[%s1945 + $0x40] sm:$0xff]
  %v1956 = vld [vmem:[%s1945 + $0x48] sm:$0xff]
  %v1957 = vld [vmem:[%s1945 + $0x50] sm:$0xf]
  %v1958 = vld [vmem:[%s1945 + $0x54] sm:$0xff]
  %v1959 = vld [vmem:[%s1945 + $0x5c] sm:$0xff]
  %v1960 = vld [vmem:[%s1945 + $0x64] sm:$0xff]
  %v1961 = vld [vmem:[%s1945 + $0x6c] sm:$0xf]
  %v1962 = vld [vmem:[%s1945 + $0x70] sm:$0xff]
  %v1963 = vld [vmem:[%s1945 + $0x78] sm:$0xff]
  %v1964 = vld [vmem:[%s1945 + $0x80] sm:$0xff]
  %v1965 = vld [vmem:[%s1945 + $0x88] sm:$0xf]
  %v1966 = vld [vmem:[%s1945 + $0x8c] sm:$0xff]
  %v1967 = vld [vmem:[%s1945 + $0x94] sm:$0xff]
  %v1968 = vld [vmem:[%s1945 + $0x9c] sm:$0xff]
  %v1969 = vld [vmem:[%s1945 + $0xa4] sm:$0xf]
  %v1970 = vld [vmem:[%s1945 + $0xa8] sm:$0xff]
  %v1971 = vld [vmem:[%s1945 + $0xb0] sm:$0xff]
  %v1972 = vld [vmem:[%s1945 + $0xb8] sm:$0xff]
  %v1973 = vld [vmem:[%s1945 + $0xc0] sm:$0xf]
  %v1974 = vld [vmem:[%s1945 + $0xc4] sm:$0xff]
  %v1975 = vld [vmem:[%s1945 + $0xcc] sm:$0xff]
  %v1976 = vld [vmem:[%s1945 + $0xd4] sm:$0xff]
  %v1977 = vld [vmem:[%s1945 + $0xdc] sm:$0xf]
  %v1978 = vld [vmem:[%s1945 + $0xe0] sm:$0xff]
  %v1979 = vld [vmem:[%s1945 + $0xe8] sm:$0xff]
  %v1980 = vld [vmem:[%s1945 + $0xf0] sm:$0xff]
  %v1981 = vld [vmem:[%s1945 + $0xf8] sm:$0xf]
  %v2018 = vunpack.c.l.b16 %v1946
  %v2019 = vunpack.c.h.b16 %v1946
  %v2020 = vunpack.c.l.b16 %v1947
  %v2021 = vunpack.c.h.b16 %v1947
  %v2022 = vunpack.c.l.b16 %v1948
  %v2023 = vunpack.c.h.b16 %v1948
  %v2024 = vunpack.c.l.b16 %v1949
  %v2025 = vunpack.c.l.b16 %v1950
  %v2026 = vunpack.c.h.b16 %v1950
  %v2027 = vunpack.c.l.b16 %v1951
  %v2028 = vunpack.c.h.b16 %v1951
  %v2029 = vunpack.c.l.b16 %v1952
  %v2030 = vunpack.c.h.b16 %v1952
  %v2031 = vunpack.c.l.b16 %v1953
  %v2032 = vunpack.c.l.b16 %v1954
  %v2033 = vunpack.c.h.b16 %v1954
  %v2034 = vunpack.c.l.b16 %v1955
  %v2035 = vunpack.c.h.b16 %v1955
  %v2036 = vunpack.c.l.b16 %v1956
  %v2037 = vunpack.c.h.b16 %v1956
  %v2038 = vunpack.c.l.b16 %v1957
  %v2039 = vunpack.c.l.b16 %v1958
  %v2040 = vunpack.c.h.b16 %v1958
  %v2041 = vunpack.c.l.b16 %v1959
  %v2042 = vunpack.c.h.b16 %v1959
  %v2043 = vunpack.c.l.b16 %v1960
  %v2044 = vunpack.c.h.b16 %v1960
  %v2045 = vunpack.c.l.b16 %v1961
  %v2046 = vunpack.c.l.b16 %v1962
  %v2047 = vunpack.c.h.b16 %v1962
  %v2048 = vunpack.c.l.b16 %v1963
  %v2049 = vunpack.c.h.b16 %v1963
  %v2050 = vunpack.c.l.b16 %v1964
  %v2051 = vunpack.c.h.b16 %v1964
  %v2052 = vunpack.c.l.b16 %v1965
  %v2053 = vunpack.c.l.b16 %v1966
  %v2054 = vunpack.c.h.b16 %v1966
  %v2055 = vunpack.c.l.b16 %v1967
  %v2056 = vunpack.c.h.b16 %v1967
  %v2057 = vunpack.c.l.b16 %v1968
  %v2058 = vunpack.c.h.b16 %v1968
  %v2059 = vunpack.c.l.b16 %v1969
  %v2060 = vunpack.c.l.b16 %v1970
  %v2061 = vunpack.c.h.b16 %v1970
  %v2062 = vunpack.c.l.b16 %v1971
  %v2063 = vunpack.c.h.b16 %v1971
  %v2064 = vunpack.c.l.b16 %v1972
  %v2065 = vunpack.c.h.b16 %v1972
  %v2066 = vunpack.c.l.b16 %v1973
  %v2067 = vunpack.c.l.b16 %v1974
  %v2068 = vunpack.c.h.b16 %v1974
  %v2069 = vunpack.c.l.b16 %v1975
  %v2070 = vunpack.c.h.b16 %v1975
  %v2071 = vunpack.c.l.b16 %v1976
  %v2072 = vunpack.c.h.b16 %v1976
  %v2073 = vunpack.c.l.b16 %v1977
  %v2074 = vunpack.c.l.b16 %v1978
  %v2075 = vunpack.c.h.b16 %v1978
  %v2076 = vunpack.c.l.b16 %v1979
  %v2077 = vunpack.c.h.b16 %v1979
  %v2078 = vunpack.c.l.b16 %v1980
  %v2079 = vunpack.c.h.b16 %v1980
  %v2080 = vunpack.c.l.b16 %v1981
  %v2081 = vpack.c.b16 %v2025, %v2018
  %v2082 = vpack.c.b16 %v2026, %v2019
  %v2083 = vpack.c.b16 %v2027, %v2020
  %v2084 = vpack.c.b16 %v2028, %v2021
  %v2085 = vpack.c.b16 %v2029, %v2022
  %v2086 = vpack.c.b16 %v2030, %v2023
  %v2087 = vpack.c.b16 %v2031, %v2024
  %v2088 = vpack.c.b16 %v2039, %v2032
  %v2089 = vpack.c.b16 %v2040, %v2033
  %v2090 = vpack.c.b16 %v2041, %v2034
  %v2091 = vpack.c.b16 %v2042, %v2035
  %v2092 = vpack.c.b16 %v2043, %v2036
  %v2093 = vpack.c.b16 %v2044, %v2037
  %v2094 = vpack.c.b16 %v2045, %v2038
  %v2095 = vpack.c.b16 %v2053, %v2046
  %v2096 = vpack.c.b16 %v2054, %v2047
  %v2097 = vpack.c.b16 %v2055, %v2048
  %v2098 = vpack.c.b16 %v2056, %v2049
  %v2099 = vpack.c.b16 %v2057, %v2050
  %v2100 = vpack.c.b16 %v2058, %v2051
  %v2101 = vpack.c.b16 %v2059, %v2052
  %v2102 = vpack.c.b16 %v2067, %v2060
  %v2103 = vpack.c.b16 %v2068, %v2061
  %v2104 = vpack.c.b16 %v2069, %v2062
  %v2105 = vpack.c.b16 %v2070, %v2063
  %v2106 = vpack.c.b16 %v2071, %v2064
  %v2107 = vpack.c.b16 %v2072, %v2065
  %v2108 = vpack.c.b16 %v2073, %v2066
  %v2109 = vpack.c.b16 %v2074, %v2074
  %v2110 = vpack.c.b16 %v2075, %v2075
  %v2111 = vpack.c.b16 %v2076, %v2076
  %v2112 = vpack.c.b16 %v2077, %v2077
  %v2113 = vpack.c.b16 %v2078, %v2078
  %v2114 = vpack.c.b16 %v2079, %v2079
  %v2115 = vpack.c.b16 %v2080, %v2080
  %v2147 = vsel %vm615, %v2087, 0
  %v2150 = vsel %vm615, %v2094, 0
  %v2153 = vsel %vm615, %v2101, 0
  %v2156 = vsel %vm615, %v2108, 0
  %v2159 = vsel %vm615, %v2115, 0
  %2161 = vmatprep.subr.bf16.mxu0 0
  %2162 = vmatpush1.bf16.msra.mxu0 %v522
  %2163 = vmatprep.subr.bf16.mxu0 0
  %2164 = vmatpush1.bf16.msra.mxu0 %v521
  %2165 = vmatprep.subr.bf16.mxu0 0
  %2166 = vmatpush1.bf16.msra.mxu0 %v520
  %2167 = vmatprep.subr.bf16.mxu0 0
  %2168 = vmatpush1.bf16.msra.mxu0 %v519
  %2169 = vmatprep.subr.bf16.mxu0 0
  %2170 = vmatpush1.bf16.msra.mxu0 %v518
  %2171 = vmatprep.subr.bf16.mxu0 0
  %2172 = vmatpush1.bf16.msra.mxu0 %v517
  %2173 = vmatprep.subr.bf16.mxu0 0
  %2174 = vmatpush1.bf16.msra.mxu0 %v516
  %2175 = vmatprep.subr.bf16.mxu0 0
  %2176 = vmatpush1.bf16.msra.mxu0 %v515
  %2177 = vmatprep.subr.bf16.mxu0 0
  %2178 = vmatpush2.bf16.msra.mxu0 %v530
  %2179 = vmatprep.subr.bf16.mxu0 0
  %2180 = vmatpush2.bf16.msra.mxu0 %v529
  %2181 = vmatprep.subr.bf16.mxu0 0
  %2182 = vmatpush2.bf16.msra.mxu0 %v528
  %2183 = vmatprep.subr.bf16.mxu0 0
  %2184 = vmatpush2.bf16.msra.mxu0 %v527
  %2185 = vmatprep.subr.bf16.mxu0 0
  %2186 = vmatpush2.bf16.msra.mxu0 %v526
  %2187 = vmatprep.subr.bf16.mxu0 0
  %2188 = vmatpush2.bf16.msra.mxu0 %v525
  %2189 = vmatprep.subr.bf16.mxu0 0
  %2190 = vmatpush2.bf16.msra.mxu0 %v524
  %2191 = vmatprep.subr.bf16.mxu0 0
  %2192 = vmatpush2.bf16.msra.mxu0 %v523
  %2193 = vmatprep.mubr.bf16.mxu0 %v2082
  %2194 = vmatmul.mubr.bf16.gmra.mxu0 %v2081
  %v2195 = vpop.f32.mrf.mxu0
  %v2196 = vadd.f32 0.0, %v2195
  %v2197 = vpop.f32.mrf.mxu0
  %v2198 = vpop.f32.mrf.mxu0
  %v2199 = vadd.f32 0.0, %v2198
  %v2200 = vpop.f32.mrf.mxu0
  %2201 = vmatprep.mubr.bf16.mxu0 %v2089
  %2202 = vmatmul.mubr.bf16.gmra.mxu0 %v2088
  %v2203 = vpop.f32.mrf.mxu0
  %v2204 = vadd.f32 0.0, %v2203
  %v2205 = vpop.f32.mrf.mxu0
  %v2206 = vpop.f32.mrf.mxu0
  %v2207 = vadd.f32 0.0, %v2206
  %v2208 = vpop.f32.mrf.mxu0
  %2209 = vmatprep.mubr.bf16.mxu0 %v2096
  %2210 = vmatmul.mubr.bf16.gmra.mxu0 %v2095
  %v2211 = vpop.f32.mrf.mxu0
  %v2212 = vadd.f32 0.0, %v2211
  %v2213 = vpop.f32.mrf.mxu0
  %v2214 = vpop.f32.mrf.mxu0
  %v2215 = vadd.f32 0.0, %v2214
  %v2216 = vpop.f32.mrf.mxu0
  %2217 = vmatprep.mubr.bf16.mxu0 %v2103
  %2218 = vmatmul.mubr.bf16.gmra.mxu0 %v2102
  %v2219 = vpop.f32.mrf.mxu0
  %v2220 = vadd.f32 0.0, %v2219
  %v2221 = vpop.f32.mrf.mxu0
  %v2222 = vpop.f32.mrf.mxu0
  %v2223 = vadd.f32 0.0, %v2222
  %v2224 = vpop.f32.mrf.mxu0
  %2225 = vmatprep.mubr.bf16.mxu0 %v2110
  %2226 = vmatmul.mubr.bf16.gmra.mxu0 %v2109
  %v2227 = vpop.f32.mrf.mxu0
  %v2228 = vadd.f32 0.0, %v2227
  %v2229 = vpop.f32.mrf.mxu0
  %v2230 = vpop.f32.mrf.mxu0
  %v2231 = vpop.f32.mrf.mxu0
  %2232 = vdwg.mxu0
  %2233 = vmatprep.subr.bf16.mxu0 0
  %2234 = vmatpush1.bf16.msra.mxu0 %v538
  %2235 = vmatprep.subr.bf16.mxu0 0
  %2236 = vmatpush1.bf16.msra.mxu0 %v537
  %2237 = vmatprep.subr.bf16.mxu0 0
  %2238 = vmatpush1.bf16.msra.mxu0 %v536
  %2239 = vmatprep.subr.bf16.mxu0 0
  %2240 = vmatpush1.bf16.msra.mxu0 %v535
  %2241 = vmatprep.subr.bf16.mxu0 0
  %2242 = vmatpush1.bf16.msra.mxu0 %v534
  %2243 = vmatprep.subr.bf16.mxu0 0
  %2244 = vmatpush1.bf16.msra.mxu0 %v533
  %2245 = vmatprep.subr.bf16.mxu0 0
  %2246 = vmatpush1.bf16.msra.mxu0 %v532
  %2247 = vmatprep.subr.bf16.mxu0 0
  %2248 = vmatpush1.bf16.msra.mxu0 %v531
  %2249 = vmatprep.subr.bf16.mxu0 0
  %2250 = vmatpush2.bf16.msra.mxu0 %v546
  %2251 = vmatprep.subr.bf16.mxu0 0
  %2252 = vmatpush2.bf16.msra.mxu0 %v545
  %2253 = vmatprep.subr.bf16.mxu0 0
  %2254 = vmatpush2.bf16.msra.mxu0 %v544
  %2255 = vmatprep.subr.bf16.mxu0 0
  %2256 = vmatpush2.bf16.msra.mxu0 %v543
  %2257 = vmatprep.subr.bf16.mxu0 0
  %2258 = vmatpush2.bf16.msra.mxu0 %v542
  %2259 = vmatprep.subr.bf16.mxu0 0
  %2260 = vmatpush2.bf16.msra.mxu0 %v541
  %2261 = vmatprep.subr.bf16.mxu0 0
  %2262 = vmatpush2.bf16.msra.mxu0 %v540
  %2263 = vmatprep.subr.bf16.mxu0 0
  %2264 = vmatpush2.bf16.msra.mxu0 %v539
  %2265 = vmatprep.mubr.bf16.mxu0 %v2084
  %2266 = vmatmul.mubr.bf16.gmra.mxu0 %v2083
  %v2267 = vpop.f32.mrf.mxu0
  %v2268 = vadd.f32 %v2196, %v2267
  %v2269 = vpop.f32.mrf.mxu0
  %v2270 = vpop.f32.mrf.mxu0
  %v2271 = vadd.f32 %v2199, %v2270
  %v2272 = vpop.f32.mrf.mxu0
  %2273 = vmatprep.mubr.bf16.mxu0 %v2091
  %2274 = vmatmul.mubr.bf16.gmra.mxu0 %v2090
  %v2275 = vpop.f32.mrf.mxu0
  %v2276 = vadd.f32 %v2204, %v2275
  %v2277 = vpop.f32.mrf.mxu0
  %v2278 = vpop.f32.mrf.mxu0
  %v2279 = vadd.f32 %v2207, %v2278
  %v2280 = vpop.f32.mrf.mxu0
  %2281 = vmatprep.mubr.bf16.mxu0 %v2098
  %2282 = vmatmul.mubr.bf16.gmra.mxu0 %v2097
  %v2283 = vpop.f32.mrf.mxu0
  %v2284 = vadd.f32 %v2212, %v2283
  %v2285 = vpop.f32.mrf.mxu0
  %v2286 = vpop.f32.mrf.mxu0
  %v2287 = vadd.f32 %v2215, %v2286
  %v2288 = vpop.f32.mrf.mxu0
  %2289 = vmatprep.mubr.bf16.mxu0 %v2105
  %2290 = vmatmul.mubr.bf16.gmra.mxu0 %v2104
  %v2291 = vpop.f32.mrf.mxu0
  %v2292 = vadd.f32 %v2220, %v2291
  %v2293 = vpop.f32.mrf.mxu0
  %v2294 = vpop.f32.mrf.mxu0
  %v2295 = vadd.f32 %v2223, %v2294
  %v2296 = vpop.f32.mrf.mxu0
  %2297 = vmatprep.mubr.bf16.mxu0 %v2112
  %2298 = vmatmul.mubr.bf16.gmra.mxu0 %v2111
  %v2299 = vpop.f32.mrf.mxu0
  %v2300 = vadd.f32 %v2228, %v2299
  %v2301 = vpop.f32.mrf.mxu0
  %v2302 = vpop.f32.mrf.mxu0
  %v2303 = vpop.f32.mrf.mxu0
  %2304 = vdwg.mxu0
  %2305 = vmatprep.subr.bf16.mxu0 0
  %2306 = vmatpush1.bf16.msra.mxu0 %v554
  %2307 = vmatprep.subr.bf16.mxu0 0
  %2308 = vmatpush1.bf16.msra.mxu0 %v553
  %2309 = vmatprep.subr.bf16.mxu0 0
  %2310 = vmatpush1.bf16.msra.mxu0 %v552
  %2311 = vmatprep.subr.bf16.mxu0 0
  %2312 = vmatpush1.bf16.msra.mxu0 %v551
  %2313 = vmatprep.subr.bf16.mxu0 0
  %2314 = vmatpush1.bf16.msra.mxu0 %v550
  %2315 = vmatprep.subr.bf16.mxu0 0
  %2316 = vmatpush1.bf16.msra.mxu0 %v549
  %2317 = vmatprep.subr.bf16.mxu0 0
  %2318 = vmatpush1.bf16.msra.mxu0 %v548
  %2319 = vmatprep.subr.bf16.mxu0 0
  %2320 = vmatpush1.bf16.msra.mxu0 %v547
  %2321 = vmatprep.subr.bf16.mxu0 0
  %2322 = vmatpush2.bf16.msra.mxu0 %v562
  %2323 = vmatprep.subr.bf16.mxu0 0
  %2324 = vmatpush2.bf16.msra.mxu0 %v561
  %2325 = vmatprep.subr.bf16.mxu0 0
  %2326 = vmatpush2.bf16.msra.mxu0 %v560
  %2327 = vmatprep.subr.bf16.mxu0 0
  %2328 = vmatpush2.bf16.msra.mxu0 %v559
  %2329 = vmatprep.subr.bf16.mxu0 0
  %2330 = vmatpush2.bf16.msra.mxu0 %v558
  %2331 = vmatprep.subr.bf16.mxu0 0
  %2332 = vmatpush2.bf16.msra.mxu0 %v557
  %2333 = vmatprep.subr.bf16.mxu0 0
  %2334 = vmatpush2.bf16.msra.mxu0 %v556
  %2335 = vmatprep.subr.bf16.mxu0 0
  %2336 = vmatpush2.bf16.msra.mxu0 %v555
  %2337 = vmatprep.mubr.bf16.mxu0 %v2086
  %2338 = vmatmul.mubr.bf16.gmra.mxu0 %v2085
  %v2339 = vpop.f32.mrf.mxu0
  %v2340 = vadd.f32 %v2268, %v2339
  %v2341 = vpop.f32.mrf.mxu0
  %v2342 = vpop.f32.mrf.mxu0
  %v2343 = vadd.f32 %v2271, %v2342
  %v2344 = vpop.f32.mrf.mxu0
  %2345 = vmatprep.mubr.bf16.mxu0 %v2093
  %2346 = vmatmul.mubr.bf16.gmra.mxu0 %v2092
  %v2347 = vpop.f32.mrf.mxu0
  %v2348 = vadd.f32 %v2276, %v2347
  %v2349 = vpop.f32.mrf.mxu0
  %v2350 = vpop.f32.mrf.mxu0
  %v2351 = vadd.f32 %v2279, %v2350
  %v2352 = vpop.f32.mrf.mxu0
  %2353 = vmatprep.mubr.bf16.mxu0 %v2100
  %2354 = vmatmul.mubr.bf16.gmra.mxu0 %v2099
  %v2355 = vpop.f32.mrf.mxu0
  %v2356 = vadd.f32 %v2284, %v2355
  %v2357 = vpop.f32.mrf.mxu0
  %v2358 = vpop.f32.mrf.mxu0
  %v2359 = vadd.f32 %v2287, %v2358
  %v2360 = vpop.f32.mrf.mxu0
  %2361 = vmatprep.mubr.bf16.mxu0 %v2107
  %2362 = vmatmul.mubr.bf16.gmra.mxu0 %v2106
  %v2363 = vpop.f32.mrf.mxu0
  %v2364 = vadd.f32 %v2292, %v2363
  %v2365 = vpop.f32.mrf.mxu0
  %v2366 = vpop.f32.mrf.mxu0
  %v2367 = vadd.f32 %v2295, %v2366
  %v2368 = vpop.f32.mrf.mxu0
  %2369 = vmatprep.mubr.bf16.mxu0 %v2114
  %2370 = vmatmul.mubr.bf16.gmra.mxu0 %v2113
  %v2371 = vpop.f32.mrf.mxu0
  %v2372 = vadd.f32 %v2300, %v2371
  %v2373 = vpop.f32.mrf.mxu0
  %v2374 = vpop.f32.mrf.mxu0
  %v2375 = vpop.f32.mrf.mxu0
  %2376 = vdwg.mxu0
  %2377 = vmatprep.subr.bf16.mxu0 0
  %2378 = vmatpush1.bf16.msra.mxu0 0
  %2379 = vmatprep.subr.bf16.mxu0 0
  %2380 = vmatpush1.bf16.msra.mxu0 0
  %2381 = vmatprep.subr.bf16.mxu0 0
  %2382 = vmatpush1.bf16.msra.mxu0 0
  %2383 = vmatprep.subr.bf16.mxu0 0
  %2384 = vmatpush1.bf16.msra.mxu0 0
  %2385 = vmatprep.subr.bf16.mxu0 0
  %2386 = vmatpush1.bf16.msra.mxu0 0
  %2387 = vmatprep.subr.bf16.mxu0 0
  %2388 = vmatpush1.bf16.msra.mxu0 0
  %2389 = vmatprep.subr.bf16.mxu0 0
  %2390 = vmatpush1.bf16.msra.mxu0 %v564
  %2391 = vmatprep.subr.bf16.mxu0 0
  %2392 = vmatpush1.bf16.msra.mxu0 %v563
  %2393 = vmatprep.subr.bf16.mxu0 0
  %2394 = vmatpush2.bf16.msra.mxu0 0
  %2395 = vmatprep.subr.bf16.mxu0 0
  %2396 = vmatpush2.bf16.msra.mxu0 0
  %2397 = vmatprep.subr.bf16.mxu0 0
  %2398 = vmatpush2.bf16.msra.mxu0 0
  %2399 = vmatprep.subr.bf16.mxu0 0
  %2400 = vmatpush2.bf16.msra.mxu0 0
  %2401 = vmatprep.subr.bf16.mxu0 0
  %2402 = vmatpush2.bf16.msra.mxu0 0
  %2403 = vmatprep.subr.bf16.mxu0 0
  %2404 = vmatpush2.bf16.msra.mxu0 0
  %2405 = vmatprep.subr.bf16.mxu0 0
  %2406 = vmatpush2.bf16.msra.mxu0 0
  %2407 = vmatprep.subr.bf16.mxu0 0
  %2408 = vmatpush2.bf16.msra.mxu0 0
  %2409 = vmatprep.mubr.bf16.mxu0 0
  %2410 = vmatmul.mubr.bf16.gmra.mxu0 %v2147
  %v2411 = vpop.f32.mrf.mxu0
  %v2412 = vadd.f32 %v2340, %v2411
  %v2413 = vpop.f32.mrf.mxu0
  %v2414 = vpop.f32.mrf.mxu0
  %v2415 = vadd.f32 %v2343, %v2414
  %v2416 = vpop.f32.mrf.mxu0
  %2417 = vmatprep.mubr.bf16.mxu0 0
  %2418 = vmatmul.mubr.bf16.gmra.mxu0 %v2150
  %v2419 = vpop.f32.mrf.mxu0
  %v2420 = vadd.f32 %v2348, %v2419
  %v2421 = vpop.f32.mrf.mxu0
  %v2422 = vpop.f32.mrf.mxu0
  %v2423 = vadd.f32 %v2351, %v2422
  %v2424 = vpop.f32.mrf.mxu0
  %2425 = vmatprep.mubr.bf16.mxu0 0
  %2426 = vmatmul.mubr.bf16.gmra.mxu0 %v2153
  %v2427 = vpop.f32.mrf.mxu0
  %v2428 = vadd.f32 %v2356, %v2427
  %v2429 = vpop.f32.mrf.mxu0
  %v2430 = vpop.f32.mrf.mxu0
  %v2431 = vadd.f32 %v2359, %v2430
  %v2432 = vpop.f32.mrf.mxu0
  %2433 = vmatprep.mubr.bf16.mxu0 0
  %2434 = vmatmul.mubr.bf16.gmra.mxu0 %v2156
  %v2435 = vpop.f32.mrf.mxu0
  %v2436 = vadd.f32 %v2364, %v2435
  %v2437 = vpop.f32.mrf.mxu0
  %v2438 = vpop.f32.mrf.mxu0
  %v2439 = vadd.f32 %v2367, %v2438
  %v2440 = vpop.f32.mrf.mxu0
  %2441 = vmatprep.mubr.bf16.mxu0 0
  %2442 = vmatmul.mubr.bf16.gmra.mxu0 %v2159
  %v2443 = vpop.f32.mrf.mxu0
  %v2444 = vadd.f32 %v2372, %v2443
  %v2445 = vpop.f32.mrf.mxu0
  %v2446 = vpop.f32.mrf.mxu0
  %v2447 = vpop.f32.mrf.mxu0
  %2448 = vdwg.mxu0
  %v2449 = vmax.f32 %v1936, %v2412
  %v2450 = vmax.f32 %v1937, %v2415
  %v2451 = vmax.f32 %v1938, %v2420
  %v2452 = vmax.f32 %v1939, %v2423
  %v2453 = vmax.f32 %v1940, %v2428
  %v2454 = vmax.f32 %v1941, %v2431
  %v2455 = vmax.f32 %v1942, %v2436
  %v2456 = vmax.f32 %v1943, %v2439
  %v2457 = vmax.f32 %v1944, %v2444
  %v2458 = vld [vmem:[%s2] sm:$0x1]
  %v2460 = vlaneseq
  %v2461 = vshrl.u32 %v2460, 7
  %v2462 = vsub.s32 0, %v2461
  %v2463 = vrot.slane %v2458, %v2462
  %v2465 = vadd.f32 %v2449, %v2463
  %v2466 = vadd.f32 %v2450, %v2463
  %v2467 = vadd.f32 %v2451, %v2463
  %v2468 = vadd.f32 %v2452, %v2463
  %v2469 = vadd.f32 %v2453, %v2463
  %v2470 = vadd.f32 %v2454, %v2463
  %v2471 = vadd.f32 %v2455, %v2463
  %v2472 = vadd.f32 %v2456, %v2463
  %v2473 = vadd.f32 %v2457, %v2463
  %v2474 = vmax.f32 %v2465, 0.0
  %v2475 = vmax.f32 %v2466, 0.0
  %v2476 = vmax.f32 %v2467, 0.0
  %v2477 = vmax.f32 %v2468, 0.0
  %v2478 = vmax.f32 %v2469, 0.0
  %v2479 = vmax.f32 %v2470, 0.0
  %v2480 = vmax.f32 %v2471, 0.0
  %v2481 = vmax.f32 %v2472, 0.0
  %v2482 = vmax.f32 %v2473, 0.0
  %vm2483 = vcmask 523264
  %2484 = vst.msk [vmem:[%s3] sm:$0xff] %vm2483, %v2474
  %2485 = vst.msk [vmem:[%s3 + $0x8] sm:$0xff] %vm2483, %v2475
  %2486 = vst.msk [vmem:[%s3 + $0x10] sm:$0xff] %vm2483, %v2476
  %2487 = vst.msk [vmem:[%s3 + $0x18] sm:$0xff] %vm2483, %v2477
  %2488 = vst.msk [vmem:[%s3 + $0x20] sm:$0xff] %vm2483, %v2478
  %2489 = vst.msk [vmem:[%s3 + $0x28] sm:$0xff] %vm2483, %v2479
  %2490 = vst.msk [vmem:[%s3 + $0x30] sm:$0xff] %vm2483, %v2480
  %2491 = vst.msk [vmem:[%s3 + $0x38] sm:$0xff] %vm2483, %v2481
  %2492 = vst.msk [vmem:[%s3 + $0x40] sm:$0xff] %vm2483, %v2482
  // Predicated region
  $region14: #{convnet_forward.4} parent=0 // pred_check
    _
  $region15: #{convnet_forward.4} parent=0 // pred_check_branch
    %2494 = sbr.rel (0) target = $region17
  $region16: #{convnet_forward.4} parent=0 // pred_region
    _
  $region17: #{convnet_forward.4} parent=0 // pred_fallthru
    _
  // Predicated region
  $region18: #{convnet_forward.4} parent=0 // pred_check
    _
  $region19: #{convnet_forward.4} parent=0 // pred_check_branch
    %2496 = sbr.rel (0) target = $region21
  $region20: #{convnet_forward.4} parent=0 // pred_region
    _
  $region21: #{convnet_forward.4} parent=0 // pred_fallthru
    _

// kernel: convnet_forward.5
$region0: #{convnet_forward.5}
  #allocation0 [shape = 'u32[]', space=smem, size = 0x4, offset = 0x4, fixed_abs, tag = 'smem constant byte address 0x4 - core index']
  #allocation1 [shape = 'u32[144,128]{1,0:T(1,128)}', space=vmem, size = 0x12000, scoped, tag = 'internal scratch']
  %s0 = inlined_call_operand.vmem [shape: f32[2,2304], index: 0, kind: input, shape index: {}]
  %s1 = inlined_call_operand.vmem [shape: f32[2304,2], index: 1, kind: input, shape index: {}]
  %s2 = inlined_call_operand.vmem [shape: f32[1,2], index: 2, kind: input, shape index: {}]
  %s3 = inlined_call_operand.hbm [shape: f32[2,2], index: 3, kind: output, shape index: {}]
  %s4 = sld [smem:[#allocation0]]
  $region22: #{convnet_forward.5} parent=0
    _
  %s6 = ssub.s32 1, %s4
  %s7 = scalar_select 0, %s6, %s4
  $region1: #{convnet_forward.5} parent=0
    #allocation2 [shape = 'u8[1024]{0}', space=vmem, size = 0x400, scoped, tag = 'output window, operand 0, single buffered']
    #allocation3 [shape = 's32[1]{0}', space=sflag, size = 0x4, scoped, tag = 'scoped memory for convnet_forward.5']
    %8 = vsyncpa [#allocation3], 0
    // Predicated region
    $region2: #{convnet_forward.5} parent=1 // pred_check
      _
    $region3: #{convnet_forward.5} parent=1 // pred_check_branch
      %10 = sbr.rel (0) target = $region5
    $region4: #{convnet_forward.5} parent=1 // pred_region
      _
    $region5: #{convnet_forward.5} parent=1 // pred_fallthru
      _
    // Predicated region
    $region6: #{convnet_forward.5} parent=1 // pred_check
      _
    $region7: #{convnet_forward.5} parent=1 // pred_check_branch
      %12 = sbr.rel (0) target = $region9
    $region8: #{convnet_forward.5} parent=1 // pred_region
      _
    $region9: #{convnet_forward.5} parent=1 // pred_fallthru
      _
    // Predicated region
    $region10: #{convnet_forward.5} parent=1 // pred_check
      _
    $region11: #{convnet_forward.5} parent=1 // pred_check_branch
      %14 = sbr.rel (0) target = $region13
    $region12: #{convnet_forward.5} parent=1 // pred_region
      _
    $region13: #{convnet_forward.5} parent=1 // pred_fallthru
      _
    %v15 = vld [vmem:[%s0] sm:$0xff]
    %v16 = vld [vmem:[%s0 + $0x8] sm:$0xff]
    %v17 = vld [vmem:[%s0 + $0x10] sm:$0xff]
    %v18 = vld [vmem:[%s0 + $0x18] sm:$0xff]
    %v19 = vld [vmem:[%s0 + $0x20] sm:$0xf]
    %v20 = vld [vmem:[%s1] sm:$0xff]
    %v21 = vld [vmem:[%s1 + $0x8] sm:$0xff]
    %v22 = vld [vmem:[%s1 + $0x10] sm:$0xff]
    %v23 = vld [vmem:[%s1 + $0x18] sm:$0xff]
    %v24 = vld [vmem:[%s1 + $0x20] sm:$0xff]
    %v25 = vld [vmem:[%s1 + $0x28] sm:$0xff]
    %v26 = vld [vmem:[%s1 + $0x30] sm:$0xff]
    %v27 = vld [vmem:[%s1 + $0x38] sm:$0xff]
    %v28 = vld [vmem:[%s1 + $0x40] sm:$0xff]
    %v29 = vld [vmem:[%s1 + $0x48] sm:$0xff]
    %v30 = vld [vmem:[%s1 + $0x50] sm:$0xff]
    %v31 = vld [vmem:[%s1 + $0x58] sm:$0xff]
    %v32 = vld [vmem:[%s1 + $0x60] sm:$0xff]
    %v33 = vld [vmem:[%s1 + $0x68] sm:$0xff]
    %v34 = vld [vmem:[%s1 + $0x70] sm:$0xff]
    %v35 = vld [vmem:[%s1 + $0x78] sm:$0xff]
    %v36 = vld [vmem:[%s1 + $0x80] sm:$0xff]
    %v37 = vld [vmem:[%s1 + $0x88] sm:$0xff]
    %v38 = vld [vmem:[%s1 + $0x90] sm:$0xff]
    %v39 = vld [vmem:[%s1 + $0x98] sm:$0xff]
    %v40 = vld [vmem:[%s1 + $0xa0] sm:$0xff]
    %v41 = vld [vmem:[%s1 + $0xa8] sm:$0xff]
    %v42 = vld [vmem:[%s1 + $0xb0] sm:$0xff]
    %v43 = vld [vmem:[%s1 + $0xb8] sm:$0xff]
    %v44 = vld [vmem:[%s1 + $0xc0] sm:$0xff]
    %v45 = vld [vmem:[%s1 + $0xc8] sm:$0xff]
    %v46 = vld [vmem:[%s1 + $0xd0] sm:$0xff]
    %v47 = vld [vmem:[%s1 + $0xd8] sm:$0xff]
    %v48 = vld [vmem:[%s1 + $0xe0] sm:$0xff]
    %v49 = vld [vmem:[%s1 + $0xe8] sm:$0xff]
    %v50 = vld [vmem:[%s1 + $0xf0] sm:$0xff]
    %v51 = vld [vmem:[%s1 + $0xf8] sm:$0xff]
    %v52 = vld [vmem:[%s1 + $0x100] sm:$0xff]
    %v53 = vld [vmem:[%s1 + $0x108] sm:$0xff]
    %v54 = vld [vmem:[%s1 + $0x110] sm:$0xff]
    %v55 = vld [vmem:[%s1 + $0x118] sm:$0xff]
    %v56 = vld [vmem:[%s1 + $0x120] sm:$0xff]
    %v57 = vld [vmem:[%s1 + $0x128] sm:$0xff]
    %v58 = vld [vmem:[%s1 + $0x130] sm:$0xff]
    %v59 = vld [vmem:[%s1 + $0x138] sm:$0xff]
    %v60 = vld [vmem:[%s1 + $0x140] sm:$0xff]
    %v61 = vld [vmem:[%s1 + $0x148] sm:$0xff]
    %v62 = vld [vmem:[%s1 + $0x150] sm:$0xff]
    %v63 = vld [vmem:[%s1 + $0x158] sm:$0xff]
    %v64 = vld [vmem:[%s1 + $0x160] sm:$0xff]
    %v65 = vld [vmem:[%s1 + $0x168] sm:$0xff]
    %v66 = vld [vmem:[%s1 + $0x170] sm:$0xff]
    %v67 = vld [vmem:[%s1 + $0x178] sm:$0xff]
    %v68 = vld [vmem:[%s1 + $0x180] sm:$0xff]
    %v69 = vld [vmem:[%s1 + $0x188] sm:$0xff]
    %v70 = vld [vmem:[%s1 + $0x190] sm:$0xff]
    %v71 = vld [vmem:[%s1 + $0x198] sm:$0xff]
    %v72 = vld [vmem:[%s1 + $0x1a0] sm:$0xff]
    %v73 = vld [vmem:[%s1 + $0x1a8] sm:$0xff]
    %v74 = vld [vmem:[%s1 + $0x1b0] sm:$0xff]
    %v75 = vld [vmem:[%s1 + $0x1b8] sm:$0xff]
    %v76 = vld [vmem:[%s1 + $0x1c0] sm:$0xff]
    %v77 = vld [vmem:[%s1 + $0x1c8] sm:$0xff]
    %v78 = vld [vmem:[%s1 + $0x1d0] sm:$0xff]
    %v79 = vld [vmem:[%s1 + $0x1d8] sm:$0xff]
    %v80 = vld [vmem:[%s1 + $0x1e0] sm:$0xff]
    %v81 = vld [vmem:[%s1 + $0x1e8] sm:$0xff]
    %v82 = vld [vmem:[%s1 + $0x1f0] sm:$0xff]
    %v83 = vld [vmem:[%s1 + $0x1f8] sm:$0xff]
    %v84 = vld [vmem:[%s1 + $0x200] sm:$0xff]
    %v85 = vld [vmem:[%s1 + $0x208] sm:$0xff]
    %v86 = vld [vmem:[%s1 + $0x210] sm:$0xff]
    %v87 = vld [vmem:[%s1 + $0x218] sm:$0xff]
    %v88 = vld [vmem:[%s1 + $0x220] sm:$0xff]
    %v89 = vld [vmem:[%s1 + $0x228] sm:$0xff]
    %v90 = vld [vmem:[%s1 + $0x230] sm:$0xff]
    %v91 = vld [vmem:[%s1 + $0x238] sm:$0xff]
    %v92 = vld [vmem:[%s1 + $0x240] sm:$0xff]
    %v93 = vld [vmem:[%s1 + $0x248] sm:$0xff]
    %v94 = vld [vmem:[%s1 + $0x250] sm:$0xff]
    %v95 = vld [vmem:[%s1 + $0x258] sm:$0xff]
    %v96 = vld [vmem:[%s1 + $0x260] sm:$0xff]
    %v97 = vld [vmem:[%s1 + $0x268] sm:$0xff]
    %v98 = vld [vmem:[%s1 + $0x270] sm:$0xff]
    %v99 = vld [vmem:[%s1 + $0x278] sm:$0xff]
    %v100 = vld [vmem:[%s1 + $0x280] sm:$0xff]
    %v101 = vld [vmem:[%s1 + $0x288] sm:$0xff]
    %v102 = vld [vmem:[%s1 + $0x290] sm:$0xff]
    %v103 = vld [vmem:[%s1 + $0x298] sm:$0xff]
    %v104 = vld [vmem:[%s1 + $0x2a0] sm:$0xff]
    %v105 = vld [vmem:[%s1 + $0x2a8] sm:$0xff]
    %v106 = vld [vmem:[%s1 + $0x2b0] sm:$0xff]
    %v107 = vld [vmem:[%s1 + $0x2b8] sm:$0xff]
    %v108 = vld [vmem:[%s1 + $0x2c0] sm:$0xff]
    %v109 = vld [vmem:[%s1 + $0x2c8] sm:$0xff]
    %v110 = vld [vmem:[%s1 + $0x2d0] sm:$0xff]
    %v111 = vld [vmem:[%s1 + $0x2d8] sm:$0xff]
    %v112 = vld [vmem:[%s1 + $0x2e0] sm:$0xff]
    %v113 = vld [vmem:[%s1 + $0x2e8] sm:$0xff]
    %v114 = vld [vmem:[%s1 + $0x2f0] sm:$0xff]
    %v115 = vld [vmem:[%s1 + $0x2f8] sm:$0xff]
    %v116 = vld [vmem:[%s1 + $0x300] sm:$0xff]
    %v117 = vld [vmem:[%s1 + $0x308] sm:$0xff]
    %v118 = vld [vmem:[%s1 + $0x310] sm:$0xff]
    %v119 = vld [vmem:[%s1 + $0x318] sm:$0xff]
    %v120 = vld [vmem:[%s1 + $0x320] sm:$0xff]
    %v121 = vld [vmem:[%s1 + $0x328] sm:$0xff]
    %v122 = vld [vmem:[%s1 + $0x330] sm:$0xff]
    %v123 = vld [vmem:[%s1 + $0x338] sm:$0xff]
    %v124 = vld [vmem:[%s1 + $0x340] sm:$0xff]
    %v125 = vld [vmem:[%s1 + $0x348] sm:$0xff]
    %v126 = vld [vmem:[%s1 + $0x350] sm:$0xff]
    %v127 = vld [vmem:[%s1 + $0x358] sm:$0xff]
    %v128 = vld [vmem:[%s1 + $0x360] sm:$0xff]
    %v129 = vld [vmem:[%s1 + $0x368] sm:$0xff]
    %v130 = vld [vmem:[%s1 + $0x370] sm:$0xff]
    %v131 = vld [vmem:[%s1 + $0x378] sm:$0xff]
    %v132 = vld [vmem:[%s1 + $0x380] sm:$0xff]
    %v133 = vld [vmem:[%s1 + $0x388] sm:$0xff]
    %v134 = vld [vmem:[%s1 + $0x390] sm:$0xff]
    %v135 = vld [vmem:[%s1 + $0x398] sm:$0xff]
    %v136 = vld [vmem:[%s1 + $0x3a0] sm:$0xff]
    %v137 = vld [vmem:[%s1 + $0x3a8] sm:$0xff]
    %v138 = vld [vmem:[%s1 + $0x3b0] sm:$0xff]
    %v139 = vld [vmem:[%s1 + $0x3b8] sm:$0xff]
    %v140 = vld [vmem:[%s1 + $0x3c0] sm:$0xff]
    %v141 = vld [vmem:[%s1 + $0x3c8] sm:$0xff]
    %v142 = vld [vmem:[%s1 + $0x3d0] sm:$0xff]
    %v143 = vld [vmem:[%s1 + $0x3d8] sm:$0xff]
    %v144 = vld [vmem:[%s1 + $0x3e0] sm:$0xff]
    %v145 = vld [vmem:[%s1 + $0x3e8] sm:$0xff]
    %v146 = vld [vmem:[%s1 + $0x3f0] sm:$0xff]
    %v147 = vld [vmem:[%s1 + $0x3f8] sm:$0xff]
    %v148 = vld [vmem:[%s1 + $0x400] sm:$0xff]
    %v149 = vld [vmem:[%s1 + $0x408] sm:$0xff]
    %v150 = vld [vmem:[%s1 + $0x410] sm:$0xff]
    %v151 = vld [vmem:[%s1 + $0x418] sm:$0xff]
    %v152 = vld [vmem:[%s1 + $0x420] sm:$0xff]
    %v153 = vld [vmem:[%s1 + $0x428] sm:$0xff]
    %v154 = vld [vmem:[%s1 + $0x430] sm:$0xff]
    %v155 = vld [vmem:[%s1 + $0x438] sm:$0xff]
    %v156 = vld [vmem:[%s1 + $0x440] sm:$0xff]
    %v157 = vld [vmem:[%s1 + $0x448] sm:$0xff]
    %v158 = vld [vmem:[%s1 + $0x450] sm:$0xff]
    %v159 = vld [vmem:[%s1 + $0x458] sm:$0xff]
    %v160 = vld [vmem:[%s1 + $0x460] sm:$0xff]
    %v161 = vld [vmem:[%s1 + $0x468] sm:$0xff]
    %v162 = vld [vmem:[%s1 + $0x470] sm:$0xff]
    %v163 = vld [vmem:[%s1 + $0x478] sm:$0xff]
    %v164 = vld [vmem:[%s1 + $0x480] sm:$0xff]
    %v165 = vld [vmem:[%s1 + $0x488] sm:$0xff]
    %v166 = vld [vmem:[%s1 + $0x490] sm:$0xff]
    %v167 = vld [vmem:[%s1 + $0x498] sm:$0xff]
    %v168 = vld [vmem:[%s1 + $0x4a0] sm:$0xff]
    %v169 = vld [vmem:[%s1 + $0x4a8] sm:$0xff]
    %v170 = vld [vmem:[%s1 + $0x4b0] sm:$0xff]
    %v171 = vld [vmem:[%s1 + $0x4b8] sm:$0xff]
    %v172 = vld [vmem:[%s1 + $0x4c0] sm:$0xff]
    %v173 = vld [vmem:[%s1 + $0x4c8] sm:$0xff]
    %v174 = vld [vmem:[%s1 + $0x4d0] sm:$0xff]
    %v175 = vld [vmem:[%s1 + $0x4d8] sm:$0xff]
    %v176 = vld [vmem:[%s1 + $0x4e0] sm:$0xff]
    %v177 = vld [vmem:[%s1 + $0x4e8] sm:$0xff]
    %v178 = vld [vmem:[%s1 + $0x4f0] sm:$0xff]
    %v179 = vld [vmem:[%s1 + $0x4f8] sm:$0xff]
    %v180 = vld [vmem:[%s1 + $0x500] sm:$0xff]
    %v181 = vld [vmem:[%s1 + $0x508] sm:$0xff]
    %v182 = vld [vmem:[%s1 + $0x510] sm:$0xff]
    %v183 = vld [vmem:[%s1 + $0x518] sm:$0xff]
    %v184 = vld [vmem:[%s1 + $0x520] sm:$0xff]
    %v185 = vld [vmem:[%s1 + $0x528] sm:$0xff]
    %v186 = vld [vmem:[%s1 + $0x530] sm:$0xff]
    %v187 = vld [vmem:[%s1 + $0x538] sm:$0xff]
    %v188 = vld [vmem:[%s1 + $0x540] sm:$0xff]
    %v189 = vld [vmem:[%s1 + $0x548] sm:$0xff]
    %v190 = vld [vmem:[%s1 + $0x550] sm:$0xff]
    %v191 = vld [vmem:[%s1 + $0x558] sm:$0xff]
    %v192 = vld [vmem:[%s1 + $0x560] sm:$0xff]
    %v193 = vld [vmem:[%s1 + $0x568] sm:$0xff]
    %v194 = vld [vmem:[%s1 + $0x570] sm:$0xff]
    %v195 = vld [vmem:[%s1 + $0x578] sm:$0xff]
    %v196 = vld [vmem:[%s1 + $0x580] sm:$0xff]
    %v197 = vld [vmem:[%s1 + $0x588] sm:$0xff]
    %v198 = vld [vmem:[%s1 + $0x590] sm:$0xff]
    %v199 = vld [vmem:[%s1 + $0x598] sm:$0xff]
    %v200 = vld [vmem:[%s1 + $0x5a0] sm:$0xff]
    %v201 = vld [vmem:[%s1 + $0x5a8] sm:$0xff]
    %v202 = vld [vmem:[%s1 + $0x5b0] sm:$0xff]
    %v203 = vld [vmem:[%s1 + $0x5b8] sm:$0xff]
    %v204 = vld [vmem:[%s1 + $0x5c0] sm:$0xff]
    %v205 = vld [vmem:[%s1 + $0x5c8] sm:$0xff]
    %v206 = vld [vmem:[%s1 + $0x5d0] sm:$0xff]
    %v207 = vld [vmem:[%s1 + $0x5d8] sm:$0xff]
    %v208 = vld [vmem:[%s1 + $0x5e0] sm:$0xff]
    %v209 = vld [vmem:[%s1 + $0x5e8] sm:$0xff]
    %v210 = vld [vmem:[%s1 + $0x5f0] sm:$0xff]
    %v211 = vld [vmem:[%s1 + $0x5f8] sm:$0xff]
    %v212 = vld [vmem:[%s1 + $0x600] sm:$0xff]
    %v213 = vld [vmem:[%s1 + $0x608] sm:$0xff]
    %v214 = vld [vmem:[%s1 + $0x610] sm:$0xff]
    %v215 = vld [vmem:[%s1 + $0x618] sm:$0xff]
    %v216 = vld [vmem:[%s1 + $0x620] sm:$0xff]
    %v217 = vld [vmem:[%s1 + $0x628] sm:$0xff]
    %v218 = vld [vmem:[%s1 + $0x630] sm:$0xff]
    %v219 = vld [vmem:[%s1 + $0x638] sm:$0xff]
    %v220 = vld [vmem:[%s1 + $0x640] sm:$0xff]
    %v221 = vld [vmem:[%s1 + $0x648] sm:$0xff]
    %v222 = vld [vmem:[%s1 + $0x650] sm:$0xff]
    %v223 = vld [vmem:[%s1 + $0x658] sm:$0xff]
    %v224 = vld [vmem:[%s1 + $0x660] sm:$0xff]
    %v225 = vld [vmem:[%s1 + $0x668] sm:$0xff]
    %v226 = vld [vmem:[%s1 + $0x670] sm:$0xff]
    %v227 = vld [vmem:[%s1 + $0x678] sm:$0xff]
    %v228 = vld [vmem:[%s1 + $0x680] sm:$0xff]
    %v229 = vld [vmem:[%s1 + $0x688] sm:$0xff]
    %v230 = vld [vmem:[%s1 + $0x690] sm:$0xff]
    %v231 = vld [vmem:[%s1 + $0x698] sm:$0xff]
    %v232 = vld [vmem:[%s1 + $0x6a0] sm:$0xff]
    %v233 = vld [vmem:[%s1 + $0x6a8] sm:$0xff]
    %v234 = vld [vmem:[%s1 + $0x6b0] sm:$0xff]
    %v235 = vld [vmem:[%s1 + $0x6b8] sm:$0xff]
    %v236 = vld [vmem:[%s1 + $0x6c0] sm:$0xff]
    %v237 = vld [vmem:[%s1 + $0x6c8] sm:$0xff]
    %v238 = vld [vmem:[%s1 + $0x6d0] sm:$0xff]
    %v239 = vld [vmem:[%s1 + $0x6d8] sm:$0xff]
    %v240 = vld [vmem:[%s1 + $0x6e0] sm:$0xff]
    %v241 = vld [vmem:[%s1 + $0x6e8] sm:$0xff]
    %v242 = vld [vmem:[%s1 + $0x6f0] sm:$0xff]
    %v243 = vld [vmem:[%s1 + $0x6f8] sm:$0xff]
    %v244 = vld [vmem:[%s1 + $0x700] sm:$0xff]
    %v245 = vld [vmem:[%s1 + $0x708] sm:$0xff]
    %v246 = vld [vmem:[%s1 + $0x710] sm:$0xff]
    %v247 = vld [vmem:[%s1 + $0x718] sm:$0xff]
    %v248 = vld [vmem:[%s1 + $0x720] sm:$0xff]
    %v249 = vld [vmem:[%s1 + $0x728] sm:$0xff]
    %v250 = vld [vmem:[%s1 + $0x730] sm:$0xff]
    %v251 = vld [vmem:[%s1 + $0x738] sm:$0xff]
    %v252 = vld [vmem:[%s1 + $0x740] sm:$0xff]
    %v253 = vld [vmem:[%s1 + $0x748] sm:$0xff]
    %v254 = vld [vmem:[%s1 + $0x750] sm:$0xff]
    %v255 = vld [vmem:[%s1 + $0x758] sm:$0xff]
    %v256 = vld [vmem:[%s1 + $0x760] sm:$0xff]
    %v257 = vld [vmem:[%s1 + $0x768] sm:$0xff]
    %v258 = vld [vmem:[%s1 + $0x770] sm:$0xff]
    %v259 = vld [vmem:[%s1 + $0x778] sm:$0xff]
    %v260 = vld [vmem:[%s1 + $0x780] sm:$0xff]
    %v261 = vld [vmem:[%s1 + $0x788] sm:$0xff]
    %v262 = vld [vmem:[%s1 + $0x790] sm:$0xff]
    %v263 = vld [vmem:[%s1 + $0x798] sm:$0xff]
    %v264 = vld [vmem:[%s1 + $0x7a0] sm:$0xff]
    %v265 = vld [vmem:[%s1 + $0x7a8] sm:$0xff]
    %v266 = vld [vmem:[%s1 + $0x7b0] sm:$0xff]
    %v267 = vld [vmem:[%s1 + $0x7b8] sm:$0xff]
    %v268 = vld [vmem:[%s1 + $0x7c0] sm:$0xff]
    %v269 = vld [vmem:[%s1 + $0x7c8] sm:$0xff]
    %v270 = vld [vmem:[%s1 + $0x7d0] sm:$0xff]
    %v271 = vld [vmem:[%s1 + $0x7d8] sm:$0xff]
    %v272 = vld [vmem:[%s1 + $0x7e0] sm:$0xff]
    %v273 = vld [vmem:[%s1 + $0x7e8] sm:$0xff]
    %v274 = vld [vmem:[%s1 + $0x7f0] sm:$0xff]
    %v275 = vld [vmem:[%s1 + $0x7f8] sm:$0xff]
    %v276 = vld [vmem:[%s1 + $0x800] sm:$0xff]
    %v277 = vld [vmem:[%s1 + $0x808] sm:$0xff]
    %v278 = vld [vmem:[%s1 + $0x810] sm:$0xff]
    %v279 = vld [vmem:[%s1 + $0x818] sm:$0xff]
    %v280 = vld [vmem:[%s1 + $0x820] sm:$0xff]
    %v281 = vld [vmem:[%s1 + $0x828] sm:$0xff]
    %v282 = vld [vmem:[%s1 + $0x830] sm:$0xff]
    %v283 = vld [vmem:[%s1 + $0x838] sm:$0xff]
    %v284 = vld [vmem:[%s1 + $0x840] sm:$0xff]
    %v285 = vld [vmem:[%s1 + $0x848] sm:$0xff]
    %v286 = vld [vmem:[%s1 + $0x850] sm:$0xff]
    %v287 = vld [vmem:[%s1 + $0x858] sm:$0xff]
    %v288 = vld [vmem:[%s1 + $0x860] sm:$0xff]
    %v289 = vld [vmem:[%s1 + $0x868] sm:$0xff]
    %v290 = vld [vmem:[%s1 + $0x870] sm:$0xff]
    %v291 = vld [vmem:[%s1 + $0x878] sm:$0xff]
    %v292 = vld [vmem:[%s1 + $0x880] sm:$0xff]
    %v293 = vld [vmem:[%s1 + $0x888] sm:$0xff]
    %v294 = vld [vmem:[%s1 + $0x890] sm:$0xff]
    %v295 = vld [vmem:[%s1 + $0x898] sm:$0xff]
    %v296 = vld [vmem:[%s1 + $0x8a0] sm:$0xff]
    %v297 = vld [vmem:[%s1 + $0x8a8] sm:$0xff]
    %v298 = vld [vmem:[%s1 + $0x8b0] sm:$0xff]
    %v299 = vld [vmem:[%s1 + $0x8b8] sm:$0xff]
    %v300 = vld [vmem:[%s1 + $0x8c0] sm:$0xff]
    %v301 = vld [vmem:[%s1 + $0x8c8] sm:$0xff]
    %v302 = vld [vmem:[%s1 + $0x8d0] sm:$0xff]
    %v303 = vld [vmem:[%s1 + $0x8d8] sm:$0xff]
    %v304 = vld [vmem:[%s1 + $0x8e0] sm:$0xff]
    %v305 = vld [vmem:[%s1 + $0x8e8] sm:$0xff]
    %v306 = vld [vmem:[%s1 + $0x8f0] sm:$0xff]
    %v307 = vld [vmem:[%s1 + $0x8f8] sm:$0xff]
    %v308 = vld [vmem:[%s2] sm:$0x1]
    %v310 = vlaneseq
    %v311 = vshrl.u32 %v310, 7
    %v312 = vsub.s32 0, %v311
    %v313 = vrot.slane %v308, %v312
    %v320 = vcombine.high %v15, %v15
    %v322 = vunpack.c.l.s4 1983009808
    %v323 = vunpack.c.0.s8 %v322
    %v324 = vlaneseq
    %v325 = vshrl.u32 %v324, 7
    %v326 = vsub.s32 %v323, %v325
    %v327 = vrot.slane %v15, %v326
    %v329 = vunpack.c.l.s4 1983009808
    %v330 = vunpack.c.0.s8 %v329
    %v331 = vlaneseq
    %v332 = vshrl.u32 %v331, 7
    %v333 = vsub.s32 %v330, %v332
    %v334 = vrot.slane %v320, %v333
    %v335 = vcombine.high %v327, %v327
    %v336 = vcombine.high %v334, %v334
    %v337 = vcombine.high %v16, %v16
    %v339 = vunpack.c.l.s4 1983009808
    %v340 = vunpack.c.0.s8 %v339
    %v341 = vlaneseq
    %v342 = vshrl.u32 %v341, 7
    %v343 = vsub.s32 %v340, %v342
    %v344 = vrot.slane %v16, %v343
    %v346 = vunpack.c.l.s4 1983009808
    %v347 = vunpack.c.0.s8 %v346
    %v348 = vlaneseq
    %v349 = vshrl.u32 %v348, 7
    %v350 = vsub.s32 %v347, %v349
    %v351 = vrot.slane %v337, %v350
    %v352 = vcombine.high %v344, %v344
    %v353 = vcombine.high %v351, %v351
    %v354 = vcombine.high %v17, %v17
    %v356 = vunpack.c.l.s4 1983009808
    %v357 = vunpack.c.0.s8 %v356
    %v358 = vlaneseq
    %v359 = vshrl.u32 %v358, 7
    %v360 = vsub.s32 %v357, %v359
    %v361 = vrot.slane %v17, %v360
    %v363 = vunpack.c.l.s4 1983009808
    %v364 = vunpack.c.0.s8 %v363
    %v365 = vlaneseq
    %v366 = vshrl.u32 %v365, 7
    %v367 = vsub.s32 %v364, %v366
    %v368 = vrot.slane %v354, %v367
    %v369 = vcombine.high %v361, %v361
    %v370 = vcombine.high %v368, %v368
    %v371 = vcombine.high %v18, %v18
    %v373 = vunpack.c.l.s4 1983009808
    %v374 = vunpack.c.0.s8 %v373
    %v375 = vlaneseq
    %v376 = vshrl.u32 %v375, 7
    %v377 = vsub.s32 %v374, %v376
    %v378 = vrot.slane %v18, %v377
    %v380 = vunpack.c.l.s4 1983009808
    %v381 = vunpack.c.0.s8 %v380
    %v382 = vlaneseq
    %v383 = vshrl.u32 %v382, 7
    %v384 = vsub.s32 %v381, %v383
    %v385 = vrot.slane %v371, %v384
    %v386 = vcombine.high %v378, %v378
    %v387 = vcombine.high %v385, %v385
    %v389 = vunpack.c.l.s4 1983009808
    %v390 = vunpack.c.0.s8 %v389
    %v391 = vlaneseq
    %v392 = vshrl.u32 %v391, 7
    %v393 = vsub.s32 %v390, %v392
    %v394 = vrot.slane %v19, %v393
    %v395 = vcombine.high %v394, %v394
    %414 = vmatprep.subr.mxu0 0.0
    %415 = vmatpush1.msra.mxu0 %v35
    %416 = vmatprep.subr.mxu0 0.0
    %417 = vmatpush1.msra.mxu0 %v34
    %418 = vmatprep.subr.mxu0 0.0
    %419 = vmatpush1.msra.mxu0 %v33
    %420 = vmatprep.subr.mxu0 0.0
    %421 = vmatpush1.msra.mxu0 %v32
    %422 = vmatprep.subr.mxu0 0.0
    %423 = vmatpush1.msra.mxu0 %v31
    %424 = vmatprep.subr.mxu0 0.0
    %425 = vmatpush1.msra.mxu0 %v30
    %426 = vmatprep.subr.mxu0 0.0
    %427 = vmatpush1.msra.mxu0 %v29
    %428 = vmatprep.subr.mxu0 0.0
    %429 = vmatpush1.msra.mxu0 %v28
    %430 = vmatprep.subr.mxu0 0.0
    %431 = vmatpush1.msra.mxu0 %v27
    %432 = vmatprep.subr.mxu0 0.0
    %433 = vmatpush1.msra.mxu0 %v26
    %434 = vmatprep.subr.mxu0 0.0
    %435 = vmatpush1.msra.mxu0 %v25
    %436 = vmatprep.subr.mxu0 0.0
    %437 = vmatpush1.msra.mxu0 %v24
    %438 = vmatprep.subr.mxu0 0.0
    %439 = vmatpush1.msra.mxu0 %v23
    %440 = vmatprep.subr.mxu0 0.0
    %441 = vmatpush1.msra.mxu0 %v22
    %442 = vmatprep.subr.mxu0 0.0
    %443 = vmatpush1.msra.mxu0 %v21
    %444 = vmatprep.subr.mxu0 0.0
    %445 = vmatpush1.msra.mxu0 %v20
    %446 = vmatprep.subr.mxu0 0.0
    %447 = vmatpush2.msra.mxu0 %v51
    %448 = vmatprep.subr.mxu0 0.0
    %449 = vmatpush2.msra.mxu0 %v50
    %450 = vmatprep.subr.mxu0 0.0
    %451 = vmatpush2.msra.mxu0 %v49
    %452 = vmatprep.subr.mxu0 0.0
    %453 = vmatpush2.msra.mxu0 %v48
    %454 = vmatprep.subr.mxu0 0.0
    %455 = vmatpush2.msra.mxu0 %v47
    %456 = vmatprep.subr.mxu0 0.0
    %457 = vmatpush2.msra.mxu0 %v46
    %458 = vmatprep.subr.mxu0 0.0
    %459 = vmatpush2.msra.mxu0 %v45
    %460 = vmatprep.subr.mxu0 0.0
    %461 = vmatpush2.msra.mxu0 %v44
    %462 = vmatprep.subr.mxu0 0.0
    %463 = vmatpush2.msra.mxu0 %v43
    %464 = vmatprep.subr.mxu0 0.0
    %465 = vmatpush2.msra.mxu0 %v42
    %466 = vmatprep.subr.mxu0 0.0
    %467 = vmatpush2.msra.mxu0 %v41
    %468 = vmatprep.subr.mxu0 0.0
    %469 = vmatpush2.msra.mxu0 %v40
    %470 = vmatprep.subr.mxu0 0.0
    %471 = vmatpush2.msra.mxu0 %v39
    %472 = vmatprep.subr.mxu0 0.0
    %473 = vmatpush2.msra.mxu0 %v38
    %474 = vmatprep.subr.mxu0 0.0
    %475 = vmatpush2.msra.mxu0 %v37
    %476 = vmatprep.subr.mxu0 0.0
    %477 = vmatpush2.msra.mxu0 %v36
    %478 = vmatprep.mubr.f32.mxu0 %v335
    %479 = vmatmul.mubr.f32.gmra.mxu0 %v327
    %v480 = vpop.f32.mrf.mxu0
    %v481 = vadd.f32 %v313, %v480
    %v482 = vpop.f32.mrf.mxu0
    %483 = vdwg.mxu0
    %484 = vmatprep.subr.mxu0 0.0
    %485 = vmatpush1.msra.mxu0 %v67
    %486 = vmatprep.subr.mxu0 0.0
    %487 = vmatpush1.msra.mxu0 %v66
    %488 = vmatprep.subr.mxu0 0.0
    %489 = vmatpush1.msra.mxu0 %v65
    %490 = vmatprep.subr.mxu0 0.0
    %491 = vmatpush1.msra.mxu0 %v64
    %492 = vmatprep.subr.mxu0 0.0
    %493 = vmatpush1.msra.mxu0 %v63
    %494 = vmatprep.subr.mxu0 0.0
    %495 = vmatpush1.msra.mxu0 %v62
    %496 = vmatprep.subr.mxu0 0.0
    %497 = vmatpush1.msra.mxu0 %v61
    %498 = vmatprep.subr.mxu0 0.0
    %499 = vmatpush1.msra.mxu0 %v60
    %500 = vmatprep.subr.mxu0 0.0
    %501 = vmatpush1.msra.mxu0 %v59
    %502 = vmatprep.subr.mxu0 0.0
    %503 = vmatpush1.msra.mxu0 %v58
    %504 = vmatprep.subr.mxu0 0.0
    %505 = vmatpush1.msra.mxu0 %v57
    %506 = vmatprep.subr.mxu0 0.0
    %507 = vmatpush1.msra.mxu0 %v56
    %508 = vmatprep.subr.mxu0 0.0
    %509 = vmatpush1.msra.mxu0 %v55
    %510 = vmatprep.subr.mxu0 0.0
    %511 = vmatpush1.msra.mxu0 %v54
    %512 = vmatprep.subr.mxu0 0.0
    %513 = vmatpush1.msra.mxu0 %v53
    %514 = vmatprep.subr.mxu0 0.0
    %515 = vmatpush1.msra.mxu0 %v52
    %516 = vmatprep.subr.mxu0 0.0
    %517 = vmatpush2.msra.mxu0 %v83
    %518 = vmatprep.subr.mxu0 0.0
    %519 = vmatpush2.msra.mxu0 %v82
    %520 = vmatprep.subr.mxu0 0.0
    %521 = vmatpush2.msra.mxu0 %v81
    %522 = vmatprep.subr.mxu0 0.0
    %523 = vmatpush2.msra.mxu0 %v80
    %524 = vmatprep.subr.mxu0 0.0
    %525 = vmatpush2.msra.mxu0 %v79
    %526 = vmatprep.subr.mxu0 0.0
    %527 = vmatpush2.msra.mxu0 %v78
    %528 = vmatprep.subr.mxu0 0.0
    %529 = vmatpush2.msra.mxu0 %v77
    %530 = vmatprep.subr.mxu0 0.0
    %531 = vmatpush2.msra.mxu0 %v76
    %532 = vmatprep.subr.mxu0 0.0
    %533 = vmatpush2.msra.mxu0 %v75
    %534 = vmatprep.subr.mxu0 0.0
    %535 = vmatpush2.msra.mxu0 %v74
    %536 = vmatprep.subr.mxu0 0.0
    %537 = vmatpush2.msra.mxu0 %v73
    %538 = vmatprep.subr.mxu0 0.0
    %539 = vmatpush2.msra.mxu0 %v72
    %540 = vmatprep.subr.mxu0 0.0
    %541 = vmatpush2.msra.mxu0 %v71
    %542 = vmatprep.subr.mxu0 0.0
    %543 = vmatpush2.msra.mxu0 %v70
    %544 = vmatprep.subr.mxu0 0.0
    %545 = vmatpush2.msra.mxu0 %v69
    %546 = vmatprep.subr.mxu0 0.0
    %547 = vmatpush2.msra.mxu0 %v68
    %548 = vmatprep.mubr.f32.mxu0 %v336
    %549 = vmatmul.mubr.f32.gmra.mxu0 %v334
    %v550 = vpop.f32.mrf.mxu0
    %v551 = vadd.f32 %v481, %v550
    %v552 = vpop.f32.mrf.mxu0
    %553 = vdwg.mxu0
    %554 = vmatprep.subr.mxu0 0.0
    %555 = vmatpush1.msra.mxu0 %v99
    %556 = vmatprep.subr.mxu0 0.0
    %557 = vmatpush1.msra.mxu0 %v98
    %558 = vmatprep.subr.mxu0 0.0
    %559 = vmatpush1.msra.mxu0 %v97
    %560 = vmatprep.subr.mxu0 0.0
    %561 = vmatpush1.msra.mxu0 %v96
    %562 = vmatprep.subr.mxu0 0.0
    %563 = vmatpush1.msra.mxu0 %v95
    %564 = vmatprep.subr.mxu0 0.0
    %565 = vmatpush1.msra.mxu0 %v94
    %566 = vmatprep.subr.mxu0 0.0
    %567 = vmatpush1.msra.mxu0 %v93
    %568 = vmatprep.subr.mxu0 0.0
    %569 = vmatpush1.msra.mxu0 %v92
    %570 = vmatprep.subr.mxu0 0.0
    %571 = vmatpush1.msra.mxu0 %v91
    %572 = vmatprep.subr.mxu0 0.0
    %573 = vmatpush1.msra.mxu0 %v90
    %574 = vmatprep.subr.mxu0 0.0
    %575 = vmatpush1.msra.mxu0 %v89
    %576 = vmatprep.subr.mxu0 0.0
    %577 = vmatpush1.msra.mxu0 %v88
    %578 = vmatprep.subr.mxu0 0.0
    %579 = vmatpush1.msra.mxu0 %v87
    %580 = vmatprep.subr.mxu0 0.0
    %581 = vmatpush1.msra.mxu0 %v86
    %582 = vmatprep.subr.mxu0 0.0
    %583 = vmatpush1.msra.mxu0 %v85
    %584 = vmatprep.subr.mxu0 0.0
    %585 = vmatpush1.msra.mxu0 %v84
    %586 = vmatprep.subr.mxu0 0.0
    %587 = vmatpush2.msra.mxu0 %v115
    %588 = vmatprep.subr.mxu0 0.0
    %589 = vmatpush2.msra.mxu0 %v114
    %590 = vmatprep.subr.mxu0 0.0
    %591 = vmatpush2.msra.mxu0 %v113
    %592 = vmatprep.subr.mxu0 0.0
    %593 = vmatpush2.msra.mxu0 %v112
    %594 = vmatprep.subr.mxu0 0.0
    %595 = vmatpush2.msra.mxu0 %v111
    %596 = vmatprep.subr.mxu0 0.0
    %597 = vmatpush2.msra.mxu0 %v110
    %598 = vmatprep.subr.mxu0 0.0
    %599 = vmatpush2.msra.mxu0 %v109
    %600 = vmatprep.subr.mxu0 0.0
    %601 = vmatpush2.msra.mxu0 %v108
    %602 = vmatprep.subr.mxu0 0.0
    %603 = vmatpush2.msra.mxu0 %v107
    %604 = vmatprep.subr.mxu0 0.0
    %605 = vmatpush2.msra.mxu0 %v106
    %606 = vmatprep.subr.mxu0 0.0
    %607 = vmatpush2.msra.mxu0 %v105
    %608 = vmatprep.subr.mxu0 0.0
    %609 = vmatpush2.msra.mxu0 %v104
    %610 = vmatprep.subr.mxu0 0.0
    %611 = vmatpush2.msra.mxu0 %v103
    %612 = vmatprep.subr.mxu0 0.0
    %613 = vmatpush2.msra.mxu0 %v102
    %614 = vmatprep.subr.mxu0 0.0
    %615 = vmatpush2.msra.mxu0 %v101
    %616 = vmatprep.subr.mxu0 0.0
    %617 = vmatpush2.msra.mxu0 %v100
    %618 = vmatprep.mubr.f32.mxu0 %v352
    %619 = vmatmul.mubr.f32.gmra.mxu0 %v344
    %v620 = vpop.f32.mrf.mxu0
    %v621 = vadd.f32 %v551, %v620
    %v622 = vpop.f32.mrf.mxu0
    %623 = vdwg.mxu0
    %624 = vmatprep.subr.mxu0 0.0
    %625 = vmatpush1.msra.mxu0 %v131
    %626 = vmatprep.subr.mxu0 0.0
    %627 = vmatpush1.msra.mxu0 %v130
    %628 = vmatprep.subr.mxu0 0.0
    %629 = vmatpush1.msra.mxu0 %v129
    %630 = vmatprep.subr.mxu0 0.0
    %631 = vmatpush1.msra.mxu0 %v128
    %632 = vmatprep.subr.mxu0 0.0
    %633 = vmatpush1.msra.mxu0 %v127
    %634 = vmatprep.subr.mxu0 0.0
    %635 = vmatpush1.msra.mxu0 %v126
    %636 = vmatprep.subr.mxu0 0.0
    %637 = vmatpush1.msra.mxu0 %v125
    %638 = vmatprep.subr.mxu0 0.0
    %639 = vmatpush1.msra.mxu0 %v124
    %640 = vmatprep.subr.mxu0 0.0
    %641 = vmatpush1.msra.mxu0 %v123
    %642 = vmatprep.subr.mxu0 0.0
    %643 = vmatpush1.msra.mxu0 %v122
    %644 = vmatprep.subr.mxu0 0.0
    %645 = vmatpush1.msra.mxu0 %v121
    %646 = vmatprep.subr.mxu0 0.0
    %647 = vmatpush1.msra.mxu0 %v120
    %648 = vmatprep.subr.mxu0 0.0
    %649 = vmatpush1.msra.mxu0 %v119
    %650 = vmatprep.subr.mxu0 0.0
    %651 = vmatpush1.msra.mxu0 %v118
    %652 = vmatprep.subr.mxu0 0.0
    %653 = vmatpush1.msra.mxu0 %v117
    %654 = vmatprep.subr.mxu0 0.0
    %655 = vmatpush1.msra.mxu0 %v116
    %656 = vmatprep.subr.mxu0 0.0
    %657 = vmatpush2.msra.mxu0 %v147
    %658 = vmatprep.subr.mxu0 0.0
    %659 = vmatpush2.msra.mxu0 %v146
    %660 = vmatprep.subr.mxu0 0.0
    %661 = vmatpush2.msra.mxu0 %v145
    %662 = vmatprep.subr.mxu0 0.0
    %663 = vmatpush2.msra.mxu0 %v144
    %664 = vmatprep.subr.mxu0 0.0
    %665 = vmatpush2.msra.mxu0 %v143
    %666 = vmatprep.subr.mxu0 0.0
    %667 = vmatpush2.msra.mxu0 %v142
    %668 = vmatprep.subr.mxu0 0.0
    %669 = vmatpush2.msra.mxu0 %v141
    %670 = vmatprep.subr.mxu0 0.0
    %671 = vmatpush2.msra.mxu0 %v140
    %672 = vmatprep.subr.mxu0 0.0
    %673 = vmatpush2.msra.mxu0 %v139
    %674 = vmatprep.subr.mxu0 0.0
    %675 = vmatpush2.msra.mxu0 %v138
    %676 = vmatprep.subr.mxu0 0.0
    %677 = vmatpush2.msra.mxu0 %v137
    %678 = vmatprep.subr.mxu0 0.0
    %679 = vmatpush2.msra.mxu0 %v136
    %680 = vmatprep.subr.mxu0 0.0
    %681 = vmatpush2.msra.mxu0 %v135
    %682 = vmatprep.subr.mxu0 0.0
    %683 = vmatpush2.msra.mxu0 %v134
    %684 = vmatprep.subr.mxu0 0.0
    %685 = vmatpush2.msra.mxu0 %v133
    %686 = vmatprep.subr.mxu0 0.0
    %687 = vmatpush2.msra.mxu0 %v132
    %688 = vmatprep.mubr.f32.mxu0 %v353
    %689 = vmatmul.mubr.f32.gmra.mxu0 %v351
    %v690 = vpop.f32.mrf.mxu0
    %v691 = vadd.f32 %v621, %v690
    %v692 = vpop.f32.mrf.mxu0
    %693 = vdwg.mxu0
    %694 = vmatprep.subr.mxu0 0.0
    %695 = vmatpush1.msra.mxu0 %v163
    %696 = vmatprep.subr.mxu0 0.0
    %697 = vmatpush1.msra.mxu0 %v162
    %698 = vmatprep.subr.mxu0 0.0
    %699 = vmatpush1.msra.mxu0 %v161
    %700 = vmatprep.subr.mxu0 0.0
    %701 = vmatpush1.msra.mxu0 %v160
    %702 = vmatprep.subr.mxu0 0.0
    %703 = vmatpush1.msra.mxu0 %v159
    %704 = vmatprep.subr.mxu0 0.0
    %705 = vmatpush1.msra.mxu0 %v158
    %706 = vmatprep.subr.mxu0 0.0
    %707 = vmatpush1.msra.mxu0 %v157
    %708 = vmatprep.subr.mxu0 0.0
    %709 = vmatpush1.msra.mxu0 %v156
    %710 = vmatprep.subr.mxu0 0.0
    %711 = vmatpush1.msra.mxu0 %v155
    %712 = vmatprep.subr.mxu0 0.0
    %713 = vmatpush1.msra.mxu0 %v154
    %714 = vmatprep.subr.mxu0 0.0
    %715 = vmatpush1.msra.mxu0 %v153
    %716 = vmatprep.subr.mxu0 0.0
    %717 = vmatpush1.msra.mxu0 %v152
    %718 = vmatprep.subr.mxu0 0.0
    %719 = vmatpush1.msra.mxu0 %v151
    %720 = vmatprep.subr.mxu0 0.0
    %721 = vmatpush1.msra.mxu0 %v150
    %722 = vmatprep.subr.mxu0 0.0
    %723 = vmatpush1.msra.mxu0 %v149
    %724 = vmatprep.subr.mxu0 0.0
    %725 = vmatpush1.msra.mxu0 %v148
    %726 = vmatprep.subr.mxu0 0.0
    %727 = vmatpush2.msra.mxu0 %v179
    %728 = vmatprep.subr.mxu0 0.0
    %729 = vmatpush2.msra.mxu0 %v178
    %730 = vmatprep.subr.mxu0 0.0
    %731 = vmatpush2.msra.mxu0 %v177
    %732 = vmatprep.subr.mxu0 0.0
    %733 = vmatpush2.msra.mxu0 %v176
    %734 = vmatprep.subr.mxu0 0.0
    %735 = vmatpush2.msra.mxu0 %v175
    %736 = vmatprep.subr.mxu0 0.0
    %737 = vmatpush2.msra.mxu0 %v174
    %738 = vmatprep.subr.mxu0 0.0
    %739 = vmatpush2.msra.mxu0 %v173
    %740 = vmatprep.subr.mxu0 0.0
    %741 = vmatpush2.msra.mxu0 %v172
    %742 = vmatprep.subr.mxu0 0.0
    %743 = vmatpush2.msra.mxu0 %v171
    %744 = vmatprep.subr.mxu0 0.0
    %745 = vmatpush2.msra.mxu0 %v170
    %746 = vmatprep.subr.mxu0 0.0
    %747 = vmatpush2.msra.mxu0 %v169
    %748 = vmatprep.subr.mxu0 0.0
    %749 = vmatpush2.msra.mxu0 %v168
    %750 = vmatprep.subr.mxu0 0.0
    %751 = vmatpush2.msra.mxu0 %v167
    %752 = vmatprep.subr.mxu0 0.0
    %753 = vmatpush2.msra.mxu0 %v166
    %754 = vmatprep.subr.mxu0 0.0
    %755 = vmatpush2.msra.mxu0 %v165
    %756 = vmatprep.subr.mxu0 0.0
    %757 = vmatpush2.msra.mxu0 %v164
    %758 = vmatprep.mubr.f32.mxu0 %v369
    %759 = vmatmul.mubr.f32.gmra.mxu0 %v361
    %v760 = vpop.f32.mrf.mxu0
    %v761 = vadd.f32 %v691, %v760
    %v762 = vpop.f32.mrf.mxu0
    %763 = vdwg.mxu0
    %764 = vmatprep.subr.mxu0 0.0
    %765 = vmatpush1.msra.mxu0 %v195
    %766 = vmatprep.subr.mxu0 0.0
    %767 = vmatpush1.msra.mxu0 %v194
    %768 = vmatprep.subr.mxu0 0.0
    %769 = vmatpush1.msra.mxu0 %v193
    %770 = vmatprep.subr.mxu0 0.0
    %771 = vmatpush1.msra.mxu0 %v192
    %772 = vmatprep.subr.mxu0 0.0
    %773 = vmatpush1.msra.mxu0 %v191
    %774 = vmatprep.subr.mxu0 0.0
    %775 = vmatpush1.msra.mxu0 %v190
    %776 = vmatprep.subr.mxu0 0.0
    %777 = vmatpush1.msra.mxu0 %v189
    %778 = vmatprep.subr.mxu0 0.0
    %779 = vmatpush1.msra.mxu0 %v188
    %780 = vmatprep.subr.mxu0 0.0
    %781 = vmatpush1.msra.mxu0 %v187
    %782 = vmatprep.subr.mxu0 0.0
    %783 = vmatpush1.msra.mxu0 %v186
    %784 = vmatprep.subr.mxu0 0.0
    %785 = vmatpush1.msra.mxu0 %v185
    %786 = vmatprep.subr.mxu0 0.0
    %787 = vmatpush1.msra.mxu0 %v184
    %788 = vmatprep.subr.mxu0 0.0
    %789 = vmatpush1.msra.mxu0 %v183
    %790 = vmatprep.subr.mxu0 0.0
    %791 = vmatpush1.msra.mxu0 %v182
    %792 = vmatprep.subr.mxu0 0.0
    %793 = vmatpush1.msra.mxu0 %v181
    %794 = vmatprep.subr.mxu0 0.0
    %795 = vmatpush1.msra.mxu0 %v180
    %796 = vmatprep.subr.mxu0 0.0
    %797 = vmatpush2.msra.mxu0 %v211
    %798 = vmatprep.subr.mxu0 0.0
    %799 = vmatpush2.msra.mxu0 %v210
    %800 = vmatprep.subr.mxu0 0.0
    %801 = vmatpush2.msra.mxu0 %v209
    %802 = vmatprep.subr.mxu0 0.0
    %803 = vmatpush2.msra.mxu0 %v208
    %804 = vmatprep.subr.mxu0 0.0
    %805 = vmatpush2.msra.mxu0 %v207
    %806 = vmatprep.subr.mxu0 0.0
    %807 = vmatpush2.msra.mxu0 %v206
    %808 = vmatprep.subr.mxu0 0.0
    %809 = vmatpush2.msra.mxu0 %v205
    %810 = vmatprep.subr.mxu0 0.0
    %811 = vmatpush2.msra.mxu0 %v204
    %812 = vmatprep.subr.mxu0 0.0
    %813 = vmatpush2.msra.mxu0 %v203
    %814 = vmatprep.subr.mxu0 0.0
    %815 = vmatpush2.msra.mxu0 %v202
    %816 = vmatprep.subr.mxu0 0.0
    %817 = vmatpush2.msra.mxu0 %v201
    %818 = vmatprep.subr.mxu0 0.0
    %819 = vmatpush2.msra.mxu0 %v200
    %820 = vmatprep.subr.mxu0 0.0
    %821 = vmatpush2.msra.mxu0 %v199
    %822 = vmatprep.subr.mxu0 0.0
    %823 = vmatpush2.msra.mxu0 %v198
    %824 = vmatprep.subr.mxu0 0.0
    %825 = vmatpush2.msra.mxu0 %v197
    %826 = vmatprep.subr.mxu0 0.0
    %827 = vmatpush2.msra.mxu0 %v196
    %828 = vmatprep.mubr.f32.mxu0 %v370
    %829 = vmatmul.mubr.f32.gmra.mxu0 %v368
    %v830 = vpop.f32.mrf.mxu0
    %v831 = vadd.f32 %v761, %v830
    %v832 = vpop.f32.mrf.mxu0
    %833 = vdwg.mxu0
    %834 = vmatprep.subr.mxu0 0.0
    %835 = vmatpush1.msra.mxu0 %v227
    %836 = vmatprep.subr.mxu0 0.0
    %837 = vmatpush1.msra.mxu0 %v226
    %838 = vmatprep.subr.mxu0 0.0
    %839 = vmatpush1.msra.mxu0 %v225
    %840 = vmatprep.subr.mxu0 0.0
    %841 = vmatpush1.msra.mxu0 %v224
    %842 = vmatprep.subr.mxu0 0.0
    %843 = vmatpush1.msra.mxu0 %v223
    %844 = vmatprep.subr.mxu0 0.0
    %845 = vmatpush1.msra.mxu0 %v222
    %846 = vmatprep.subr.mxu0 0.0
    %847 = vmatpush1.msra.mxu0 %v221
    %848 = vmatprep.subr.mxu0 0.0
    %849 = vmatpush1.msra.mxu0 %v220
    %850 = vmatprep.subr.mxu0 0.0
    %851 = vmatpush1.msra.mxu0 %v219
    %852 = vmatprep.subr.mxu0 0.0
    %853 = vmatpush1.msra.mxu0 %v218
    %854 = vmatprep.subr.mxu0 0.0
    %855 = vmatpush1.msra.mxu0 %v217
    %856 = vmatprep.subr.mxu0 0.0
    %857 = vmatpush1.msra.mxu0 %v216
    %858 = vmatprep.subr.mxu0 0.0
    %859 = vmatpush1.msra.mxu0 %v215
    %860 = vmatprep.subr.mxu0 0.0
    %861 = vmatpush1.msra.mxu0 %v214
    %862 = vmatprep.subr.mxu0 0.0
    %863 = vmatpush1.msra.mxu0 %v213
    %864 = vmatprep.subr.mxu0 0.0
    %865 = vmatpush1.msra.mxu0 %v212
    %866 = vmatprep.subr.mxu0 0.0
    %867 = vmatpush2.msra.mxu0 %v243
    %868 = vmatprep.subr.mxu0 0.0
    %869 = vmatpush2.msra.mxu0 %v242
    %870 = vmatprep.subr.mxu0 0.0
    %871 = vmatpush2.msra.mxu0 %v241
    %872 = vmatprep.subr.mxu0 0.0
    %873 = vmatpush2.msra.mxu0 %v240
    %874 = vmatprep.subr.mxu0 0.0
    %875 = vmatpush2.msra.mxu0 %v239
    %876 = vmatprep.subr.mxu0 0.0
    %877 = vmatpush2.msra.mxu0 %v238
    %878 = vmatprep.subr.mxu0 0.0
    %879 = vmatpush2.msra.mxu0 %v237
    %880 = vmatprep.subr.mxu0 0.0
    %881 = vmatpush2.msra.mxu0 %v236
    %882 = vmatprep.subr.mxu0 0.0
    %883 = vmatpush2.msra.mxu0 %v235
    %884 = vmatprep.subr.mxu0 0.0
    %885 = vmatpush2.msra.mxu0 %v234
    %886 = vmatprep.subr.mxu0 0.0
    %887 = vmatpush2.msra.mxu0 %v233
    %888 = vmatprep.subr.mxu0 0.0
    %889 = vmatpush2.msra.mxu0 %v232
    %890 = vmatprep.subr.mxu0 0.0
    %891 = vmatpush2.msra.mxu0 %v231
    %892 = vmatprep.subr.mxu0 0.0
    %893 = vmatpush2.msra.mxu0 %v230
    %894 = vmatprep.subr.mxu0 0.0
    %895 = vmatpush2.msra.mxu0 %v229
    %896 = vmatprep.subr.mxu0 0.0
    %897 = vmatpush2.msra.mxu0 %v228
    %898 = vmatprep.mubr.f32.mxu0 %v386
    %899 = vmatmul.mubr.f32.gmra.mxu0 %v378
    %v900 = vpop.f32.mrf.mxu0
    %v901 = vadd.f32 %v831, %v900
    %v902 = vpop.f32.mrf.mxu0
    %903 = vdwg.mxu0
    %904 = vmatprep.subr.mxu0 0.0
    %905 = vmatpush1.msra.mxu0 %v259
    %906 = vmatprep.subr.mxu0 0.0
    %907 = vmatpush1.msra.mxu0 %v258
    %908 = vmatprep.subr.mxu0 0.0
    %909 = vmatpush1.msra.mxu0 %v257
    %910 = vmatprep.subr.mxu0 0.0
    %911 = vmatpush1.msra.mxu0 %v256
    %912 = vmatprep.subr.mxu0 0.0
    %913 = vmatpush1.msra.mxu0 %v255
    %914 = vmatprep.subr.mxu0 0.0
    %915 = vmatpush1.msra.mxu0 %v254
    %916 = vmatprep.subr.mxu0 0.0
    %917 = vmatpush1.msra.mxu0 %v253
    %918 = vmatprep.subr.mxu0 0.0
    %919 = vmatpush1.msra.mxu0 %v252
    %920 = vmatprep.subr.mxu0 0.0
    %921 = vmatpush1.msra.mxu0 %v251
    %922 = vmatprep.subr.mxu0 0.0
    %923 = vmatpush1.msra.mxu0 %v250
    %924 = vmatprep.subr.mxu0 0.0
    %925 = vmatpush1.msra.mxu0 %v249
    %926 = vmatprep.subr.mxu0 0.0
    %927 = vmatpush1.msra.mxu0 %v248
    %928 = vmatprep.subr.mxu0 0.0
    %929 = vmatpush1.msra.mxu0 %v247
    %930 = vmatprep.subr.mxu0 0.0
    %931 = vmatpush1.msra.mxu0 %v246
    %932 = vmatprep.subr.mxu0 0.0
    %933 = vmatpush1.msra.mxu0 %v245
    %934 = vmatprep.subr.mxu0 0.0
    %935 = vmatpush1.msra.mxu0 %v244
    %936 = vmatprep.subr.mxu0 0.0
    %937 = vmatpush2.msra.mxu0 %v275
    %938 = vmatprep.subr.mxu0 0.0
    %939 = vmatpush2.msra.mxu0 %v274
    %940 = vmatprep.subr.mxu0 0.0
    %941 = vmatpush2.msra.mxu0 %v273
    %942 = vmatprep.subr.mxu0 0.0
    %943 = vmatpush2.msra.mxu0 %v272
    %944 = vmatprep.subr.mxu0 0.0
    %945 = vmatpush2.msra.mxu0 %v271
    %946 = vmatprep.subr.mxu0 0.0
    %947 = vmatpush2.msra.mxu0 %v270
    %948 = vmatprep.subr.mxu0 0.0
    %949 = vmatpush2.msra.mxu0 %v269
    %950 = vmatprep.subr.mxu0 0.0
    %951 = vmatpush2.msra.mxu0 %v268
    %952 = vmatprep.subr.mxu0 0.0
    %953 = vmatpush2.msra.mxu0 %v267
    %954 = vmatprep.subr.mxu0 0.0
    %955 = vmatpush2.msra.mxu0 %v266
    %956 = vmatprep.subr.mxu0 0.0
    %957 = vmatpush2.msra.mxu0 %v265
    %958 = vmatprep.subr.mxu0 0.0
    %959 = vmatpush2.msra.mxu0 %v264
    %960 = vmatprep.subr.mxu0 0.0
    %961 = vmatpush2.msra.mxu0 %v263
    %962 = vmatprep.subr.mxu0 0.0
    %963 = vmatpush2.msra.mxu0 %v262
    %964 = vmatprep.subr.mxu0 0.0
    %965 = vmatpush2.msra.mxu0 %v261
    %966 = vmatprep.subr.mxu0 0.0
    %967 = vmatpush2.msra.mxu0 %v260
    %968 = vmatprep.mubr.f32.mxu0 %v387
    %969 = vmatmul.mubr.f32.gmra.mxu0 %v385
    %v970 = vpop.f32.mrf.mxu0
    %v971 = vadd.f32 %v901, %v970
    %v972 = vpop.f32.mrf.mxu0
    %973 = vdwg.mxu0
    %974 = vmatprep.subr.mxu0 0.0
    %975 = vmatpush1.msra.mxu0 %v291
    %976 = vmatprep.subr.mxu0 0.0
    %977 = vmatpush1.msra.mxu0 %v290
    %978 = vmatprep.subr.mxu0 0.0
    %979 = vmatpush1.msra.mxu0 %v289
    %980 = vmatprep.subr.mxu0 0.0
    %981 = vmatpush1.msra.mxu0 %v288
    %982 = vmatprep.subr.mxu0 0.0
    %983 = vmatpush1.msra.mxu0 %v287
    %984 = vmatprep.subr.mxu0 0.0
    %985 = vmatpush1.msra.mxu0 %v286
    %986 = vmatprep.subr.mxu0 0.0
    %987 = vmatpush1.msra.mxu0 %v285
    %988 = vmatprep.subr.mxu0 0.0
    %989 = vmatpush1.msra.mxu0 %v284
    %990 = vmatprep.subr.mxu0 0.0
    %991 = vmatpush1.msra.mxu0 %v283
    %992 = vmatprep.subr.mxu0 0.0
    %993 = vmatpush1.msra.mxu0 %v282
    %994 = vmatprep.subr.mxu0 0.0
    %995 = vmatpush1.msra.mxu0 %v281
    %996 = vmatprep.subr.mxu0 0.0
    %997 = vmatpush1.msra.mxu0 %v280
    %998 = vmatprep.subr.mxu0 0.0
    %999 = vmatpush1.msra.mxu0 %v279
    %1000 = vmatprep.subr.mxu0 0.0
    %1001 = vmatpush1.msra.mxu0 %v278
    %1002 = vmatprep.subr.mxu0 0.0
    %1003 = vmatpush1.msra.mxu0 %v277
    %1004 = vmatprep.subr.mxu0 0.0
    %1005 = vmatpush1.msra.mxu0 %v276
    %1006 = vmatprep.subr.mxu0 0.0
    %1007 = vmatpush2.msra.mxu0 %v307
    %1008 = vmatprep.subr.mxu0 0.0
    %1009 = vmatpush2.msra.mxu0 %v306
    %1010 = vmatprep.subr.mxu0 0.0
    %1011 = vmatpush2.msra.mxu0 %v305
    %1012 = vmatprep.subr.mxu0 0.0
    %1013 = vmatpush2.msra.mxu0 %v304
    %1014 = vmatprep.subr.mxu0 0.0
    %1015 = vmatpush2.msra.mxu0 %v303
    %1016 = vmatprep.subr.mxu0 0.0
    %1017 = vmatpush2.msra.mxu0 %v302
    %1018 = vmatprep.subr.mxu0 0.0
    %1019 = vmatpush2.msra.mxu0 %v301
    %1020 = vmatprep.subr.mxu0 0.0
    %1021 = vmatpush2.msra.mxu0 %v300
    %1022 = vmatprep.subr.mxu0 0.0
    %1023 = vmatpush2.msra.mxu0 %v299
    %1024 = vmatprep.subr.mxu0 0.0
    %1025 = vmatpush2.msra.mxu0 %v298
    %1026 = vmatprep.subr.mxu0 0.0
    %1027 = vmatpush2.msra.mxu0 %v297
    %1028 = vmatprep.subr.mxu0 0.0
    %1029 = vmatpush2.msra.mxu0 %v296
    %1030 = vmatprep.subr.mxu0 0.0
    %1031 = vmatpush2.msra.mxu0 %v295
    %1032 = vmatprep.subr.mxu0 0.0
    %1033 = vmatpush2.msra.mxu0 %v294
    %1034 = vmatprep.subr.mxu0 0.0
    %1035 = vmatpush2.msra.mxu0 %v293
    %1036 = vmatprep.subr.mxu0 0.0
    %1037 = vmatpush2.msra.mxu0 %v292
    %1038 = vmatprep.mubr.f32.mxu0 %v395
    %1039 = vmatmul.mubr.f32.gmra.mxu0 %v394
    %v1040 = vpop.f32.mrf.mxu0
    %v1041 = vadd.f32 %v971, %v1040
    %v1042 = vpop.f32.mrf.mxu0
    %1043 = vdwg.mxu0
    %vm1044 = vcmask 9216
    %1045 = vst.msk [vmem:[#allocation2] sm:$0x3] %vm1044, %v1041
    // Predicated region
    $region14: #{convnet_forward.5} parent=1 // pred_check
      _
    $region15: #{convnet_forward.5} parent=1 // pred_check_branch
      %1047 = sbr.rel (0) target = $region17
    $region16: #{convnet_forward.5} parent=1 // pred_region
      %s1049 = ssub.s32 32, 32
      %1050 = vsyncadd [#allocation3], %s1049
      %s1052 = sshll.u32 [#allocation2], 4
      %s1053 = int_to_ptr.vmem [resolvable:$true] %s1052
      %1055 = dma.vmem_to_hbm [thread:$0]  %s1053, 32, %s3, [#allocation3]
    $region17: #{convnet_forward.5} parent=1 // pred_fallthru
      _
    // Predicated region
    $region18: #{convnet_forward.5} parent=1 // pred_check
      _
    $region19: #{convnet_forward.5} parent=1 // pred_check_branch
      %1057 = sbr.rel (0) target = $region21
    $region20: #{convnet_forward.5} parent=1 // pred_region
      %1058 = dma.done [#allocation3], 32
    $region21: #{convnet_forward.5} parent=1 // pred_fallthru
      _
    %1059 = vsyncpa [#allocation3], 1

</llo_original>
